<compile_context>
chip_gen: v6e
topology: v6e:2x2x1
jax: 0.10.0
libtpu: 0.0.40
codegen_flags: <defaults>
</compile_context>

<pallas_src>
import functools

import jax
import jax.numpy as jnp
from jax import lax
from jax.experimental import pallas as pl
from jax.experimental.pallas import tpu as pltpu

_MM_DTYPE = jnp.bfloat16           # MXU-native dtype for the 1x1-conv matmuls
_ACT_DTYPE = jnp.bfloat16          # HBM dtype for large inter-kernel activations
_LN_EPS = 1e-5                     # LayerNorm eps (matches the PyTorch module)
_L2_EPS = 1e-12                    # torch F.normalize eps
_NEG_INF = -1e30                   # additive mask value for off-head attention entries


def _derive_vmem_limit():
    """Per-generation scoped-VMEM limit (flat 48 MiB under-uses v5e/v6e and is risky on v7x)."""
    try:
        cap = int(getattr(pltpu.get_tpu_info(), "vmem_capacity_bytes", 64 * 1024 * 1024))
    except Exception:                       # query unavailable -> conservative default
        cap = 64 * 1024 * 1024
    return min(int(cap * 0.6), 100 * 1024 * 1024)


_VMEM_LIMIT = _derive_vmem_limit()
_MAX_ROW_TILE = 1024 if _VMEM_LIMIT >= 64 * 1024 * 1024 else 512


def _pick_row_tile(n_rows):
    """Biggest row tile that divides n_rows (multiple of 8, per-generation cap)."""
    for tr in (1024, 512, 256, 128, 64, 32, 16, 8):
        if tr <= _MAX_ROW_TILE and n_rows % tr == 0:
            return tr
    return n_rows


# ------------------------------------------------------------------------------------------------
# Kernel 1: fused LayerNorm (WithBias / BiasFree) + 1x1 conv (bf16 MXU matmul + bias).
# NOTE: with C < 128 the output stores are lane-masked; perf-target configs have C >= 128.
# ------------------------------------------------------------------------------------------------
def _ln_matmul_kernel(x_ref, g_ref, b_ref, w_ref, cb_ref, o_ref):
    x = x_ref[0].astype(jnp.float32)                        # (TR, Cin)
    mu = jnp.mean(x, axis=-1, keepdims=True)
    xc = x - mu
    var = jnp.mean(xc * xc, axis=-1, keepdims=True)         # torch var(unbiased=False)
    a = xc * lax.rsqrt(var + _LN_EPS) * g_ref[0] + b_ref[0]
    acc = jnp.dot(a.astype(_MM_DTYPE), w_ref[...], preferred_element_type=jnp.float32)
    o_ref[0] = (acc + cb_ref[0]).astype(o_ref.dtype)


def _ln_matmul_biasfree_kernel(x_ref, g_ref, w_ref, cb_ref, o_ref):
    x = x_ref[0].astype(jnp.float32)
    mu = jnp.mean(x, axis=-1, keepdims=True)
    xc = x - mu
    var = jnp.mean(xc * xc, axis=-1, keepdims=True)
    a = x * lax.rsqrt(var + _LN_EPS) * g_ref[0]
    acc = jnp.dot(a.astype(_MM_DTYPE), w_ref[...], preferred_element_type=jnp.float32)
    o_ref[0] = (acc + cb_ref[0]).astype(o_ref.dtype)


def _ln_matmul(x, gamma, beta, w_bf16, cbias, *, bias_free, out_dtype=_ACT_DTYPE):
    B, R, Cin = x.shape
    Cout = w_bf16.shape[1]
    tr = _pick_row_tile(R)
    x_spec = pl.BlockSpec((1, tr, Cin), lambda b, r: (b, r, 0))
    g_spec = pl.BlockSpec((1, Cin), lambda b, r: (0, 0))
    w_spec = pl.BlockSpec((Cin, Cout), lambda b, r: (0, 0))
    cb_spec = pl.BlockSpec((1, Cout), lambda b, r: (0, 0))
    if bias_free:
        kernel = _ln_matmul_biasfree_kernel
        in_specs = [x_spec, g_spec, w_spec, cb_spec]
        args = (x, gamma, w_bf16, cbias)
    else:
        b_spec = pl.BlockSpec((1, Cin), lambda b, r: (0, 0))
        kernel = _ln_matmul_kernel
        in_specs = [x_spec, g_spec, b_spec, w_spec, cb_spec]
        args = (x, gamma, beta, w_bf16, cbias)
    return pl.pallas_call(
        kernel,
        out_shape=jax.ShapeDtypeStruct((B, R, Cout), out_dtype),
        grid=(B, R // tr),
        in_specs=in_specs,
        out_specs=pl.BlockSpec((1, tr, Cout), lambda b, r: (b, r, 0)),
        compiler_params=pltpu.CompilerParams(
            dimension_semantics=("parallel", "parallel"),
            vmem_limit_bytes=_VMEM_LIMIT),
    )(*args)


# ------------------------------------------------------------------------------------------------
# Kernel 2: depthwise 3x3 conv + bias; padding realised via a VMEM scratch whose 1-wide halo only
# is zeroed (interior overwritten from the input block).
# ------------------------------------------------------------------------------------------------
def _dwconv3x3_kernel(x_ref, w_ref, b_ref, o_ref, xp_ref):
    H, W, C = o_ref.shape[1], o_ref.shape[2], o_ref.shape[3]
    zrow = jnp.zeros((1, W + 2, C), jnp.float32)
    zcol = jnp.zeros((H + 2, 1, C), jnp.float32)
    xp_ref[0:1, :, :] = zrow
    xp_ref[H + 1:H + 2, :, :] = zrow
    xp_ref[:, 0:1, :] = zcol
    xp_ref[:, W + 1:W + 2, :] = zcol
    xp_ref[1:H + 1, 1:W + 1, :] = x_ref[0].astype(jnp.float32)
    acc = jnp.zeros((H, W, C), jnp.float32) + b_ref[...]    # bias broadcast
    # TODO(synk): production-size images need an H-tiled grid with 1-row halos and pltpu.roll
    # based taps (plus fusion into the neighbouring kernels); full-image blocks are fine here.
    for ky in range(3):
        for kx in range(3):
            acc = acc + xp_ref[ky:ky + H, kx:kx + W, :] * w_ref[ky * 3 + kx]
    o_ref[0] = acc.astype(o_ref.dtype)


def _dwconv3x3(x_bhwc, w_taps, bias_c, *, out_dtype=_ACT_DTYPE):
    B, H, W, C = x_bhwc.shape
    return pl.pallas_call(
        _dwconv3x3_kernel,
        out_shape=jax.ShapeDtypeStruct((B, H, W, C), out_dtype),
        grid=(B,),
        in_specs=[
            pl.BlockSpec((1, H, W, C), lambda b: (b, 0, 0, 0)),
            pl.BlockSpec((9, 1, C), lambda b: (0, 0, 0)),
            pl.BlockSpec((1, C), lambda b: (0, 0)),
        ],
        out_specs=pl.BlockSpec((1, H, W, C), lambda b: (b, 0, 0, 0)),
        scratch_shapes=[pltpu.VMEM((H + 2, W + 2, C), jnp.float32)],
        compiler_params=pltpu.CompilerParams(
            dimension_semantics=("parallel",),
            vmem_limit_bytes=_VMEM_LIMIT),
    )(x_bhwc, w_taps, bias_c)


# ------------------------------------------------------------------------------------------------
# Kernel 3: transposed (channel) attention, all heads in one masked (C x C) matmul, fused with
# project_out (1x1 conv) + bias + residual add -> single lane-dense full-width store.
# ------------------------------------------------------------------------------------------------
def _chan_attn_kernel(qkv_ref, res_ref, tvec_ref, mask_ref, pw_ref, pb_ref, o_ref, *, dim):
    C = dim
    qkv = qkv_ref[0].astype(jnp.float32)                    # (HW, 3C)
    # NOTE: with C a multiple of 128 these lane slices are aligned; TODO(synk): emit q/k/v as
    # separate arrays from the qkv matmul so BlockSpec delivers them as aligned windows.
    q = qkv[:, 0 * C:1 * C]
    k = qkv[:, 1 * C:2 * C]
    v = qkv[:, 2 * C:3 * C]
    # torch F.normalize over HW: rsqrt(max(ss, eps^2)) == 1 / max(||.||, eps).
    qn = q * lax.rsqrt(jnp.maximum(jnp.sum(q * q, axis=0, keepdims=True), _L2_EPS * _L2_EPS))
    kn = k * lax.rsqrt(jnp.maximum(jnp.sum(k * k, axis=0, keepdims=True), _L2_EPS * _L2_EPS))
    qn = qn * tvec_ref[...]                                 # per-head temperature folded into q
    # One (C x C) MXU matmul for all heads; the block-diagonal additive mask (0 on-head,
    # -1e30 off-head) makes the row softmax exactly the per-head softmax.
    s = lax.dot_general(qn, kn, (((0,), (0,)), ((), ())),
                        preferred_element_type=jnp.float32) + mask_ref[...]
    s = s - jnp.max(s, axis=-1, keepdims=True)
    p = jnp.exp(s)
    p = p * pl.reciprocal(jnp.sum(p, axis=-1, keepdims=True), approx=True)
    attn = lax.dot_general(v, p, (((1,), (1,)), ((), ())),
                           preferred_element_type=jnp.float32)        # (HW, C)
    proj = jnp.dot(attn.astype(_MM_DTYPE), pw_ref[...], preferred_element_type=jnp.float32)
    o_ref[0] = (res_ref[0].astype(jnp.float32) + proj + pb_ref[0]).astype(o_ref.dtype)


def _chan_attention(qkv, res, tvec, mask, pw_bf16, pbias, *, dim):
    B, R, C3 = qkv.shape
    kernel = functools.partial(_chan_attn_kernel, dim=dim)
    # TODO(synk): grid=(B,) gives only B megacore steps; an HW-chunked two-pass formulation
    # would expose more parallel steps on v7x's 2 TensorCores.
    return pl.pallas_call(
        kernel,
        out_shape=jax.ShapeDtypeStruct((B, R, dim), jnp.float32),
        grid=(B,),
        in_specs=[
            pl.BlockSpec((1, R, C3), lambda b: (b, 0, 0)),
            pl.BlockSpec((1, R, dim), lambda b: (b, 0, 0)),
            pl.BlockSpec((1, dim), lambda b: (0, 0)),
            pl.BlockSpec((dim, dim), lambda b: (0, 0)),
            pl.BlockSpec((dim, dim), lambda b: (0, 0)),
            pl.BlockSpec((1, dim), lambda b: (0, 0)),
        ],
        out_specs=pl.BlockSpec((1, R, dim), lambda b: (b, 0, 0)),
        compiler_params=pltpu.CompilerParams(
            dimension_semantics=("parallel",),
            vmem_limit_bytes=_VMEM_LIMIT),
    )(qkv, res, tvec, mask, pw_bf16, pbias)


# ------------------------------------------------------------------------------------------------
# Kernel 4: FFN gate (gelu(x1) * x2) + project_out (1x1 conv) + bias + residual add.
# ------------------------------------------------------------------------------------------------
def _ffn_out_kernel(h_ref, r_ref, w_ref, b_ref, o_ref, *, hidden):
    h12 = h_ref[0].astype(jnp.float32)                      # (TR, 2*hidden)
    x1 = h12[:, :hidden]
    x2 = h12[:, hidden:]
    # TODO(synk): torch F.gelu uses the exact erf form; tanh approximation used (dev <= ~3e-3).
    c = 0.7978845608028654                                  # sqrt(2/pi)
    g = 0.5 * x1 * (1.0 + jnp.tanh(c * (x1 + 0.044715 * x1 * x1 * x1))) * x2
    acc = jnp.dot(g.astype(_MM_DTYPE), w_ref[...], preferred_element_type=jnp.float32)
    o_ref[0] = (r_ref[0].astype(jnp.float32) + acc + b_ref[0]).astype(o_ref.dtype)


def _ffn_out(h12, res, w_bf16, cbias, *, hidden):
    B, R, H2 = h12.shape
    Cout = w_bf16.shape[1]
    tr = _pick_row_tile(R)
    kernel = functools.partial(_ffn_out_kernel, hidden=hidden)
    return pl.pallas_call(
        kernel,
        out_shape=jax.ShapeDtypeStruct((B, R, Cout), jnp.float32),
        grid=(B, R // tr),
        in_specs=[
            pl.BlockSpec((1, tr, H2), lambda b, r: (b, r, 0)),
            pl.BlockSpec((1, tr, Cout), lambda b, r: (b, r, 0)),
            pl.BlockSpec((hidden, Cout), lambda b, r: (0, 0)),
            pl.BlockSpec((1, Cout), lambda b, r: (0, 0)),
        ],
        out_specs=pl.BlockSpec((1, tr, Cout), lambda b, r: (b, r, 0)),
        compiler_params=pltpu.CompilerParams(
            dimension_semantics=("parallel", "parallel"),
            vmem_limit_bytes=_VMEM_LIMIT),
    )(h12, res, w_bf16, cbias)


# ------------------------------------------------------------------------------------------------
# One-time parameter preparation (hoisted out of the jitted forward).
# ------------------------------------------------------------------------------------------------
def prepare_params(params, *, dim, num_heads):
    C = dim
    ch = C // num_heads
    hidden2 = params["ffn_in_w"].shape[0]
    hidden = hidden2 // 2
    head_id = jnp.arange(C) // ch
    f32 = jnp.float32
    return {
        "norm1_w": params["norm1_w"].astype(f32)[None],
        "norm1_b": params["norm1_b"].astype(f32)[None],
        "norm2_w": params["norm2_w"].astype(f32)[None],
        "norm2_b": params["norm2_b"].astype(f32)[None],
        "qkv_w": params["qkv_w"].reshape(3 * C, C).T.astype(_MM_DTYPE),
        "qkv_b": params["qkv_b"].astype(f32)[None],
        "qkv_dw_w": jnp.transpose(params["qkv_dw_w"].reshape(3 * C, 9),
                                  (1, 0)).reshape(9, 1, 3 * C).astype(f32),
        "qkv_dw_b": params["qkv_dw_b"].astype(f32)[None],
        "temp_vec": jnp.repeat(params["temperature"].reshape(num_heads), ch)[None].astype(f32),
        "attn_mask": jnp.where(head_id[:, None] == head_id[None, :], 0.0, _NEG_INF).astype(f32),
        "attn_proj_w": params["attn_proj_w"].reshape(C, C).T.astype(_MM_DTYPE),
        "attn_proj_b": params["attn_proj_b"].astype(f32)[None],
        "ffn_in_w": params["ffn_in_w"].reshape(hidden2, C).T.astype(_MM_DTYPE),
        "ffn_in_b": params["ffn_in_b"].astype(f32)[None],
        "ffn_dw_w": jnp.transpose(params["ffn_dw_w"].reshape(hidden2, 9),
                                  (1, 0)).reshape(9, 1, hidden2).astype(f32),
        "ffn_dw_b": params["ffn_dw_b"].astype(f32)[None],
        "ffn_out_w": params["ffn_out_w"].reshape(C, hidden).T.astype(_MM_DTYPE),
        "ffn_out_b": params["ffn_out_b"].astype(f32)[None],
    }


# ------------------------------------------------------------------------------------------------
# Full TransformerBlock forward (NCHW in / NCHW out).
# ------------------------------------------------------------------------------------------------
def transformer_block_forward(x_nchw, prep, *, layernorm_type="WithBias"):
    B, C, H, W = x_nchw.shape
    R = H * W
    bias_free = (layernorm_type == "BiasFree")

    # single NCHW -> channels-last conversion (channels on the TPU 128-lane axis)
    xt = jnp.transpose(x_nchw, (0, 2, 3, 1)).reshape(B, R, C).astype(jnp.float32)

    # ------------- attention branch: x + project_out(attn(dwconv(qkv(norm1(x))))) -------------
    qkv_pre = _ln_matmul(xt, prep["norm1_w"], prep["norm1_b"],
                         prep["qkv_w"], prep["qkv_b"], bias_free=bias_free)
    qkv = _dwconv3x3(qkv_pre.reshape(B, H, W, 3 * C),
                     prep["qkv_dw_w"], prep["qkv_dw_b"]).reshape(B, R, 3 * C)
    x1 = _chan_attention(qkv, xt, prep["temp_vec"], prep["attn_mask"],
                         prep["attn_proj_w"], prep["attn_proj_b"], dim=C)

    # ------------- feed-forward branch: x1 + project_out(gelu(h1) * h2) -----------------------
    hidden2 = prep["ffn_in_w"].shape[1]
    h_pre = _ln_matmul(x1, prep["norm2_w"], prep["norm2_b"],
                       prep["ffn_in_w"], prep["ffn_in_b"], bias_free=bias_free)
    h12 = _dwconv3x3(h_pre.reshape(B, H, W, hidden2),
                     prep["ffn_dw_w"], prep["ffn_dw_b"]).reshape(B, R, hidden2)
    out = _ffn_out(h12, x1, prep["ffn_out_w"], prep["ffn_out_b"], hidden=hidden2 // 2)

    return jnp.transpose(out.reshape(B, H, W, C), (0, 3, 1, 2))


# ------------------------------------------------------------------------------------------------
# Pure-JAX f32 reference (mirrors the PyTorch module exactly).
# ------------------------------------------------------------------------------------------------
def _reference_forward(x, p, *, num_heads, layernorm_type="WithBias"):
    B, C, H, W = x.shape

    def layer_norm(t, w, b):
        t3 = jnp.transpose(t, (0, 2, 3, 1)).reshape(B, H * W, -1)
        mu = jnp.mean(t3, axis=-1, keepdims=True)
        var = jnp.mean((t3 - mu) ** 2, axis=-1, keepdims=True)
        if layernorm_type == "BiasFree":
            y = t3 / jnp.sqrt(var + _LN_EPS) * w
        else:
            y = (t3 - mu) / jnp.sqrt(var + _LN_EPS) * w + b
        return jnp.transpose(y.reshape(B, H, W, -1), (0, 3, 1, 2))

    def conv1x1(t, w, b):
        y = lax.conv_general_dilated(t, w, (1, 1), "VALID",
                                     dimension_numbers=("NCHW", "OIHW", "NCHW"))
        return y + b[None, :, None, None]

    def dwconv(t, w, b):
        y = lax.conv_general_dilated(t, w, (1, 1), ((1, 1), (1, 1)),
                                     dimension_numbers=("NCHW", "OIHW", "NCHW"),
                                     feature_group_count=t.shape[1])
        return y + b[None, :, None, None]

    def attention(t):
        qkv = dwconv(conv1x1(t, p["qkv_w"], p["qkv_b"]), p["qkv_dw_w"], p["qkv_dw_b"])
        q, k, v = jnp.split(qkv, 3, axis=1)
        heads = lambda z: z.reshape(B, num_heads, C // num_heads, H * W)
        q, k, v = heads(q), heads(k), heads(v)
        q = q / jnp.maximum(jnp.linalg.norm(q, axis=-1, keepdims=True), _L2_EPS)
        k = k / jnp.maximum(jnp.linalg.norm(k, axis=-1, keepdims=True), _L2_EPS)
        attn = jnp.einsum("bhcn,bhdn->bhcd", q, k) * p["temperature"][None]
        attn = jax.nn.softmax(attn, axis=-1)
        out = jnp.einsum("bhcd,bhdn->bhcn", attn, v).reshape(B, C, H, W)
        return conv1x1(out, p["attn_proj_w"], p["attn_proj_b"])

    def ffn(t):
        h = dwconv(conv1x1(t, p["ffn_in_w"], p["ffn_in_b"]), p["ffn_dw_w"], p["ffn_dw_b"])
        x1, x2 = jnp.split(h, 2, axis=1)
        g = jax.nn.gelu(x1, approximate=False) * x2
        return conv1x1(g, p["ffn_out_w"], p["ffn_out_b"])

    t = x + attention(layer_norm(x, p["norm1_w"], p["norm1_b"]))
    t = t + ffn(layer_norm(t, p["norm2_w"], p["norm2_b"]))
    return t


if __name__ == "__main__":
    B, C, H, W = 2, 16, 16, 16
    num_heads = 2
    ffn_expansion_factor = 2.0
    hidden = int(C * ffn_expansion_factor)

    ks = jax.random.split(jax.random.PRNGKey(0), 18)
    nrm = lambda k, shape, s: jax.random.normal(k, shape, dtype=jnp.float32) * s

    params = {
        "norm1_w": 1.0 + 0.1 * jax.random.normal(ks[0], (C,), jnp.float32),
        "norm1_b": 0.05 * jax.random.normal(ks[1], (C,), jnp.float32),
        "qkv_w": nrm(ks[2], (3 * C, C, 1, 1), (1.0 / C) ** 0.5),
        "qkv_b": nrm(ks[3], (3 * C,), 0.05),
        "qkv_dw_w": nrm(ks[4], (3 * C, 1, 3, 3), 1.0 / 3.0),
        "qkv_dw_b": nrm(ks[5], (3 * C,), 0.05),
        "temperature": 1.0 + 0.25 * jax.random.normal(ks[6], (num_heads, 1, 1), jnp.float32),
        "attn_proj_w": nrm(ks[7], (C, C, 1, 1), (1.0 / C) ** 0.5),
        "attn_proj_b": nrm(ks[8], (C,), 0.05),
        "norm2_w": 1.0 + 0.1 * jax.random.normal(ks[9], (C,), jnp.float32),
        "norm2_b": 0.05 * jax.random.normal(ks[10], (C,), jnp.float32),
        "ffn_in_w": nrm(ks[11], (2 * hidden, C, 1, 1), (1.0 / C) ** 0.5),
        "ffn_in_b": nrm(ks[12], (2 * hidden,), 0.05),
        "ffn_dw_w": nrm(ks[13], (2 * hidden, 1, 3, 3), 1.0 / 3.0),
        "ffn_dw_b": nrm(ks[14], (2 * hidden,), 0.05),
        "ffn_out_w": nrm(ks[15], (C, hidden, 1, 1), (1.0 / hidden) ** 0.5),
        "ffn_out_b": nrm(ks[16], (C,), 0.05),
    }
    x = jax.random.normal(ks[17], (B, C, H, W), dtype=jnp.float32)

    prep = prepare_params(params, dim=C, num_heads=num_heads)
    fwd = jax.jit(functools.partial(transformer_block_forward, layernorm_type="WithBias"))
    out = jax.block_until_ready(fwd(x, prep))

    ref = _reference_forward(x, params, num_heads=num_heads, layernorm_type="WithBias")
    assert out.shape == (B, C, H, W), out.shape
    max_err = float(jnp.max(jnp.abs(out - ref)))
    # bf16 HBM intermediates + bf16 MXU matmuls (per perf review) => ~1e-2-level deviation
    # from the f32 reference; tolerance set accordingly.
    assert jnp.allclose(out, ref, atol=1e-1, rtol=1e-1), \
        f"mismatch vs reference, max abs err {max_err}"

    print("KERNEL_OK")
</pallas_src>

<mosaic_0001>
module attributes {stable_mosaic.version = 11 : i64} {
  func.func @_ln_matmul_kernel(%arg0: i32, %arg1: i32, %arg2: memref<1x256x16xf32, #tpu.memory_space<vmem>>, %arg3: memref<1x16xf32, #tpu.memory_space<vmem>>, %arg4: memref<1x16xf32, #tpu.memory_space<vmem>>, %arg5: memref<16x48xbf16, #tpu.memory_space<vmem>>, %arg6: memref<1x48xf32, #tpu.memory_space<vmem>>, %arg7: memref<1x256x48xbf16, #tpu.memory_space<vmem>>) attributes {dimension_semantics = [#tpu.dimension_semantics<parallel>, #tpu.dimension_semantics<parallel>], iteration_bounds = array<i64: 2, 1>, scalar_prefetch = 0 : i64, scratch_operands = 0 : i64, tpu.core_type = #tpu.core_type<tc>, window_params = [{transform_indices = @transform_0, window_bounds = array<i64: 1, 256, 16>}, {pipeline_mode = #tpu.pipeline_mode<synchronous>, transform_indices = @transform_1, window_bounds = array<i64: 1, 16>}, {pipeline_mode = #tpu.pipeline_mode<synchronous>, transform_indices = @transform_2, window_bounds = array<i64: 1, 16>}, {pipeline_mode = #tpu.pipeline_mode<synchronous>, transform_indices = @transform_3, window_bounds = array<i64: 16, 48>}, {pipeline_mode = #tpu.pipeline_mode<synchronous>, transform_indices = @transform_4, window_bounds = array<i64: 1, 48>}, {transform_indices = @transform_5, window_bounds = array<i64: 1, 256, 48>}]} {
    %c0 = arith.constant 0 : index
    %c0_0 = arith.constant 0 : index
    %c0_1 = arith.constant 0 : index
    %0 = vector.load %arg2[%c0, %c0_0, %c0_1] : memref<1x256x16xf32, #tpu.memory_space<vmem>>, vector<1x256x16xf32>
    %1 = vector.shape_cast %0 : vector<1x256x16xf32> to vector<256x16xf32>
    %cst = arith.constant dense<0.000000e+00> : vector<256xf32>
    %2 = vector.multi_reduction <add>, %1, %cst [1] : vector<256x16xf32> to vector<256xf32>
    %3 = vector.shape_cast %2 : vector<256xf32> to vector<256x1xf32>
    %cst_2 = arith.constant 1.600000e+01 : f32
    %4 = vector.broadcast %cst_2 : f32 to vector<256x1xf32>
    %5 = arith.divf %3, %4 : vector<256x1xf32>
    %6 = vector.broadcast %5 : vector<256x1xf32> to vector<256x16xf32>
    %7 = arith.subf %1, %6 : vector<256x16xf32>
    %8 = arith.mulf %7, %7 : vector<256x16xf32>
    %cst_3 = arith.constant dense<0.000000e+00> : vector<256xf32>
    %9 = vector.multi_reduction <add>, %8, %cst_3 [1] : vector<256x16xf32> to vector<256xf32>
    %10 = vector.shape_cast %9 : vector<256xf32> to vector<256x1xf32>
    %cst_4 = arith.constant 1.600000e+01 : f32
    %11 = vector.broadcast %cst_4 : f32 to vector<256x1xf32>
    %12 = arith.divf %10, %11 : vector<256x1xf32>
    %cst_5 = arith.constant 9.99999974E-6 : f32
    %13 = vector.broadcast %cst_5 : f32 to vector<256x1xf32>
    %14 = arith.addf %12, %13 : vector<256x1xf32>
    %15 = math.rsqrt %14 : vector<256x1xf32>
    %16 = vector.broadcast %15 : vector<256x1xf32> to vector<256x16xf32>
    %17 = arith.mulf %7, %16 : vector<256x16xf32>
    %c0_6 = arith.constant 0 : index
    %c0_7 = arith.constant 0 : index
    %18 = vector.load %arg3[%c0_6, %c0_7] : memref<1x16xf32, #tpu.memory_space<vmem>>, vector<1x16xf32>
    %19 = vector.shape_cast %18 : vector<1x16xf32> to vector<16xf32>
    %20 = vector.shape_cast %19 : vector<16xf32> to vector<1x16xf32>
    %21 = vector.broadcast %20 : vector<1x16xf32> to vector<256x16xf32>
    %22 = arith.mulf %17, %21 : vector<256x16xf32>
    %c0_8 = arith.constant 0 : index
    %c0_9 = arith.constant 0 : index
    %23 = vector.load %arg4[%c0_8, %c0_9] : memref<1x16xf32, #tpu.memory_space<vmem>>, vector<1x16xf32>
    %24 = vector.shape_cast %23 : vector<1x16xf32> to vector<16xf32>
    %25 = vector.shape_cast %24 : vector<16xf32> to vector<1x16xf32>
    %26 = vector.broadcast %25 : vector<1x16xf32> to vector<256x16xf32>
    %27 = arith.addf %22, %26 : vector<256x16xf32>
    %28 = arith.truncf %27 : vector<256x16xf32> to vector<256x16xbf16>
    %c0_10 = arith.constant 0 : index
    %c0_11 = arith.constant 0 : index
    %29 = vector.load %arg5[%c0_10, %c0_11] : memref<16x48xbf16, #tpu.memory_space<vmem>>, vector<16x48xbf16>
    %cst_12 = arith.constant dense<0.000000e+00> : vector<256x48xf32>
    %30 = tpu.matmul %28, %29, %cst_12 {dimension_numbers = #tpu.dot_dimension_numbers<[1], [0], [0], [1], [0, 0, 1, 1], [], []>} : vector<256x16xbf16>, vector<16x48xbf16>, vector<256x48xf32> -> vector<256x48xf32>
    %c0_13 = arith.constant 0 : index
    %c0_14 = arith.constant 0 : index
    %31 = vector.load %arg6[%c0_13, %c0_14] : memref<1x48xf32, #tpu.memory_space<vmem>>, vector<1x48xf32>
    %32 = vector.shape_cast %31 : vector<1x48xf32> to vector<48xf32>
    %33 = vector.shape_cast %32 : vector<48xf32> to vector<1x48xf32>
    %34 = vector.broadcast %33 : vector<1x48xf32> to vector<256x48xf32>
    %35 = arith.addf %30, %34 : vector<256x48xf32>
    %36 = arith.truncf %35 : vector<256x48xf32> to vector<256x48xbf16>
    %c0_15 = arith.constant 0 : index
    %c0_16 = arith.constant 0 : index
    %c0_17 = arith.constant 0 : index
    %37 = vector.load %arg7[%c0_15, %c0_16, %c0_17] : memref<1x256x48xbf16, #tpu.memory_space<vmem>>, vector<1x256x48xbf16>
    %38 = vector.shape_cast %37 : vector<1x256x48xbf16> to vector<256x48xbf16>
    %39 = vector.shape_cast %36 : vector<256x48xbf16> to vector<1x256x48xbf16>
    tpu.vector_store %arg7[%c0_15, %c0_16, %c0_17], %39 {strides = array<i32>} : memref<1x256x48xbf16, #tpu.memory_space<vmem>>, vector<1x256x48xbf16>,
    return
  }
  func.func @transform_0(%arg0: i32, %arg1: i32) -> (i32, i32, i32) {
    %c0_i32 = arith.constant 0 : i32
    %c0_i32_0 = arith.constant 0 : i32
    return %arg0, %arg1, %c0_i32 : i32, i32, i32
  }
  func.func @transform_1(%arg0: i32, %arg1: i32) -> (i32, i32) {
    %c0_i32 = arith.constant 0 : i32
    %c0_i32_0 = arith.constant 0 : i32
    %c0_i32_1 = arith.constant 0 : i32
    return %c0_i32, %c0_i32_0 : i32, i32
  }
  func.func @transform_2(%arg0: i32, %arg1: i32) -> (i32, i32) {
    %c0_i32 = arith.constant 0 : i32
    %c0_i32_0 = arith.constant 0 : i32
    %c0_i32_1 = arith.constant 0 : i32
    return %c0_i32, %c0_i32_0 : i32, i32
  }
  func.func @transform_3(%arg0: i32, %arg1: i32) -> (i32, i32) {
    %c0_i32 = arith.constant 0 : i32
    %c0_i32_0 = arith.constant 0 : i32
    %c0_i32_1 = arith.constant 0 : i32
    return %c0_i32, %c0_i32_0 : i32, i32
  }
  func.func @transform_4(%arg0: i32, %arg1: i32) -> (i32, i32) {
    %c0_i32 = arith.constant 0 : i32
    %c0_i32_0 = arith.constant 0 : i32
    %c0_i32_1 = arith.constant 0 : i32
    return %c0_i32, %c0_i32_0 : i32, i32
  }
  func.func @transform_5(%arg0: i32, %arg1: i32) -> (i32, i32, i32) {
    %c0_i32 = arith.constant 0 : i32
    %c0_i32_0 = arith.constant 0 : i32
    return %arg0, %arg1, %c0_i32 : i32, i32, i32
  }
}

module attributes {stable_mosaic.version = 11 : i64} {
  func.func @_chan_attn_kernel(%arg0: i32, %arg1: memref<1x256x48xbf16, #tpu.memory_space<vmem>>, %arg2: memref<1x256x16xf32, #tpu.memory_space<vmem>>, %arg3: memref<1x16xf32, #tpu.memory_space<vmem>>, %arg4: memref<16x16xf32, #tpu.memory_space<vmem>>, %arg5: memref<16x16xbf16, #tpu.memory_space<vmem>>, %arg6: memref<1x16xf32, #tpu.memory_space<vmem>>, %arg7: memref<1x256x16xf32, #tpu.memory_space<vmem>>) attributes {dimension_semantics = [#tpu.dimension_semantics<parallel>], iteration_bounds = array<i64: 2>, scalar_prefetch = 0 : i64, scratch_operands = 0 : i64, tpu.core_type = #tpu.core_type<tc>, window_params = [{transform_indices = @transform_0, window_bounds = array<i64: 1, 256, 48>}, {transform_indices = @transform_1, window_bounds = array<i64: 1, 256, 16>}, {pipeline_mode = #tpu.pipeline_mode<synchronous>, transform_indices = @transform_2, window_bounds = array<i64: 1, 16>}, {pipeline_mode = #tpu.pipeline_mode<synchronous>, transform_indices = @transform_3, window_bounds = array<i64: 16, 16>}, {pipeline_mode = #tpu.pipeline_mode<synchronous>, transform_indices = @transform_4, window_bounds = array<i64: 16, 16>}, {pipeline_mode = #tpu.pipeline_mode<synchronous>, transform_indices = @transform_5, window_bounds = array<i64: 1, 16>}, {transform_indices = @transform_6, window_bounds = array<i64: 1, 256, 16>}]} {
    %c0 = arith.constant 0 : index
    %c0_0 = arith.constant 0 : index
    %c0_1 = arith.constant 0 : index
    %0 = vector.load %arg1[%c0, %c0_0, %c0_1] : memref<1x256x48xbf16, #tpu.memory_space<vmem>>, vector<1x256x48xbf16>
    %1 = vector.shape_cast %0 : vector<1x256x48xbf16> to vector<256x48xbf16>
    %2 = arith.extf %1 : vector<256x48xbf16> to vector<256x48xf32>
    %3 = vector.extract_strided_slice %2 {offsets = [0, 0], sizes = [256, 16], strides = [1, 1]} : vector<256x48xf32> to vector<256x16xf32>
    %4 = vector.extract_strided_slice %2 {offsets = [0, 16], sizes = [256, 16], strides = [1, 1]} : vector<256x48xf32> to vector<256x16xf32>
    %5 = vector.extract_strided_slice %2 {offsets = [0, 32], sizes = [256, 16], strides = [1, 1]} : vector<256x48xf32> to vector<256x16xf32>
    %6 = arith.mulf %3, %3 : vector<256x16xf32>
    %cst = arith.constant dense<0.000000e+00> : vector<16xf32>
    %7 = vector.multi_reduction <add>, %6, %cst [0] : vector<256x16xf32> to vector<16xf32>
    %8 = vector.shape_cast %7 : vector<16xf32> to vector<1x16xf32>
    %cst_2 = arith.constant 1.000000e-24 : f32
    %9 = vector.broadcast %cst_2 : f32 to vector<1x16xf32>
    %10 = arith.maximumf %8, %9 : vector<1x16xf32>
    %11 = math.rsqrt %10 : vector<1x16xf32>
    %12 = vector.broadcast %11 : vector<1x16xf32> to vector<256x16xf32>
    %13 = arith.mulf %3, %12 : vector<256x16xf32>
    %14 = arith.mulf %4, %4 : vector<256x16xf32>
    %cst_3 = arith.constant dense<0.000000e+00> : vector<16xf32>
    %15 = vector.multi_reduction <add>, %14, %cst_3 [0] : vector<256x16xf32> to vector<16xf32>
    %16 = vector.shape_cast %15 : vector<16xf32> to vector<1x16xf32>
    %cst_4 = arith.constant 1.000000e-24 : f32
    %17 = vector.broadcast %cst_4 : f32 to vector<1x16xf32>
    %18 = arith.maximumf %16, %17 : vector<1x16xf32>
    %19 = math.rsqrt %18 : vector<1x16xf32>
    %20 = vector.broadcast %19 : vector<1x16xf32> to vector<256x16xf32>
    %21 = arith.mulf %4, %20 : vector<256x16xf32>
    %c0_5 = arith.constant 0 : index
    %c0_6 = arith.constant 0 : index
    %22 = vector.load %arg3[%c0_5, %c0_6] : memref<1x16xf32, #tpu.memory_space<vmem>>, vector<1x16xf32>
    %23 = vector.broadcast %22 : vector<1x16xf32> to vector<256x16xf32>
    %24 = arith.mulf %13, %23 : vector<256x16xf32>
    %cst_7 = arith.constant dense<0.000000e+00> : vector<16x16xf32>
    %25 = tpu.matmul %24, %21, %cst_7 {dimension_numbers = #tpu.dot_dimension_numbers<[0], [0], [1], [1], [0, 1, 1, 1], [], []>} : vector<256x16xf32>, vector<256x16xf32>, vector<16x16xf32> -> vector<16x16xf32>
    %c0_8 = arith.constant 0 : index
    %c0_9 = arith.constant 0 : index
    %26 = vector.load %arg4[%c0_8, %c0_9] : memref<16x16xf32, #tpu.memory_space<vmem>>, vector<16x16xf32>
    %27 = arith.addf %25, %26 : vector<16x16xf32>
    %cst_10 = arith.constant dense<0xFF800000> : vector<16xf32>
    %28 = vector.multi_reduction <maximumf>, %27, %cst_10 [1] : vector<16x16xf32> to vector<16xf32>
    %29 = vector.shape_cast %28 : vector<16xf32> to vector<16x1xf32>
    %30 = vector.broadcast %29 : vector<16x1xf32> to vector<16x16xf32>
    %31 = arith.subf %27, %30 : vector<16x16xf32>
    %32 = math.exp %31 : vector<16x16xf32>
    %cst_11 = arith.constant dense<0.000000e+00> : vector<16xf32>
    %33 = vector.multi_reduction <add>, %32, %cst_11 [1] : vector<16x16xf32> to vector<16xf32>
    %34 = vector.shape_cast %33 : vector<16xf32> to vector<16x1xf32>
    %35 = tpu.reciprocal %34 {approx = true} : vector<16x1xf32> -> vector<16x1xf32>
    %36 = vector.broadcast %35 : vector<16x1xf32> to vector<16x16xf32>
    %37 = arith.mulf %32, %36 : vector<16x16xf32>
    %cst_12 = arith.constant dense<0.000000e+00> : vector<256x16xf32>
    %38 = tpu.matmul %5, %37, %cst_12 {dimension_numbers = #tpu.dot_dimension_numbers<[1], [1], [0], [0], [0, 0, 1, 0], [], []>} : vector<256x16xf32>, vector<16x16xf32>, vector<256x16xf32> -> vector<256x16xf32>
    %39 = arith.truncf %38 : vector<256x16xf32> to vector<256x16xbf16>
    %c0_13 = arith.constant 0 : index
    %c0_14 = arith.constant 0 : index
    %40 = vector.load %arg5[%c0_13, %c0_14] : memref<16x16xbf16, #tpu.memory_space<vmem>>, vector<16x16xbf16>
    %cst_15 = arith.constant dense<0.000000e+00> : vector<256x16xf32>
    %41 = tpu.matmul %39, %40, %cst_15 {dimension_numbers = #tpu.dot_dimension_numbers<[1], [0], [0], [1], [0, 0, 1, 1], [], []>} : vector<256x16xbf16>, vector<16x16xbf16>, vector<256x16xf32> -> vector<256x16xf32>
    %c0_16 = arith.constant 0 : index
    %c0_17 = arith.constant 0 : index
    %c0_18 = arith.constant 0 : index
    %42 = vector.load %arg2[%c0_16, %c0_17, %c0_18] : memref<1x256x16xf32, #tpu.memory_space<vmem>>, vector<1x256x16xf32>
    %43 = vector.shape_cast %42 : vector<1x256x16xf32> to vector<256x16xf32>
    %44 = arith.addf %43, %41 : vector<256x16xf32>
    %c0_19 = arith.constant 0 : index
    %c0_20 = arith.constant 0 : index
    %45 = vector.load %arg6[%c0_19, %c0_20] : memref<1x16xf32, #tpu.memory_space<vmem>>, vector<1x16xf32>
    %46 = vector.shape_cast %45 : vector<1x16xf32> to vector<16xf32>
    %47 = vector.shape_cast %46 : vector<16xf32> to vector<1x16xf32>
    %48 = vector.broadcast %47 : vector<1x16xf32> to vector<256x16xf32>
    %49 = arith.addf %44, %48 : vector<256x16xf32>
    %c0_21 = arith.constant 0 : index
    %c0_22 = arith.constant 0 : index
    %c0_23 = arith.constant 0 : index
    %50 = vector.load %arg7[%c0_21, %c0_22, %c0_23] : memref<1x256x16xf32, #tpu.memory_space<vmem>>, vector<1x256x16xf32>
    %51 = vector.shape_cast %50 : vector<1x256x16xf32> to vector<256x16xf32>
    %52 = vector.shape_cast %49 : vector<256x16xf32> to vector<1x256x16xf32>
    tpu.vector_store %arg7[%c0_21, %c0_22, %c0_23], %52 {strides = array<i32>} : memref<1x256x16xf32, #tpu.memory_space<vmem>>, vector<1x256x16xf32>,
    return
  }
  func.func @transform_0(%arg0: i32) -> (i32, i32, i32) {
    %c0_i32 = arith.constant 0 : i32
    %c0_i32_0 = arith.constant 0 : i32
    %c0_i32_1 = arith.constant 0 : i32
    return %arg0, %c0_i32, %c0_i32_0 : i32, i32, i32
  }
  func.func @transform_1(%arg0: i32) -> (i32, i32, i32) {
    %c0_i32 = arith.constant 0 : i32
    %c0_i32_0 = arith.constant 0 : i32
    %c0_i32_1 = arith.constant 0 : i32
    return %arg0, %c0_i32, %c0_i32_0 : i32, i32, i32
  }
  func.func @transform_2(%arg0: i32) -> (i32, i32) {
    %c0_i32 = arith.constant 0 : i32
    %c0_i32_0 = arith.constant 0 : i32
    %c0_i32_1 = arith.constant 0 : i32
    return %c0_i32, %c0_i32_0 : i32, i32
  }
  func.func @transform_3(%arg0: i32) -> (i32, i32) {
    %c0_i32 = arith.constant 0 : i32
    %c0_i32_0 = arith.constant 0 : i32
    %c0_i32_1 = arith.constant 0 : i32
    return %c0_i32, %c0_i32_0 : i32, i32
  }
  func.func @transform_4(%arg0: i32) -> (i32, i32) {
    %c0_i32 = arith.constant 0 : i32
    %c0_i32_0 = arith.constant 0 : i32
    %c0_i32_1 = arith.constant 0 : i32
    return %c0_i32, %c0_i32_0 : i32, i32
  }
  func.func @transform_5(%arg0: i32) -> (i32, i32) {
    %c0_i32 = arith.constant 0 : i32
    %c0_i32_0 = arith.constant 0 : i32
    %c0_i32_1 = arith.constant 0 : i32
    return %c0_i32, %c0_i32_0 : i32, i32
  }
  func.func @transform_6(%arg0: i32) -> (i32, i32, i32) {
    %c0_i32 = arith.constant 0 : i32
    %c0_i32_0 = arith.constant 0 : i32
    %c0_i32_1 = arith.constant 0 : i32
    return %arg0, %c0_i32, %c0_i32_0 : i32, i32, i32
  }
}

module attributes {stable_mosaic.version = 11 : i64} {
  func.func @_dwconv3x3_kernel(%arg0: i32, %arg1: memref<1x16x16x48xbf16, #tpu.memory_space<vmem>>, %arg2: memref<9x1x48xf32, #tpu.memory_space<vmem>>, %arg3: memref<1x48xf32, #tpu.memory_space<vmem>>, %arg4: memref<1x16x16x48xbf16, #tpu.memory_space<vmem>>, %arg5: memref<18x18x48xf32, #tpu.memory_space<vmem>>) attributes {dimension_semantics = [#tpu.dimension_semantics<parallel>], iteration_bounds = array<i64: 2>, scalar_prefetch = 0 : i64, scratch_operands = 1 : i64, tpu.core_type = #tpu.core_type<tc>, window_params = [{transform_indices = @transform_0, window_bounds = array<i64: 1, 16, 16, 48>}, {pipeline_mode = #tpu.pipeline_mode<synchronous>, transform_indices = @transform_1, window_bounds = array<i64: 9, 1, 48>}, {pipeline_mode = #tpu.pipeline_mode<synchronous>, transform_indices = @transform_2, window_bounds = array<i64: 1, 48>}, {transform_indices = @transform_3, window_bounds = array<i64: 1, 16, 16, 48>}]} {
    %cst = arith.constant 0.000000e+00 : f32
    %0 = vector.broadcast %cst : f32 to vector<1x18x48xf32>
    %cst_0 = arith.constant 0.000000e+00 : f32
    %1 = vector.broadcast %cst_0 : f32 to vector<18x1x48xf32>
    %c0 = arith.constant 0 : index
    %c0_1 = arith.constant 0 : index
    %c0_2 = arith.constant 0 : index
    %2 = vector.load %arg5[%c0, %c0_1, %c0_2] : memref<18x18x48xf32, #tpu.memory_space<vmem>>, vector<1x18x48xf32>
    tpu.vector_store %arg5[%c0, %c0_1, %c0_2], %0 {strides = array<i32>} : memref<18x18x48xf32, #tpu.memory_space<vmem>>, vector<1x18x48xf32>,
    %c17 = arith.constant 17 : index
    %c0_3 = arith.constant 0 : index
    %c0_4 = arith.constant 0 : index
    %3 = vector.load %arg5[%c17, %c0_3, %c0_4] : memref<18x18x48xf32, #tpu.memory_space<vmem>>, vector<1x18x48xf32>
    tpu.vector_store %arg5[%c17, %c0_3, %c0_4], %0 {strides = array<i32>} : memref<18x18x48xf32, #tpu.memory_space<vmem>>, vector<1x18x48xf32>,
    %c0_5 = arith.constant 0 : index
    %c0_6 = arith.constant 0 : index
    %c0_7 = arith.constant 0 : index
    %4 = vector.load %arg5[%c0_5, %c0_6, %c0_7] : memref<18x18x48xf32, #tpu.memory_space<vmem>>, vector<18x1x48xf32>
    tpu.vector_store %arg5[%c0_5, %c0_6, %c0_7], %1 {strides = array<i32>} : memref<18x18x48xf32, #tpu.memory_space<vmem>>, vector<18x1x48xf32>,
    %c0_8 = arith.constant 0 : index
    %c17_9 = arith.constant 17 : index
    %c0_10 = arith.constant 0 : index
    %5 = vector.load %arg5[%c0_8, %c17_9, %c0_10] : memref<18x18x48xf32, #tpu.memory_space<vmem>>, vector<18x1x48xf32>
    tpu.vector_store %arg5[%c0_8, %c17_9, %c0_10], %1 {strides = array<i32>} : memref<18x18x48xf32, #tpu.memory_space<vmem>>, vector<18x1x48xf32>,
    %c0_11 = arith.constant 0 : index
    %c0_12 = arith.constant 0 : index
    %c0_13 = arith.constant 0 : index
    %c0_14 = arith.constant 0 : index
    %6 = vector.load %arg1[%c0_11, %c0_12, %c0_13, %c0_14] : memref<1x16x16x48xbf16, #tpu.memory_space<vmem>>, vector<1x16x16x48xbf16>
    %7 = vector.shape_cast %6 : vector<1x16x16x48xbf16> to vector<16x16x48xbf16>
    %8 = arith.extf %7 : vector<16x16x48xbf16> to vector<16x16x48xf32>
    %c1 = arith.constant 1 : index
    %c1_15 = arith.constant 1 : index
    %c0_16 = arith.constant 0 : index
    %9 = vector.load %arg5[%c1, %c1_15, %c0_16] : memref<18x18x48xf32, #tpu.memory_space<vmem>>, vector<16x16x48xf32>
    tpu.vector_store %arg5[%c1, %c1_15, %c0_16], %8 {strides = array<i32>} : memref<18x18x48xf32, #tpu.memory_space<vmem>>, vector<16x16x48xf32>,
    %cst_17 = arith.constant 0.000000e+00 : f32
    %10 = vector.broadcast %cst_17 : f32 to vector<16x16x48xf32>
    %c0_18 = arith.constant 0 : index
    %c0_19 = arith.constant 0 : index
    %11 = vector.load %arg3[%c0_18, %c0_19] : memref<1x48xf32, #tpu.memory_space<vmem>>, vector<1x48xf32>
    %12 = vector.shape_cast %11 : vector<1x48xf32> to vector<1x1x48xf32>
    %13 = vector.broadcast %12 : vector<1x1x48xf32> to vector<16x16x48xf32>
    %14 = arith.addf %10, %13 : vector<16x16x48xf32>
    %c0_20 = arith.constant 0 : index
    %c0_21 = arith.constant 0 : index
    %c0_22 = arith.constant 0 : index
    %15 = vector.load %arg5[%c0_20, %c0_21, %c0_22] : memref<18x18x48xf32, #tpu.memory_space<vmem>>, vector<16x16x48xf32>
    %c0_23 = arith.constant 0 : index
    %c0_24 = arith.constant 0 : index
    %c0_25 = arith.constant 0 : index
    %16 = vector.load %arg2[%c0_23, %c0_24, %c0_25] : memref<9x1x48xf32, #tpu.memory_space<vmem>>, vector<1x1x48xf32>
    %17 = vector.shape_cast %16 : vector<1x1x48xf32> to vector<1x48xf32>
    %18 = vector.shape_cast %17 : vector<1x48xf32> to vector<1x1x48xf32>
    %19 = vector.broadcast %18 : vector<1x1x48xf32> to vector<16x16x48xf32>
    %20 = arith.mulf %15, %19 : vector<16x16x48xf32>
    %21 = arith.addf %14, %20 : vector<16x16x48xf32>
    %c0_26 = arith.constant 0 : index
    %c1_27 = arith.constant 1 : index
    %c0_28 = arith.constant 0 : index
    %22 = vector.load %arg5[%c0_26, %c1_27, %c0_28] : memref<18x18x48xf32, #tpu.memory_space<vmem>>, vector<16x16x48xf32>
    %c1_29 = arith.constant 1 : index
    %c0_30 = arith.constant 0 : index
    %c0_31 = arith.constant 0 : index
    %23 = vector.load %arg2[%c1_29, %c0_30, %c0_31] : memref<9x1x48xf32, #tpu.memory_space<vmem>>, vector<1x1x48xf32>
    %24 = vector.shape_cast %23 : vector<1x1x48xf32> to vector<1x48xf32>
    %25 = vector.shape_cast %24 : vector<1x48xf32> to vector<1x1x48xf32>
    %26 = vector.broadcast %25 : vector<1x1x48xf32> to vector<16x16x48xf32>
    %27 = arith.mulf %22, %26 : vector<16x16x48xf32>
    %28 = arith.addf %21, %27 : vector<16x16x48xf32>
    %c0_32 = arith.constant 0 : index
    %c2 = arith.constant 2 : index
    %c0_33 = arith.constant 0 : index
    %29 = vector.load %arg5[%c0_32, %c2, %c0_33] : memref<18x18x48xf32, #tpu.memory_space<vmem>>, vector<16x16x48xf32>
    %c2_34 = arith.constant 2 : index
    %c0_35 = arith.constant 0 : index
    %c0_36 = arith.constant 0 : index
    %30 = vector.load %arg2[%c2_34, %c0_35, %c0_36] : memref<9x1x48xf32, #tpu.memory_space<vmem>>, vector<1x1x48xf32>
    %31 = vector.shape_cast %30 : vector<1x1x48xf32> to vector<1x48xf32>
    %32 = vector.shape_cast %31 : vector<1x48xf32> to vector<1x1x48xf32>
    %33 = vector.broadcast %32 : vector<1x1x48xf32> to vector<16x16x48xf32>
    %34 = arith.mulf %29, %33 : vector<16x16x48xf32>
    %35 = arith.addf %28, %34 : vector<16x16x48xf32>
    %c1_37 = arith.constant 1 : index
    %c0_38 = arith.constant 0 : index
    %c0_39 = arith.constant 0 : index
    %36 = vector.load %arg5[%c1_37, %c0_38, %c0_39] : memref<18x18x48xf32, #tpu.memory_space<vmem>>, vector<16x16x48xf32>
    %c3 = arith.constant 3 : index
    %c0_40 = arith.constant 0 : index
    %c0_41 = arith.constant 0 : index
    %37 = vector.load %arg2[%c3, %c0_40, %c0_41] : memref<9x1x48xf32, #tpu.memory_space<vmem>>, vector<1x1x48xf32>
    %38 = vector.shape_cast %37 : vector<1x1x48xf32> to vector<1x48xf32>
    %39 = vector.shape_cast %38 : vector<1x48xf32> to vector<1x1x48xf32>
    %40 = vector.broadcast %39 : vector<1x1x48xf32> to vector<16x16x48xf32>
    %41 = arith.mulf %36, %40 : vector<16x16x48xf32>
    %42 = arith.addf %35, %41 : vector<16x16x48xf32>
    %c1_42 = arith.constant 1 : index
    %c1_43 = arith.constant 1 : index
    %c0_44 = arith.constant 0 : index
    %43 = vector.load %arg5[%c1_42, %c1_43, %c0_44] : memref<18x18x48xf32, #tpu.memory_space<vmem>>, vector<16x16x48xf32>
    %c4 = arith.constant 4 : index
    %c0_45 = arith.constant 0 : index
    %c0_46 = arith.constant 0 : index
    %44 = vector.load %arg2[%c4, %c0_45, %c0_46] : memref<9x1x48xf32, #tpu.memory_space<vmem>>, vector<1x1x48xf32>
    %45 = vector.shape_cast %44 : vector<1x1x48xf32> to vector<1x48xf32>
    %46 = vector.shape_cast %45 : vector<1x48xf32> to vector<1x1x48xf32>
    %47 = vector.broadcast %46 : vector<1x1x48xf32> to vector<16x16x48xf32>
    %48 = arith.mulf %43, %47 : vector<16x16x48xf32>
    %49 = arith.addf %42, %48 : vector<16x16x48xf32>
    %c1_47 = arith.constant 1 : index
    %c2_48 = arith.constant 2 : index
    %c0_49 = arith.constant 0 : index
    %50 = vector.load %arg5[%c1_47, %c2_48, %c0_49] : memref<18x18x48xf32, #tpu.memory_space<vmem>>, vector<16x16x48xf32>
    %c5 = arith.constant 5 : index
    %c0_50 = arith.constant 0 : index
    %c0_51 = arith.constant 0 : index
    %51 = vector.load %arg2[%c5, %c0_50, %c0_51] : memref<9x1x48xf32, #tpu.memory_space<vmem>>, vector<1x1x48xf32>
    %52 = vector.shape_cast %51 : vector<1x1x48xf32> to vector<1x48xf32>
    %53 = vector.shape_cast %52 : vector<1x48xf32> to vector<1x1x48xf32>
    %54 = vector.broadcast %53 : vector<1x1x48xf32> to vector<16x16x48xf32>
    %55 = arith.mulf %50, %54 : vector<16x16x48xf32>
    %56 = arith.addf %49, %55 : vector<16x16x48xf32>
    %c2_52 = arith.constant 2 : index
    %c0_53 = arith.constant 0 : index
    %c0_54 = arith.constant 0 : index
    %57 = vector.load %arg5[%c2_52, %c0_53, %c0_54] : memref<18x18x48xf32, #tpu.memory_space<vmem>>, vector<16x16x48xf32>
    %c6 = arith.constant 6 : index
    %c0_55 = arith.constant 0 : index
    %c0_56 = arith.constant 0 : index
    %58 = vector.load %arg2[%c6, %c0_55, %c0_56] : memref<9x1x48xf32, #tpu.memory_space<vmem>>, vector<1x1x48xf32>
    %59 = vector.shape_cast %58 : vector<1x1x48xf32> to vector<1x48xf32>
    %60 = vector.shape_cast %59 : vector<1x48xf32> to vector<1x1x48xf32>
    %61 = vector.broadcast %60 : vector<1x1x48xf32> to vector<16x16x48xf32>
    %62 = arith.mulf %57, %61 : vector<16x16x48xf32>
    %63 = arith.addf %56, %62 : vector<16x16x48xf32>
    %c2_57 = arith.constant 2 : index
    %c1_58 = arith.constant 1 : index
    %c0_59 = arith.constant 0 : index
    %64 = vector.load %arg5[%c2_57, %c1_58, %c0_59] : memref<18x18x48xf32, #tpu.memory_space<vmem>>, vector<16x16x48xf32>
    %c7 = arith.constant 7 : index
    %c0_60 = arith.constant 0 : index
    %c0_61 = arith.constant 0 : index
    %65 = vector.load %arg2[%c7, %c0_60, %c0_61] : memref<9x1x48xf32, #tpu.memory_space<vmem>>, vector<1x1x48xf32>
    %66 = vector.shape_cast %65 : vector<1x1x48xf32> to vector<1x48xf32>
    %67 = vector.shape_cast %66 : vector<1x48xf32> to vector<1x1x48xf32>
    %68 = vector.broadcast %67 : vector<1x1x48xf32> to vector<16x16x48xf32>
    %69 = arith.mulf %64, %68 : vector<16x16x48xf32>
    %70 = arith.addf %63, %69 : vector<16x16x48xf32>
    %c2_62 = arith.constant 2 : index
    %c2_63 = arith.constant 2 : index
    %c0_64 = arith.constant 0 : index
    %71 = vector.load %arg5[%c2_62, %c2_63, %c0_64] : memref<18x18x48xf32, #tpu.memory_space<vmem>>, vector<16x16x48xf32>
    %c8 = arith.constant 8 : index
    %c0_65 = arith.constant 0 : index
    %c0_66 = arith.constant 0 : index
    %72 = vector.load %arg2[%c8, %c0_65, %c0_66] : memref<9x1x48xf32, #tpu.memory_space<vmem>>, vector<1x1x48xf32>
    %73 = vector.shape_cast %72 : vector<1x1x48xf32> to vector<1x48xf32>
    %74 = vector.shape_cast %73 : vector<1x48xf32> to vector<1x1x48xf32>
    %75 = vector.broadcast %74 : vector<1x1x48xf32> to vector<16x16x48xf32>
    %76 = arith.mulf %71, %75 : vector<16x16x48xf32>
    %77 = arith.addf %70, %76 : vector<16x16x48xf32>
    %78 = arith.truncf %77 : vector<16x16x48xf32> to vector<16x16x48xbf16>
    %c0_67 = arith.constant 0 : index
    %c0_68 = arith.constant 0 : index
    %c0_69 = arith.constant 0 : index
    %c0_70 = arith.constant 0 : index
    %79 = vector.load %arg4[%c0_67, %c0_68, %c0_69, %c0_70] : memref<1x16x16x48xbf16, #tpu.memory_space<vmem>>, vector<1x16x16x48xbf16>
    %80 = vector.shape_cast %79 : vector<1x16x16x48xbf16> to vector<16x16x48xbf16>
    %81 = vector.shape_cast %78 : vector<16x16x48xbf16> to vector<1x16x16x48xbf16>
    tpu.vector_store %arg4[%c0_67, %c0_68, %c0_69, %c0_70], %81 {strides = array<i32>} : memref<1x16x16x48xbf16, #tpu.memory_space<vmem>>, vector<1x16x16x48xbf16>,
    return
  }
  func.func @transform_0(%arg0: i32) -> (i32, i32, i32, i32) {
    %c0_i32 = arith.constant 0 : i32
    %c0_i32_0 = arith.constant 0 : i32
    %c0_i32_1 = arith.constant 0 : i32
    %c0_i32_2 = arith.constant 0 : i32
    return %arg0, %c0_i32, %c0_i32_0, %c0_i32_1 : i32, i32, i32, i32
  }
  func.func @transform_1(%arg0: i32) -> (i32, i32, i32) {
    %c0_i32 = arith.constant 0 : i32
    %c0_i32_0 = arith.constant 0 : i32
    %c0_i32_1 = arith.constant 0 : i32
    %c0_i32_2 = arith.constant 0 : i32
    return %c0_i32, %c0_i32_0, %c0_i32_1 : i32, i32, i32
  }
  func.func @transform_2(%arg0: i32) -> (i32, i32) {
    %c0_i32 = arith.constant 0 : i32
    %c0_i32_0 = arith.constant 0 : i32
    %c0_i32_1 = arith.constant 0 : i32
    return %c0_i32, %c0_i32_0 : i32, i32
  }
  func.func @transform_3(%arg0: i32) -> (i32, i32, i32, i32) {
    %c0_i32 = arith.constant 0 : i32
    %c0_i32_0 = arith.constant 0 : i32
    %c0_i32_1 = arith.constant 0 : i32
    %c0_i32_2 = arith.constant 0 : i32
    return %arg0, %c0_i32, %c0_i32_0, %c0_i32_1 : i32, i32, i32, i32
  }
}

module attributes {stable_mosaic.version = 11 : i64} {
  func.func @_ln_matmul_kernel(%arg0: i32, %arg1: i32, %arg2: memref<1x256x16xf32, #tpu.memory_space<vmem>>, %arg3: memref<1x16xf32, #tpu.memory_space<vmem>>, %arg4: memref<1x16xf32, #tpu.memory_space<vmem>>, %arg5: memref<16x64xbf16, #tpu.memory_space<vmem>>, %arg6: memref<1x64xf32, #tpu.memory_space<vmem>>, %arg7: memref<1x256x64xbf16, #tpu.memory_space<vmem>>) attributes {dimension_semantics = [#tpu.dimension_semantics<parallel>, #tpu.dimension_semantics<parallel>], iteration_bounds = array<i64: 2, 1>, scalar_prefetch = 0 : i64, scratch_operands = 0 : i64, tpu.core_type = #tpu.core_type<tc>, window_params = [{transform_indices = @transform_0, window_bounds = array<i64: 1, 256, 16>}, {pipeline_mode = #tpu.pipeline_mode<synchronous>, transform_indices = @transform_1, window_bounds = array<i64: 1, 16>}, {pipeline_mode = #tpu.pipeline_mode<synchronous>, transform_indices = @transform_2, window_bounds = array<i64: 1, 16>}, {pipeline_mode = #tpu.pipeline_mode<synchronous>, transform_indices = @transform_3, window_bounds = array<i64: 16, 64>}, {pipeline_mode = #tpu.pipeline_mode<synchronous>, transform_indices = @transform_4, window_bounds = array<i64: 1, 64>}, {transform_indices = @transform_5, window_bounds = array<i64: 1, 256, 64>}]} {
    %c0 = arith.constant 0 : index
    %c0_0 = arith.constant 0 : index
    %c0_1 = arith.constant 0 : index
    %0 = vector.load %arg2[%c0, %c0_0, %c0_1] : memref<1x256x16xf32, #tpu.memory_space<vmem>>, vector<1x256x16xf32>
    %1 = vector.shape_cast %0 : vector<1x256x16xf32> to vector<256x16xf32>
    %cst = arith.constant dense<0.000000e+00> : vector<256xf32>
    %2 = vector.multi_reduction <add>, %1, %cst [1] : vector<256x16xf32> to vector<256xf32>
    %3 = vector.shape_cast %2 : vector<256xf32> to vector<256x1xf32>
    %cst_2 = arith.constant 1.600000e+01 : f32
    %4 = vector.broadcast %cst_2 : f32 to vector<256x1xf32>
    %5 = arith.divf %3, %4 : vector<256x1xf32>
    %6 = vector.broadcast %5 : vector<256x1xf32> to vector<256x16xf32>
    %7 = arith.subf %1, %6 : vector<256x16xf32>
    %8 = arith.mulf %7, %7 : vector<256x16xf32>
    %cst_3 = arith.constant dense<0.000000e+00> : vector<256xf32>
    %9 = vector.multi_reduction <add>, %8, %cst_3 [1] : vector<256x16xf32> to vector<256xf32>
    %10 = vector.shape_cast %9 : vector<256xf32> to vector<256x1xf32>
    %cst_4 = arith.constant 1.600000e+01 : f32
    %11 = vector.broadcast %cst_4 : f32 to vector<256x1xf32>
    %12 = arith.divf %10, %11 : vector<256x1xf32>
    %cst_5 = arith.constant 9.99999974E-6 : f32
    %13 = vector.broadcast %cst_5 : f32 to vector<256x1xf32>
    %14 = arith.addf %12, %13 : vector<256x1xf32>
    %15 = math.rsqrt %14 : vector<256x1xf32>
    %16 = vector.broadcast %15 : vector<256x1xf32> to vector<256x16xf32>
    %17 = arith.mulf %7, %16 : vector<256x16xf32>
    %c0_6 = arith.constant 0 : index
    %c0_7 = arith.constant 0 : index
    %18 = vector.load %arg3[%c0_6, %c0_7] : memref<1x16xf32, #tpu.memory_space<vmem>>, vector<1x16xf32>
    %19 = vector.shape_cast %18 : vector<1x16xf32> to vector<16xf32>
    %20 = vector.shape_cast %19 : vector<16xf32> to vector<1x16xf32>
    %21 = vector.broadcast %20 : vector<1x16xf32> to vector<256x16xf32>
    %22 = arith.mulf %17, %21 : vector<256x16xf32>
    %c0_8 = arith.constant 0 : index
    %c0_9 = arith.constant 0 : index
    %23 = vector.load %arg4[%c0_8, %c0_9] : memref<1x16xf32, #tpu.memory_space<vmem>>, vector<1x16xf32>
    %24 = vector.shape_cast %23 : vector<1x16xf32> to vector<16xf32>
    %25 = vector.shape_cast %24 : vector<16xf32> to vector<1x16xf32>
    %26 = vector.broadcast %25 : vector<1x16xf32> to vector<256x16xf32>
    %27 = arith.addf %22, %26 : vector<256x16xf32>
    %28 = arith.truncf %27 : vector<256x16xf32> to vector<256x16xbf16>
    %c0_10 = arith.constant 0 : index
    %c0_11 = arith.constant 0 : index
    %29 = vector.load %arg5[%c0_10, %c0_11] : memref<16x64xbf16, #tpu.memory_space<vmem>>, vector<16x64xbf16>
    %cst_12 = arith.constant dense<0.000000e+00> : vector<256x64xf32>
    %30 = tpu.matmul %28, %29, %cst_12 {dimension_numbers = #tpu.dot_dimension_numbers<[1], [0], [0], [1], [0, 0, 1, 1], [], []>} : vector<256x16xbf16>, vector<16x64xbf16>, vector<256x64xf32> -> vector<256x64xf32>
    %c0_13 = arith.constant 0 : index
    %c0_14 = arith.constant 0 : index
    %31 = vector.load %arg6[%c0_13, %c0_14] : memref<1x64xf32, #tpu.memory_space<vmem>>, vector<1x64xf32>
    %32 = vector.shape_cast %31 : vector<1x64xf32> to vector<64xf32>
    %33 = vector.shape_cast %32 : vector<64xf32> to vector<1x64xf32>
    %34 = vector.broadcast %33 : vector<1x64xf32> to vector<256x64xf32>
    %35 = arith.addf %30, %34 : vector<256x64xf32>
    %36 = arith.truncf %35 : vector<256x64xf32> to vector<256x64xbf16>
    %c0_15 = arith.constant 0 : index
    %c0_16 = arith.constant 0 : index
    %c0_17 = arith.constant 0 : index
    %37 = vector.load %arg7[%c0_15, %c0_16, %c0_17] : memref<1x256x64xbf16, #tpu.memory_space<vmem>>, vector<1x256x64xbf16>
    %38 = vector.shape_cast %37 : vector<1x256x64xbf16> to vector<256x64xbf16>
    %39 = vector.shape_cast %36 : vector<256x64xbf16> to vector<1x256x64xbf16>
    tpu.vector_store %arg7[%c0_15, %c0_16, %c0_17], %39 {strides = array<i32>} : memref<1x256x64xbf16, #tpu.memory_space<vmem>>, vector<1x256x64xbf16>,
    return
  }
  func.func @transform_0(%arg0: i32, %arg1: i32) -> (i32, i32, i32) {
    %c0_i32 = arith.constant 0 : i32
    %c0_i32_0 = arith.constant 0 : i32
    return %arg0, %arg1, %c0_i32 : i32, i32, i32
  }
  func.func @transform_1(%arg0: i32, %arg1: i32) -> (i32, i32) {
    %c0_i32 = arith.constant 0 : i32
    %c0_i32_0 = arith.constant 0 : i32
    %c0_i32_1 = arith.constant 0 : i32
    return %c0_i32, %c0_i32_0 : i32, i32
  }
  func.func @transform_2(%arg0: i32, %arg1: i32) -> (i32, i32) {
    %c0_i32 = arith.constant 0 : i32
    %c0_i32_0 = arith.constant 0 : i32
    %c0_i32_1 = arith.constant 0 : i32
    return %c0_i32, %c0_i32_0 : i32, i32
  }
  func.func @transform_3(%arg0: i32, %arg1: i32) -> (i32, i32) {
    %c0_i32 = arith.constant 0 : i32
    %c0_i32_0 = arith.constant 0 : i32
    %c0_i32_1 = arith.constant 0 : i32
    return %c0_i32, %c0_i32_0 : i32, i32
  }
  func.func @transform_4(%arg0: i32, %arg1: i32) -> (i32, i32) {
    %c0_i32 = arith.constant 0 : i32
    %c0_i32_0 = arith.constant 0 : i32
    %c0_i32_1 = arith.constant 0 : i32
    return %c0_i32, %c0_i32_0 : i32, i32
  }
  func.func @transform_5(%arg0: i32, %arg1: i32) -> (i32, i32, i32) {
    %c0_i32 = arith.constant 0 : i32
    %c0_i32_0 = arith.constant 0 : i32
    return %arg0, %arg1, %c0_i32 : i32, i32, i32
  }
}

module attributes {stable_mosaic.version = 11 : i64} {
  func.func @_dwconv3x3_kernel(%arg0: i32, %arg1: memref<1x16x16x64xbf16, #tpu.memory_space<vmem>>, %arg2: memref<9x1x64xf32, #tpu.memory_space<vmem>>, %arg3: memref<1x64xf32, #tpu.memory_space<vmem>>, %arg4: memref<1x16x16x64xbf16, #tpu.memory_space<vmem>>, %arg5: memref<18x18x64xf32, #tpu.memory_space<vmem>>) attributes {dimension_semantics = [#tpu.dimension_semantics<parallel>], iteration_bounds = array<i64: 2>, scalar_prefetch = 0 : i64, scratch_operands = 1 : i64, tpu.core_type = #tpu.core_type<tc>, window_params = [{transform_indices = @transform_0, window_bounds = array<i64: 1, 16, 16, 64>}, {pipeline_mode = #tpu.pipeline_mode<synchronous>, transform_indices = @transform_1, window_bounds = array<i64: 9, 1, 64>}, {pipeline_mode = #tpu.pipeline_mode<synchronous>, transform_indices = @transform_2, window_bounds = array<i64: 1, 64>}, {transform_indices = @transform_3, window_bounds = array<i64: 1, 16, 16, 64>}]} {
    %cst = arith.constant 0.000000e+00 : f32
    %0 = vector.broadcast %cst : f32 to vector<1x18x64xf32>
    %cst_0 = arith.constant 0.000000e+00 : f32
    %1 = vector.broadcast %cst_0 : f32 to vector<18x1x64xf32>
    %c0 = arith.constant 0 : index
    %c0_1 = arith.constant 0 : index
    %c0_2 = arith.constant 0 : index
    %2 = vector.load %arg5[%c0, %c0_1, %c0_2] : memref<18x18x64xf32, #tpu.memory_space<vmem>>, vector<1x18x64xf32>
    tpu.vector_store %arg5[%c0, %c0_1, %c0_2], %0 {strides = array<i32>} : memref<18x18x64xf32, #tpu.memory_space<vmem>>, vector<1x18x64xf32>,
    %c17 = arith.constant 17 : index
    %c0_3 = arith.constant 0 : index
    %c0_4 = arith.constant 0 : index
    %3 = vector.load %arg5[%c17, %c0_3, %c0_4] : memref<18x18x64xf32, #tpu.memory_space<vmem>>, vector<1x18x64xf32>
    tpu.vector_store %arg5[%c17, %c0_3, %c0_4], %0 {strides = array<i32>} : memref<18x18x64xf32, #tpu.memory_space<vmem>>, vector<1x18x64xf32>,
    %c0_5 = arith.constant 0 : index
    %c0_6 = arith.constant 0 : index
    %c0_7 = arith.constant 0 : index
    %4 = vector.load %arg5[%c0_5, %c0_6, %c0_7] : memref<18x18x64xf32, #tpu.memory_space<vmem>>, vector<18x1x64xf32>
    tpu.vector_store %arg5[%c0_5, %c0_6, %c0_7], %1 {strides = array<i32>} : memref<18x18x64xf32, #tpu.memory_space<vmem>>, vector<18x1x64xf32>,
    %c0_8 = arith.constant 0 : index
    %c17_9 = arith.constant 17 : index
    %c0_10 = arith.constant 0 : index
    %5 = vector.load %arg5[%c0_8, %c17_9, %c0_10] : memref<18x18x64xf32, #tpu.memory_space<vmem>>, vector<18x1x64xf32>
    tpu.vector_store %arg5[%c0_8, %c17_9, %c0_10], %1 {strides = array<i32>} : memref<18x18x64xf32, #tpu.memory_space<vmem>>, vector<18x1x64xf32>,
    %c0_11 = arith.constant 0 : index
    %c0_12 = arith.constant 0 : index
    %c0_13 = arith.constant 0 : index
    %c0_14 = arith.constant 0 : index
    %6 = vector.load %arg1[%c0_11, %c0_12, %c0_13, %c0_14] : memref<1x16x16x64xbf16, #tpu.memory_space<vmem>>, vector<1x16x16x64xbf16>
    %7 = vector.shape_cast %6 : vector<1x16x16x64xbf16> to vector<16x16x64xbf16>
    %8 = arith.extf %7 : vector<16x16x64xbf16> to vector<16x16x64xf32>
    %c1 = arith.constant 1 : index
    %c1_15 = arith.constant 1 : index
    %c0_16 = arith.constant 0 : index
    %9 = vector.load %arg5[%c1, %c1_15, %c0_16] : memref<18x18x64xf32, #tpu.memory_space<vmem>>, vector<16x16x64xf32>
    tpu.vector_store %arg5[%c1, %c1_15, %c0_16], %8 {strides = array<i32>} : memref<18x18x64xf32, #tpu.memory_space<vmem>>, vector<16x16x64xf32>,
    %cst_17 = arith.constant 0.000000e+00 : f32
    %10 = vector.broadcast %cst_17 : f32 to vector<16x16x64xf32>
    %c0_18 = arith.constant 0 : index
    %c0_19 = arith.constant 0 : index
    %11 = vector.load %arg3[%c0_18, %c0_19] : memref<1x64xf32, #tpu.memory_space<vmem>>, vector<1x64xf32>
    %12 = vector.shape_cast %11 : vector<1x64xf32> to vector<1x1x64xf32>
    %13 = vector.broadcast %12 : vector<1x1x64xf32> to vector<16x16x64xf32>
    %14 = arith.addf %10, %13 : vector<16x16x64xf32>
    %c0_20 = arith.constant 0 : index
    %c0_21 = arith.constant 0 : index
    %c0_22 = arith.constant 0 : index
    %15 = vector.load %arg5[%c0_20, %c0_21, %c0_22] : memref<18x18x64xf32, #tpu.memory_space<vmem>>, vector<16x16x64xf32>
    %c0_23 = arith.constant 0 : index
    %c0_24 = arith.constant 0 : index
    %c0_25 = arith.constant 0 : index
    %16 = vector.load %arg2[%c0_23, %c0_24, %c0_25] : memref<9x1x64xf32, #tpu.memory_space<vmem>>, vector<1x1x64xf32>
    %17 = vector.shape_cast %16 : vector<1x1x64xf32> to vector<1x64xf32>
    %18 = vector.shape_cast %17 : vector<1x64xf32> to vector<1x1x64xf32>
    %19 = vector.broadcast %18 : vector<1x1x64xf32> to vector<16x16x64xf32>
    %20 = arith.mulf %15, %19 : vector<16x16x64xf32>
    %21 = arith.addf %14, %20 : vector<16x16x64xf32>
    %c0_26 = arith.constant 0 : index
    %c1_27 = arith.constant 1 : index
    %c0_28 = arith.constant 0 : index
    %22 = vector.load %arg5[%c0_26, %c1_27, %c0_28] : memref<18x18x64xf32, #tpu.memory_space<vmem>>, vector<16x16x64xf32>
    %c1_29 = arith.constant 1 : index
    %c0_30 = arith.constant 0 : index
    %c0_31 = arith.constant 0 : index
    %23 = vector.load %arg2[%c1_29, %c0_30, %c0_31] : memref<9x1x64xf32, #tpu.memory_space<vmem>>, vector<1x1x64xf32>
    %24 = vector.shape_cast %23 : vector<1x1x64xf32> to vector<1x64xf32>
    %25 = vector.shape_cast %24 : vector<1x64xf32> to vector<1x1x64xf32>
    %26 = vector.broadcast %25 : vector<1x1x64xf32> to vector<16x16x64xf32>
    %27 = arith.mulf %22, %26 : vector<16x16x64xf32>
    %28 = arith.addf %21, %27 : vector<16x16x64xf32>
    %c0_32 = arith.constant 0 : index
    %c2 = arith.constant 2 : index
    %c0_33 = arith.constant 0 : index
    %29 = vector.load %arg5[%c0_32, %c2, %c0_33] : memref<18x18x64xf32, #tpu.memory_space<vmem>>, vector<16x16x64xf32>
    %c2_34 = arith.constant 2 : index
    %c0_35 = arith.constant 0 : index
    %c0_36 = arith.constant 0 : index
    %30 = vector.load %arg2[%c2_34, %c0_35, %c0_36] : memref<9x1x64xf32, #tpu.memory_space<vmem>>, vector<1x1x64xf32>
    %31 = vector.shape_cast %30 : vector<1x1x64xf32> to vector<1x64xf32>
    %32 = vector.shape_cast %31 : vector<1x64xf32> to vector<1x1x64xf32>
    %33 = vector.broadcast %32 : vector<1x1x64xf32> to vector<16x16x64xf32>
    %34 = arith.mulf %29, %33 : vector<16x16x64xf32>
    %35 = arith.addf %28, %34 : vector<16x16x64xf32>
    %c1_37 = arith.constant 1 : index
    %c0_38 = arith.constant 0 : index
    %c0_39 = arith.constant 0 : index
    %36 = vector.load %arg5[%c1_37, %c0_38, %c0_39] : memref<18x18x64xf32, #tpu.memory_space<vmem>>, vector<16x16x64xf32>
    %c3 = arith.constant 3 : index
    %c0_40 = arith.constant 0 : index
    %c0_41 = arith.constant 0 : index
    %37 = vector.load %arg2[%c3, %c0_40, %c0_41] : memref<9x1x64xf32, #tpu.memory_space<vmem>>, vector<1x1x64xf32>
    %38 = vector.shape_cast %37 : vector<1x1x64xf32> to vector<1x64xf32>
    %39 = vector.shape_cast %38 : vector<1x64xf32> to vector<1x1x64xf32>
    %40 = vector.broadcast %39 : vector<1x1x64xf32> to vector<16x16x64xf32>
    %41 = arith.mulf %36, %40 : vector<16x16x64xf32>
    %42 = arith.addf %35, %41 : vector<16x16x64xf32>
    %c1_42 = arith.constant 1 : index
    %c1_43 = arith.constant 1 : index
    %c0_44 = arith.constant 0 : index
    %43 = vector.load %arg5[%c1_42, %c1_43, %c0_44] : memref<18x18x64xf32, #tpu.memory_space<vmem>>, vector<16x16x64xf32>
    %c4 = arith.constant 4 : index
    %c0_45 = arith.constant 0 : index
    %c0_46 = arith.constant 0 : index
    %44 = vector.load %arg2[%c4, %c0_45, %c0_46] : memref<9x1x64xf32, #tpu.memory_space<vmem>>, vector<1x1x64xf32>
    %45 = vector.shape_cast %44 : vector<1x1x64xf32> to vector<1x64xf32>
    %46 = vector.shape_cast %45 : vector<1x64xf32> to vector<1x1x64xf32>
    %47 = vector.broadcast %46 : vector<1x1x64xf32> to vector<16x16x64xf32>
    %48 = arith.mulf %43, %47 : vector<16x16x64xf32>
    %49 = arith.addf %42, %48 : vector<16x16x64xf32>
    %c1_47 = arith.constant 1 : index
    %c2_48 = arith.constant 2 : index
    %c0_49 = arith.constant 0 : index
    %50 = vector.load %arg5[%c1_47, %c2_48, %c0_49] : memref<18x18x64xf32, #tpu.memory_space<vmem>>, vector<16x16x64xf32>
    %c5 = arith.constant 5 : index
    %c0_50 = arith.constant 0 : index
    %c0_51 = arith.constant 0 : index
    %51 = vector.load %arg2[%c5, %c0_50, %c0_51] : memref<9x1x64xf32, #tpu.memory_space<vmem>>, vector<1x1x64xf32>
    %52 = vector.shape_cast %51 : vector<1x1x64xf32> to vector<1x64xf32>
    %53 = vector.shape_cast %52 : vector<1x64xf32> to vector<1x1x64xf32>
    %54 = vector.broadcast %53 : vector<1x1x64xf32> to vector<16x16x64xf32>
    %55 = arith.mulf %50, %54 : vector<16x16x64xf32>
    %56 = arith.addf %49, %55 : vector<16x16x64xf32>
    %c2_52 = arith.constant 2 : index
    %c0_53 = arith.constant 0 : index
    %c0_54 = arith.constant 0 : index
    %57 = vector.load %arg5[%c2_52, %c0_53, %c0_54] : memref<18x18x64xf32, #tpu.memory_space<vmem>>, vector<16x16x64xf32>
    %c6 = arith.constant 6 : index
    %c0_55 = arith.constant 0 : index
    %c0_56 = arith.constant 0 : index
    %58 = vector.load %arg2[%c6, %c0_55, %c0_56] : memref<9x1x64xf32, #tpu.memory_space<vmem>>, vector<1x1x64xf32>
    %59 = vector.shape_cast %58 : vector<1x1x64xf32> to vector<1x64xf32>
    %60 = vector.shape_cast %59 : vector<1x64xf32> to vector<1x1x64xf32>
    %61 = vector.broadcast %60 : vector<1x1x64xf32> to vector<16x16x64xf32>
    %62 = arith.mulf %57, %61 : vector<16x16x64xf32>
    %63 = arith.addf %56, %62 : vector<16x16x64xf32>
    %c2_57 = arith.constant 2 : index
    %c1_58 = arith.constant 1 : index
    %c0_59 = arith.constant 0 : index
    %64 = vector.load %arg5[%c2_57, %c1_58, %c0_59] : memref<18x18x64xf32, #tpu.memory_space<vmem>>, vector<16x16x64xf32>
    %c7 = arith.constant 7 : index
    %c0_60 = arith.constant 0 : index
    %c0_61 = arith.constant 0 : index
    %65 = vector.load %arg2[%c7, %c0_60, %c0_61] : memref<9x1x64xf32, #tpu.memory_space<vmem>>, vector<1x1x64xf32>
    %66 = vector.shape_cast %65 : vector<1x1x64xf32> to vector<1x64xf32>
    %67 = vector.shape_cast %66 : vector<1x64xf32> to vector<1x1x64xf32>
    %68 = vector.broadcast %67 : vector<1x1x64xf32> to vector<16x16x64xf32>
    %69 = arith.mulf %64, %68 : vector<16x16x64xf32>
    %70 = arith.addf %63, %69 : vector<16x16x64xf32>
    %c2_62 = arith.constant 2 : index
    %c2_63 = arith.constant 2 : index
    %c0_64 = arith.constant 0 : index
    %71 = vector.load %arg5[%c2_62, %c2_63, %c0_64] : memref<18x18x64xf32, #tpu.memory_space<vmem>>, vector<16x16x64xf32>
    %c8 = arith.constant 8 : index
    %c0_65 = arith.constant 0 : index
    %c0_66 = arith.constant 0 : index
    %72 = vector.load %arg2[%c8, %c0_65, %c0_66] : memref<9x1x64xf32, #tpu.memory_space<vmem>>, vector<1x1x64xf32>
    %73 = vector.shape_cast %72 : vector<1x1x64xf32> to vector<1x64xf32>
    %74 = vector.shape_cast %73 : vector<1x64xf32> to vector<1x1x64xf32>
    %75 = vector.broadcast %74 : vector<1x1x64xf32> to vector<16x16x64xf32>
    %76 = arith.mulf %71, %75 : vector<16x16x64xf32>
    %77 = arith.addf %70, %76 : vector<16x16x64xf32>
    %78 = arith.truncf %77 : vector<16x16x64xf32> to vector<16x16x64xbf16>
    %c0_67 = arith.constant 0 : index
    %c0_68 = arith.constant 0 : index
    %c0_69 = arith.constant 0 : index
    %c0_70 = arith.constant 0 : index
    %79 = vector.load %arg4[%c0_67, %c0_68, %c0_69, %c0_70] : memref<1x16x16x64xbf16, #tpu.memory_space<vmem>>, vector<1x16x16x64xbf16>
    %80 = vector.shape_cast %79 : vector<1x16x16x64xbf16> to vector<16x16x64xbf16>
    %81 = vector.shape_cast %78 : vector<16x16x64xbf16> to vector<1x16x16x64xbf16>
    tpu.vector_store %arg4[%c0_67, %c0_68, %c0_69, %c0_70], %81 {strides = array<i32>} : memref<1x16x16x64xbf16, #tpu.memory_space<vmem>>, vector<1x16x16x64xbf16>,
    return
  }
  func.func @transform_0(%arg0: i32) -> (i32, i32, i32, i32) {
    %c0_i32 = arith.constant 0 : i32
    %c0_i32_0 = arith.constant 0 : i32
    %c0_i32_1 = arith.constant 0 : i32
    %c0_i32_2 = arith.constant 0 : i32
    return %arg0, %c0_i32, %c0_i32_0, %c0_i32_1 : i32, i32, i32, i32
  }
  func.func @transform_1(%arg0: i32) -> (i32, i32, i32) {
    %c0_i32 = arith.constant 0 : i32
    %c0_i32_0 = arith.constant 0 : i32
    %c0_i32_1 = arith.constant 0 : i32
    %c0_i32_2 = arith.constant 0 : i32
    return %c0_i32, %c0_i32_0, %c0_i32_1 : i32, i32, i32
  }
  func.func @transform_2(%arg0: i32) -> (i32, i32) {
    %c0_i32 = arith.constant 0 : i32
    %c0_i32_0 = arith.constant 0 : i32
    %c0_i32_1 = arith.constant 0 : i32
    return %c0_i32, %c0_i32_0 : i32, i32
  }
  func.func @transform_3(%arg0: i32) -> (i32, i32, i32, i32) {
    %c0_i32 = arith.constant 0 : i32
    %c0_i32_0 = arith.constant 0 : i32
    %c0_i32_1 = arith.constant 0 : i32
    %c0_i32_2 = arith.constant 0 : i32
    return %arg0, %c0_i32, %c0_i32_0, %c0_i32_1 : i32, i32, i32, i32
  }
}

module attributes {stable_mosaic.version = 11 : i64} {
  func.func @_ffn_out_kernel(%arg0: i32, %arg1: i32, %arg2: memref<1x256x64xbf16, #tpu.memory_space<vmem>>, %arg3: memref<1x256x16xf32, #tpu.memory_space<vmem>>, %arg4: memref<32x16xbf16, #tpu.memory_space<vmem>>, %arg5: memref<1x16xf32, #tpu.memory_space<vmem>>, %arg6: memref<1x256x16xf32, #tpu.memory_space<vmem>>) attributes {dimension_semantics = [#tpu.dimension_semantics<parallel>, #tpu.dimension_semantics<parallel>], iteration_bounds = array<i64: 2, 1>, scalar_prefetch = 0 : i64, scratch_operands = 0 : i64, tpu.core_type = #tpu.core_type<tc>, window_params = [{transform_indices = @transform_0, window_bounds = array<i64: 1, 256, 64>}, {transform_indices = @transform_1, window_bounds = array<i64: 1, 256, 16>}, {pipeline_mode = #tpu.pipeline_mode<synchronous>, transform_indices = @transform_2, window_bounds = array<i64: 32, 16>}, {pipeline_mode = #tpu.pipeline_mode<synchronous>, transform_indices = @transform_3, window_bounds = array<i64: 1, 16>}, {transform_indices = @transform_4, window_bounds = array<i64: 1, 256, 16>}]} {
    %c0 = arith.constant 0 : index
    %c0_0 = arith.constant 0 : index
    %c0_1 = arith.constant 0 : index
    %0 = vector.load %arg2[%c0, %c0_0, %c0_1] : memref<1x256x64xbf16, #tpu.memory_space<vmem>>, vector<1x256x64xbf16>
    %1 = vector.shape_cast %0 : vector<1x256x64xbf16> to vector<256x64xbf16>
    %2 = arith.extf %1 : vector<256x64xbf16> to vector<256x64xf32>
    %3 = vector.extract_strided_slice %2 {offsets = [0, 0], sizes = [256, 32], strides = [1, 1]} : vector<256x64xf32> to vector<256x32xf32>
    %4 = vector.extract_strided_slice %2 {offsets = [0, 32], sizes = [256, 32], strides = [1, 1]} : vector<256x64xf32> to vector<256x32xf32>
    %cst = arith.constant 5.000000e-01 : f32
    %5 = vector.broadcast %cst : f32 to vector<256x32xf32>
    %6 = arith.mulf %5, %3 : vector<256x32xf32>
    %cst_2 = arith.constant 4.471500e-02 : f32
    %7 = vector.broadcast %cst_2 : f32 to vector<256x32xf32>
    %8 = arith.mulf %7, %3 : vector<256x32xf32>
    %9 = arith.mulf %8, %3 : vector<256x32xf32>
    %10 = arith.mulf %9, %3 : vector<256x32xf32>
    %11 = arith.addf %3, %10 : vector<256x32xf32>
    %cst_3 = arith.constant 0.797884583 : f32
    %12 = vector.broadcast %cst_3 : f32 to vector<256x32xf32>
    %13 = arith.mulf %12, %11 : vector<256x32xf32>
    %14 = math.tanh %13 : vector<256x32xf32>
    %cst_4 = arith.constant 1.000000e+00 : f32
    %15 = vector.broadcast %cst_4 : f32 to vector<256x32xf32>
    %16 = arith.addf %15, %14 : vector<256x32xf32>
    %17 = arith.mulf %6, %16 : vector<256x32xf32>
    %18 = arith.mulf %17, %4 : vector<256x32xf32>
    %19 = arith.truncf %18 : vector<256x32xf32> to vector<256x32xbf16>
    %c0_5 = arith.constant 0 : index
    %c0_6 = arith.constant 0 : index
    %20 = vector.load %arg4[%c0_5, %c0_6] : memref<32x16xbf16, #tpu.memory_space<vmem>>, vector<32x16xbf16>
    %cst_7 = arith.constant dense<0.000000e+00> : vector<256x16xf32>
    %21 = tpu.matmul %19, %20, %cst_7 {dimension_numbers = #tpu.dot_dimension_numbers<[1], [0], [0], [1], [0, 0, 1, 1], [], []>} : vector<256x32xbf16>, vector<32x16xbf16>, vector<256x16xf32> -> vector<256x16xf32>
    %c0_8 = arith.constant 0 : index
    %c0_9 = arith.constant 0 : index
    %c0_10 = arith.constant 0 : index
    %22 = vector.load %arg3[%c0_8, %c0_9, %c0_10] : memref<1x256x16xf32, #tpu.memory_space<vmem>>, vector<1x256x16xf32>
    %23 = vector.shape_cast %22 : vector<1x256x16xf32> to vector<256x16xf32>
    %24 = arith.addf %23, %21 : vector<256x16xf32>
    %c0_11 = arith.constant 0 : index
    %c0_12 = arith.constant 0 : index
    %25 = vector.load %arg5[%c0_11, %c0_12] : memref<1x16xf32, #tpu.memory_space<vmem>>, vector<1x16xf32>
    %26 = vector.shape_cast %25 : vector<1x16xf32> to vector<16xf32>
    %27 = vector.shape_cast %26 : vector<16xf32> to vector<1x16xf32>
    %28 = vector.broadcast %27 : vector<1x16xf32> to vector<256x16xf32>
    %29 = arith.addf %24, %28 : vector<256x16xf32>
    %c0_13 = arith.constant 0 : index
    %c0_14 = arith.constant 0 : index
    %c0_15 = arith.constant 0 : index
    %30 = vector.load %arg6[%c0_13, %c0_14, %c0_15] : memref<1x256x16xf32, #tpu.memory_space<vmem>>, vector<1x256x16xf32>
    %31 = vector.shape_cast %30 : vector<1x256x16xf32> to vector<256x16xf32>
    %32 = vector.shape_cast %29 : vector<256x16xf32> to vector<1x256x16xf32>
    tpu.vector_store %arg6[%c0_13, %c0_14, %c0_15], %32 {strides = array<i32>} : memref<1x256x16xf32, #tpu.memory_space<vmem>>, vector<1x256x16xf32>,
    return
  }
  func.func @transform_0(%arg0: i32, %arg1: i32) -> (i32, i32, i32) {
    %c0_i32 = arith.constant 0 : i32
    %c0_i32_0 = arith.constant 0 : i32
    return %arg0, %arg1, %c0_i32 : i32, i32, i32
  }
  func.func @transform_1(%arg0: i32, %arg1: i32) -> (i32, i32, i32) {
    %c0_i32 = arith.constant 0 : i32
    %c0_i32_0 = arith.constant 0 : i32
    return %arg0, %arg1, %c0_i32 : i32, i32, i32
  }
  func.func @transform_2(%arg0: i32, %arg1: i32) -> (i32, i32) {
    %c0_i32 = arith.constant 0 : i32
    %c0_i32_0 = arith.constant 0 : i32
    %c0_i32_1 = arith.constant 0 : i32
    return %c0_i32, %c0_i32_0 : i32, i32
  }
  func.func @transform_3(%arg0: i32, %arg1: i32) -> (i32, i32) {
    %c0_i32 = arith.constant 0 : i32
    %c0_i32_0 = arith.constant 0 : i32
    %c0_i32_1 = arith.constant 0 : i32
    return %c0_i32, %c0_i32_0 : i32, i32
  }
  func.func @transform_4(%arg0: i32, %arg1: i32) -> (i32, i32, i32) {
    %c0_i32 = arith.constant 0 : i32
    %c0_i32_0 = arith.constant 0 : i32
    return %arg0, %arg1, %c0_i32 : i32, i32, i32
  }
}

</mosaic_0001>

<llo_original>
// kernel: transformer_block_forward.6
$region0: #{transformer_block_forward.6}
  #allocation0 [shape = 'u32[]', space=smem, size = 0x4, offset = 0x4, fixed_abs, tag = 'smem constant byte address 0x4 - core index']
  #allocation1 [shape = 'u32[144,128]{1,0:T(1,128)}', space=vmem, size = 0x12000, scoped, tag = 'internal scratch']
  %s0 = inlined_call_operand.vmem [shape: f32[2,256,16], index: 0, kind: input, shape index: {}]
  %s1 = inlined_call_operand.vmem [shape: f32[1,16], index: 1, kind: input, shape index: {}]
  %s2 = inlined_call_operand.vmem [shape: f32[1,16], index: 2, kind: input, shape index: {}]
  %s3 = inlined_call_operand.vmem [shape: bf16[16,48], index: 3, kind: input, shape index: {}]
  %s4 = inlined_call_operand.vmem [shape: f32[1,48], index: 4, kind: input, shape index: {}]
  %s5 = inlined_call_operand.vmem [shape: bf16[2,256,48], index: 5, kind: output, shape index: {}]
  %s6 = sld [smem:[#allocation0]]
  $region53: #{transformer_block_forward.6} parent=0
    _
  %s8 = ssub.s32 1, %s6
  %s9 = scalar_select 0, %s8, %s6
  loop: start=0, step=1, limit=4
  $region2: #{transformer_block_forward.6} parent=0 // loop_pre_header
    _
  $region3: #{transformer_block_forward.6} parent=0 // loop_header
    %s11 = sphi 0, %s15
    %p12 = scmp.ge.s32.totalorder %s11, 4
    %s18 = sphi 0, %s30
    %s19 = sphi 0, %s26
    %s20 = sphi 0, %s18
    %s21 = sphi 0, %s19
    %s22 = sphi 0, %s20
    %s23 = sphi 0, %s21
    %s35 = sphi 0, %s37
    %s38 = sphi 0, %s35
    %s39 = sphi 0, %s38
    %s55 = sphi 0, %s39
    %s59 = sphi 0, %s59
    %s61 = sphi 0, %s59
    %s62 = sphi 0, %s61
    %s76 = sphi 0, %s62
    %s80 = sphi 0, %s80
    %s82 = sphi 0, %s80
    %s83 = sphi 0, %s82
    %s97 = sphi 0, %s83
    %s101 = sphi 0, %s101
    %s103 = sphi 0, %s101
    %s104 = sphi 0, %s103
    %s118 = sphi 0, %s104
    %s122 = sphi 0, %s122
    %s124 = sphi 0, %s122
    %s125 = sphi 0, %s124
    %s139 = sphi 0, %s125
    %s147 = sphi 0, %s149
    %s150 = sphi 0, %s147
    %s151 = sphi 0, %s150
    %s167 = sphi 0, %s151
  $region4: #{transformer_block_forward.6} parent=0 // loop_header_branch
    %14 = sbr.rel (%p12) target = $region8
  $region5: #{transformer_block_forward.6} parent=0 // loop_body
    %s16 = ssub.s32 %s11, 1
    %s17 = ssub.s32 %s11, 2
    %s24 = sadd.s32 1, %s19
    %p25 = scmp.ge.s32.totalorder %s24, 1
    %s26 = scalar_select %p25, 0, %s24
    %s27 = sadd.s32 1, %s18
    %s28 = scalar_select %p25, %s27, %s18
    %p29 = scmp.ge.s32.totalorder %s28, 2
    %s30 = scalar_select %p29, 0, %s28
    %s31 = ssub.s32 %s18, %s30
    %s32 = ssub.s32 %s19, %s26
    %s33 = sor.u32 %s31, %s32
    %p34 = scmp.eq.s32.totalorder %s33, 0
    %s36 = sadd.s32 %s35, 1
    %s37 = scalar_select %p34, %s35, %s36
    %p40 = pneg %p34
    %p41 = scmp.eq.s32.totalorder %s11, 1
    %p42 = por %p40, %p41
    %p43 = scmp.ne.s32.totalorder %s35, %s38
    %p44 = scmp.eq.s32.totalorder %s11, 0
    %p45 = por %p43, %p44
    %p46 = scmp.ne.s32.totalorder %s35, %s38
    %p47 = scmp.eq.s32.totalorder %s16, 1
    %p48 = por %p46, %p47
    %p49 = scmp.ne.s32.totalorder %s38, %s39
    %p50 = scmp.eq.s32.totalorder %s16, 0
    %p51 = por %p49, %p50
    %p52 = scmp.ne.s32.totalorder %s38, %s39
    %p53 = scmp.eq.s32.totalorder %s17, 1
    %p54 = por %p52, %p53
    %p56 = scmp.ne.s32.totalorder %s39, %s55
    %p57 = scmp.eq.s32.totalorder %s17, 0
    %p58 = por %p56, %p57
    %s60 = sadd.s32 %s59, 1
    %p63 = scmp.eq.s32.totalorder %s11, 1
    %p64 = scmp.ne.s32.totalorder %s59, %s61
    %p65 = scmp.eq.s32.totalorder %s11, 0
    %p66 = por %p64, %p65
    %p67 = scmp.ne.s32.totalorder %s59, %s61
    %p68 = scmp.eq.s32.totalorder %s16, 1
    %p69 = por %p67, %p68
    %p70 = scmp.ne.s32.totalorder %s61, %s62
    %p71 = scmp.eq.s32.totalorder %s16, 0
    %p72 = por %p70, %p71
    %p73 = scmp.ne.s32.totalorder %s61, %s62
    %p74 = scmp.eq.s32.totalorder %s17, 1
    %p75 = por %p73, %p74
    %p77 = scmp.ne.s32.totalorder %s62, %s76
    %p78 = scmp.eq.s32.totalorder %s17, 0
    %p79 = por %p77, %p78
    %s81 = sadd.s32 %s80, 1
    %p84 = scmp.eq.s32.totalorder %s11, 1
    %p85 = scmp.ne.s32.totalorder %s80, %s82
    %p86 = scmp.eq.s32.totalorder %s11, 0
    %p87 = por %p85, %p86
    %p88 = scmp.ne.s32.totalorder %s80, %s82
    %p89 = scmp.eq.s32.totalorder %s16, 1
    %p90 = por %p88, %p89
    %p91 = scmp.ne.s32.totalorder %s82, %s83
    %p92 = scmp.eq.s32.totalorder %s16, 0
    %p93 = por %p91, %p92
    %p94 = scmp.ne.s32.totalorder %s82, %s83
    %p95 = scmp.eq.s32.totalorder %s17, 1
    %p96 = por %p94, %p95
    %p98 = scmp.ne.s32.totalorder %s83, %s97
    %p99 = scmp.eq.s32.totalorder %s17, 0
    %p100 = por %p98, %p99
    %s102 = sadd.s32 %s101, 1
    %p105 = scmp.eq.s32.totalorder %s11, 1
    %p106 = scmp.ne.s32.totalorder %s101, %s103
    %p107 = scmp.eq.s32.totalorder %s11, 0
    %p108 = por %p106, %p107
    %p109 = scmp.ne.s32.totalorder %s101, %s103
    %p110 = scmp.eq.s32.totalorder %s16, 1
    %p111 = por %p109, %p110
    %p112 = scmp.ne.s32.totalorder %s103, %s104
    %p113 = scmp.eq.s32.totalorder %s16, 0
    %p114 = por %p112, %p113
    %p115 = scmp.ne.s32.totalorder %s103, %s104
    %p116 = scmp.eq.s32.totalorder %s17, 1
    %p117 = por %p115, %p116
    %p119 = scmp.ne.s32.totalorder %s104, %s118
    %p120 = scmp.eq.s32.totalorder %s17, 0
    %p121 = por %p119, %p120
    %s123 = sadd.s32 %s122, 1
    %p126 = scmp.eq.s32.totalorder %s11, 1
    %p127 = scmp.ne.s32.totalorder %s122, %s124
    %p128 = scmp.eq.s32.totalorder %s11, 0
    %p129 = por %p127, %p128
    %p130 = scmp.ne.s32.totalorder %s122, %s124
    %p131 = scmp.eq.s32.totalorder %s16, 1
    %p132 = por %p130, %p131
    %p133 = scmp.ne.s32.totalorder %s124, %s125
    %p134 = scmp.eq.s32.totalorder %s16, 0
    %p135 = por %p133, %p134
    %p136 = scmp.ne.s32.totalorder %s124, %s125
    %p137 = scmp.eq.s32.totalorder %s17, 1
    %p138 = por %p136, %p137
    %p140 = scmp.ne.s32.totalorder %s125, %s139
    %p141 = scmp.eq.s32.totalorder %s17, 0
    %p142 = por %p140, %p141
    %s143 = ssub.s32 %s18, %s30
    %s144 = ssub.s32 %s19, %s26
    %s145 = sor.u32 %s143, %s144
    %p146 = scmp.eq.s32.totalorder %s145, 0
    %s148 = sadd.s32 %s147, 1
    %s149 = scalar_select %p146, %s147, %s148
    %p152 = pneg %p146
    %p153 = scmp.eq.s32.totalorder %s11, 1
    %p154 = por %p152, %p153
    %p155 = scmp.ne.s32.totalorder %s147, %s150
    %p156 = scmp.eq.s32.totalorder %s11, 0
    %p157 = por %p155, %p156
    %p158 = scmp.ne.s32.totalorder %s147, %s150
    %p159 = scmp.eq.s32.totalorder %s16, 1
    %p160 = por %p158, %p159
    %p161 = scmp.ne.s32.totalorder %s150, %s151
    %p162 = scmp.eq.s32.totalorder %s16, 0
    %p163 = por %p161, %p162
    %p164 = scmp.ne.s32.totalorder %s150, %s151
    %p165 = scmp.eq.s32.totalorder %s17, 1
    %p166 = por %p164, %p165
    %p168 = scmp.ne.s32.totalorder %s151, %s167
    %p169 = scmp.eq.s32.totalorder %s17, 0
    %p170 = por %p168, %p169
    %p171 = scmp.le.s32.totalorder 1, %s11
    %p172 = scmp.lt.s32.totalorder %s11, 3
    %p173 = pnand %p171, %p172
    %p174 = pneg %p173
    // Predicated region
    $region9: #{transformer_block_forward.6} parent=5 // pred_check
      _
    $region10: #{transformer_block_forward.6} parent=5 // pred_check_branch
      %176 = sbr.rel (%p173) target = $region12
    $region11: #{transformer_block_forward.6} parent=5 // pred_region
      %s177 = ssub.s32 %s11, 1
      // Predicated region
      $region13: #{transformer_block_forward.6} parent=11 // pred_check
        %p178 = pneg %p72
      $region14: #{transformer_block_forward.6} parent=11 // pred_check_branch
        %180 = sbr.rel (%p178) target = $region16
      $region15: #{transformer_block_forward.6} parent=11 // pred_region
        _
      $region16: #{transformer_block_forward.6} parent=11 // pred_fallthru
        _
      // Predicated region
      $region17: #{transformer_block_forward.6} parent=11 // pred_check
        %p181 = pneg %p93
      $region18: #{transformer_block_forward.6} parent=11 // pred_check_branch
        %183 = sbr.rel (%p181) target = $region20
      $region19: #{transformer_block_forward.6} parent=11 // pred_region
        _
      $region20: #{transformer_block_forward.6} parent=11 // pred_fallthru
        _
      // Predicated region
      $region21: #{transformer_block_forward.6} parent=11 // pred_check
        %p184 = pneg %p114
      $region22: #{transformer_block_forward.6} parent=11 // pred_check_branch
        %186 = sbr.rel (%p184) target = $region24
      $region23: #{transformer_block_forward.6} parent=11 // pred_region
        _
      $region24: #{transformer_block_forward.6} parent=11 // pred_fallthru
        _
      // Predicated region
      $region25: #{transformer_block_forward.6} parent=11 // pred_check
        %p187 = pneg %p135
      $region26: #{transformer_block_forward.6} parent=11 // pred_check_branch
        %189 = sbr.rel (%p187) target = $region28
      $region27: #{transformer_block_forward.6} parent=11 // pred_region
        _
      $region28: #{transformer_block_forward.6} parent=11 // pred_fallthru
        _
    $region12: #{transformer_block_forward.6} parent=5 // pred_fallthru
      _
    %p190 = scmp.lt.s32.totalorder %s11, 2
    // Predicated region
    $region29: #{transformer_block_forward.6} parent=5 // pred_check
      %p191 = pneg %p190
    $region30: #{transformer_block_forward.6} parent=5 // pred_check_branch
      %193 = sbr.rel (%p191) target = $region32
    $region31: #{transformer_block_forward.6} parent=5 // pred_region
      // Predicated region
      $region33: #{transformer_block_forward.6} parent=31 // pred_check
        %p194 = pneg %p45
      $region34: #{transformer_block_forward.6} parent=31 // pred_check_branch
        %196 = sbr.rel (%p194) target = $region36
      $region35: #{transformer_block_forward.6} parent=31 // pred_region
        %s197 = smul.u32 32, %s19
        %p198 = scmp.lt.s32.totalorder %s18, 1
        %s199 = scalar_select %p198, %s18, 1
        %p200 = scmp.lt.s32.totalorder %s197, 31
        %s201 = scalar_select %p200, %s197, 31
        %s202 = smul.addr %s199, 32
        %s203 = sadd.s32 %s201, %s202
        %s204 = smul.addr %s203, 8
        %s205 = scalar_lea.vmem %s0, %s204
        %s206 = smul.u32 32, %s19
      $region36: #{transformer_block_forward.6} parent=31 // pred_fallthru
        _
    $region32: #{transformer_block_forward.6} parent=5 // pred_fallthru
      _
    %p207 = scmp.le.s32.totalorder 1, %s11
    %p208 = scmp.lt.s32.totalorder %s11, 3
    %p209 = pnand %p207, %p208
    %p210 = pneg %p209
    // Predicated region
    $region37: #{transformer_block_forward.6} parent=5 // pred_check
      _
    $region38: #{transformer_block_forward.6} parent=5 // pred_check_branch
      %212 = sbr.rel (%p209) target = $region40
    $region39: #{transformer_block_forward.6} parent=5 // pred_region
      %s213 = ssub.s32 %s11, 1
      %s214 = smul.u32 32, %s21
      %p215 = scmp.lt.s32.totalorder %s20, 1
      %s216 = scalar_select %p215, %s20, 1
      %p217 = scmp.lt.s32.totalorder %s214, 31
      %s218 = scalar_select %p217, %s214, 31
      %s219 = smul.addr %s216, 32
      %s220 = sadd.s32 %s218, %s219
      %s221 = smul.addr %s220, 8
      %s222 = scalar_lea.vmem %s0, %s221
      %p223 = pneg %p51
      %p224 = pneg %p48
      %p225 = pneg %p72
      %p226 = pneg %p69
      %p227 = pneg %p93
      %p228 = pneg %p90
      %p229 = pneg %p114
      %p230 = pneg %p111
      %p231 = pneg %p135
      %p232 = pneg %p132
      %p233 = pneg %p163
      %p234 = pneg %p160
      %s235 = smul.u32 32, %s21
      %p236 = scmp.lt.s32.totalorder %s20, 1
      %s237 = scalar_select %p236, %s20, 1
      %p238 = scmp.lt.s32.totalorder %s235, 31
      %s239 = scalar_select %p238, %s235, 31
      %s240 = smul.addr %s237, 32
      %s241 = sadd.s32 %s239, %s240
      %s242 = smul.addr %s241, 4
      %s243 = scalar_lea.vmem %s5, %s242
      %s244 = smul.u32 32, %s21
      %p245 = scmp.lt.s32.totalorder %s20, 1
      %s246 = scalar_select %p245, %s20, 1
      %p247 = scmp.lt.s32.totalorder %s244, 31
      %s248 = scalar_select %p247, %s244, 31
      %s249 = smul.addr %s246, 32
      %s250 = sadd.s32 %s248, %s249
      %s251 = smul.addr %s250, 8
      %s252 = scalar_lea.vmem %s0, %s251
      %s253 = smul.u32 32, %s21
      %s254 = smul.u32 32, %s21
      %p255 = scmp.lt.s32.totalorder %s20, 1
      %s256 = scalar_select %p255, %s20, 1
      %p257 = scmp.lt.s32.totalorder %s254, 31
      %s258 = scalar_select %p257, %s254, 31
      %s259 = smul.addr %s256, 32
      %s260 = sadd.s32 %s258, %s259
      %s261 = smul.addr %s260, 4
      %s262 = scalar_lea.vmem %s5, %s261
      %s263 = smul.u32 32, %s21
      %v265 = vld [vmem:[%s252] sm:$0xff]
      %v266 = vld [vmem:[%s252 + $0x8] sm:$0xff]
      %v267 = vld [vmem:[%s252 + $0x10] sm:$0xff]
      %v268 = vld [vmem:[%s252 + $0x18] sm:$0xff]
      %v269 = vld [vmem:[%s252 + $0x20] sm:$0xff]
      %v270 = vld [vmem:[%s252 + $0x28] sm:$0xff]
      %v271 = vld [vmem:[%s252 + $0x30] sm:$0xff]
      %v272 = vld [vmem:[%s252 + $0x38] sm:$0xff]
      %v273 = vld [vmem:[%s252 + $0x40] sm:$0xff]
      %v274 = vld [vmem:[%s252 + $0x48] sm:$0xff]
      %v275 = vld [vmem:[%s252 + $0x50] sm:$0xff]
      %v276 = vld [vmem:[%s252 + $0x58] sm:$0xff]
      %v277 = vld [vmem:[%s252 + $0x60] sm:$0xff]
      %v278 = vld [vmem:[%s252 + $0x68] sm:$0xff]
      %v279 = vld [vmem:[%s252 + $0x70] sm:$0xff]
      %v280 = vld [vmem:[%s252 + $0x78] sm:$0xff]
      %v281 = vld [vmem:[%s252 + $0x80] sm:$0xff]
      %v282 = vld [vmem:[%s252 + $0x88] sm:$0xff]
      %v283 = vld [vmem:[%s252 + $0x90] sm:$0xff]
      %v284 = vld [vmem:[%s252 + $0x98] sm:$0xff]
      %v285 = vld [vmem:[%s252 + $0xa0] sm:$0xff]
      %v286 = vld [vmem:[%s252 + $0xa8] sm:$0xff]
      %v287 = vld [vmem:[%s252 + $0xb0] sm:$0xff]
      %v288 = vld [vmem:[%s252 + $0xb8] sm:$0xff]
      %v289 = vld [vmem:[%s252 + $0xc0] sm:$0xff]
      %v290 = vld [vmem:[%s252 + $0xc8] sm:$0xff]
      %v291 = vld [vmem:[%s252 + $0xd0] sm:$0xff]
      %v292 = vld [vmem:[%s252 + $0xd8] sm:$0xff]
      %v293 = vld [vmem:[%s252 + $0xe0] sm:$0xff]
      %v294 = vld [vmem:[%s252 + $0xe8] sm:$0xff]
      %v295 = vld [vmem:[%s252 + $0xf0] sm:$0xff]
      %v296 = vld [vmem:[%s252 + $0xf8] sm:$0xff]
      %vm297 = vcmask 130048
      %v298 = vsel %vm297, %v265, 0.0
      %299 = vadd.xlane.f32.xlu0 %v298
      %v300 = vpop.xlane.xlu0 %299
      %v301 = vsel %vm297, %v266, 0.0
      %302 = vadd.xlane.f32.xlu0 %v301
      %v303 = vpop.xlane.xlu0 %302
      %v304 = vsel %vm297, %v267, 0.0
      %305 = vadd.xlane.f32.xlu0 %v304
      %v306 = vpop.xlane.xlu0 %305
      %v307 = vsel %vm297, %v268, 0.0
      %308 = vadd.xlane.f32.xlu0 %v307
      %v309 = vpop.xlane.xlu0 %308
      %v310 = vsel %vm297, %v269, 0.0
      %311 = vadd.xlane.f32.xlu0 %v310
      %v312 = vpop.xlane.xlu0 %311
      %v313 = vsel %vm297, %v270, 0.0
      %314 = vadd.xlane.f32.xlu0 %v313
      %v315 = vpop.xlane.xlu0 %314
      %v316 = vsel %vm297, %v271, 0.0
      %317 = vadd.xlane.f32.xlu0 %v316
      %v318 = vpop.xlane.xlu0 %317
      %v319 = vsel %vm297, %v272, 0.0
      %320 = vadd.xlane.f32.xlu0 %v319
      %v321 = vpop.xlane.xlu0 %320
      %v322 = vsel %vm297, %v273, 0.0
      %323 = vadd.xlane.f32.xlu0 %v322
      %v324 = vpop.xlane.xlu0 %323
      %v325 = vsel %vm297, %v274, 0.0
      %326 = vadd.xlane.f32.xlu0 %v325
      %v327 = vpop.xlane.xlu0 %326
      %v328 = vsel %vm297, %v275, 0.0
      %329 = vadd.xlane.f32.xlu0 %v328
      %v330 = vpop.xlane.xlu0 %329
      %v331 = vsel %vm297, %v276, 0.0
      %332 = vadd.xlane.f32.xlu0 %v331
      %v333 = vpop.xlane.xlu0 %332
      %v334 = vsel %vm297, %v277, 0.0
      %335 = vadd.xlane.f32.xlu0 %v334
      %v336 = vpop.xlane.xlu0 %335
      %v337 = vsel %vm297, %v278, 0.0
      %338 = vadd.xlane.f32.xlu0 %v337
      %v339 = vpop.xlane.xlu0 %338
      %v340 = vsel %vm297, %v279, 0.0
      %341 = vadd.xlane.f32.xlu0 %v340
      %v342 = vpop.xlane.xlu0 %341
      %v343 = vsel %vm297, %v280, 0.0
      %344 = vadd.xlane.f32.xlu0 %v343
      %v345 = vpop.xlane.xlu0 %344
      %v346 = vsel %vm297, %v281, 0.0
      %347 = vadd.xlane.f32.xlu0 %v346
      %v348 = vpop.xlane.xlu0 %347
      %v349 = vsel %vm297, %v282, 0.0
      %350 = vadd.xlane.f32.xlu0 %v349
      %v351 = vpop.xlane.xlu0 %350
      %v352 = vsel %vm297, %v283, 0.0
      %353 = vadd.xlane.f32.xlu0 %v352
      %v354 = vpop.xlane.xlu0 %353
      %v355 = vsel %vm297, %v284, 0.0
      %356 = vadd.xlane.f32.xlu0 %v355
      %v357 = vpop.xlane.xlu0 %356
      %v358 = vsel %vm297, %v285, 0.0
      %359 = vadd.xlane.f32.xlu0 %v358
      %v360 = vpop.xlane.xlu0 %359
      %v361 = vsel %vm297, %v286, 0.0
      %362 = vadd.xlane.f32.xlu0 %v361
      %v363 = vpop.xlane.xlu0 %362
      %v364 = vsel %vm297, %v287, 0.0
      %365 = vadd.xlane.f32.xlu0 %v364
      %v366 = vpop.xlane.xlu0 %365
      %v367 = vsel %vm297, %v288, 0.0
      %368 = vadd.xlane.f32.xlu0 %v367
      %v369 = vpop.xlane.xlu0 %368
      %v370 = vsel %vm297, %v289, 0.0
      %371 = vadd.xlane.f32.xlu0 %v370
      %v372 = vpop.xlane.xlu0 %371
      %v373 = vsel %vm297, %v290, 0.0
      %374 = vadd.xlane.f32.xlu0 %v373
      %v375 = vpop.xlane.xlu0 %374
      %v376 = vsel %vm297, %v291, 0.0
      %377 = vadd.xlane.f32.xlu0 %v376
      %v378 = vpop.xlane.xlu0 %377
      %v379 = vsel %vm297, %v292, 0.0
      %380 = vadd.xlane.f32.xlu0 %v379
      %v381 = vpop.xlane.xlu0 %380
      %v382 = vsel %vm297, %v293, 0.0
      %383 = vadd.xlane.f32.xlu0 %v382
      %v384 = vpop.xlane.xlu0 %383
      %v385 = vsel %vm297, %v294, 0.0
      %386 = vadd.xlane.f32.xlu0 %v385
      %v387 = vpop.xlane.xlu0 %386
      %v388 = vsel %vm297, %v295, 0.0
      %389 = vadd.xlane.f32.xlu0 %v388
      %v390 = vpop.xlane.xlu0 %389
      %v391 = vsel %vm297, %v296, 0.0
      %392 = vadd.xlane.f32.xlu0 %v391
      %v393 = vpop.xlane.xlu0 %392
      %v394 = vrcp.pop 16.0
      %v395 = vmul.f32 %v300, %v394
      %v396 = vmul.f32 %v303, %v394
      %v397 = vmul.f32 %v306, %v394
      %v398 = vmul.f32 %v309, %v394
      %v399 = vmul.f32 %v312, %v394
      %v400 = vmul.f32 %v315, %v394
      %v401 = vmul.f32 %v318, %v394
      %v402 = vmul.f32 %v321, %v394
      %v403 = vmul.f32 %v324, %v394
      %v404 = vmul.f32 %v327, %v394
      %v405 = vmul.f32 %v330, %v394
      %v406 = vmul.f32 %v333, %v394
      %v407 = vmul.f32 %v336, %v394
      %v408 = vmul.f32 %v339, %v394
      %v409 = vmul.f32 %v342, %v394
      %v410 = vmul.f32 %v345, %v394
      %v411 = vmul.f32 %v348, %v394
      %v412 = vmul.f32 %v351, %v394
      %v413 = vmul.f32 %v354, %v394
      %v414 = vmul.f32 %v357, %v394
      %v415 = vmul.f32 %v360, %v394
      %v416 = vmul.f32 %v363, %v394
      %v417 = vmul.f32 %v366, %v394
      %v418 = vmul.f32 %v369, %v394
      %v419 = vmul.f32 %v372, %v394
      %v420 = vmul.f32 %v375, %v394
      %v421 = vmul.f32 %v378, %v394
      %v422 = vmul.f32 %v381, %v394
      %v423 = vmul.f32 %v384, %v394
      %v424 = vmul.f32 %v387, %v394
      %v425 = vmul.f32 %v390, %v394
      %v426 = vmul.f32 %v393, %v394
      %v427 = vsub.f32 %v265, %v395
      %v428 = vsub.f32 %v266, %v396
      %v429 = vsub.f32 %v267, %v397
      %v430 = vsub.f32 %v268, %v398
      %v431 = vsub.f32 %v269, %v399
      %v432 = vsub.f32 %v270, %v400
      %v433 = vsub.f32 %v271, %v401
      %v434 = vsub.f32 %v272, %v402
      %v435 = vsub.f32 %v273, %v403
      %v436 = vsub.f32 %v274, %v404
      %v437 = vsub.f32 %v275, %v405
      %v438 = vsub.f32 %v276, %v406
      %v439 = vsub.f32 %v277, %v407
      %v440 = vsub.f32 %v278, %v408
      %v441 = vsub.f32 %v279, %v409
      %v442 = vsub.f32 %v280, %v410
      %v443 = vsub.f32 %v281, %v411
      %v444 = vsub.f32 %v282, %v412
      %v445 = vsub.f32 %v283, %v413
      %v446 = vsub.f32 %v284, %v414
      %v447 = vsub.f32 %v285, %v415
      %v448 = vsub.f32 %v286, %v416
      %v449 = vsub.f32 %v287, %v417
      %v450 = vsub.f32 %v288, %v418
      %v451 = vsub.f32 %v289, %v419
      %v452 = vsub.f32 %v290, %v420
      %v453 = vsub.f32 %v291, %v421
      %v454 = vsub.f32 %v292, %v422
      %v455 = vsub.f32 %v293, %v423
      %v456 = vsub.f32 %v294, %v424
      %v457 = vsub.f32 %v295, %v425
      %v458 = vsub.f32 %v296, %v426
      %v459 = vmul.f32 %v427, %v427
      %v460 = vmul.f32 %v428, %v428
      %v461 = vmul.f32 %v429, %v429
      %v462 = vmul.f32 %v430, %v430
      %v463 = vmul.f32 %v431, %v431
      %v464 = vmul.f32 %v432, %v432
      %v465 = vmul.f32 %v433, %v433
      %v466 = vmul.f32 %v434, %v434
      %v467 = vmul.f32 %v435, %v435
      %v468 = vmul.f32 %v436, %v436
      %v469 = vmul.f32 %v437, %v437
      %v470 = vmul.f32 %v438, %v438
      %v471 = vmul.f32 %v439, %v439
      %v472 = vmul.f32 %v440, %v440
      %v473 = vmul.f32 %v441, %v441
      %v474 = vmul.f32 %v442, %v442
      %v475 = vmul.f32 %v443, %v443
      %v476 = vmul.f32 %v444, %v444
      %v477 = vmul.f32 %v445, %v445
      %v478 = vmul.f32 %v446, %v446
      %v479 = vmul.f32 %v447, %v447
      %v480 = vmul.f32 %v448, %v448
      %v481 = vmul.f32 %v449, %v449
      %v482 = vmul.f32 %v450, %v450
      %v483 = vmul.f32 %v451, %v451
      %v484 = vmul.f32 %v452, %v452
      %v485 = vmul.f32 %v453, %v453
      %v486 = vmul.f32 %v454, %v454
      %v487 = vmul.f32 %v455, %v455
      %v488 = vmul.f32 %v456, %v456
      %v489 = vmul.f32 %v457, %v457
      %v490 = vmul.f32 %v458, %v458
      %v491 = vsel %vm297, %v459, 0.0
      %492 = vadd.xlane.f32.xlu0 %v491
      %v493 = vpop.xlane.xlu0 %492
      %v494 = vsel %vm297, %v460, 0.0
      %495 = vadd.xlane.f32.xlu0 %v494
      %v496 = vpop.xlane.xlu0 %495
      %v497 = vsel %vm297, %v461, 0.0
      %498 = vadd.xlane.f32.xlu0 %v497
      %v499 = vpop.xlane.xlu0 %498
      %v500 = vsel %vm297, %v462, 0.0
      %501 = vadd.xlane.f32.xlu0 %v500
      %v502 = vpop.xlane.xlu0 %501
      %v503 = vsel %vm297, %v463, 0.0
      %504 = vadd.xlane.f32.xlu0 %v503
      %v505 = vpop.xlane.xlu0 %504
      %v506 = vsel %vm297, %v464, 0.0
      %507 = vadd.xlane.f32.xlu0 %v506
      %v508 = vpop.xlane.xlu0 %507
      %v509 = vsel %vm297, %v465, 0.0
      %510 = vadd.xlane.f32.xlu0 %v509
      %v511 = vpop.xlane.xlu0 %510
      %v512 = vsel %vm297, %v466, 0.0
      %513 = vadd.xlane.f32.xlu0 %v512
      %v514 = vpop.xlane.xlu0 %513
      %v515 = vsel %vm297, %v467, 0.0
      %516 = vadd.xlane.f32.xlu0 %v515
      %v517 = vpop.xlane.xlu0 %516
      %v518 = vsel %vm297, %v468, 0.0
      %519 = vadd.xlane.f32.xlu0 %v518
      %v520 = vpop.xlane.xlu0 %519
      %v521 = vsel %vm297, %v469, 0.0
      %522 = vadd.xlane.f32.xlu0 %v521
      %v523 = vpop.xlane.xlu0 %522
      %v524 = vsel %vm297, %v470, 0.0
      %525 = vadd.xlane.f32.xlu0 %v524
      %v526 = vpop.xlane.xlu0 %525
      %v527 = vsel %vm297, %v471, 0.0
      %528 = vadd.xlane.f32.xlu0 %v527
      %v529 = vpop.xlane.xlu0 %528
      %v530 = vsel %vm297, %v472, 0.0
      %531 = vadd.xlane.f32.xlu0 %v530
      %v532 = vpop.xlane.xlu0 %531
      %v533 = vsel %vm297, %v473, 0.0
      %534 = vadd.xlane.f32.xlu0 %v533
      %v535 = vpop.xlane.xlu0 %534
      %v536 = vsel %vm297, %v474, 0.0
      %537 = vadd.xlane.f32.xlu0 %v536
      %v538 = vpop.xlane.xlu0 %537
      %v539 = vsel %vm297, %v475, 0.0
      %540 = vadd.xlane.f32.xlu0 %v539
      %v541 = vpop.xlane.xlu0 %540
      %v542 = vsel %vm297, %v476, 0.0
      %543 = vadd.xlane.f32.xlu0 %v542
      %v544 = vpop.xlane.xlu0 %543
      %v545 = vsel %vm297, %v477, 0.0
      %546 = vadd.xlane.f32.xlu0 %v545
      %v547 = vpop.xlane.xlu0 %546
      %v548 = vsel %vm297, %v478, 0.0
      %549 = vadd.xlane.f32.xlu0 %v548
      %v550 = vpop.xlane.xlu0 %549
      %v551 = vsel %vm297, %v479, 0.0
      %552 = vadd.xlane.f32.xlu0 %v551
      %v553 = vpop.xlane.xlu0 %552
      %v554 = vsel %vm297, %v480, 0.0
      %555 = vadd.xlane.f32.xlu0 %v554
      %v556 = vpop.xlane.xlu0 %555
      %v557 = vsel %vm297, %v481, 0.0
      %558 = vadd.xlane.f32.xlu0 %v557
      %v559 = vpop.xlane.xlu0 %558
      %v560 = vsel %vm297, %v482, 0.0
      %561 = vadd.xlane.f32.xlu0 %v560
      %v562 = vpop.xlane.xlu0 %561
      %v563 = vsel %vm297, %v483, 0.0
      %564 = vadd.xlane.f32.xlu0 %v563
      %v565 = vpop.xlane.xlu0 %564
      %v566 = vsel %vm297, %v484, 0.0
      %567 = vadd.xlane.f32.xlu0 %v566
      %v568 = vpop.xlane.xlu0 %567
      %v569 = vsel %vm297, %v485, 0.0
      %570 = vadd.xlane.f32.xlu0 %v569
      %v571 = vpop.xlane.xlu0 %570
      %v572 = vsel %vm297, %v486, 0.0
      %573 = vadd.xlane.f32.xlu0 %v572
      %v574 = vpop.xlane.xlu0 %573
      %v575 = vsel %vm297, %v487, 0.0
      %576 = vadd.xlane.f32.xlu0 %v575
      %v577 = vpop.xlane.xlu0 %576
      %v578 = vsel %vm297, %v488, 0.0
      %579 = vadd.xlane.f32.xlu0 %v578
      %v580 = vpop.xlane.xlu0 %579
      %v581 = vsel %vm297, %v489, 0.0
      %582 = vadd.xlane.f32.xlu0 %v581
      %v583 = vpop.xlane.xlu0 %582
      %v584 = vsel %vm297, %v490, 0.0
      %585 = vadd.xlane.f32.xlu0 %v584
      %v586 = vpop.xlane.xlu0 %585
      %v587 = vmul.f32 %v493, %v394
      %v588 = vmul.f32 %v496, %v394
      %v589 = vmul.f32 %v499, %v394
      %v590 = vmul.f32 %v502, %v394
      %v591 = vmul.f32 %v505, %v394
      %v592 = vmul.f32 %v508, %v394
      %v593 = vmul.f32 %v511, %v394
      %v594 = vmul.f32 %v514, %v394
      %v595 = vmul.f32 %v517, %v394
      %v596 = vmul.f32 %v520, %v394
      %v597 = vmul.f32 %v523, %v394
      %v598 = vmul.f32 %v526, %v394
      %v599 = vmul.f32 %v529, %v394
      %v600 = vmul.f32 %v532, %v394
      %v601 = vmul.f32 %v535, %v394
      %v602 = vmul.f32 %v538, %v394
      %v603 = vmul.f32 %v541, %v394
      %v604 = vmul.f32 %v544, %v394
      %v605 = vmul.f32 %v547, %v394
      %v606 = vmul.f32 %v550, %v394
      %v607 = vmul.f32 %v553, %v394
      %v608 = vmul.f32 %v556, %v394
      %v609 = vmul.f32 %v559, %v394
      %v610 = vmul.f32 %v562, %v394
      %v611 = vmul.f32 %v565, %v394
      %v612 = vmul.f32 %v568, %v394
      %v613 = vmul.f32 %v571, %v394
      %v614 = vmul.f32 %v574, %v394
      %v615 = vmul.f32 %v577, %v394
      %v616 = vmul.f32 %v580, %v394
      %v617 = vmul.f32 %v583, %v394
      %v618 = vmul.f32 %v586, %v394
      %v619 = vadd.f32 %v587, 1e-05
      %v620 = vadd.f32 %v588, 1e-05
      %v621 = vadd.f32 %v589, 1e-05
      %v622 = vadd.f32 %v590, 1e-05
      %v623 = vadd.f32 %v591, 1e-05
      %v624 = vadd.f32 %v592, 1e-05
      %v625 = vadd.f32 %v593, 1e-05
      %v626 = vadd.f32 %v594, 1e-05
      %v627 = vadd.f32 %v595, 1e-05
      %v628 = vadd.f32 %v596, 1e-05
      %v629 = vadd.f32 %v597, 1e-05
      %v630 = vadd.f32 %v598, 1e-05
      %v631 = vadd.f32 %v599, 1e-05
      %v632 = vadd.f32 %v600, 1e-05
      %v633 = vadd.f32 %v601, 1e-05
      %v634 = vadd.f32 %v602, 1e-05
      %v635 = vadd.f32 %v603, 1e-05
      %v636 = vadd.f32 %v604, 1e-05
      %v637 = vadd.f32 %v605, 1e-05
      %v638 = vadd.f32 %v606, 1e-05
      %v639 = vadd.f32 %v607, 1e-05
      %v640 = vadd.f32 %v608, 1e-05
      %v641 = vadd.f32 %v609, 1e-05
      %v642 = vadd.f32 %v610, 1e-05
      %v643 = vadd.f32 %v611, 1e-05
      %v644 = vadd.f32 %v612, 1e-05
      %v645 = vadd.f32 %v613, 1e-05
      %v646 = vadd.f32 %v614, 1e-05
      %v647 = vadd.f32 %v615, 1e-05
      %v648 = vadd.f32 %v616, 1e-05
      %v649 = vadd.f32 %v617, 1e-05
      %v650 = vadd.f32 %v618, 1e-05
      %v651 = vrsqrt.pop %v619
      %v652 = vrsqrt.pop %v620
      %v653 = vrsqrt.pop %v621
      %v654 = vrsqrt.pop %v622
      %v655 = vrsqrt.pop %v623
      %v656 = vrsqrt.pop %v624
      %v657 = vrsqrt.pop %v625
      %v658 = vrsqrt.pop %v626
      %v659 = vrsqrt.pop %v627
      %v660 = vrsqrt.pop %v628
      %v661 = vrsqrt.pop %v629
      %v662 = vrsqrt.pop %v630
      %v663 = vrsqrt.pop %v631
      %v664 = vrsqrt.pop %v632
      %v665 = vrsqrt.pop %v633
      %v666 = vrsqrt.pop %v634
      %v667 = vrsqrt.pop %v635
      %v668 = vrsqrt.pop %v636
      %v669 = vrsqrt.pop %v637
      %v670 = vrsqrt.pop %v638
      %v671 = vrsqrt.pop %v639
      %v672 = vrsqrt.pop %v640
      %v673 = vrsqrt.pop %v641
      %v674 = vrsqrt.pop %v642
      %v675 = vrsqrt.pop %v643
      %v676 = vrsqrt.pop %v644
      %v677 = vrsqrt.pop %v645
      %v678 = vrsqrt.pop %v646
      %v679 = vrsqrt.pop %v647
      %v680 = vrsqrt.pop %v648
      %v681 = vrsqrt.pop %v649
      %v682 = vrsqrt.pop %v650
      %v683 = vmul.f32 %v427, %v651
      %v684 = vmul.f32 %v428, %v652
      %v685 = vmul.f32 %v429, %v653
      %v686 = vmul.f32 %v430, %v654
      %v687 = vmul.f32 %v431, %v655
      %v688 = vmul.f32 %v432, %v656
      %v689 = vmul.f32 %v433, %v657
      %v690 = vmul.f32 %v434, %v658
      %v691 = vmul.f32 %v435, %v659
      %v692 = vmul.f32 %v436, %v660
      %v693 = vmul.f32 %v437, %v661
      %v694 = vmul.f32 %v438, %v662
      %v695 = vmul.f32 %v439, %v663
      %v696 = vmul.f32 %v440, %v664
      %v697 = vmul.f32 %v441, %v665
      %v698 = vmul.f32 %v442, %v666
      %v699 = vmul.f32 %v443, %v667
      %v700 = vmul.f32 %v444, %v668
      %v701 = vmul.f32 %v445, %v669
      %v702 = vmul.f32 %v446, %v670
      %v703 = vmul.f32 %v447, %v671
      %v704 = vmul.f32 %v448, %v672
      %v705 = vmul.f32 %v449, %v673
      %v706 = vmul.f32 %v450, %v674
      %v707 = vmul.f32 %v451, %v675
      %v708 = vmul.f32 %v452, %v676
      %v709 = vmul.f32 %v453, %v677
      %v710 = vmul.f32 %v454, %v678
      %v711 = vmul.f32 %v455, %v679
      %v712 = vmul.f32 %v456, %v680
      %v713 = vmul.f32 %v457, %v681
      %v714 = vmul.f32 %v458, %v682
      %v715 = vld [vmem:[%s1] sm:$0x1]
      %v717 = vlaneseq
      %v718 = vshrl.u32 %v717, 7
      %v719 = vsub.s32 0, %v718
      %v720 = vrot.slane %v715, %v719
      %v722 = vmul.f32 %v683, %v720
      %v723 = vmul.f32 %v684, %v720
      %v724 = vmul.f32 %v685, %v720
      %v725 = vmul.f32 %v686, %v720
      %v726 = vmul.f32 %v687, %v720
      %v727 = vmul.f32 %v688, %v720
      %v728 = vmul.f32 %v689, %v720
      %v729 = vmul.f32 %v690, %v720
      %v730 = vmul.f32 %v691, %v720
      %v731 = vmul.f32 %v692, %v720
      %v732 = vmul.f32 %v693, %v720
      %v733 = vmul.f32 %v694, %v720
      %v734 = vmul.f32 %v695, %v720
      %v735 = vmul.f32 %v696, %v720
      %v736 = vmul.f32 %v697, %v720
      %v737 = vmul.f32 %v698, %v720
      %v738 = vmul.f32 %v699, %v720
      %v739 = vmul.f32 %v700, %v720
      %v740 = vmul.f32 %v701, %v720
      %v741 = vmul.f32 %v702, %v720
      %v742 = vmul.f32 %v703, %v720
      %v743 = vmul.f32 %v704, %v720
      %v744 = vmul.f32 %v705, %v720
      %v745 = vmul.f32 %v706, %v720
      %v746 = vmul.f32 %v707, %v720
      %v747 = vmul.f32 %v708, %v720
      %v748 = vmul.f32 %v709, %v720
      %v749 = vmul.f32 %v710, %v720
      %v750 = vmul.f32 %v711, %v720
      %v751 = vmul.f32 %v712, %v720
      %v752 = vmul.f32 %v713, %v720
      %v753 = vmul.f32 %v714, %v720
      %v754 = vld [vmem:[%s2] sm:$0x1]
      %v756 = vlaneseq
      %v757 = vshrl.u32 %v756, 7
      %v758 = vsub.s32 0, %v757
      %v759 = vrot.slane %v754, %v758
      %v761 = vadd.f32 %v722, %v759
      %v762 = vadd.f32 %v723, %v759
      %v763 = vadd.f32 %v724, %v759
      %v764 = vadd.f32 %v725, %v759
      %v765 = vadd.f32 %v726, %v759
      %v766 = vadd.f32 %v727, %v759
      %v767 = vadd.f32 %v728, %v759
      %v768 = vadd.f32 %v729, %v759
      %v769 = vadd.f32 %v730, %v759
      %v770 = vadd.f32 %v731, %v759
      %v771 = vadd.f32 %v732, %v759
      %v772 = vadd.f32 %v733, %v759
      %v773 = vadd.f32 %v734, %v759
      %v774 = vadd.f32 %v735, %v759
      %v775 = vadd.f32 %v736, %v759
      %v776 = vadd.f32 %v737, %v759
      %v777 = vadd.f32 %v738, %v759
      %v778 = vadd.f32 %v739, %v759
      %v779 = vadd.f32 %v740, %v759
      %v780 = vadd.f32 %v741, %v759
      %v781 = vadd.f32 %v742, %v759
      %v782 = vadd.f32 %v743, %v759
      %v783 = vadd.f32 %v744, %v759
      %v784 = vadd.f32 %v745, %v759
      %v785 = vadd.f32 %v746, %v759
      %v786 = vadd.f32 %v747, %v759
      %v787 = vadd.f32 %v748, %v759
      %v788 = vadd.f32 %v749, %v759
      %v789 = vadd.f32 %v750, %v759
      %v790 = vadd.f32 %v751, %v759
      %v791 = vadd.f32 %v752, %v759
      %v792 = vadd.f32 %v753, %v759
      %v793 = vpack.c.bf16 %v762, %v761
      %v794 = vpack.c.bf16 %v764, %v763
      %v795 = vpack.c.bf16 %v766, %v765
      %v796 = vpack.c.bf16 %v768, %v767
      %v797 = vpack.c.bf16 %v770, %v769
      %v798 = vpack.c.bf16 %v772, %v771
      %v799 = vpack.c.bf16 %v774, %v773
      %v800 = vpack.c.bf16 %v776, %v775
      %v801 = vpack.c.bf16 %v778, %v777
      %v802 = vpack.c.bf16 %v780, %v779
      %v803 = vpack.c.bf16 %v782, %v781
      %v804 = vpack.c.bf16 %v784, %v783
      %v805 = vpack.c.bf16 %v786, %v785
      %v806 = vpack.c.bf16 %v788, %v787
      %v807 = vpack.c.bf16 %v790, %v789
      %v808 = vpack.c.bf16 %v792, %v791
      %v809 = vld [vmem:[%s3] sm:$0xf]
      %v810 = vld [vmem:[%s3 + $0x4] sm:$0xf]
      %v811 = vld [vmem:[%s4] sm:$0x1]
      %v813 = vlaneseq
      %v814 = vshrl.u32 %v813, 7
      %v815 = vsub.s32 0, %v814
      %v816 = vrot.slane %v811, %v815
      %v820 = vunpack.c.l.b16 %v809
      %v821 = vunpack.c.l.b16 %v810
      %v822 = vpack.c.b16 %v821, %v820
      %v825 = vsel %vm297, %v793, 0
      %v828 = vsel %vm297, %v794, 0
      %v831 = vsel %vm297, %v795, 0
      %v834 = vsel %vm297, %v796, 0
      %v837 = vsel %vm297, %v797, 0
      %v840 = vsel %vm297, %v798, 0
      %v843 = vsel %vm297, %v799, 0
      %v846 = vsel %vm297, %v800, 0
      %v849 = vsel %vm297, %v801, 0
      %v852 = vsel %vm297, %v802, 0
      %v855 = vsel %vm297, %v803, 0
      %v858 = vsel %vm297, %v804, 0
      %v861 = vsel %vm297, %v805, 0
      %v864 = vsel %vm297, %v806, 0
      %v867 = vsel %vm297, %v807, 0
      %v870 = vsel %vm297, %v808, 0
      %872 = vmatprep.subr.bf16.mxu0 0
      %873 = vmatpush1.bf16.msra.mxu0 0
      %874 = vmatprep.subr.bf16.mxu0 0
      %875 = vmatpush1.bf16.msra.mxu0 0
      %876 = vmatprep.subr.bf16.mxu0 0
      %877 = vmatpush1.bf16.msra.mxu0 0
      %878 = vmatprep.subr.bf16.mxu0 0
      %879 = vmatpush1.bf16.msra.mxu0 0
      %880 = vmatprep.subr.bf16.mxu0 0
      %881 = vmatpush1.bf16.msra.mxu0 0
      %882 = vmatprep.subr.bf16.mxu0 0
      %883 = vmatpush1.bf16.msra.mxu0 0
      %884 = vmatprep.subr.bf16.mxu0 0
      %885 = vmatpush1.bf16.msra.mxu0 0
      %886 = vmatprep.subr.bf16.mxu0 0
      %887 = vmatpush1.bf16.msra.mxu0 %v822
      %888 = vmatprep.subr.bf16.mxu0 0
      %889 = vmatpush2.bf16.msra.mxu0 0
      %890 = vmatprep.subr.bf16.mxu0 0
      %891 = vmatpush2.bf16.msra.mxu0 0
      %892 = vmatprep.subr.bf16.mxu0 0
      %893 = vmatpush2.bf16.msra.mxu0 0
      %894 = vmatprep.subr.bf16.mxu0 0
      %895 = vmatpush2.bf16.msra.mxu0 0
      %896 = vmatprep.subr.bf16.mxu0 0
      %897 = vmatpush2.bf16.msra.mxu0 0
      %898 = vmatprep.subr.bf16.mxu0 0
      %899 = vmatpush2.bf16.msra.mxu0 0
      %900 = vmatprep.subr.bf16.mxu0 0
      %901 = vmatpush2.bf16.msra.mxu0 0
      %902 = vmatprep.subr.bf16.mxu0 0
      %903 = vmatpush2.bf16.msra.mxu0 0
      %904 = vmatprep.mubr.bf16.mxu0 0
      %905 = vmatmul.mubr.bf16.gmra.mxu0 %v825
      %v906 = vpop.f32.mrf.mxu0
      %v907 = vadd.f32 %v816, %v906
      %v908 = vpop.f32.mrf.mxu0
      %v909 = vpop.f32.mrf.mxu0
      %v910 = vadd.f32 %v816, %v909
      %v911 = vpop.f32.mrf.mxu0
      %912 = vmatprep.mubr.bf16.mxu0 0
      %913 = vmatmul.mubr.bf16.gmra.mxu0 %v828
      %v914 = vpop.f32.mrf.mxu0
      %v915 = vadd.f32 %v816, %v914
      %v916 = vpop.f32.mrf.mxu0
      %v917 = vpop.f32.mrf.mxu0
      %v918 = vadd.f32 %v816, %v917
      %v919 = vpop.f32.mrf.mxu0
      %920 = vmatprep.mubr.bf16.mxu0 0
      %921 = vmatmul.mubr.bf16.gmra.mxu0 %v831
      %v922 = vpop.f32.mrf.mxu0
      %v923 = vadd.f32 %v816, %v922
      %v924 = vpop.f32.mrf.mxu0
      %v925 = vpop.f32.mrf.mxu0
      %v926 = vadd.f32 %v816, %v925
      %v927 = vpop.f32.mrf.mxu0
      %928 = vmatprep.mubr.bf16.mxu0 0
      %929 = vmatmul.mubr.bf16.gmra.mxu0 %v834
      %v930 = vpop.f32.mrf.mxu0
      %v931 = vadd.f32 %v816, %v930
      %v932 = vpop.f32.mrf.mxu0
      %v933 = vpop.f32.mrf.mxu0
      %v934 = vadd.f32 %v816, %v933
      %v935 = vpop.f32.mrf.mxu0
      %936 = vmatprep.mubr.bf16.mxu0 0
      %937 = vmatmul.mubr.bf16.gmra.mxu0 %v837
      %v938 = vpop.f32.mrf.mxu0
      %v939 = vadd.f32 %v816, %v938
      %v940 = vpop.f32.mrf.mxu0
      %v941 = vpop.f32.mrf.mxu0
      %v942 = vadd.f32 %v816, %v941
      %v943 = vpop.f32.mrf.mxu0
      %944 = vmatprep.mubr.bf16.mxu0 0
      %945 = vmatmul.mubr.bf16.gmra.mxu0 %v840
      %v946 = vpop.f32.mrf.mxu0
      %v947 = vadd.f32 %v816, %v946
      %v948 = vpop.f32.mrf.mxu0
      %v949 = vpop.f32.mrf.mxu0
      %v950 = vadd.f32 %v816, %v949
      %v951 = vpop.f32.mrf.mxu0
      %952 = vmatprep.mubr.bf16.mxu0 0
      %953 = vmatmul.mubr.bf16.gmra.mxu0 %v843
      %v954 = vpop.f32.mrf.mxu0
      %v955 = vadd.f32 %v816, %v954
      %v956 = vpop.f32.mrf.mxu0
      %v957 = vpop.f32.mrf.mxu0
      %v958 = vadd.f32 %v816, %v957
      %v959 = vpop.f32.mrf.mxu0
      %960 = vmatprep.mubr.bf16.mxu0 0
      %961 = vmatmul.mubr.bf16.gmra.mxu0 %v846
      %v962 = vpop.f32.mrf.mxu0
      %v963 = vadd.f32 %v816, %v962
      %v964 = vpop.f32.mrf.mxu0
      %v965 = vpop.f32.mrf.mxu0
      %v966 = vadd.f32 %v816, %v965
      %v967 = vpop.f32.mrf.mxu0
      %968 = vmatprep.mubr.bf16.mxu0 0
      %969 = vmatmul.mubr.bf16.gmra.mxu0 %v849
      %v970 = vpop.f32.mrf.mxu0
      %v971 = vadd.f32 %v816, %v970
      %v972 = vpop.f32.mrf.mxu0
      %v973 = vpop.f32.mrf.mxu0
      %v974 = vadd.f32 %v816, %v973
      %v975 = vpop.f32.mrf.mxu0
      %976 = vmatprep.mubr.bf16.mxu0 0
      %977 = vmatmul.mubr.bf16.gmra.mxu0 %v852
      %v978 = vpop.f32.mrf.mxu0
      %v979 = vadd.f32 %v816, %v978
      %v980 = vpop.f32.mrf.mxu0
      %v981 = vpop.f32.mrf.mxu0
      %v982 = vadd.f32 %v816, %v981
      %v983 = vpop.f32.mrf.mxu0
      %984 = vmatprep.mubr.bf16.mxu0 0
      %985 = vmatmul.mubr.bf16.gmra.mxu0 %v855
      %v986 = vpop.f32.mrf.mxu0
      %v987 = vadd.f32 %v816, %v986
      %v988 = vpop.f32.mrf.mxu0
      %v989 = vpop.f32.mrf.mxu0
      %v990 = vadd.f32 %v816, %v989
      %v991 = vpop.f32.mrf.mxu0
      %992 = vmatprep.mubr.bf16.mxu0 0
      %993 = vmatmul.mubr.bf16.gmra.mxu0 %v858
      %v994 = vpop.f32.mrf.mxu0
      %v995 = vadd.f32 %v816, %v994
      %v996 = vpop.f32.mrf.mxu0
      %v997 = vpop.f32.mrf.mxu0
      %v998 = vadd.f32 %v816, %v997
      %v999 = vpop.f32.mrf.mxu0
      %1000 = vmatprep.mubr.bf16.mxu0 0
      %1001 = vmatmul.mubr.bf16.gmra.mxu0 %v861
      %v1002 = vpop.f32.mrf.mxu0
      %v1003 = vadd.f32 %v816, %v1002
      %v1004 = vpop.f32.mrf.mxu0
      %v1005 = vpop.f32.mrf.mxu0
      %v1006 = vadd.f32 %v816, %v1005
      %v1007 = vpop.f32.mrf.mxu0
      %1008 = vmatprep.mubr.bf16.mxu0 0
      %1009 = vmatmul.mubr.bf16.gmra.mxu0 %v864
      %v1010 = vpop.f32.mrf.mxu0
      %v1011 = vadd.f32 %v816, %v1010
      %v1012 = vpop.f32.mrf.mxu0
      %v1013 = vpop.f32.mrf.mxu0
      %v1014 = vadd.f32 %v816, %v1013
      %v1015 = vpop.f32.mrf.mxu0
      %1016 = vmatprep.mubr.bf16.mxu0 0
      %1017 = vmatmul.mubr.bf16.gmra.mxu0 %v867
      %v1018 = vpop.f32.mrf.mxu0
      %v1019 = vadd.f32 %v816, %v1018
      %v1020 = vpop.f32.mrf.mxu0
      %v1021 = vpop.f32.mrf.mxu0
      %v1022 = vadd.f32 %v816, %v1021
      %v1023 = vpop.f32.mrf.mxu0
      %1024 = vmatprep.mubr.bf16.mxu0 0
      %1025 = vmatmul.mubr.bf16.gmra.mxu0 %v870
      %v1026 = vpop.f32.mrf.mxu0
      %v1027 = vadd.f32 %v816, %v1026
      %v1028 = vpop.f32.mrf.mxu0
      %v1029 = vpop.f32.mrf.mxu0
      %v1030 = vadd.f32 %v816, %v1029
      %v1031 = vpop.f32.mrf.mxu0
      %1032 = vdwg.mxu0
      %v1033 = vpack.c.bf16 %v910, %v907
      %v1034 = vpack.c.bf16 %v918, %v915
      %v1035 = vpack.c.bf16 %v926, %v923
      %v1036 = vpack.c.bf16 %v934, %v931
      %v1037 = vpack.c.bf16 %v942, %v939
      %v1038 = vpack.c.bf16 %v950, %v947
      %v1039 = vpack.c.bf16 %v958, %v955
      %v1040 = vpack.c.bf16 %v966, %v963
      %v1041 = vpack.c.bf16 %v974, %v971
      %v1042 = vpack.c.bf16 %v982, %v979
      %v1043 = vpack.c.bf16 %v990, %v987
      %v1044 = vpack.c.bf16 %v998, %v995
      %v1045 = vpack.c.bf16 %v1006, %v1003
      %v1046 = vpack.c.bf16 %v1014, %v1011
      %v1047 = vpack.c.bf16 %v1022, %v1019
      %v1048 = vpack.c.bf16 %v1030, %v1027
      %v1065 = vunpack.c.l.b16 %v1033
      %v1066 = vunpack.c.h.b16 %v1033
      %v1067 = vunpack.c.l.b16 %v1034
      %v1068 = vunpack.c.h.b16 %v1034
      %v1069 = vunpack.c.l.b16 %v1035
      %v1070 = vunpack.c.h.b16 %v1035
      %v1071 = vunpack.c.l.b16 %v1036
      %v1072 = vunpack.c.h.b16 %v1036
      %v1073 = vunpack.c.l.b16 %v1037
      %v1074 = vunpack.c.h.b16 %v1037
      %v1075 = vunpack.c.l.b16 %v1038
      %v1076 = vunpack.c.h.b16 %v1038
      %v1077 = vunpack.c.l.b16 %v1039
      %v1078 = vunpack.c.h.b16 %v1039
      %v1079 = vunpack.c.l.b16 %v1040
      %v1080 = vunpack.c.h.b16 %v1040
      %v1081 = vunpack.c.l.b16 %v1041
      %v1082 = vunpack.c.h.b16 %v1041
      %v1083 = vunpack.c.l.b16 %v1042
      %v1084 = vunpack.c.h.b16 %v1042
      %v1085 = vunpack.c.l.b16 %v1043
      %v1086 = vunpack.c.h.b16 %v1043
      %v1087 = vunpack.c.l.b16 %v1044
      %v1088 = vunpack.c.h.b16 %v1044
      %v1089 = vunpack.c.l.b16 %v1045
      %v1090 = vunpack.c.h.b16 %v1045
      %v1091 = vunpack.c.l.b16 %v1046
      %v1092 = vunpack.c.h.b16 %v1046
      %v1093 = vunpack.c.l.b16 %v1047
      %v1094 = vunpack.c.h.b16 %v1047
      %v1095 = vunpack.c.l.b16 %v1048
      %v1096 = vunpack.c.h.b16 %v1048
      %v1097 = vpack.c.b16 %v1065, %v1065
      %v1098 = vpack.c.b16 %v1066, %v1066
      %v1099 = vpack.c.b16 %v1067, %v1067
      %v1100 = vpack.c.b16 %v1068, %v1068
      %v1101 = vpack.c.b16 %v1069, %v1069
      %v1102 = vpack.c.b16 %v1070, %v1070
      %v1103 = vpack.c.b16 %v1071, %v1071
      %v1104 = vpack.c.b16 %v1072, %v1072
      %v1105 = vpack.c.b16 %v1073, %v1073
      %v1106 = vpack.c.b16 %v1074, %v1074
      %v1107 = vpack.c.b16 %v1075, %v1075
      %v1108 = vpack.c.b16 %v1076, %v1076
      %v1109 = vpack.c.b16 %v1077, %v1077
      %v1110 = vpack.c.b16 %v1078, %v1078
      %v1111 = vpack.c.b16 %v1079, %v1079
      %v1112 = vpack.c.b16 %v1080, %v1080
      %v1113 = vpack.c.b16 %v1081, %v1081
      %v1114 = vpack.c.b16 %v1082, %v1082
      %v1115 = vpack.c.b16 %v1083, %v1083
      %v1116 = vpack.c.b16 %v1084, %v1084
      %v1117 = vpack.c.b16 %v1085, %v1085
      %v1118 = vpack.c.b16 %v1086, %v1086
      %v1119 = vpack.c.b16 %v1087, %v1087
      %v1120 = vpack.c.b16 %v1088, %v1088
      %v1121 = vpack.c.b16 %v1089, %v1089
      %v1122 = vpack.c.b16 %v1090, %v1090
      %v1123 = vpack.c.b16 %v1091, %v1091
      %v1124 = vpack.c.b16 %v1092, %v1092
      %v1125 = vpack.c.b16 %v1093, %v1093
      %v1126 = vpack.c.b16 %v1094, %v1094
      %v1127 = vpack.c.b16 %v1095, %v1095
      %v1128 = vpack.c.b16 %v1096, %v1096
      %vm1161 = vcmask 388096
      %1162 = vst.msk [vmem:[%s262] sm:$0xf] %vm1161, %v1097
      %1163 = vst.msk [vmem:[%s262 + $0x4] sm:$0xf] %vm1161, %v1098
      %1164 = vst.msk [vmem:[%s262 + $0x8] sm:$0xf] %vm1161, %v1099
      %1165 = vst.msk [vmem:[%s262 + $0xc] sm:$0xf] %vm1161, %v1100
      %1166 = vst.msk [vmem:[%s262 + $0x10] sm:$0xf] %vm1161, %v1101
      %1167 = vst.msk [vmem:[%s262 + $0x14] sm:$0xf] %vm1161, %v1102
      %1168 = vst.msk [vmem:[%s262 + $0x18] sm:$0xf] %vm1161, %v1103
      %1169 = vst.msk [vmem:[%s262 + $0x1c] sm:$0xf] %vm1161, %v1104
      %1170 = vst.msk [vmem:[%s262 + $0x20] sm:$0xf] %vm1161, %v1105
      %1171 = vst.msk [vmem:[%s262 + $0x24] sm:$0xf] %vm1161, %v1106
      %1172 = vst.msk [vmem:[%s262 + $0x28] sm:$0xf] %vm1161, %v1107
      %1173 = vst.msk [vmem:[%s262 + $0x2c] sm:$0xf] %vm1161, %v1108
      %1174 = vst.msk [vmem:[%s262 + $0x30] sm:$0xf] %vm1161, %v1109
      %1175 = vst.msk [vmem:[%s262 + $0x34] sm:$0xf] %vm1161, %v1110
      %1176 = vst.msk [vmem:[%s262 + $0x38] sm:$0xf] %vm1161, %v1111
      %1177 = vst.msk [vmem:[%s262 + $0x3c] sm:$0xf] %vm1161, %v1112
      %1178 = vst.msk [vmem:[%s262 + $0x40] sm:$0xf] %vm1161, %v1113
      %1179 = vst.msk [vmem:[%s262 + $0x44] sm:$0xf] %vm1161, %v1114
      %1180 = vst.msk [vmem:[%s262 + $0x48] sm:$0xf] %vm1161, %v1115
      %1181 = vst.msk [vmem:[%s262 + $0x4c] sm:$0xf] %vm1161, %v1116
      %1182 = vst.msk [vmem:[%s262 + $0x50] sm:$0xf] %vm1161, %v1117
      %1183 = vst.msk [vmem:[%s262 + $0x54] sm:$0xf] %vm1161, %v1118
      %1184 = vst.msk [vmem:[%s262 + $0x58] sm:$0xf] %vm1161, %v1119
      %1185 = vst.msk [vmem:[%s262 + $0x5c] sm:$0xf] %vm1161, %v1120
      %1186 = vst.msk [vmem:[%s262 + $0x60] sm:$0xf] %vm1161, %v1121
      %1187 = vst.msk [vmem:[%s262 + $0x64] sm:$0xf] %vm1161, %v1122
      %1188 = vst.msk [vmem:[%s262 + $0x68] sm:$0xf] %vm1161, %v1123
      %1189 = vst.msk [vmem:[%s262 + $0x6c] sm:$0xf] %vm1161, %v1124
      %1190 = vst.msk [vmem:[%s262 + $0x70] sm:$0xf] %vm1161, %v1125
      %1191 = vst.msk [vmem:[%s262 + $0x74] sm:$0xf] %vm1161, %v1126
      %1192 = vst.msk [vmem:[%s262 + $0x78] sm:$0xf] %vm1161, %v1127
      %1193 = vst.msk [vmem:[%s262 + $0x7c] sm:$0xf] %vm1161, %v1128
      %s1194 = smul.u32 32, %s21
      %p1195 = scmp.lt.s32.totalorder %s20, 1
      %s1196 = scalar_select %p1195, %s20, 1
      %p1197 = scmp.lt.s32.totalorder %s1194, 31
      %s1198 = scalar_select %p1197, %s1194, 31
      %s1199 = smul.addr %s1196, 32
      %s1200 = sadd.s32 %s1198, %s1199
      %s1201 = smul.addr %s1200, 4
      %s1202 = scalar_lea.vmem %s5, %s1201
      // Predicated region
      $region41: #{transformer_block_forward.6} parent=39 // pred_check
        %p1203 = pneg %p160
      $region42: #{transformer_block_forward.6} parent=39 // pred_check_branch
        %1205 = sbr.rel (%p1203) target = $region44
      $region43: #{transformer_block_forward.6} parent=39 // pred_region
        %s1206 = smul.u32 32, %s21
      $region44: #{transformer_block_forward.6} parent=39 // pred_fallthru
        _
    $region40: #{transformer_block_forward.6} parent=5 // pred_fallthru
      _
    %p1207 = scmp.le.s32.totalorder 2, %s11
    // Predicated region
    $region45: #{transformer_block_forward.6} parent=5 // pred_check
      %p1208 = pneg %p1207
    $region46: #{transformer_block_forward.6} parent=5 // pred_check_branch
      %1210 = sbr.rel (%p1208) target = $region48
    $region47: #{transformer_block_forward.6} parent=5 // pred_region
      %s1211 = ssub.s32 %s11, 2
      // Predicated region
      $region49: #{transformer_block_forward.6} parent=47 // pred_check
        %p1212 = pneg %p166
      $region50: #{transformer_block_forward.6} parent=47 // pred_check_branch
        %1214 = sbr.rel (%p1212) target = $region52
      $region51: #{transformer_block_forward.6} parent=47 // pred_region
        %s1215 = smul.u32 32, %s23
        %p1216 = scmp.lt.s32.totalorder %s22, 1
        %s1217 = scalar_select %p1216, %s22, 1
        %p1218 = scmp.lt.s32.totalorder %s1215, 31
        %s1219 = scalar_select %p1218, %s1215, 31
        %s1220 = smul.addr %s1217, 32
        %s1221 = sadd.s32 %s1219, %s1220
        %s1222 = smul.addr %s1221, 4
        %s1223 = scalar_lea.vmem %s5, %s1222
      $region52: #{transformer_block_forward.6} parent=47 // pred_fallthru
        _
    $region48: #{transformer_block_forward.6} parent=5 // pred_fallthru
      _
  $region6: #{transformer_block_forward.6} parent=0 // loop_footer
    %s15 = sadd.s32 1, %s11
  $region7: #{transformer_block_forward.6} parent=0 // loop_footer_branch
    %10 = sbr.rel target = $region3
  $region8: #{transformer_block_forward.6} parent=0 // loop_exit
    _

// kernel: transformer_block_forward.8
$region0: #{transformer_block_forward.8}
  #allocation0 [shape = 'u32[]', space=smem, size = 0x4, offset = 0x4, fixed_abs, tag = 'smem constant byte address 0x4 - core index']
  #allocation1 [shape = 'u32[144,128]{1,0:T(1,128)}', space=vmem, size = 0x12000, scoped, tag = 'internal scratch']
  %s0 = inlined_call_operand.vmem [shape: bf16[2,256,48], index: 0, kind: input, shape index: {}]
  %s1 = inlined_call_operand.vmem [shape: f32[2,256,16], index: 1, kind: input, shape index: {}]
  %s2 = inlined_call_operand.vmem [shape: f32[1,16], index: 2, kind: input, shape index: {}]
  %s3 = inlined_call_operand.vmem [shape: f32[16,16], index: 3, kind: input, shape index: {}]
  %s4 = inlined_call_operand.vmem [shape: bf16[16,16], index: 4, kind: input, shape index: {}]
  %s5 = inlined_call_operand.vmem [shape: f32[1,16], index: 5, kind: input, shape index: {}]
  %s6 = inlined_call_operand.vmem [shape: f32[2,256,16], index: 6, kind: output, shape index: {}]
  %s7 = sld [smem:[#allocation0]]
  $region57: #{transformer_block_forward.8} parent=0
    _
  %s9 = ssub.s32 1, %s7
  %s10 = scalar_select 0, %s9, %s7
  loop: start=0, step=1, limit=4
  $region2: #{transformer_block_forward.8} parent=0 // loop_pre_header
    _
  $region3: #{transformer_block_forward.8} parent=0 // loop_header
    %s12 = sphi 0, %s16
    %p13 = scmp.ge.s32.totalorder %s12, 4
    %s22 = sphi 0, %s24
    %s25 = sphi 0, %s22
    %s26 = sphi 0, %s25
    %s42 = sphi 0, %s26
    %s48 = sphi 0, %s50
    %s51 = sphi 0, %s48
    %s52 = sphi 0, %s51
    %s68 = sphi 0, %s52
    %s72 = sphi 0, %s72
    %s74 = sphi 0, %s72
    %s75 = sphi 0, %s74
    %s89 = sphi 0, %s75
    %s93 = sphi 0, %s93
    %s95 = sphi 0, %s93
    %s96 = sphi 0, %s95
    %s110 = sphi 0, %s96
    %s114 = sphi 0, %s114
    %s116 = sphi 0, %s114
    %s117 = sphi 0, %s116
    %s131 = sphi 0, %s117
    %s135 = sphi 0, %s135
    %s137 = sphi 0, %s135
    %s138 = sphi 0, %s137
    %s152 = sphi 0, %s138
    %s158 = sphi 0, %s160
    %s161 = sphi 0, %s158
    %s162 = sphi 0, %s161
    %s178 = sphi 0, %s162
  $region4: #{transformer_block_forward.8} parent=0 // loop_header_branch
    %15 = sbr.rel (%p13) target = $region8
  $region5: #{transformer_block_forward.8} parent=0 // loop_body
    %s17 = ssub.s32 %s12, 1
    %s18 = ssub.s32 %s12, 2
    %s19 = sadd.s32 %s12, 1
    %s20 = ssub.s32 %s12, %s19
    %p21 = scmp.eq.s32.totalorder %s20, 0
    %s23 = sadd.s32 %s22, 1
    %s24 = scalar_select %p21, %s22, %s23
    %p27 = pneg %p21
    %p28 = scmp.eq.s32.totalorder %s12, 1
    %p29 = por %p27, %p28
    %p30 = scmp.ne.s32.totalorder %s22, %s25
    %p31 = scmp.eq.s32.totalorder %s12, 0
    %p32 = por %p30, %p31
    %p33 = scmp.ne.s32.totalorder %s22, %s25
    %p34 = scmp.eq.s32.totalorder %s17, 1
    %p35 = por %p33, %p34
    %p36 = scmp.ne.s32.totalorder %s25, %s26
    %p37 = scmp.eq.s32.totalorder %s17, 0
    %p38 = por %p36, %p37
    %p39 = scmp.ne.s32.totalorder %s25, %s26
    %p40 = scmp.eq.s32.totalorder %s18, 1
    %p41 = por %p39, %p40
    %p43 = scmp.ne.s32.totalorder %s26, %s42
    %p44 = scmp.eq.s32.totalorder %s18, 0
    %p45 = por %p43, %p44
    %s46 = ssub.s32 %s12, %s19
    %p47 = scmp.eq.s32.totalorder %s46, 0
    %s49 = sadd.s32 %s48, 1
    %s50 = scalar_select %p47, %s48, %s49
    %p53 = pneg %p47
    %p54 = scmp.eq.s32.totalorder %s12, 1
    %p55 = por %p53, %p54
    %p56 = scmp.ne.s32.totalorder %s48, %s51
    %p57 = scmp.eq.s32.totalorder %s12, 0
    %p58 = por %p56, %p57
    %p59 = scmp.ne.s32.totalorder %s48, %s51
    %p60 = scmp.eq.s32.totalorder %s17, 1
    %p61 = por %p59, %p60
    %p62 = scmp.ne.s32.totalorder %s51, %s52
    %p63 = scmp.eq.s32.totalorder %s17, 0
    %p64 = por %p62, %p63
    %p65 = scmp.ne.s32.totalorder %s51, %s52
    %p66 = scmp.eq.s32.totalorder %s18, 1
    %p67 = por %p65, %p66
    %p69 = scmp.ne.s32.totalorder %s52, %s68
    %p70 = scmp.eq.s32.totalorder %s18, 0
    %p71 = por %p69, %p70
    %s73 = sadd.s32 %s72, 1
    %p76 = scmp.eq.s32.totalorder %s12, 1
    %p77 = scmp.ne.s32.totalorder %s72, %s74
    %p78 = scmp.eq.s32.totalorder %s12, 0
    %p79 = por %p77, %p78
    %p80 = scmp.ne.s32.totalorder %s72, %s74
    %p81 = scmp.eq.s32.totalorder %s17, 1
    %p82 = por %p80, %p81
    %p83 = scmp.ne.s32.totalorder %s74, %s75
    %p84 = scmp.eq.s32.totalorder %s17, 0
    %p85 = por %p83, %p84
    %p86 = scmp.ne.s32.totalorder %s74, %s75
    %p87 = scmp.eq.s32.totalorder %s18, 1
    %p88 = por %p86, %p87
    %p90 = scmp.ne.s32.totalorder %s75, %s89
    %p91 = scmp.eq.s32.totalorder %s18, 0
    %p92 = por %p90, %p91
    %s94 = sadd.s32 %s93, 1
    %p97 = scmp.eq.s32.totalorder %s12, 1
    %p98 = scmp.ne.s32.totalorder %s93, %s95
    %p99 = scmp.eq.s32.totalorder %s12, 0
    %p100 = por %p98, %p99
    %p101 = scmp.ne.s32.totalorder %s93, %s95
    %p102 = scmp.eq.s32.totalorder %s17, 1
    %p103 = por %p101, %p102
    %p104 = scmp.ne.s32.totalorder %s95, %s96
    %p105 = scmp.eq.s32.totalorder %s17, 0
    %p106 = por %p104, %p105
    %p107 = scmp.ne.s32.totalorder %s95, %s96
    %p108 = scmp.eq.s32.totalorder %s18, 1
    %p109 = por %p107, %p108
    %p111 = scmp.ne.s32.totalorder %s96, %s110
    %p112 = scmp.eq.s32.totalorder %s18, 0
    %p113 = por %p111, %p112
    %s115 = sadd.s32 %s114, 1
    %p118 = scmp.eq.s32.totalorder %s12, 1
    %p119 = scmp.ne.s32.totalorder %s114, %s116
    %p120 = scmp.eq.s32.totalorder %s12, 0
    %p121 = por %p119, %p120
    %p122 = scmp.ne.s32.totalorder %s114, %s116
    %p123 = scmp.eq.s32.totalorder %s17, 1
    %p124 = por %p122, %p123
    %p125 = scmp.ne.s32.totalorder %s116, %s117
    %p126 = scmp.eq.s32.totalorder %s17, 0
    %p127 = por %p125, %p126
    %p128 = scmp.ne.s32.totalorder %s116, %s117
    %p129 = scmp.eq.s32.totalorder %s18, 1
    %p130 = por %p128, %p129
    %p132 = scmp.ne.s32.totalorder %s117, %s131
    %p133 = scmp.eq.s32.totalorder %s18, 0
    %p134 = por %p132, %p133
    %s136 = sadd.s32 %s135, 1
    %p139 = scmp.eq.s32.totalorder %s12, 1
    %p140 = scmp.ne.s32.totalorder %s135, %s137
    %p141 = scmp.eq.s32.totalorder %s12, 0
    %p142 = por %p140, %p141
    %p143 = scmp.ne.s32.totalorder %s135, %s137
    %p144 = scmp.eq.s32.totalorder %s17, 1
    %p145 = por %p143, %p144
    %p146 = scmp.ne.s32.totalorder %s137, %s138
    %p147 = scmp.eq.s32.totalorder %s17, 0
    %p148 = por %p146, %p147
    %p149 = scmp.ne.s32.totalorder %s137, %s138
    %p150 = scmp.eq.s32.totalorder %s18, 1
    %p151 = por %p149, %p150
    %p153 = scmp.ne.s32.totalorder %s138, %s152
    %p154 = scmp.eq.s32.totalorder %s18, 0
    %p155 = por %p153, %p154
    %s156 = ssub.s32 %s12, %s19
    %p157 = scmp.eq.s32.totalorder %s156, 0
    %s159 = sadd.s32 %s158, 1
    %s160 = scalar_select %p157, %s158, %s159
    %p163 = pneg %p157
    %p164 = scmp.eq.s32.totalorder %s12, 1
    %p165 = por %p163, %p164
    %p166 = scmp.ne.s32.totalorder %s158, %s161
    %p167 = scmp.eq.s32.totalorder %s12, 0
    %p168 = por %p166, %p167
    %p169 = scmp.ne.s32.totalorder %s158, %s161
    %p170 = scmp.eq.s32.totalorder %s17, 1
    %p171 = por %p169, %p170
    %p172 = scmp.ne.s32.totalorder %s161, %s162
    %p173 = scmp.eq.s32.totalorder %s17, 0
    %p174 = por %p172, %p173
    %p175 = scmp.ne.s32.totalorder %s161, %s162
    %p176 = scmp.eq.s32.totalorder %s18, 1
    %p177 = por %p175, %p176
    %p179 = scmp.ne.s32.totalorder %s162, %s178
    %p180 = scmp.eq.s32.totalorder %s18, 0
    %p181 = por %p179, %p180
    %p182 = scmp.le.s32.totalorder 1, %s12
    %p183 = scmp.lt.s32.totalorder %s12, 3
    %p184 = pnand %p182, %p183
    %p185 = pneg %p184
    // Predicated region
    $region9: #{transformer_block_forward.8} parent=5 // pred_check
      _
    $region10: #{transformer_block_forward.8} parent=5 // pred_check_branch
      %187 = sbr.rel (%p184) target = $region12
    $region11: #{transformer_block_forward.8} parent=5 // pred_region
      %s188 = ssub.s32 %s12, 1
      // Predicated region
      $region13: #{transformer_block_forward.8} parent=11 // pred_check
        %p189 = pneg %p85
      $region14: #{transformer_block_forward.8} parent=11 // pred_check_branch
        %191 = sbr.rel (%p189) target = $region16
      $region15: #{transformer_block_forward.8} parent=11 // pred_region
        _
      $region16: #{transformer_block_forward.8} parent=11 // pred_fallthru
        _
      // Predicated region
      $region17: #{transformer_block_forward.8} parent=11 // pred_check
        %p192 = pneg %p106
      $region18: #{transformer_block_forward.8} parent=11 // pred_check_branch
        %194 = sbr.rel (%p192) target = $region20
      $region19: #{transformer_block_forward.8} parent=11 // pred_region
        _
      $region20: #{transformer_block_forward.8} parent=11 // pred_fallthru
        _
      // Predicated region
      $region21: #{transformer_block_forward.8} parent=11 // pred_check
        %p195 = pneg %p127
      $region22: #{transformer_block_forward.8} parent=11 // pred_check_branch
        %197 = sbr.rel (%p195) target = $region24
      $region23: #{transformer_block_forward.8} parent=11 // pred_region
        _
      $region24: #{transformer_block_forward.8} parent=11 // pred_fallthru
        _
      // Predicated region
      $region25: #{transformer_block_forward.8} parent=11 // pred_check
        %p198 = pneg %p148
      $region26: #{transformer_block_forward.8} parent=11 // pred_check_branch
        %200 = sbr.rel (%p198) target = $region28
      $region27: #{transformer_block_forward.8} parent=11 // pred_region
        _
      $region28: #{transformer_block_forward.8} parent=11 // pred_fallthru
        _
    $region12: #{transformer_block_forward.8} parent=5 // pred_fallthru
      _
    %p201 = scmp.lt.s32.totalorder %s12, 2
    // Predicated region
    $region29: #{transformer_block_forward.8} parent=5 // pred_check
      %p202 = pneg %p201
    $region30: #{transformer_block_forward.8} parent=5 // pred_check_branch
      %204 = sbr.rel (%p202) target = $region32
    $region31: #{transformer_block_forward.8} parent=5 // pred_region
      // Predicated region
      $region33: #{transformer_block_forward.8} parent=31 // pred_check
        %p205 = pneg %p32
      $region34: #{transformer_block_forward.8} parent=31 // pred_check_branch
        %207 = sbr.rel (%p205) target = $region36
      $region35: #{transformer_block_forward.8} parent=31 // pred_region
        %p208 = scmp.lt.s32.totalorder %s12, 1
        %s209 = scalar_select %p208, %s12, 1
        %s210 = smul.addr %s209, 32
        %s211 = smul.addr %s210, 4
        %s212 = scalar_lea.vmem %s0, %s211
      $region36: #{transformer_block_forward.8} parent=31 // pred_fallthru
        _
      // Predicated region
      $region37: #{transformer_block_forward.8} parent=31 // pred_check
        %p213 = pneg %p58
      $region38: #{transformer_block_forward.8} parent=31 // pred_check_branch
        %215 = sbr.rel (%p213) target = $region40
      $region39: #{transformer_block_forward.8} parent=31 // pred_region
        %p216 = scmp.lt.s32.totalorder %s12, 1
        %s217 = scalar_select %p216, %s12, 1
        %s218 = smul.addr %s217, 32
        %s219 = smul.addr %s218, 8
        %s220 = scalar_lea.vmem %s1, %s219
      $region40: #{transformer_block_forward.8} parent=31 // pred_fallthru
        _
    $region32: #{transformer_block_forward.8} parent=5 // pred_fallthru
      _
    %p221 = scmp.le.s32.totalorder 1, %s12
    %p222 = scmp.lt.s32.totalorder %s12, 3
    %p223 = pnand %p221, %p222
    %p224 = pneg %p223
    // Predicated region
    $region41: #{transformer_block_forward.8} parent=5 // pred_check
      _
    $region42: #{transformer_block_forward.8} parent=5 // pred_check_branch
      %226 = sbr.rel (%p223) target = $region44
    $region43: #{transformer_block_forward.8} parent=5 // pred_region
      %s227 = ssub.s32 %s12, 1
      %p228 = scmp.lt.s32.totalorder %s17, 1
      %s229 = scalar_select %p228, %s17, 1
      %s230 = smul.addr %s229, 32
      %s231 = smul.addr %s230, 4
      %s232 = scalar_lea.vmem %s0, %s231
      %p233 = pneg %p38
      %p234 = pneg %p35
      %p235 = scmp.lt.s32.totalorder %s17, 1
      %s236 = scalar_select %p235, %s17, 1
      %s237 = smul.addr %s236, 32
      %s238 = smul.addr %s237, 8
      %s239 = scalar_lea.vmem %s1, %s238
      %p240 = pneg %p64
      %p241 = pneg %p61
      %p242 = pneg %p85
      %p243 = pneg %p82
      %p244 = pneg %p106
      %p245 = pneg %p103
      %p246 = pneg %p127
      %p247 = pneg %p124
      %p248 = pneg %p148
      %p249 = pneg %p145
      %p250 = pneg %p174
      %p251 = pneg %p171
      %p252 = scmp.lt.s32.totalorder %s17, 1
      %s253 = scalar_select %p252, %s17, 1
      %s254 = smul.addr %s253, 32
      %s255 = smul.addr %s254, 8
      %s256 = scalar_lea.vmem %s6, %s255
      %p257 = scmp.lt.s32.totalorder %s17, 1
      %s258 = scalar_select %p257, %s17, 1
      %s259 = smul.addr %s258, 32
      %s260 = smul.addr %s259, 4
      %s261 = scalar_lea.vmem %s0, %s260
      %p262 = scmp.lt.s32.totalorder %s17, 1
      %s263 = scalar_select %p262, %s17, 1
      %s264 = smul.addr %s263, 32
      %s265 = smul.addr %s264, 8
      %s266 = scalar_lea.vmem %s1, %s265
      %p267 = scmp.lt.s32.totalorder %s17, 1
      %s268 = scalar_select %p267, %s17, 1
      %s269 = smul.addr %s268, 32
      %s270 = smul.addr %s269, 8
      %s271 = scalar_lea.vmem %s6, %s270
      %v273 = vld [vmem:[%s261] sm:$0xf]
      %v274 = vld [vmem:[%s261 + $0x4] sm:$0xf]
      %v275 = vld [vmem:[%s261 + $0x8] sm:$0xf]
      %v276 = vld [vmem:[%s261 + $0xc] sm:$0xf]
      %v277 = vld [vmem:[%s261 + $0x10] sm:$0xf]
      %v278 = vld [vmem:[%s261 + $0x14] sm:$0xf]
      %v279 = vld [vmem:[%s261 + $0x18] sm:$0xf]
      %v280 = vld [vmem:[%s261 + $0x1c] sm:$0xf]
      %v281 = vld [vmem:[%s261 + $0x20] sm:$0xf]
      %v282 = vld [vmem:[%s261 + $0x24] sm:$0xf]
      %v283 = vld [vmem:[%s261 + $0x28] sm:$0xf]
      %v284 = vld [vmem:[%s261 + $0x2c] sm:$0xf]
      %v285 = vld [vmem:[%s261 + $0x30] sm:$0xf]
      %v286 = vld [vmem:[%s261 + $0x34] sm:$0xf]
      %v287 = vld [vmem:[%s261 + $0x38] sm:$0xf]
      %v288 = vld [vmem:[%s261 + $0x3c] sm:$0xf]
      %v289 = vld [vmem:[%s261 + $0x40] sm:$0xf]
      %v290 = vld [vmem:[%s261 + $0x44] sm:$0xf]
      %v291 = vld [vmem:[%s261 + $0x48] sm:$0xf]
      %v292 = vld [vmem:[%s261 + $0x4c] sm:$0xf]
      %v293 = vld [vmem:[%s261 + $0x50] sm:$0xf]
      %v294 = vld [vmem:[%s261 + $0x54] sm:$0xf]
      %v295 = vld [vmem:[%s261 + $0x58] sm:$0xf]
      %v296 = vld [vmem:[%s261 + $0x5c] sm:$0xf]
      %v297 = vld [vmem:[%s261 + $0x60] sm:$0xf]
      %v298 = vld [vmem:[%s261 + $0x64] sm:$0xf]
      %v299 = vld [vmem:[%s261 + $0x68] sm:$0xf]
      %v300 = vld [vmem:[%s261 + $0x6c] sm:$0xf]
      %v301 = vld [vmem:[%s261 + $0x70] sm:$0xf]
      %v302 = vld [vmem:[%s261 + $0x74] sm:$0xf]
      %v303 = vld [vmem:[%s261 + $0x78] sm:$0xf]
      %v304 = vld [vmem:[%s261 + $0x7c] sm:$0xf]
      %v305 = vunpack.c.l.bf16 %v273
      %v306 = vunpack.c.l.bf16 %v274
      %v307 = vunpack.c.l.bf16 %v275
      %v308 = vunpack.c.l.bf16 %v276
      %v309 = vunpack.c.l.bf16 %v277
      %v310 = vunpack.c.l.bf16 %v278
      %v311 = vunpack.c.l.bf16 %v279
      %v312 = vunpack.c.l.bf16 %v280
      %v313 = vunpack.c.l.bf16 %v281
      %v314 = vunpack.c.l.bf16 %v282
      %v315 = vunpack.c.l.bf16 %v283
      %v316 = vunpack.c.l.bf16 %v284
      %v317 = vunpack.c.l.bf16 %v285
      %v318 = vunpack.c.l.bf16 %v286
      %v319 = vunpack.c.l.bf16 %v287
      %v320 = vunpack.c.l.bf16 %v288
      %v321 = vunpack.c.l.bf16 %v289
      %v322 = vunpack.c.l.bf16 %v290
      %v323 = vunpack.c.l.bf16 %v291
      %v324 = vunpack.c.l.bf16 %v292
      %v325 = vunpack.c.l.bf16 %v293
      %v326 = vunpack.c.l.bf16 %v294
      %v327 = vunpack.c.l.bf16 %v295
      %v328 = vunpack.c.l.bf16 %v296
      %v329 = vunpack.c.l.bf16 %v297
      %v330 = vunpack.c.l.bf16 %v298
      %v331 = vunpack.c.l.bf16 %v299
      %v332 = vunpack.c.l.bf16 %v300
      %v333 = vunpack.c.l.bf16 %v301
      %v334 = vunpack.c.l.bf16 %v302
      %v335 = vunpack.c.l.bf16 %v303
      %v336 = vunpack.c.l.bf16 %v304
      %v337 = vmul.f32 %v305, %v305
      %v338 = vmul.f32 %v306, %v306
      %v339 = vmul.f32 %v307, %v307
      %v340 = vmul.f32 %v308, %v308
      %v341 = vmul.f32 %v309, %v309
      %v342 = vmul.f32 %v310, %v310
      %v343 = vmul.f32 %v311, %v311
      %v344 = vmul.f32 %v312, %v312
      %v345 = vmul.f32 %v313, %v313
      %v346 = vmul.f32 %v314, %v314
      %v347 = vmul.f32 %v315, %v315
      %v348 = vmul.f32 %v316, %v316
      %v349 = vmul.f32 %v317, %v317
      %v350 = vmul.f32 %v318, %v318
      %v351 = vmul.f32 %v319, %v319
      %v352 = vmul.f32 %v320, %v320
      %v353 = vmul.f32 %v321, %v321
      %v354 = vmul.f32 %v322, %v322
      %v355 = vmul.f32 %v323, %v323
      %v356 = vmul.f32 %v324, %v324
      %v357 = vmul.f32 %v325, %v325
      %v358 = vmul.f32 %v326, %v326
      %v359 = vmul.f32 %v327, %v327
      %v360 = vmul.f32 %v328, %v328
      %v361 = vmul.f32 %v329, %v329
      %v362 = vmul.f32 %v330, %v330
      %v363 = vmul.f32 %v331, %v331
      %v364 = vmul.f32 %v332, %v332
      %v365 = vmul.f32 %v333, %v333
      %v366 = vmul.f32 %v334, %v334
      %v367 = vmul.f32 %v335, %v335
      %v368 = vmul.f32 %v336, %v336
      %vm369 = vcmask 130048
      %v370 = vsel %vm369, %v337, 0.0
      %v371 = vsel %vm369, %v338, 0.0
      %v372 = vadd.f32 %v370, %v371
      %v373 = vsel %vm369, %v339, 0.0
      %v374 = vadd.f32 %v372, %v373
      %v375 = vsel %vm369, %v340, 0.0
      %v376 = vadd.f32 %v374, %v375
      %v377 = vsel %vm369, %v341, 0.0
      %v378 = vadd.f32 %v376, %v377
      %v379 = vsel %vm369, %v342, 0.0
      %v380 = vadd.f32 %v378, %v379
      %v381 = vsel %vm369, %v343, 0.0
      %v382 = vadd.f32 %v380, %v381
      %v383 = vsel %vm369, %v344, 0.0
      %v384 = vadd.f32 %v382, %v383
      %v385 = vsel %vm369, %v345, 0.0
      %v386 = vadd.f32 %v384, %v385
      %v387 = vsel %vm369, %v346, 0.0
      %v388 = vadd.f32 %v386, %v387
      %v389 = vsel %vm369, %v347, 0.0
      %v390 = vadd.f32 %v388, %v389
      %v391 = vsel %vm369, %v348, 0.0
      %v392 = vadd.f32 %v390, %v391
      %v393 = vsel %vm369, %v349, 0.0
      %v394 = vadd.f32 %v392, %v393
      %v395 = vsel %vm369, %v350, 0.0
      %v396 = vadd.f32 %v394, %v395
      %v397 = vsel %vm369, %v351, 0.0
      %v398 = vadd.f32 %v396, %v397
      %v399 = vsel %vm369, %v352, 0.0
      %v400 = vadd.f32 %v398, %v399
      %v401 = vsel %vm369, %v353, 0.0
      %v402 = vadd.f32 %v400, %v401
      %v403 = vsel %vm369, %v354, 0.0
      %v404 = vadd.f32 %v402, %v403
      %v405 = vsel %vm369, %v355, 0.0
      %v406 = vadd.f32 %v404, %v405
      %v407 = vsel %vm369, %v356, 0.0
      %v408 = vadd.f32 %v406, %v407
      %v409 = vsel %vm369, %v357, 0.0
      %v410 = vadd.f32 %v408, %v409
      %v411 = vsel %vm369, %v358, 0.0
      %v412 = vadd.f32 %v410, %v411
      %v413 = vsel %vm369, %v359, 0.0
      %v414 = vadd.f32 %v412, %v413
      %v415 = vsel %vm369, %v360, 0.0
      %v416 = vadd.f32 %v414, %v415
      %v417 = vsel %vm369, %v361, 0.0
      %v418 = vadd.f32 %v416, %v417
      %v419 = vsel %vm369, %v362, 0.0
      %v420 = vadd.f32 %v418, %v419
      %v421 = vsel %vm369, %v363, 0.0
      %v422 = vadd.f32 %v420, %v421
      %v423 = vsel %vm369, %v364, 0.0
      %v424 = vadd.f32 %v422, %v423
      %v425 = vsel %vm369, %v365, 0.0
      %v426 = vadd.f32 %v424, %v425
      %v427 = vsel %vm369, %v366, 0.0
      %v428 = vadd.f32 %v426, %v427
      %v429 = vsel %vm369, %v367, 0.0
      %v430 = vadd.f32 %v428, %v429
      %v431 = vsel %vm369, %v368, 0.0
      %v432 = vadd.f32 %v430, %v431
      %v433 = vrot.slane %v432, 4
      %v434 = vadd.f32 %v432, %v433
      %v435 = vrot.slane %v434, 2
      %v436 = vadd.f32 %v434, %v435
      %v437 = vrot.slane %v436, 1
      %v438 = vadd.f32 %v436, %v437
      %v439 = vmax.f32 %v438, 1e-24
      %v440 = vrsqrt.pop %v439
      %v441 = vmul.f32 %v305, %v440
      %v442 = vmul.f32 %v306, %v440
      %v443 = vmul.f32 %v307, %v440
      %v444 = vmul.f32 %v308, %v440
      %v445 = vmul.f32 %v309, %v440
      %v446 = vmul.f32 %v310, %v440
      %v447 = vmul.f32 %v311, %v440
      %v448 = vmul.f32 %v312, %v440
      %v449 = vmul.f32 %v313, %v440
      %v450 = vmul.f32 %v314, %v440
      %v451 = vmul.f32 %v315, %v440
      %v452 = vmul.f32 %v316, %v440
      %v453 = vmul.f32 %v317, %v440
      %v454 = vmul.f32 %v318, %v440
      %v455 = vmul.f32 %v319, %v440
      %v456 = vmul.f32 %v320, %v440
      %v457 = vmul.f32 %v321, %v440
      %v458 = vmul.f32 %v322, %v440
      %v459 = vmul.f32 %v323, %v440
      %v460 = vmul.f32 %v324, %v440
      %v461 = vmul.f32 %v325, %v440
      %v462 = vmul.f32 %v326, %v440
      %v463 = vmul.f32 %v327, %v440
      %v464 = vmul.f32 %v328, %v440
      %v465 = vmul.f32 %v329, %v440
      %v466 = vmul.f32 %v330, %v440
      %v467 = vmul.f32 %v331, %v440
      %v468 = vmul.f32 %v332, %v440
      %v469 = vmul.f32 %v333, %v440
      %v470 = vmul.f32 %v334, %v440
      %v471 = vmul.f32 %v335, %v440
      %v472 = vmul.f32 %v336, %v440
      %vm473 = vcmask 261248
      %v474 = vsel %vm473, %v337, 0.0
      %v475 = vsel %vm473, %v338, 0.0
      %v476 = vadd.f32 %v474, %v475
      %v477 = vsel %vm473, %v339, 0.0
      %v478 = vadd.f32 %v476, %v477
      %v479 = vsel %vm473, %v340, 0.0
      %v480 = vadd.f32 %v478, %v479
      %v481 = vsel %vm473, %v341, 0.0
      %v482 = vadd.f32 %v480, %v481
      %v483 = vsel %vm473, %v342, 0.0
      %v484 = vadd.f32 %v482, %v483
      %v485 = vsel %vm473, %v343, 0.0
      %v486 = vadd.f32 %v484, %v485
      %v487 = vsel %vm473, %v344, 0.0
      %v488 = vadd.f32 %v486, %v487
      %v489 = vsel %vm473, %v345, 0.0
      %v490 = vadd.f32 %v488, %v489
      %v491 = vsel %vm473, %v346, 0.0
      %v492 = vadd.f32 %v490, %v491
      %v493 = vsel %vm473, %v347, 0.0
      %v494 = vadd.f32 %v492, %v493
      %v495 = vsel %vm473, %v348, 0.0
      %v496 = vadd.f32 %v494, %v495
      %v497 = vsel %vm473, %v349, 0.0
      %v498 = vadd.f32 %v496, %v497
      %v499 = vsel %vm473, %v350, 0.0
      %v500 = vadd.f32 %v498, %v499
      %v501 = vsel %vm473, %v351, 0.0
      %v502 = vadd.f32 %v500, %v501
      %v503 = vsel %vm473, %v352, 0.0
      %v504 = vadd.f32 %v502, %v503
      %v505 = vsel %vm473, %v353, 0.0
      %v506 = vadd.f32 %v504, %v505
      %v507 = vsel %vm473, %v354, 0.0
      %v508 = vadd.f32 %v506, %v507
      %v509 = vsel %vm473, %v355, 0.0
      %v510 = vadd.f32 %v508, %v509
      %v511 = vsel %vm473, %v356, 0.0
      %v512 = vadd.f32 %v510, %v511
      %v513 = vsel %vm473, %v357, 0.0
      %v514 = vadd.f32 %v512, %v513
      %v515 = vsel %vm473, %v358, 0.0
      %v516 = vadd.f32 %v514, %v515
      %v517 = vsel %vm473, %v359, 0.0
      %v518 = vadd.f32 %v516, %v517
      %v519 = vsel %vm473, %v360, 0.0
      %v520 = vadd.f32 %v518, %v519
      %v521 = vsel %vm473, %v361, 0.0
      %v522 = vadd.f32 %v520, %v521
      %v523 = vsel %vm473, %v362, 0.0
      %v524 = vadd.f32 %v522, %v523
      %v525 = vsel %vm473, %v363, 0.0
      %v526 = vadd.f32 %v524, %v525
      %v527 = vsel %vm473, %v364, 0.0
      %v528 = vadd.f32 %v526, %v527
      %v529 = vsel %vm473, %v365, 0.0
      %v530 = vadd.f32 %v528, %v529
      %v531 = vsel %vm473, %v366, 0.0
      %v532 = vadd.f32 %v530, %v531
      %v533 = vsel %vm473, %v367, 0.0
      %v534 = vadd.f32 %v532, %v533
      %v535 = vsel %vm473, %v368, 0.0
      %v536 = vadd.f32 %v534, %v535
      %v537 = vrot.slane %v536, 4
      %v538 = vadd.f32 %v536, %v537
      %v539 = vrot.slane %v538, 2
      %v540 = vadd.f32 %v538, %v539
      %v541 = vrot.slane %v540, 1
      %v542 = vadd.f32 %v540, %v541
      %v543 = vmax.f32 %v542, 1e-24
      %v544 = vrsqrt.pop %v543
      %v545 = vmul.f32 %v305, %v544
      %v546 = vmul.f32 %v306, %v544
      %v547 = vmul.f32 %v307, %v544
      %v548 = vmul.f32 %v308, %v544
      %v549 = vmul.f32 %v309, %v544
      %v550 = vmul.f32 %v310, %v544
      %v551 = vmul.f32 %v311, %v544
      %v552 = vmul.f32 %v312, %v544
      %v553 = vmul.f32 %v313, %v544
      %v554 = vmul.f32 %v314, %v544
      %v555 = vmul.f32 %v315, %v544
      %v556 = vmul.f32 %v316, %v544
      %v557 = vmul.f32 %v317, %v544
      %v558 = vmul.f32 %v318, %v544
      %v559 = vmul.f32 %v319, %v544
      %v560 = vmul.f32 %v320, %v544
      %v561 = vmul.f32 %v321, %v544
      %v562 = vmul.f32 %v322, %v544
      %v563 = vmul.f32 %v323, %v544
      %v564 = vmul.f32 %v324, %v544
      %v565 = vmul.f32 %v325, %v544
      %v566 = vmul.f32 %v326, %v544
      %v567 = vmul.f32 %v327, %v544
      %v568 = vmul.f32 %v328, %v544
      %v569 = vmul.f32 %v329, %v544
      %v570 = vmul.f32 %v330, %v544
      %v571 = vmul.f32 %v331, %v544
      %v572 = vmul.f32 %v332, %v544
      %v573 = vmul.f32 %v333, %v544
      %v574 = vmul.f32 %v334, %v544
      %v575 = vmul.f32 %v335, %v544
      %v576 = vmul.f32 %v336, %v544
      %v577 = vld [vmem:[%s2] sm:$0x1]
      %v579 = vlaneseq
      %v580 = vshrl.u32 %v579, 7
      %v581 = vsub.s32 0, %v580
      %v582 = vrot.slane %v577, %v581
      %v584 = vmul.f32 %v441, %v582
      %v585 = vmul.f32 %v442, %v582
      %v586 = vmul.f32 %v443, %v582
      %v587 = vmul.f32 %v444, %v582
      %v588 = vmul.f32 %v445, %v582
      %v589 = vmul.f32 %v446, %v582
      %v590 = vmul.f32 %v447, %v582
      %v591 = vmul.f32 %v448, %v582
      %v592 = vmul.f32 %v449, %v582
      %v593 = vmul.f32 %v450, %v582
      %v594 = vmul.f32 %v451, %v582
      %v595 = vmul.f32 %v452, %v582
      %v596 = vmul.f32 %v453, %v582
      %v597 = vmul.f32 %v454, %v582
      %v598 = vmul.f32 %v455, %v582
      %v599 = vmul.f32 %v456, %v582
      %v600 = vmul.f32 %v457, %v582
      %v601 = vmul.f32 %v458, %v582
      %v602 = vmul.f32 %v459, %v582
      %v603 = vmul.f32 %v460, %v582
      %v604 = vmul.f32 %v461, %v582
      %v605 = vmul.f32 %v462, %v582
      %v606 = vmul.f32 %v463, %v582
      %v607 = vmul.f32 %v464, %v582
      %v608 = vmul.f32 %v465, %v582
      %v609 = vmul.f32 %v466, %v582
      %v610 = vmul.f32 %v467, %v582
      %v611 = vmul.f32 %v468, %v582
      %v612 = vmul.f32 %v469, %v582
      %v613 = vmul.f32 %v470, %v582
      %v614 = vmul.f32 %v471, %v582
      %v615 = vmul.f32 %v472, %v582
      %v616 = vld [vmem:[%s3] sm:$0xff]
      %v617 = vld [vmem:[%s3 + $0x8] sm:$0xff]
      %618 = vxpose.xlu0.b32.start [1/16] %v584, 128
      %619 = vxpose.xlu0.b32.cont [2/16] %v585, 128
      %620 = vxpose.xlu0.b32.cont [3/16] %v586, 128
      %621 = vxpose.xlu0.b32.cont [4/16] %v587, 128
      %622 = vxpose.xlu0.b32.cont [5/16] %v588, 128
      %623 = vxpose.xlu0.b32.cont [6/16] %v589, 128
      %624 = vxpose.xlu0.b32.cont [7/16] %v590, 128
      %625 = vxpose.xlu0.b32.cont [8/16] %v591, 128
      %626 = vxpose.xlu0.b32.cont [9/16] %v592, 128
      %627 = vxpose.xlu0.b32.cont [10/16] %v593, 128
      %628 = vxpose.xlu0.b32.cont [11/16] %v594, 128
      %629 = vxpose.xlu0.b32.cont [12/16] %v595, 128
      %630 = vxpose.xlu0.b32.cont [13/16] %v596, 128
      %631 = vxpose.xlu0.b32.cont [14/16] %v597, 128
      %632 = vxpose.xlu0.b32.cont [15/16] %v598, 128
      %633 = vxpose.xlu0.b32.end [16/16] %v599, 128
      %v634 = vpop.trf.xlu0
      %v635 = vpop.trf.xlu0
      %v636 = vpop.trf.xlu0
      %v637 = vpop.trf.xlu0
      %v638 = vpop.trf.xlu0
      %v639 = vpop.trf.xlu0
      %v640 = vpop.trf.xlu0
      %v641 = vpop.trf.xlu0
      %v642 = vpop.trf.xlu0
      %v643 = vpop.trf.xlu0
      %v644 = vpop.trf.xlu0
      %v645 = vpop.trf.xlu0
      %v646 = vpop.trf.xlu0
      %v647 = vpop.trf.xlu0
      %v648 = vpop.trf.xlu0
      %v649 = vpop.trf.xlu0
      %650 = vxpose.xlu0.b32.start [1/16] %v600, 128
      %651 = vxpose.xlu0.b32.cont [2/16] %v601, 128
      %652 = vxpose.xlu0.b32.cont [3/16] %v602, 128
      %653 = vxpose.xlu0.b32.cont [4/16] %v603, 128
      %654 = vxpose.xlu0.b32.cont [5/16] %v604, 128
      %655 = vxpose.xlu0.b32.cont [6/16] %v605, 128
      %656 = vxpose.xlu0.b32.cont [7/16] %v606, 128
      %657 = vxpose.xlu0.b32.cont [8/16] %v607, 128
      %658 = vxpose.xlu0.b32.cont [9/16] %v608, 128
      %659 = vxpose.xlu0.b32.cont [10/16] %v609, 128
      %660 = vxpose.xlu0.b32.cont [11/16] %v610, 128
      %661 = vxpose.xlu0.b32.cont [12/16] %v611, 128
      %662 = vxpose.xlu0.b32.cont [13/16] %v612, 128
      %663 = vxpose.xlu0.b32.cont [14/16] %v613, 128
      %664 = vxpose.xlu0.b32.cont [15/16] %v614, 128
      %665 = vxpose.xlu0.b32.end [16/16] %v615, 128
      %v666 = vpop.trf.xlu0
      %v667 = vpop.trf.xlu0
      %v668 = vpop.trf.xlu0
      %v669 = vpop.trf.xlu0
      %v670 = vpop.trf.xlu0
      %v671 = vpop.trf.xlu0
      %v672 = vpop.trf.xlu0
      %v673 = vpop.trf.xlu0
      %v674 = vpop.trf.xlu0
      %v675 = vpop.trf.xlu0
      %v676 = vpop.trf.xlu0
      %v677 = vpop.trf.xlu0
      %v678 = vpop.trf.xlu0
      %v679 = vpop.trf.xlu0
      %v680 = vpop.trf.xlu0
      %v681 = vpop.trf.xlu0
      %714 = vrot.lane.b32.xlu0 %v545, 112
      %v715 = vpop.permute.xlu0 %714
      %716 = vrot.lane.b32.xlu0 %v546, 112
      %v717 = vpop.permute.xlu0 %716
      %718 = vrot.lane.b32.xlu0 %v547, 112
      %v719 = vpop.permute.xlu0 %718
      %720 = vrot.lane.b32.xlu0 %v548, 112
      %v721 = vpop.permute.xlu0 %720
      %722 = vrot.lane.b32.xlu0 %v549, 112
      %v723 = vpop.permute.xlu0 %722
      %724 = vrot.lane.b32.xlu0 %v550, 112
      %v725 = vpop.permute.xlu0 %724
      %726 = vrot.lane.b32.xlu0 %v551, 112
      %v727 = vpop.permute.xlu0 %726
      %728 = vrot.lane.b32.xlu0 %v552, 112
      %v729 = vpop.permute.xlu0 %728
      %730 = vrot.lane.b32.xlu0 %v553, 112
      %v731 = vpop.permute.xlu0 %730
      %732 = vrot.lane.b32.xlu0 %v554, 112
      %v733 = vpop.permute.xlu0 %732
      %734 = vrot.lane.b32.xlu0 %v555, 112
      %v735 = vpop.permute.xlu0 %734
      %736 = vrot.lane.b32.xlu0 %v556, 112
      %v737 = vpop.permute.xlu0 %736
      %738 = vrot.lane.b32.xlu0 %v557, 112
      %v739 = vpop.permute.xlu0 %738
      %740 = vrot.lane.b32.xlu0 %v558, 112
      %v741 = vpop.permute.xlu0 %740
      %742 = vrot.lane.b32.xlu0 %v559, 112
      %v743 = vpop.permute.xlu0 %742
      %744 = vrot.lane.b32.xlu0 %v560, 112
      %v745 = vpop.permute.xlu0 %744
      %746 = vrot.lane.b32.xlu0 %v561, 112
      %v747 = vpop.permute.xlu0 %746
      %748 = vrot.lane.b32.xlu0 %v562, 112
      %v749 = vpop.permute.xlu0 %748
      %750 = vrot.lane.b32.xlu0 %v563, 112
      %v751 = vpop.permute.xlu0 %750
      %752 = vrot.lane.b32.xlu0 %v564, 112
      %v753 = vpop.permute.xlu0 %752
      %754 = vrot.lane.b32.xlu0 %v565, 112
      %v755 = vpop.permute.xlu0 %754
      %756 = vrot.lane.b32.xlu0 %v566, 112
      %v757 = vpop.permute.xlu0 %756
      %758 = vrot.lane.b32.xlu0 %v567, 112
      %v759 = vpop.permute.xlu0 %758
      %760 = vrot.lane.b32.xlu0 %v568, 112
      %v761 = vpop.permute.xlu0 %760
      %762 = vrot.lane.b32.xlu0 %v569, 112
      %v763 = vpop.permute.xlu0 %762
      %764 = vrot.lane.b32.xlu0 %v570, 112
      %v765 = vpop.permute.xlu0 %764
      %766 = vrot.lane.b32.xlu0 %v571, 112
      %v767 = vpop.permute.xlu0 %766
      %768 = vrot.lane.b32.xlu0 %v572, 112
      %v769 = vpop.permute.xlu0 %768
      %770 = vrot.lane.b32.xlu0 %v573, 112
      %v771 = vpop.permute.xlu0 %770
      %772 = vrot.lane.b32.xlu0 %v574, 112
      %v773 = vpop.permute.xlu0 %772
      %774 = vrot.lane.b32.xlu0 %v575, 112
      %v775 = vpop.permute.xlu0 %774
      %776 = vrot.lane.b32.xlu0 %v576, 112
      %v777 = vpop.permute.xlu0 %776
      %810 = vmatprep.subr.mxu0 0.0
      %811 = vmatpush1.msra.mxu0 %v745
      %812 = vmatprep.subr.mxu0 0.0
      %813 = vmatpush1.msra.mxu0 %v743
      %814 = vmatprep.subr.mxu0 0.0
      %815 = vmatpush1.msra.mxu0 %v741
      %816 = vmatprep.subr.mxu0 0.0
      %817 = vmatpush1.msra.mxu0 %v739
      %818 = vmatprep.subr.mxu0 0.0
      %819 = vmatpush1.msra.mxu0 %v737
      %820 = vmatprep.subr.mxu0 0.0
      %821 = vmatpush1.msra.mxu0 %v735
      %822 = vmatprep.subr.mxu0 0.0
      %823 = vmatpush1.msra.mxu0 %v733
      %824 = vmatprep.subr.mxu0 0.0
      %825 = vmatpush1.msra.mxu0 %v731
      %826 = vmatprep.subr.mxu0 0.0
      %827 = vmatpush1.msra.mxu0 %v729
      %828 = vmatprep.subr.mxu0 0.0
      %829 = vmatpush1.msra.mxu0 %v727
      %830 = vmatprep.subr.mxu0 0.0
      %831 = vmatpush1.msra.mxu0 %v725
      %832 = vmatprep.subr.mxu0 0.0
      %833 = vmatpush1.msra.mxu0 %v723
      %834 = vmatprep.subr.mxu0 0.0
      %835 = vmatpush1.msra.mxu0 %v721
      %836 = vmatprep.subr.mxu0 0.0
      %837 = vmatpush1.msra.mxu0 %v719
      %838 = vmatprep.subr.mxu0 0.0
      %839 = vmatpush1.msra.mxu0 %v717
      %840 = vmatprep.subr.mxu0 0.0
      %841 = vmatpush1.msra.mxu0 %v715
      %842 = vmatprep.subr.mxu0 0.0
      %843 = vmatpush2.msra.mxu0 %v777
      %844 = vmatprep.subr.mxu0 0.0
      %845 = vmatpush2.msra.mxu0 %v775
      %846 = vmatprep.subr.mxu0 0.0
      %847 = vmatpush2.msra.mxu0 %v773
      %848 = vmatprep.subr.mxu0 0.0
      %849 = vmatpush2.msra.mxu0 %v771
      %850 = vmatprep.subr.mxu0 0.0
      %851 = vmatpush2.msra.mxu0 %v769
      %852 = vmatprep.subr.mxu0 0.0
      %853 = vmatpush2.msra.mxu0 %v767
      %854 = vmatprep.subr.mxu0 0.0
      %855 = vmatpush2.msra.mxu0 %v765
      %856 = vmatprep.subr.mxu0 0.0
      %857 = vmatpush2.msra.mxu0 %v763
      %858 = vmatprep.subr.mxu0 0.0
      %859 = vmatpush2.msra.mxu0 %v761
      %860 = vmatprep.subr.mxu0 0.0
      %861 = vmatpush2.msra.mxu0 %v759
      %862 = vmatprep.subr.mxu0 0.0
      %863 = vmatpush2.msra.mxu0 %v757
      %864 = vmatprep.subr.mxu0 0.0
      %865 = vmatpush2.msra.mxu0 %v755
      %866 = vmatprep.subr.mxu0 0.0
      %867 = vmatpush2.msra.mxu0 %v753
      %868 = vmatprep.subr.mxu0 0.0
      %869 = vmatpush2.msra.mxu0 %v751
      %870 = vmatprep.subr.mxu0 0.0
      %871 = vmatpush2.msra.mxu0 %v749
      %872 = vmatprep.subr.mxu0 0.0
      %873 = vmatpush2.msra.mxu0 %v747
      %874 = vmatprep.mubr.f32.mxu0 %v666
      %875 = vmatmul.mubr.f32.gmra.mxu0 %v634
      %v876 = vpop.f32.mrf.mxu0
      %v877 = vadd.f32 %v616, %v876
      %v878 = vpop.f32.mrf.mxu0
      %879 = vmatprep.mubr.f32.mxu0 %v667
      %880 = vmatmul.mubr.f32.gmra.mxu0 %v635
      %v881 = vpop.f32.mrf.mxu0
      %v882 = vadd.f32 %v617, %v881
      %v883 = vpop.f32.mrf.mxu0
      %884 = vdwg.mxu0
      %v885 = vsel %vm369, %v877, -inf
      %886 = vmax.xlane.f32.xlu0 %v885
      %v887 = vpop.xlane.xlu0 %886
      %v888 = vsel %vm369, %v882, -inf
      %889 = vmax.xlane.f32.xlu0 %v888
      %v890 = vpop.xlane.xlu0 %889
      %v891 = vsub.f32 %v877, %v887
      %v892 = vsub.f32 %v882, %v890
      %v893 = vmul.f32 %v891, 1.442695
      %v894 = vpow.pop %v893
      %v895 = vmul.f32 %v892, 1.442695
      %v896 = vpow.pop %v895
      %v897 = vsel %vm369, %v894, 0.0
      %898 = vadd.xlane.f32.xlu0 %v897
      %v899 = vpop.xlane.xlu0 %898
      %v900 = vsel %vm369, %v896, 0.0
      %901 = vadd.xlane.f32.xlu0 %v900
      %v902 = vpop.xlane.xlu0 %901
      %v903 = vrcp.pop %v899
      %v904 = vrcp.pop %v902
      %v905 = vmul.f32 %v894, %v903
      %v906 = vmul.f32 %v896, %v904
      %939 = vrot.lane.b32.xlu0 %v305, 96
      %v940 = vpop.permute.xlu0 %939
      %941 = vrot.lane.b32.xlu0 %v306, 96
      %v942 = vpop.permute.xlu0 %941
      %943 = vrot.lane.b32.xlu0 %v307, 96
      %v944 = vpop.permute.xlu0 %943
      %945 = vrot.lane.b32.xlu0 %v308, 96
      %v946 = vpop.permute.xlu0 %945
      %947 = vrot.lane.b32.xlu0 %v309, 96
      %v948 = vpop.permute.xlu0 %947
      %949 = vrot.lane.b32.xlu0 %v310, 96
      %v950 = vpop.permute.xlu0 %949
      %951 = vrot.lane.b32.xlu0 %v311, 96
      %v952 = vpop.permute.xlu0 %951
      %953 = vrot.lane.b32.xlu0 %v312, 96
      %v954 = vpop.permute.xlu0 %953
      %955 = vrot.lane.b32.xlu0 %v313, 96
      %v956 = vpop.permute.xlu0 %955
      %957 = vrot.lane.b32.xlu0 %v314, 96
      %v958 = vpop.permute.xlu0 %957
      %959 = vrot.lane.b32.xlu0 %v315, 96
      %v960 = vpop.permute.xlu0 %959
      %961 = vrot.lane.b32.xlu0 %v316, 96
      %v962 = vpop.permute.xlu0 %961
      %963 = vrot.lane.b32.xlu0 %v317, 96
      %v964 = vpop.permute.xlu0 %963
      %965 = vrot.lane.b32.xlu0 %v318, 96
      %v966 = vpop.permute.xlu0 %965
      %967 = vrot.lane.b32.xlu0 %v319, 96
      %v968 = vpop.permute.xlu0 %967
      %969 = vrot.lane.b32.xlu0 %v320, 96
      %v970 = vpop.permute.xlu0 %969
      %971 = vrot.lane.b32.xlu0 %v321, 96
      %v972 = vpop.permute.xlu0 %971
      %973 = vrot.lane.b32.xlu0 %v322, 96
      %v974 = vpop.permute.xlu0 %973
      %975 = vrot.lane.b32.xlu0 %v323, 96
      %v976 = vpop.permute.xlu0 %975
      %977 = vrot.lane.b32.xlu0 %v324, 96
      %v978 = vpop.permute.xlu0 %977
      %979 = vrot.lane.b32.xlu0 %v325, 96
      %v980 = vpop.permute.xlu0 %979
      %981 = vrot.lane.b32.xlu0 %v326, 96
      %v982 = vpop.permute.xlu0 %981
      %983 = vrot.lane.b32.xlu0 %v327, 96
      %v984 = vpop.permute.xlu0 %983
      %985 = vrot.lane.b32.xlu0 %v328, 96
      %v986 = vpop.permute.xlu0 %985
      %987 = vrot.lane.b32.xlu0 %v329, 96
      %v988 = vpop.permute.xlu0 %987
      %989 = vrot.lane.b32.xlu0 %v330, 96
      %v990 = vpop.permute.xlu0 %989
      %991 = vrot.lane.b32.xlu0 %v331, 96
      %v992 = vpop.permute.xlu0 %991
      %993 = vrot.lane.b32.xlu0 %v332, 96
      %v994 = vpop.permute.xlu0 %993
      %995 = vrot.lane.b32.xlu0 %v333, 96
      %v996 = vpop.permute.xlu0 %995
      %997 = vrot.lane.b32.xlu0 %v334, 96
      %v998 = vpop.permute.xlu0 %997
      %999 = vrot.lane.b32.xlu0 %v335, 96
      %v1000 = vpop.permute.xlu0 %999
      %1001 = vrot.lane.b32.xlu0 %v336, 96
      %v1002 = vpop.permute.xlu0 %1001
      %v1003 = vsel %vm369, %v940, 0
      %v1005 = vsel %vm369, %v942, 0
      %v1007 = vsel %vm369, %v944, 0
      %v1009 = vsel %vm369, %v946, 0
      %v1011 = vsel %vm369, %v948, 0
      %v1013 = vsel %vm369, %v950, 0
      %v1015 = vsel %vm369, %v952, 0
      %v1017 = vsel %vm369, %v954, 0
      %v1019 = vsel %vm369, %v956, 0
      %v1021 = vsel %vm369, %v958, 0
      %v1023 = vsel %vm369, %v960, 0
      %v1025 = vsel %vm369, %v962, 0
      %v1027 = vsel %vm369, %v964, 0
      %v1029 = vsel %vm369, %v966, 0
      %v1031 = vsel %vm369, %v968, 0
      %v1033 = vsel %vm369, %v970, 0
      %v1035 = vsel %vm369, %v972, 0
      %v1037 = vsel %vm369, %v974, 0
      %v1039 = vsel %vm369, %v976, 0
      %v1041 = vsel %vm369, %v978, 0
      %v1043 = vsel %vm369, %v980, 0
      %v1045 = vsel %vm369, %v982, 0
      %v1047 = vsel %vm369, %v984, 0
      %v1049 = vsel %vm369, %v986, 0
      %v1051 = vsel %vm369, %v988, 0
      %v1053 = vsel %vm369, %v990, 0
      %v1055 = vsel %vm369, %v992, 0
      %v1057 = vsel %vm369, %v994, 0
      %v1059 = vsel %vm369, %v996, 0
      %v1061 = vsel %vm369, %v998, 0
      %v1063 = vsel %vm369, %v1000, 0
      %v1065 = vsel %vm369, %v1002, 0
      %v1068 = vsel %vm369, %v905, 0
      %v1071 = vsel %vm369, %v906, 0
      %1073 = vmatprep.subr.mxu0 0.0
      %1074 = vmatpush1.xpose.msra.mxu0 0.0
      %1075 = vmatprep.subr.mxu0 0.0
      %1076 = vmatpush1.xpose.msra.mxu0 0.0
      %1077 = vmatprep.subr.mxu0 0.0
      %1078 = vmatpush1.xpose.msra.mxu0 0.0
      %1079 = vmatprep.subr.mxu0 0.0
      %1080 = vmatpush1.xpose.msra.mxu0 0.0
      %1081 = vmatprep.subr.mxu0 0.0
      %1082 = vmatpush1.xpose.msra.mxu0 0.0
      %1083 = vmatprep.subr.mxu0 0.0
      %1084 = vmatpush1.xpose.msra.mxu0 0.0
      %1085 = vmatprep.subr.mxu0 0.0
      %1086 = vmatpush1.xpose.msra.mxu0 0.0
      %1087 = vmatprep.subr.mxu0 0.0
      %1088 = vmatpush1.xpose.msra.mxu0 0.0
      %1089 = vmatprep.subr.mxu0 0.0
      %1090 = vmatpush1.xpose.msra.mxu0 0.0
      %1091 = vmatprep.subr.mxu0 0.0
      %1092 = vmatpush1.xpose.msra.mxu0 0.0
      %1093 = vmatprep.subr.mxu0 0.0
      %1094 = vmatpush1.xpose.msra.mxu0 0.0
      %1095 = vmatprep.subr.mxu0 0.0
      %1096 = vmatpush1.xpose.msra.mxu0 0.0
      %1097 = vmatprep.subr.mxu0 0.0
      %1098 = vmatpush1.xpose.msra.mxu0 0.0
      %1099 = vmatprep.subr.mxu0 0.0
      %1100 = vmatpush1.xpose.msra.mxu0 0.0
      %1101 = vmatprep.subr.mxu0 0.0
      %1102 = vmatpush1.xpose.msra.mxu0 %v1071
      %1103 = vmatprep.subr.mxu0 0.0
      %1104 = vmatpush1.xpose.msra.mxu0 %v1068
      %1105 = vmatprep.subr.mxu0 0.0
      %1106 = vmatpush2.xpose.msra.mxu0 0.0
      %1107 = vmatprep.subr.mxu0 0.0
      %1108 = vmatpush2.xpose.msra.mxu0 0.0
      %1109 = vmatprep.subr.mxu0 0.0
      %1110 = vmatpush2.xpose.msra.mxu0 0.0
      %1111 = vmatprep.subr.mxu0 0.0
      %1112 = vmatpush2.xpose.msra.mxu0 0.0
      %1113 = vmatprep.subr.mxu0 0.0
      %1114 = vmatpush2.xpose.msra.mxu0 0.0
      %1115 = vmatprep.subr.mxu0 0.0
      %1116 = vmatpush2.xpose.msra.mxu0 0.0
      %1117 = vmatprep.subr.mxu0 0.0
      %1118 = vmatpush2.xpose.msra.mxu0 0.0
      %1119 = vmatprep.subr.mxu0 0.0
      %1120 = vmatpush2.xpose.msra.mxu0 0.0
      %1121 = vmatprep.subr.mxu0 0.0
      %1122 = vmatpush2.xpose.msra.mxu0 0.0
      %1123 = vmatprep.subr.mxu0 0.0
      %1124 = vmatpush2.xpose.msra.mxu0 0.0
      %1125 = vmatprep.subr.mxu0 0.0
      %1126 = vmatpush2.xpose.msra.mxu0 0.0
      %1127 = vmatprep.subr.mxu0 0.0
      %1128 = vmatpush2.xpose.msra.mxu0 0.0
      %1129 = vmatprep.subr.mxu0 0.0
      %1130 = vmatpush2.xpose.msra.mxu0 0.0
      %1131 = vmatprep.subr.mxu0 0.0
      %1132 = vmatpush2.xpose.msra.mxu0 0.0
      %1133 = vmatprep.subr.mxu0 0.0
      %1134 = vmatpush2.xpose.msra.mxu0 0.0
      %1135 = vmatprep.subr.mxu0 0.0
      %1136 = vmatpush2.xpose.msra.mxu0 0.0
      %1137 = vmatprep.mubr.f32.mxu0 0.0
      %1138 = vmatmul.mubr.f32.gmra.mxu0 %v1003
      %v1139 = vpop.f32.mrf.mxu0
      %v1140 = vadd.f32 0.0, %v1139
      %v1141 = vpop.f32.mrf.mxu0
      %1142 = vmatprep.mubr.f32.mxu0 0.0
      %1143 = vmatmul.mubr.f32.gmra.mxu0 %v1005
      %v1144 = vpop.f32.mrf.mxu0
      %v1145 = vadd.f32 0.0, %v1144
      %v1146 = vpop.f32.mrf.mxu0
      %1147 = vmatprep.mubr.f32.mxu0 0.0
      %1148 = vmatmul.mubr.f32.gmra.mxu0 %v1007
      %v1149 = vpop.f32.mrf.mxu0
      %v1150 = vadd.f32 0.0, %v1149
      %v1151 = vpop.f32.mrf.mxu0
      %1152 = vmatprep.mubr.f32.mxu0 0.0
      %1153 = vmatmul.mubr.f32.gmra.mxu0 %v1009
      %v1154 = vpop.f32.mrf.mxu0
      %v1155 = vadd.f32 0.0, %v1154
      %v1156 = vpop.f32.mrf.mxu0
      %1157 = vmatprep.mubr.f32.mxu0 0.0
      %1158 = vmatmul.mubr.f32.gmra.mxu0 %v1011
      %v1159 = vpop.f32.mrf.mxu0
      %v1160 = vadd.f32 0.0, %v1159
      %v1161 = vpop.f32.mrf.mxu0
      %1162 = vmatprep.mubr.f32.mxu0 0.0
      %1163 = vmatmul.mubr.f32.gmra.mxu0 %v1013
      %v1164 = vpop.f32.mrf.mxu0
      %v1165 = vadd.f32 0.0, %v1164
      %v1166 = vpop.f32.mrf.mxu0
      %1167 = vmatprep.mubr.f32.mxu0 0.0
      %1168 = vmatmul.mubr.f32.gmra.mxu0 %v1015
      %v1169 = vpop.f32.mrf.mxu0
      %v1170 = vadd.f32 0.0, %v1169
      %v1171 = vpop.f32.mrf.mxu0
      %1172 = vmatprep.mubr.f32.mxu0 0.0
      %1173 = vmatmul.mubr.f32.gmra.mxu0 %v1017
      %v1174 = vpop.f32.mrf.mxu0
      %v1175 = vadd.f32 0.0, %v1174
      %v1176 = vpop.f32.mrf.mxu0
      %1177 = vmatprep.mubr.f32.mxu0 0.0
      %1178 = vmatmul.mubr.f32.gmra.mxu0 %v1019
      %v1179 = vpop.f32.mrf.mxu0
      %v1180 = vadd.f32 0.0, %v1179
      %v1181 = vpop.f32.mrf.mxu0
      %1182 = vmatprep.mubr.f32.mxu0 0.0
      %1183 = vmatmul.mubr.f32.gmra.mxu0 %v1021
      %v1184 = vpop.f32.mrf.mxu0
      %v1185 = vadd.f32 0.0, %v1184
      %v1186 = vpop.f32.mrf.mxu0
      %1187 = vmatprep.mubr.f32.mxu0 0.0
      %1188 = vmatmul.mubr.f32.gmra.mxu0 %v1023
      %v1189 = vpop.f32.mrf.mxu0
      %v1190 = vadd.f32 0.0, %v1189
      %v1191 = vpop.f32.mrf.mxu0
      %1192 = vmatprep.mubr.f32.mxu0 0.0
      %1193 = vmatmul.mubr.f32.gmra.mxu0 %v1025
      %v1194 = vpop.f32.mrf.mxu0
      %v1195 = vadd.f32 0.0, %v1194
      %v1196 = vpop.f32.mrf.mxu0
      %1197 = vmatprep.mubr.f32.mxu0 0.0
      %1198 = vmatmul.mubr.f32.gmra.mxu0 %v1027
      %v1199 = vpop.f32.mrf.mxu0
      %v1200 = vadd.f32 0.0, %v1199
      %v1201 = vpop.f32.mrf.mxu0
      %1202 = vmatprep.mubr.f32.mxu0 0.0
      %1203 = vmatmul.mubr.f32.gmra.mxu0 %v1029
      %v1204 = vpop.f32.mrf.mxu0
      %v1205 = vadd.f32 0.0, %v1204
      %v1206 = vpop.f32.mrf.mxu0
      %1207 = vmatprep.mubr.f32.mxu0 0.0
      %1208 = vmatmul.mubr.f32.gmra.mxu0 %v1031
      %v1209 = vpop.f32.mrf.mxu0
      %v1210 = vadd.f32 0.0, %v1209
      %v1211 = vpop.f32.mrf.mxu0
      %1212 = vmatprep.mubr.f32.mxu0 0.0
      %1213 = vmatmul.mubr.f32.gmra.mxu0 %v1033
      %v1214 = vpop.f32.mrf.mxu0
      %v1215 = vadd.f32 0.0, %v1214
      %v1216 = vpop.f32.mrf.mxu0
      %1217 = vmatprep.mubr.f32.mxu0 0.0
      %1218 = vmatmul.mubr.f32.gmra.mxu0 %v1035
      %v1219 = vpop.f32.mrf.mxu0
      %v1220 = vadd.f32 0.0, %v1219
      %v1221 = vpop.f32.mrf.mxu0
      %1222 = vmatprep.mubr.f32.mxu0 0.0
      %1223 = vmatmul.mubr.f32.gmra.mxu0 %v1037
      %v1224 = vpop.f32.mrf.mxu0
      %v1225 = vadd.f32 0.0, %v1224
      %v1226 = vpop.f32.mrf.mxu0
      %1227 = vmatprep.mubr.f32.mxu0 0.0
      %1228 = vmatmul.mubr.f32.gmra.mxu0 %v1039
      %v1229 = vpop.f32.mrf.mxu0
      %v1230 = vadd.f32 0.0, %v1229
      %v1231 = vpop.f32.mrf.mxu0
      %1232 = vmatprep.mubr.f32.mxu0 0.0
      %1233 = vmatmul.mubr.f32.gmra.mxu0 %v1041
      %v1234 = vpop.f32.mrf.mxu0
      %v1235 = vadd.f32 0.0, %v1234
      %v1236 = vpop.f32.mrf.mxu0
      %1237 = vmatprep.mubr.f32.mxu0 0.0
      %1238 = vmatmul.mubr.f32.gmra.mxu0 %v1043
      %v1239 = vpop.f32.mrf.mxu0
      %v1240 = vadd.f32 0.0, %v1239
      %v1241 = vpop.f32.mrf.mxu0
      %1242 = vmatprep.mubr.f32.mxu0 0.0
      %1243 = vmatmul.mubr.f32.gmra.mxu0 %v1045
      %v1244 = vpop.f32.mrf.mxu0
      %v1245 = vadd.f32 0.0, %v1244
      %v1246 = vpop.f32.mrf.mxu0
      %1247 = vmatprep.mubr.f32.mxu0 0.0
      %1248 = vmatmul.mubr.f32.gmra.mxu0 %v1047
      %v1249 = vpop.f32.mrf.mxu0
      %v1250 = vadd.f32 0.0, %v1249
      %v1251 = vpop.f32.mrf.mxu0
      %1252 = vmatprep.mubr.f32.mxu0 0.0
      %1253 = vmatmul.mubr.f32.gmra.mxu0 %v1049
      %v1254 = vpop.f32.mrf.mxu0
      %v1255 = vadd.f32 0.0, %v1254
      %v1256 = vpop.f32.mrf.mxu0
      %1257 = vmatprep.mubr.f32.mxu0 0.0
      %1258 = vmatmul.mubr.f32.gmra.mxu0 %v1051
      %v1259 = vpop.f32.mrf.mxu0
      %v1260 = vadd.f32 0.0, %v1259
      %v1261 = vpop.f32.mrf.mxu0
      %1262 = vmatprep.mubr.f32.mxu0 0.0
      %1263 = vmatmul.mubr.f32.gmra.mxu0 %v1053
      %v1264 = vpop.f32.mrf.mxu0
      %v1265 = vadd.f32 0.0, %v1264
      %v1266 = vpop.f32.mrf.mxu0
      %1267 = vmatprep.mubr.f32.mxu0 0.0
      %1268 = vmatmul.mubr.f32.gmra.mxu0 %v1055
      %v1269 = vpop.f32.mrf.mxu0
      %v1270 = vadd.f32 0.0, %v1269
      %v1271 = vpop.f32.mrf.mxu0
      %1272 = vmatprep.mubr.f32.mxu0 0.0
      %1273 = vmatmul.mubr.f32.gmra.mxu0 %v1057
      %v1274 = vpop.f32.mrf.mxu0
      %v1275 = vadd.f32 0.0, %v1274
      %v1276 = vpop.f32.mrf.mxu0
      %1277 = vmatprep.mubr.f32.mxu0 0.0
      %1278 = vmatmul.mubr.f32.gmra.mxu0 %v1059
      %v1279 = vpop.f32.mrf.mxu0
      %v1280 = vadd.f32 0.0, %v1279
      %v1281 = vpop.f32.mrf.mxu0
      %1282 = vmatprep.mubr.f32.mxu0 0.0
      %1283 = vmatmul.mubr.f32.gmra.mxu0 %v1061
      %v1284 = vpop.f32.mrf.mxu0
      %v1285 = vadd.f32 0.0, %v1284
      %v1286 = vpop.f32.mrf.mxu0
      %1287 = vmatprep.mubr.f32.mxu0 0.0
      %1288 = vmatmul.mubr.f32.gmra.mxu0 %v1063
      %v1289 = vpop.f32.mrf.mxu0
      %v1290 = vadd.f32 0.0, %v1289
      %v1291 = vpop.f32.mrf.mxu0
      %1292 = vmatprep.mubr.f32.mxu0 0.0
      %1293 = vmatmul.mubr.f32.gmra.mxu0 %v1065
      %v1294 = vpop.f32.mrf.mxu0
      %v1295 = vadd.f32 0.0, %v1294
      %v1296 = vpop.f32.mrf.mxu0
      %1297 = vdwg.mxu0
      %v1298 = vpack.c.bf16 %v1145, %v1140
      %v1299 = vpack.c.bf16 %v1155, %v1150
      %v1300 = vpack.c.bf16 %v1165, %v1160
      %v1301 = vpack.c.bf16 %v1175, %v1170
      %v1302 = vpack.c.bf16 %v1185, %v1180
      %v1303 = vpack.c.bf16 %v1195, %v1190
      %v1304 = vpack.c.bf16 %v1205, %v1200
      %v1305 = vpack.c.bf16 %v1215, %v1210
      %v1306 = vpack.c.bf16 %v1225, %v1220
      %v1307 = vpack.c.bf16 %v1235, %v1230
      %v1308 = vpack.c.bf16 %v1245, %v1240
      %v1309 = vpack.c.bf16 %v1255, %v1250
      %v1310 = vpack.c.bf16 %v1265, %v1260
      %v1311 = vpack.c.bf16 %v1275, %v1270
      %v1312 = vpack.c.bf16 %v1285, %v1280
      %v1313 = vpack.c.bf16 %v1295, %v1290
      %v1314 = vld [vmem:[%s4] sm:$0xf]
      %v1315 = vld [vmem:[%s4 + $0x4] sm:$0xf]
      %v1318 = vunpack.c.l.b16 %v1314
      %v1319 = vunpack.c.l.b16 %v1315
      %v1320 = vpack.c.b16 %v1319, %v1318
      %v1323 = vsel %vm369, %v1298, 0
      %v1326 = vsel %vm369, %v1299, 0
      %v1329 = vsel %vm369, %v1300, 0
      %v1332 = vsel %vm369, %v1301, 0
      %v1335 = vsel %vm369, %v1302, 0
      %v1338 = vsel %vm369, %v1303, 0
      %v1341 = vsel %vm369, %v1304, 0
      %v1344 = vsel %vm369, %v1305, 0
      %v1347 = vsel %vm369, %v1306, 0
      %v1350 = vsel %vm369, %v1307, 0
      %v1353 = vsel %vm369, %v1308, 0
      %v1356 = vsel %vm369, %v1309, 0
      %v1359 = vsel %vm369, %v1310, 0
      %v1362 = vsel %vm369, %v1311, 0
      %v1365 = vsel %vm369, %v1312, 0
      %v1368 = vsel %vm369, %v1313, 0
      %1370 = vmatprep.subr.bf16.mxu0 0
      %1371 = vmatpush1.bf16.msra.mxu0 0
      %1372 = vmatprep.subr.bf16.mxu0 0
      %1373 = vmatpush1.bf16.msra.mxu0 0
      %1374 = vmatprep.subr.bf16.mxu0 0
      %1375 = vmatpush1.bf16.msra.mxu0 0
      %1376 = vmatprep.subr.bf16.mxu0 0
      %1377 = vmatpush1.bf16.msra.mxu0 0
      %1378 = vmatprep.subr.bf16.mxu0 0
      %1379 = vmatpush1.bf16.msra.mxu0 0
      %1380 = vmatprep.subr.bf16.mxu0 0
      %1381 = vmatpush1.bf16.msra.mxu0 0
      %1382 = vmatprep.subr.bf16.mxu0 0
      %1383 = vmatpush1.bf16.msra.mxu0 0
      %1384 = vmatprep.subr.bf16.mxu0 0
      %1385 = vmatpush1.bf16.msra.mxu0 %v1320
      %1386 = vmatprep.subr.bf16.mxu0 0
      %1387 = vmatpush2.bf16.msra.mxu0 0
      %1388 = vmatprep.subr.bf16.mxu0 0
      %1389 = vmatpush2.bf16.msra.mxu0 0
      %1390 = vmatprep.subr.bf16.mxu0 0
      %1391 = vmatpush2.bf16.msra.mxu0 0
      %1392 = vmatprep.subr.bf16.mxu0 0
      %1393 = vmatpush2.bf16.msra.mxu0 0
      %1394 = vmatprep.subr.bf16.mxu0 0
      %1395 = vmatpush2.bf16.msra.mxu0 0
      %1396 = vmatprep.subr.bf16.mxu0 0
      %1397 = vmatpush2.bf16.msra.mxu0 0
      %1398 = vmatprep.subr.bf16.mxu0 0
      %1399 = vmatpush2.bf16.msra.mxu0 0
      %1400 = vmatprep.subr.bf16.mxu0 0
      %1401 = vmatpush2.bf16.msra.mxu0 0
      %1402 = vmatprep.mubr.bf16.mxu0 0
      %1403 = vmatmul.mubr.bf16.gmra.mxu0 %v1323
      %v1404 = vpop.f32.mrf.mxu0
      %v1405 = vadd.f32 0.0, %v1404
      %v1406 = vpop.f32.mrf.mxu0
      %v1407 = vpop.f32.mrf.mxu0
      %v1408 = vadd.f32 0.0, %v1407
      %v1409 = vpop.f32.mrf.mxu0
      %1410 = vmatprep.mubr.bf16.mxu0 0
      %1411 = vmatmul.mubr.bf16.gmra.mxu0 %v1326
      %v1412 = vpop.f32.mrf.mxu0
      %v1413 = vadd.f32 0.0, %v1412
      %v1414 = vpop.f32.mrf.mxu0
      %v1415 = vpop.f32.mrf.mxu0
      %v1416 = vadd.f32 0.0, %v1415
      %v1417 = vpop.f32.mrf.mxu0
      %1418 = vmatprep.mubr.bf16.mxu0 0
      %1419 = vmatmul.mubr.bf16.gmra.mxu0 %v1329
      %v1420 = vpop.f32.mrf.mxu0
      %v1421 = vadd.f32 0.0, %v1420
      %v1422 = vpop.f32.mrf.mxu0
      %v1423 = vpop.f32.mrf.mxu0
      %v1424 = vadd.f32 0.0, %v1423
      %v1425 = vpop.f32.mrf.mxu0
      %1426 = vmatprep.mubr.bf16.mxu0 0
      %1427 = vmatmul.mubr.bf16.gmra.mxu0 %v1332
      %v1428 = vpop.f32.mrf.mxu0
      %v1429 = vadd.f32 0.0, %v1428
      %v1430 = vpop.f32.mrf.mxu0
      %v1431 = vpop.f32.mrf.mxu0
      %v1432 = vadd.f32 0.0, %v1431
      %v1433 = vpop.f32.mrf.mxu0
      %1434 = vmatprep.mubr.bf16.mxu0 0
      %1435 = vmatmul.mubr.bf16.gmra.mxu0 %v1335
      %v1436 = vpop.f32.mrf.mxu0
      %v1437 = vadd.f32 0.0, %v1436
      %v1438 = vpop.f32.mrf.mxu0
      %v1439 = vpop.f32.mrf.mxu0
      %v1440 = vadd.f32 0.0, %v1439
      %v1441 = vpop.f32.mrf.mxu0
      %1442 = vmatprep.mubr.bf16.mxu0 0
      %1443 = vmatmul.mubr.bf16.gmra.mxu0 %v1338
      %v1444 = vpop.f32.mrf.mxu0
      %v1445 = vadd.f32 0.0, %v1444
      %v1446 = vpop.f32.mrf.mxu0
      %v1447 = vpop.f32.mrf.mxu0
      %v1448 = vadd.f32 0.0, %v1447
      %v1449 = vpop.f32.mrf.mxu0
      %1450 = vmatprep.mubr.bf16.mxu0 0
      %1451 = vmatmul.mubr.bf16.gmra.mxu0 %v1341
      %v1452 = vpop.f32.mrf.mxu0
      %v1453 = vadd.f32 0.0, %v1452
      %v1454 = vpop.f32.mrf.mxu0
      %v1455 = vpop.f32.mrf.mxu0
      %v1456 = vadd.f32 0.0, %v1455
      %v1457 = vpop.f32.mrf.mxu0
      %1458 = vmatprep.mubr.bf16.mxu0 0
      %1459 = vmatmul.mubr.bf16.gmra.mxu0 %v1344
      %v1460 = vpop.f32.mrf.mxu0
      %v1461 = vadd.f32 0.0, %v1460
      %v1462 = vpop.f32.mrf.mxu0
      %v1463 = vpop.f32.mrf.mxu0
      %v1464 = vadd.f32 0.0, %v1463
      %v1465 = vpop.f32.mrf.mxu0
      %1466 = vmatprep.mubr.bf16.mxu0 0
      %1467 = vmatmul.mubr.bf16.gmra.mxu0 %v1347
      %v1468 = vpop.f32.mrf.mxu0
      %v1469 = vadd.f32 0.0, %v1468
      %v1470 = vpop.f32.mrf.mxu0
      %v1471 = vpop.f32.mrf.mxu0
      %v1472 = vadd.f32 0.0, %v1471
      %v1473 = vpop.f32.mrf.mxu0
      %1474 = vmatprep.mubr.bf16.mxu0 0
      %1475 = vmatmul.mubr.bf16.gmra.mxu0 %v1350
      %v1476 = vpop.f32.mrf.mxu0
      %v1477 = vadd.f32 0.0, %v1476
      %v1478 = vpop.f32.mrf.mxu0
      %v1479 = vpop.f32.mrf.mxu0
      %v1480 = vadd.f32 0.0, %v1479
      %v1481 = vpop.f32.mrf.mxu0
      %1482 = vmatprep.mubr.bf16.mxu0 0
      %1483 = vmatmul.mubr.bf16.gmra.mxu0 %v1353
      %v1484 = vpop.f32.mrf.mxu0
      %v1485 = vadd.f32 0.0, %v1484
      %v1486 = vpop.f32.mrf.mxu0
      %v1487 = vpop.f32.mrf.mxu0
      %v1488 = vadd.f32 0.0, %v1487
      %v1489 = vpop.f32.mrf.mxu0
      %1490 = vmatprep.mubr.bf16.mxu0 0
      %1491 = vmatmul.mubr.bf16.gmra.mxu0 %v1356
      %v1492 = vpop.f32.mrf.mxu0
      %v1493 = vadd.f32 0.0, %v1492
      %v1494 = vpop.f32.mrf.mxu0
      %v1495 = vpop.f32.mrf.mxu0
      %v1496 = vadd.f32 0.0, %v1495
      %v1497 = vpop.f32.mrf.mxu0
      %1498 = vmatprep.mubr.bf16.mxu0 0
      %1499 = vmatmul.mubr.bf16.gmra.mxu0 %v1359
      %v1500 = vpop.f32.mrf.mxu0
      %v1501 = vadd.f32 0.0, %v1500
      %v1502 = vpop.f32.mrf.mxu0
      %v1503 = vpop.f32.mrf.mxu0
      %v1504 = vadd.f32 0.0, %v1503
      %v1505 = vpop.f32.mrf.mxu0
      %1506 = vmatprep.mubr.bf16.mxu0 0
      %1507 = vmatmul.mubr.bf16.gmra.mxu0 %v1362
      %v1508 = vpop.f32.mrf.mxu0
      %v1509 = vadd.f32 0.0, %v1508
      %v1510 = vpop.f32.mrf.mxu0
      %v1511 = vpop.f32.mrf.mxu0
      %v1512 = vadd.f32 0.0, %v1511
      %v1513 = vpop.f32.mrf.mxu0
      %1514 = vmatprep.mubr.bf16.mxu0 0
      %1515 = vmatmul.mubr.bf16.gmra.mxu0 %v1365
      %v1516 = vpop.f32.mrf.mxu0
      %v1517 = vadd.f32 0.0, %v1516
      %v1518 = vpop.f32.mrf.mxu0
      %v1519 = vpop.f32.mrf.mxu0
      %v1520 = vadd.f32 0.0, %v1519
      %v1521 = vpop.f32.mrf.mxu0
      %1522 = vmatprep.mubr.bf16.mxu0 0
      %1523 = vmatmul.mubr.bf16.gmra.mxu0 %v1368
      %v1524 = vpop.f32.mrf.mxu0
      %v1525 = vadd.f32 0.0, %v1524
      %v1526 = vpop.f32.mrf.mxu0
      %v1527 = vpop.f32.mrf.mxu0
      %v1528 = vadd.f32 0.0, %v1527
      %v1529 = vpop.f32.mrf.mxu0
      %1530 = vdwg.mxu0
      %v1531 = vld [vmem:[%s266] sm:$0xff]
      %v1532 = vld [vmem:[%s266 + $0x8] sm:$0xff]
      %v1533 = vld [vmem:[%s266 + $0x10] sm:$0xff]
      %v1534 = vld [vmem:[%s266 + $0x18] sm:$0xff]
      %v1535 = vld [vmem:[%s266 + $0x20] sm:$0xff]
      %v1536 = vld [vmem:[%s266 + $0x28] sm:$0xff]
      %v1537 = vld [vmem:[%s266 + $0x30] sm:$0xff]
      %v1538 = vld [vmem:[%s266 + $0x38] sm:$0xff]
      %v1539 = vld [vmem:[%s266 + $0x40] sm:$0xff]
      %v1540 = vld [vmem:[%s266 + $0x48] sm:$0xff]
      %v1541 = vld [vmem:[%s266 + $0x50] sm:$0xff]
      %v1542 = vld [vmem:[%s266 + $0x58] sm:$0xff]
      %v1543 = vld [vmem:[%s266 + $0x60] sm:$0xff]
      %v1544 = vld [vmem:[%s266 + $0x68] sm:$0xff]
      %v1545 = vld [vmem:[%s266 + $0x70] sm:$0xff]
      %v1546 = vld [vmem:[%s266 + $0x78] sm:$0xff]
      %v1547 = vld [vmem:[%s266 + $0x80] sm:$0xff]
      %v1548 = vld [vmem:[%s266 + $0x88] sm:$0xff]
      %v1549 = vld [vmem:[%s266 + $0x90] sm:$0xff]
      %v1550 = vld [vmem:[%s266 + $0x98] sm:$0xff]
      %v1551 = vld [vmem:[%s266 + $0xa0] sm:$0xff]
      %v1552 = vld [vmem:[%s266 + $0xa8] sm:$0xff]
      %v1553 = vld [vmem:[%s266 + $0xb0] sm:$0xff]
      %v1554 = vld [vmem:[%s266 + $0xb8] sm:$0xff]
      %v1555 = vld [vmem:[%s266 + $0xc0] sm:$0xff]
      %v1556 = vld [vmem:[%s266 + $0xc8] sm:$0xff]
      %v1557 = vld [vmem:[%s266 + $0xd0] sm:$0xff]
      %v1558 = vld [vmem:[%s266 + $0xd8] sm:$0xff]
      %v1559 = vld [vmem:[%s266 + $0xe0] sm:$0xff]
      %v1560 = vld [vmem:[%s266 + $0xe8] sm:$0xff]
      %v1561 = vld [vmem:[%s266 + $0xf0] sm:$0xff]
      %v1562 = vld [vmem:[%s266 + $0xf8] sm:$0xff]
      %v1563 = vadd.f32 %v1531, %v1405
      %v1564 = vadd.f32 %v1532, %v1408
      %v1565 = vadd.f32 %v1533, %v1413
      %v1566 = vadd.f32 %v1534, %v1416
      %v1567 = vadd.f32 %v1535, %v1421
      %v1568 = vadd.f32 %v1536, %v1424
      %v1569 = vadd.f32 %v1537, %v1429
      %v1570 = vadd.f32 %v1538, %v1432
      %v1571 = vadd.f32 %v1539, %v1437
      %v1572 = vadd.f32 %v1540, %v1440
      %v1573 = vadd.f32 %v1541, %v1445
      %v1574 = vadd.f32 %v1542, %v1448
      %v1575 = vadd.f32 %v1543, %v1453
      %v1576 = vadd.f32 %v1544, %v1456
      %v1577 = vadd.f32 %v1545, %v1461
      %v1578 = vadd.f32 %v1546, %v1464
      %v1579 = vadd.f32 %v1547, %v1469
      %v1580 = vadd.f32 %v1548, %v1472
      %v1581 = vadd.f32 %v1549, %v1477
      %v1582 = vadd.f32 %v1550, %v1480
      %v1583 = vadd.f32 %v1551, %v1485
      %v1584 = vadd.f32 %v1552, %v1488
      %v1585 = vadd.f32 %v1553, %v1493
      %v1586 = vadd.f32 %v1554, %v1496
      %v1587 = vadd.f32 %v1555, %v1501
      %v1588 = vadd.f32 %v1556, %v1504
      %v1589 = vadd.f32 %v1557, %v1509
      %v1590 = vadd.f32 %v1558, %v1512
      %v1591 = vadd.f32 %v1559, %v1517
      %v1592 = vadd.f32 %v1560, %v1520
      %v1593 = vadd.f32 %v1561, %v1525
      %v1594 = vadd.f32 %v1562, %v1528
      %v1595 = vld [vmem:[%s5] sm:$0x1]
      %v1597 = vlaneseq
      %v1598 = vshrl.u32 %v1597, 7
      %v1599 = vsub.s32 0, %v1598
      %v1600 = vrot.slane %v1595, %v1599
      %v1602 = vadd.f32 %v1563, %v1600
      %v1603 = vadd.f32 %v1564, %v1600
      %v1604 = vadd.f32 %v1565, %v1600
      %v1605 = vadd.f32 %v1566, %v1600
      %v1606 = vadd.f32 %v1567, %v1600
      %v1607 = vadd.f32 %v1568, %v1600
      %v1608 = vadd.f32 %v1569, %v1600
      %v1609 = vadd.f32 %v1570, %v1600
      %v1610 = vadd.f32 %v1571, %v1600
      %v1611 = vadd.f32 %v1572, %v1600
      %v1612 = vadd.f32 %v1573, %v1600
      %v1613 = vadd.f32 %v1574, %v1600
      %v1614 = vadd.f32 %v1575, %v1600
      %v1615 = vadd.f32 %v1576, %v1600
      %v1616 = vadd.f32 %v1577, %v1600
      %v1617 = vadd.f32 %v1578, %v1600
      %v1618 = vadd.f32 %v1579, %v1600
      %v1619 = vadd.f32 %v1580, %v1600
      %v1620 = vadd.f32 %v1581, %v1600
      %v1621 = vadd.f32 %v1582, %v1600
      %v1622 = vadd.f32 %v1583, %v1600
      %v1623 = vadd.f32 %v1584, %v1600
      %v1624 = vadd.f32 %v1585, %v1600
      %v1625 = vadd.f32 %v1586, %v1600
      %v1626 = vadd.f32 %v1587, %v1600
      %v1627 = vadd.f32 %v1588, %v1600
      %v1628 = vadd.f32 %v1589, %v1600
      %v1629 = vadd.f32 %v1590, %v1600
      %v1630 = vadd.f32 %v1591, %v1600
      %v1631 = vadd.f32 %v1592, %v1600
      %v1632 = vadd.f32 %v1593, %v1600
      %v1633 = vadd.f32 %v1594, %v1600
      %1634 = vst.msk [vmem:[%s271] sm:$0xff] %vm369, %v1602
      %1635 = vst.msk [vmem:[%s271 + $0x8] sm:$0xff] %vm369, %v1603
      %1636 = vst.msk [vmem:[%s271 + $0x10] sm:$0xff] %vm369, %v1604
      %1637 = vst.msk [vmem:[%s271 + $0x18] sm:$0xff] %vm369, %v1605
      %1638 = vst.msk [vmem:[%s271 + $0x20] sm:$0xff] %vm369, %v1606
      %1639 = vst.msk [vmem:[%s271 + $0x28] sm:$0xff] %vm369, %v1607
      %1640 = vst.msk [vmem:[%s271 + $0x30] sm:$0xff] %vm369, %v1608
      %1641 = vst.msk [vmem:[%s271 + $0x38] sm:$0xff] %vm369, %v1609
      %1642 = vst.msk [vmem:[%s271 + $0x40] sm:$0xff] %vm369, %v1610
      %1643 = vst.msk [vmem:[%s271 + $0x48] sm:$0xff] %vm369, %v1611
      %1644 = vst.msk [vmem:[%s271 + $0x50] sm:$0xff] %vm369, %v1612
      %1645 = vst.msk [vmem:[%s271 + $0x58] sm:$0xff] %vm369, %v1613
      %1646 = vst.msk [vmem:[%s271 + $0x60] sm:$0xff] %vm369, %v1614
      %1647 = vst.msk [vmem:[%s271 + $0x68] sm:$0xff] %vm369, %v1615
      %1648 = vst.msk [vmem:[%s271 + $0x70] sm:$0xff] %vm369, %v1616
      %1649 = vst.msk [vmem:[%s271 + $0x78] sm:$0xff] %vm369, %v1617
      %1650 = vst.msk [vmem:[%s271 + $0x80] sm:$0xff] %vm369, %v1618
      %1651 = vst.msk [vmem:[%s271 + $0x88] sm:$0xff] %vm369, %v1619
      %1652 = vst.msk [vmem:[%s271 + $0x90] sm:$0xff] %vm369, %v1620
      %1653 = vst.msk [vmem:[%s271 + $0x98] sm:$0xff] %vm369, %v1621
      %1654 = vst.msk [vmem:[%s271 + $0xa0] sm:$0xff] %vm369, %v1622
      %1655 = vst.msk [vmem:[%s271 + $0xa8] sm:$0xff] %vm369, %v1623
      %1656 = vst.msk [vmem:[%s271 + $0xb0] sm:$0xff] %vm369, %v1624
      %1657 = vst.msk [vmem:[%s271 + $0xb8] sm:$0xff] %vm369, %v1625
      %1658 = vst.msk [vmem:[%s271 + $0xc0] sm:$0xff] %vm369, %v1626
      %1659 = vst.msk [vmem:[%s271 + $0xc8] sm:$0xff] %vm369, %v1627
      %1660 = vst.msk [vmem:[%s271 + $0xd0] sm:$0xff] %vm369, %v1628
      %1661 = vst.msk [vmem:[%s271 + $0xd8] sm:$0xff] %vm369, %v1629
      %1662 = vst.msk [vmem:[%s271 + $0xe0] sm:$0xff] %vm369, %v1630
      %1663 = vst.msk [vmem:[%s271 + $0xe8] sm:$0xff] %vm369, %v1631
      %1664 = vst.msk [vmem:[%s271 + $0xf0] sm:$0xff] %vm369, %v1632
      %1665 = vst.msk [vmem:[%s271 + $0xf8] sm:$0xff] %vm369, %v1633
      %p1666 = scmp.lt.s32.totalorder %s17, 1
      %s1667 = scalar_select %p1666, %s17, 1
      %s1668 = smul.addr %s1667, 32
      %s1669 = smul.addr %s1668, 8
      %s1670 = scalar_lea.vmem %s6, %s1669
      // Predicated region
      $region45: #{transformer_block_forward.8} parent=43 // pred_check
        %p1671 = pneg %p171
      $region46: #{transformer_block_forward.8} parent=43 // pred_check_branch
        %1673 = sbr.rel (%p1671) target = $region48
      $region47: #{transformer_block_forward.8} parent=43 // pred_region
        _
      $region48: #{transformer_block_forward.8} parent=43 // pred_fallthru
        _
    $region44: #{transformer_block_forward.8} parent=5 // pred_fallthru
      _
    %p1674 = scmp.le.s32.totalorder 2, %s12
    // Predicated region
    $region49: #{transformer_block_forward.8} parent=5 // pred_check
      %p1675 = pneg %p1674
    $region50: #{transformer_block_forward.8} parent=5 // pred_check_branch
      %1677 = sbr.rel (%p1675) target = $region52
    $region51: #{transformer_block_forward.8} parent=5 // pred_region
      %s1678 = ssub.s32 %s12, 2
      // Predicated region
      $region53: #{transformer_block_forward.8} parent=51 // pred_check
        %p1679 = pneg %p177
      $region54: #{transformer_block_forward.8} parent=51 // pred_check_branch
        %1681 = sbr.rel (%p1679) target = $region56
      $region55: #{transformer_block_forward.8} parent=51 // pred_region
        %p1682 = scmp.lt.s32.totalorder %s18, 1
        %s1683 = scalar_select %p1682, %s18, 1
        %s1684 = smul.addr %s1683, 32
        %s1685 = smul.addr %s1684, 8
        %s1686 = scalar_lea.vmem %s6, %s1685
      $region56: #{transformer_block_forward.8} parent=51 // pred_fallthru
        _
    $region52: #{transformer_block_forward.8} parent=5 // pred_fallthru
      _
  $region6: #{transformer_block_forward.8} parent=0 // loop_footer
    %s16 = sadd.s32 1, %s12
  $region7: #{transformer_block_forward.8} parent=0 // loop_footer_branch
    %11 = sbr.rel target = $region3
  $region8: #{transformer_block_forward.8} parent=0 // loop_exit
    _

// kernel: transformer_block_forward.7
$region0: #{transformer_block_forward.7}
  #allocation0 [shape = 'u32[]', space=smem, size = 0x4, offset = 0x4, fixed_abs, tag = 'smem constant byte address 0x4 - core index']
  #allocation1 [shape = 'u32[144,128]{1,0:T(1,128)}', space=vmem, size = 0x12000, scoped, tag = 'internal scratch']
  #allocation2 [shape = 'f32[18,18,48]{2,1,0:T(8,128)}', space=vmem, size = 0x36000, scoped, tag = 'scratch operand']
  %s0 = inlined_call_operand.vmem [shape: bf16[2,16,16,48], index: 0, kind: input, shape index: {}]
  %s1 = inlined_call_operand.vmem [shape: f32[9,1,48], index: 1, kind: input, shape index: {}]
  %s2 = inlined_call_operand.vmem [shape: f32[1,48], index: 2, kind: input, shape index: {}]
  %s3 = inlined_call_operand.vmem [shape: bf16[2,16,16,48], index: 3, kind: output, shape index: {}]
  %s4 = sld [smem:[#allocation0]]
  $region45: #{transformer_block_forward.7} parent=0
    _
  %s6 = ssub.s32 1, %s4
  %s7 = scalar_select 0, %s6, %s4
  loop: start=0, step=1, limit=4
  $region2: #{transformer_block_forward.7} parent=0 // loop_pre_header
    _
  $region3: #{transformer_block_forward.7} parent=0 // loop_header
    %s9 = sphi 0, %s13
    %p10 = scmp.ge.s32.totalorder %s9, 4
    %s19 = sphi 0, %s21
    %s22 = sphi 0, %s19
    %s23 = sphi 0, %s22
    %s39 = sphi 0, %s23
    %s43 = sphi 0, %s43
    %s45 = sphi 0, %s43
    %s46 = sphi 0, %s45
    %s60 = sphi 0, %s46
    %s64 = sphi 0, %s64
    %s66 = sphi 0, %s64
    %s67 = sphi 0, %s66
    %s81 = sphi 0, %s67
    %s87 = sphi 0, %s89
    %s90 = sphi 0, %s87
    %s91 = sphi 0, %s90
    %s107 = sphi 0, %s91
  $region4: #{transformer_block_forward.7} parent=0 // loop_header_branch
    %12 = sbr.rel (%p10) target = $region8
  $region5: #{transformer_block_forward.7} parent=0 // loop_body
    %s14 = ssub.s32 %s9, 1
    %s15 = ssub.s32 %s9, 2
    %s16 = sadd.s32 %s9, 1
    %s17 = ssub.s32 %s9, %s16
    %p18 = scmp.eq.s32.totalorder %s17, 0
    %s20 = sadd.s32 %s19, 1
    %s21 = scalar_select %p18, %s19, %s20
    %p24 = pneg %p18
    %p25 = scmp.eq.s32.totalorder %s9, 1
    %p26 = por %p24, %p25
    %p27 = scmp.ne.s32.totalorder %s19, %s22
    %p28 = scmp.eq.s32.totalorder %s9, 0
    %p29 = por %p27, %p28
    %p30 = scmp.ne.s32.totalorder %s19, %s22
    %p31 = scmp.eq.s32.totalorder %s14, 1
    %p32 = por %p30, %p31
    %p33 = scmp.ne.s32.totalorder %s22, %s23
    %p34 = scmp.eq.s32.totalorder %s14, 0
    %p35 = por %p33, %p34
    %p36 = scmp.ne.s32.totalorder %s22, %s23
    %p37 = scmp.eq.s32.totalorder %s15, 1
    %p38 = por %p36, %p37
    %p40 = scmp.ne.s32.totalorder %s23, %s39
    %p41 = scmp.eq.s32.totalorder %s15, 0
    %p42 = por %p40, %p41
    %s44 = sadd.s32 %s43, 1
    %p47 = scmp.eq.s32.totalorder %s9, 1
    %p48 = scmp.ne.s32.totalorder %s43, %s45
    %p49 = scmp.eq.s32.totalorder %s9, 0
    %p50 = por %p48, %p49
    %p51 = scmp.ne.s32.totalorder %s43, %s45
    %p52 = scmp.eq.s32.totalorder %s14, 1
    %p53 = por %p51, %p52
    %p54 = scmp.ne.s32.totalorder %s45, %s46
    %p55 = scmp.eq.s32.totalorder %s14, 0
    %p56 = por %p54, %p55
    %p57 = scmp.ne.s32.totalorder %s45, %s46
    %p58 = scmp.eq.s32.totalorder %s15, 1
    %p59 = por %p57, %p58
    %p61 = scmp.ne.s32.totalorder %s46, %s60
    %p62 = scmp.eq.s32.totalorder %s15, 0
    %p63 = por %p61, %p62
    %s65 = sadd.s32 %s64, 1
    %p68 = scmp.eq.s32.totalorder %s9, 1
    %p69 = scmp.ne.s32.totalorder %s64, %s66
    %p70 = scmp.eq.s32.totalorder %s9, 0
    %p71 = por %p69, %p70
    %p72 = scmp.ne.s32.totalorder %s64, %s66
    %p73 = scmp.eq.s32.totalorder %s14, 1
    %p74 = por %p72, %p73
    %p75 = scmp.ne.s32.totalorder %s66, %s67
    %p76 = scmp.eq.s32.totalorder %s14, 0
    %p77 = por %p75, %p76
    %p78 = scmp.ne.s32.totalorder %s66, %s67
    %p79 = scmp.eq.s32.totalorder %s15, 1
    %p80 = por %p78, %p79
    %p82 = scmp.ne.s32.totalorder %s67, %s81
    %p83 = scmp.eq.s32.totalorder %s15, 0
    %p84 = por %p82, %p83
    %s85 = ssub.s32 %s9, %s16
    %p86 = scmp.eq.s32.totalorder %s85, 0
    %s88 = sadd.s32 %s87, 1
    %s89 = scalar_select %p86, %s87, %s88
    %p92 = pneg %p86
    %p93 = scmp.eq.s32.totalorder %s9, 1
    %p94 = por %p92, %p93
    %p95 = scmp.ne.s32.totalorder %s87, %s90
    %p96 = scmp.eq.s32.totalorder %s9, 0
    %p97 = por %p95, %p96
    %p98 = scmp.ne.s32.totalorder %s87, %s90
    %p99 = scmp.eq.s32.totalorder %s14, 1
    %p100 = por %p98, %p99
    %p101 = scmp.ne.s32.totalorder %s90, %s91
    %p102 = scmp.eq.s32.totalorder %s14, 0
    %p103 = por %p101, %p102
    %p104 = scmp.ne.s32.totalorder %s90, %s91
    %p105 = scmp.eq.s32.totalorder %s15, 1
    %p106 = por %p104, %p105
    %p108 = scmp.ne.s32.totalorder %s91, %s107
    %p109 = scmp.eq.s32.totalorder %s15, 0
    %p110 = por %p108, %p109
    %p111 = scmp.le.s32.totalorder 1, %s9
    %p112 = scmp.lt.s32.totalorder %s9, 3
    %p113 = pnand %p111, %p112
    %p114 = pneg %p113
    // Predicated region
    $region9: #{transformer_block_forward.7} parent=5 // pred_check
      _
    $region10: #{transformer_block_forward.7} parent=5 // pred_check_branch
      %116 = sbr.rel (%p113) target = $region12
    $region11: #{transformer_block_forward.7} parent=5 // pred_region
      %s117 = ssub.s32 %s9, 1
      // Predicated region
      $region13: #{transformer_block_forward.7} parent=11 // pred_check
        %p118 = pneg %p56
      $region14: #{transformer_block_forward.7} parent=11 // pred_check_branch
        %120 = sbr.rel (%p118) target = $region16
      $region15: #{transformer_block_forward.7} parent=11 // pred_region
        _
      $region16: #{transformer_block_forward.7} parent=11 // pred_fallthru
        _
      // Predicated region
      $region17: #{transformer_block_forward.7} parent=11 // pred_check
        %p121 = pneg %p77
      $region18: #{transformer_block_forward.7} parent=11 // pred_check_branch
        %123 = sbr.rel (%p121) target = $region20
      $region19: #{transformer_block_forward.7} parent=11 // pred_region
        _
      $region20: #{transformer_block_forward.7} parent=11 // pred_fallthru
        _
    $region12: #{transformer_block_forward.7} parent=5 // pred_fallthru
      _
    %p124 = scmp.lt.s32.totalorder %s9, 2
    // Predicated region
    $region21: #{transformer_block_forward.7} parent=5 // pred_check
      %p125 = pneg %p124
    $region22: #{transformer_block_forward.7} parent=5 // pred_check_branch
      %127 = sbr.rel (%p125) target = $region24
    $region23: #{transformer_block_forward.7} parent=5 // pred_region
      // Predicated region
      $region25: #{transformer_block_forward.7} parent=23 // pred_check
        %p128 = pneg %p29
      $region26: #{transformer_block_forward.7} parent=23 // pred_check_branch
        %130 = sbr.rel (%p128) target = $region28
      $region27: #{transformer_block_forward.7} parent=23 // pred_region
        %p131 = scmp.lt.s32.totalorder %s9, 1
        %s132 = scalar_select %p131, %s9, 1
        %s133 = smul.addr %s132, 32
        %s134 = smul.addr %s133, 4
        %s135 = scalar_lea.vmem %s0, %s134
      $region28: #{transformer_block_forward.7} parent=23 // pred_fallthru
        _
    $region24: #{transformer_block_forward.7} parent=5 // pred_fallthru
      _
    %p136 = scmp.le.s32.totalorder 1, %s9
    %p137 = scmp.lt.s32.totalorder %s9, 3
    %p138 = pnand %p136, %p137
    %p139 = pneg %p138
    // Predicated region
    $region29: #{transformer_block_forward.7} parent=5 // pred_check
      _
    $region30: #{transformer_block_forward.7} parent=5 // pred_check_branch
      %141 = sbr.rel (%p138) target = $region32
    $region31: #{transformer_block_forward.7} parent=5 // pred_region
      %s142 = ssub.s32 %s9, 1
      %p143 = scmp.lt.s32.totalorder %s14, 1
      %s144 = scalar_select %p143, %s14, 1
      %s145 = smul.addr %s144, 32
      %s146 = smul.addr %s145, 4
      %s147 = scalar_lea.vmem %s0, %s146
      %p148 = pneg %p35
      %p149 = pneg %p32
      %p150 = pneg %p56
      %p151 = pneg %p53
      %p152 = pneg %p77
      %p153 = pneg %p74
      %p154 = pneg %p103
      %p155 = pneg %p100
      %p156 = scmp.lt.s32.totalorder %s14, 1
      %s157 = scalar_select %p156, %s14, 1
      %s158 = smul.addr %s157, 32
      %s159 = smul.addr %s158, 4
      %s160 = scalar_lea.vmem %s3, %s159
      %p161 = scmp.lt.s32.totalorder %s14, 1
      %s162 = scalar_select %p161, %s14, 1
      %s163 = smul.addr %s162, 32
      %s164 = smul.addr %s163, 4
      %s165 = scalar_lea.vmem %s0, %s164
      %p166 = scmp.lt.s32.totalorder %s14, 1
      %s167 = scalar_select %p166, %s14, 1
      %s168 = smul.addr %s167, 32
      %s169 = smul.addr %s168, 4
      %s170 = scalar_lea.vmem %s3, %s169
      %vm171 = vcmask 392192
      %172 = vst.msk [vmem:[#allocation2] sm:$0xff] %vm171, 0.0
      %173 = vst.msk [vmem:[#allocation2 + $0x8] sm:$0xff] %vm171, 0.0
      %vm174 = vcmask 386048
      %175 = vst.msk [vmem:[#allocation2 + $0x10] sm:$0x3] %vm174, 0.0
      %s176 = scalar_lea.vmem [#allocation2], 408
      %177 = vst.msk [vmem:[%s176] sm:$0xff] %vm171, 0.0
      %178 = vst.msk [vmem:[%s176 + $0x8] sm:$0xff] %vm171, 0.0
      %179 = vst.msk [vmem:[%s176 + $0x10] sm:$0x3] %vm174, 0.0
      %vm180 = vcmask 385024
      %181 = vst.msk [vmem:[#allocation2] sm:$0x1] %vm180, 0.0
      %182 = vst.msk [vmem:[#allocation2 + $0x18] sm:$0x1] %vm180, 0.0
      %183 = vst.msk [vmem:[#allocation2 + $0x30] sm:$0x1] %vm180, 0.0
      %184 = vst.msk [vmem:[#allocation2 + $0x48] sm:$0x1] %vm180, 0.0
      %185 = vst.msk [vmem:[#allocation2 + $0x60] sm:$0x1] %vm180, 0.0
      %186 = vst.msk [vmem:[#allocation2 + $0x78] sm:$0x1] %vm180, 0.0
      %187 = vst.msk [vmem:[#allocation2 + $0x90] sm:$0x1] %vm180, 0.0
      %188 = vst.msk [vmem:[#allocation2 + $0xa8] sm:$0x1] %vm180, 0.0
      %189 = vst.msk [vmem:[#allocation2 + $0xc0] sm:$0x1] %vm180, 0.0
      %190 = vst.msk [vmem:[#allocation2 + $0xd8] sm:$0x1] %vm180, 0.0
      %191 = vst.msk [vmem:[#allocation2 + $0xf0] sm:$0x1] %vm180, 0.0
      %192 = vst.msk [vmem:[#allocation2 + $0x108] sm:$0x1] %vm180, 0.0
      %193 = vst.msk [vmem:[#allocation2 + $0x120] sm:$0x1] %vm180, 0.0
      %194 = vst.msk [vmem:[#allocation2 + $0x138] sm:$0x1] %vm180, 0.0
      %195 = vst.msk [vmem:[#allocation2 + $0x150] sm:$0x1] %vm180, 0.0
      %196 = vst.msk [vmem:[#allocation2 + $0x168] sm:$0x1] %vm180, 0.0
      %197 = vst.msk [vmem:[#allocation2 + $0x180] sm:$0x1] %vm180, 0.0
      %198 = vst.msk [vmem:[#allocation2 + $0x198] sm:$0x1] %vm180, 0.0
      %199 = vst.msk [vmem:[#allocation2 + $0x11] sm:$0x1] %vm180, 0.0
      %200 = vst.msk [vmem:[#allocation2 + $0x29] sm:$0x1] %vm180, 0.0
      %201 = vst.msk [vmem:[#allocation2 + $0x41] sm:$0x1] %vm180, 0.0
      %202 = vst.msk [vmem:[#allocation2 + $0x59] sm:$0x1] %vm180, 0.0
      %203 = vst.msk [vmem:[#allocation2 + $0x71] sm:$0x1] %vm180, 0.0
      %204 = vst.msk [vmem:[#allocation2 + $0x89] sm:$0x1] %vm180, 0.0
      %205 = vst.msk [vmem:[#allocation2 + $0xa1] sm:$0x1] %vm180, 0.0
      %206 = vst.msk [vmem:[#allocation2 + $0xb9] sm:$0x1] %vm180, 0.0
      %207 = vst.msk [vmem:[#allocation2 + $0xd1] sm:$0x1] %vm180, 0.0
      %208 = vst.msk [vmem:[#allocation2 + $0xe9] sm:$0x1] %vm180, 0.0
      %209 = vst.msk [vmem:[#allocation2 + $0x101] sm:$0x1] %vm180, 0.0
      %210 = vst.msk [vmem:[#allocation2 + $0x119] sm:$0x1] %vm180, 0.0
      %211 = vst.msk [vmem:[#allocation2 + $0x131] sm:$0x1] %vm180, 0.0
      %212 = vst.msk [vmem:[#allocation2 + $0x149] sm:$0x1] %vm180, 0.0
      %213 = vst.msk [vmem:[#allocation2 + $0x161] sm:$0x1] %vm180, 0.0
      %214 = vst.msk [vmem:[#allocation2 + $0x179] sm:$0x1] %vm180, 0.0
      %215 = vst.msk [vmem:[#allocation2 + $0x191] sm:$0x1] %vm180, 0.0
      %216 = vst.msk [vmem:[#allocation2 + $0x1a9] sm:$0x1] %vm180, 0.0
      %v217 = vld [vmem:[%s165] sm:$0xf]
      %v218 = vld [vmem:[%s165 + $0x4] sm:$0xf]
      %v219 = vld [vmem:[%s165 + $0x8] sm:$0xf]
      %v220 = vld [vmem:[%s165 + $0xc] sm:$0xf]
      %v221 = vld [vmem:[%s165 + $0x10] sm:$0xf]
      %v222 = vld [vmem:[%s165 + $0x14] sm:$0xf]
      %v223 = vld [vmem:[%s165 + $0x18] sm:$0xf]
      %v224 = vld [vmem:[%s165 + $0x1c] sm:$0xf]
      %v225 = vld [vmem:[%s165 + $0x20] sm:$0xf]
      %v226 = vld [vmem:[%s165 + $0x24] sm:$0xf]
      %v227 = vld [vmem:[%s165 + $0x28] sm:$0xf]
      %v228 = vld [vmem:[%s165 + $0x2c] sm:$0xf]
      %v229 = vld [vmem:[%s165 + $0x30] sm:$0xf]
      %v230 = vld [vmem:[%s165 + $0x34] sm:$0xf]
      %v231 = vld [vmem:[%s165 + $0x38] sm:$0xf]
      %v232 = vld [vmem:[%s165 + $0x3c] sm:$0xf]
      %v233 = vld [vmem:[%s165 + $0x40] sm:$0xf]
      %v234 = vld [vmem:[%s165 + $0x44] sm:$0xf]
      %v235 = vld [vmem:[%s165 + $0x48] sm:$0xf]
      %v236 = vld [vmem:[%s165 + $0x4c] sm:$0xf]
      %v237 = vld [vmem:[%s165 + $0x50] sm:$0xf]
      %v238 = vld [vmem:[%s165 + $0x54] sm:$0xf]
      %v239 = vld [vmem:[%s165 + $0x58] sm:$0xf]
      %v240 = vld [vmem:[%s165 + $0x5c] sm:$0xf]
      %v241 = vld [vmem:[%s165 + $0x60] sm:$0xf]
      %v242 = vld [vmem:[%s165 + $0x64] sm:$0xf]
      %v243 = vld [vmem:[%s165 + $0x68] sm:$0xf]
      %v244 = vld [vmem:[%s165 + $0x6c] sm:$0xf]
      %v245 = vld [vmem:[%s165 + $0x70] sm:$0xf]
      %v246 = vld [vmem:[%s165 + $0x74] sm:$0xf]
      %v247 = vld [vmem:[%s165 + $0x78] sm:$0xf]
      %v248 = vld [vmem:[%s165 + $0x7c] sm:$0xf]
      %v249 = vunpack.c.l.bf16 %v217
      %v250 = vunpack.c.l.bf16 %v218
      %v251 = vunpack.c.l.bf16 %v219
      %v252 = vunpack.c.l.bf16 %v220
      %v253 = vunpack.c.l.bf16 %v221
      %v254 = vunpack.c.l.bf16 %v222
      %v255 = vunpack.c.l.bf16 %v223
      %v256 = vunpack.c.l.bf16 %v224
      %v257 = vunpack.c.l.bf16 %v225
      %v258 = vunpack.c.l.bf16 %v226
      %v259 = vunpack.c.l.bf16 %v227
      %v260 = vunpack.c.l.bf16 %v228
      %v261 = vunpack.c.l.bf16 %v229
      %v262 = vunpack.c.l.bf16 %v230
      %v263 = vunpack.c.l.bf16 %v231
      %v264 = vunpack.c.l.bf16 %v232
      %v265 = vunpack.c.l.bf16 %v233
      %v266 = vunpack.c.l.bf16 %v234
      %v267 = vunpack.c.l.bf16 %v235
      %v268 = vunpack.c.l.bf16 %v236
      %v269 = vunpack.c.l.bf16 %v237
      %v270 = vunpack.c.l.bf16 %v238
      %v271 = vunpack.c.l.bf16 %v239
      %v272 = vunpack.c.l.bf16 %v240
      %v273 = vunpack.c.l.bf16 %v241
      %v274 = vunpack.c.l.bf16 %v242
      %v275 = vunpack.c.l.bf16 %v243
      %v276 = vunpack.c.l.bf16 %v244
      %v277 = vunpack.c.l.bf16 %v245
      %v278 = vunpack.c.l.bf16 %v246
      %v279 = vunpack.c.l.bf16 %v247
      %v280 = vunpack.c.l.bf16 %v248
      %s281 = scalar_lea.vmem [#allocation2], 24
      %282 = vst.msk [vmem:[%s281 + $0x1] sm:$0xff] %vm171, %v249
      %283 = vst.msk [vmem:[%s281 + $0x9] sm:$0xff] %vm171, %v250
      %284 = vst.msk [vmem:[%s281 + $0x19] sm:$0xff] %vm171, %v251
      %285 = vst.msk [vmem:[%s281 + $0x21] sm:$0xff] %vm171, %v252
      %286 = vst.msk [vmem:[%s281 + $0x31] sm:$0xff] %vm171, %v253
      %287 = vst.msk [vmem:[%s281 + $0x39] sm:$0xff] %vm171, %v254
      %288 = vst.msk [vmem:[%s281 + $0x49] sm:$0xff] %vm171, %v255
      %289 = vst.msk [vmem:[%s281 + $0x51] sm:$0xff] %vm171, %v256
      %290 = vst.msk [vmem:[%s281 + $0x61] sm:$0xff] %vm171, %v257
      %291 = vst.msk [vmem:[%s281 + $0x69] sm:$0xff] %vm171, %v258
      %292 = vst.msk [vmem:[%s281 + $0x79] sm:$0xff] %vm171, %v259
      %293 = vst.msk [vmem:[%s281 + $0x81] sm:$0xff] %vm171, %v260
      %294 = vst.msk [vmem:[%s281 + $0x91] sm:$0xff] %vm171, %v261
      %295 = vst.msk [vmem:[%s281 + $0x99] sm:$0xff] %vm171, %v262
      %296 = vst.msk [vmem:[%s281 + $0xa9] sm:$0xff] %vm171, %v263
      %297 = vst.msk [vmem:[%s281 + $0xb1] sm:$0xff] %vm171, %v264
      %298 = vst.msk [vmem:[%s281 + $0xc1] sm:$0xff] %vm171, %v265
      %299 = vst.msk [vmem:[%s281 + $0xc9] sm:$0xff] %vm171, %v266
      %300 = vst.msk [vmem:[%s281 + $0xd9] sm:$0xff] %vm171, %v267
      %301 = vst.msk [vmem:[%s281 + $0xe1] sm:$0xff] %vm171, %v268
      %302 = vst.msk [vmem:[%s281 + $0xf1] sm:$0xff] %vm171, %v269
      %303 = vst.msk [vmem:[%s281 + $0xf9] sm:$0xff] %vm171, %v270
      %304 = vst.msk [vmem:[%s281 + $0x109] sm:$0xff] %vm171, %v271
      %305 = vst.msk [vmem:[%s281 + $0x111] sm:$0xff] %vm171, %v272
      %306 = vst.msk [vmem:[%s281 + $0x121] sm:$0xff] %vm171, %v273
      %307 = vst.msk [vmem:[%s281 + $0x129] sm:$0xff] %vm171, %v274
      %308 = vst.msk [vmem:[%s281 + $0x139] sm:$0xff] %vm171, %v275
      %309 = vst.msk [vmem:[%s281 + $0x141] sm:$0xff] %vm171, %v276
      %310 = vst.msk [vmem:[%s281 + $0x151] sm:$0xff] %vm171, %v277
      %311 = vst.msk [vmem:[%s281 + $0x159] sm:$0xff] %vm171, %v278
      %312 = vst.msk [vmem:[%s281 + $0x169] sm:$0xff] %vm171, %v279
      %313 = vst.msk [vmem:[%s281 + $0x171] sm:$0xff] %vm171, %v280
      %v314 = vld [vmem:[%s2] sm:$0x1]
      %v316 = vlaneseq
      %v317 = vshrl.u32 %v316, 7
      %v318 = vsub.s32 0, %v317
      %v319 = vrot.slane %v314, %v318
      %v321 = vadd.f32 %v319, 0.0
      %v322 = vld [vmem:[#allocation2] sm:$0xff]
      %v323 = vld [vmem:[#allocation2 + $0x8] sm:$0xff]
      %v324 = vld [vmem:[#allocation2 + $0x18] sm:$0xff]
      %v325 = vld [vmem:[#allocation2 + $0x20] sm:$0xff]
      %v326 = vld [vmem:[#allocation2 + $0x30] sm:$0xff]
      %v327 = vld [vmem:[#allocation2 + $0x38] sm:$0xff]
      %v328 = vld [vmem:[#allocation2 + $0x48] sm:$0xff]
      %v329 = vld [vmem:[#allocation2 + $0x50] sm:$0xff]
      %v330 = vld [vmem:[#allocation2 + $0x60] sm:$0xff]
      %v331 = vld [vmem:[#allocation2 + $0x68] sm:$0xff]
      %v332 = vld [vmem:[#allocation2 + $0x78] sm:$0xff]
      %v333 = vld [vmem:[#allocation2 + $0x80] sm:$0xff]
      %v334 = vld [vmem:[#allocation2 + $0x90] sm:$0xff]
      %v335 = vld [vmem:[#allocation2 + $0x98] sm:$0xff]
      %v336 = vld [vmem:[#allocation2 + $0xa8] sm:$0xff]
      %v337 = vld [vmem:[#allocation2 + $0xb0] sm:$0xff]
      %v338 = vld [vmem:[#allocation2 + $0xc0] sm:$0xff]
      %v339 = vld [vmem:[#allocation2 + $0xc8] sm:$0xff]
      %v340 = vld [vmem:[#allocation2 + $0xd8] sm:$0xff]
      %v341 = vld [vmem:[#allocation2 + $0xe0] sm:$0xff]
      %v342 = vld [vmem:[#allocation2 + $0xf0] sm:$0xff]
      %v343 = vld [vmem:[#allocation2 + $0xf8] sm:$0xff]
      %v344 = vld [vmem:[#allocation2 + $0x108] sm:$0xff]
      %v345 = vld [vmem:[#allocation2 + $0x110] sm:$0xff]
      %v346 = vld [vmem:[#allocation2 + $0x120] sm:$0xff]
      %v347 = vld [vmem:[#allocation2 + $0x128] sm:$0xff]
      %v348 = vld [vmem:[#allocation2 + $0x138] sm:$0xff]
      %v349 = vld [vmem:[#allocation2 + $0x140] sm:$0xff]
      %v350 = vld [vmem:[#allocation2 + $0x150] sm:$0xff]
      %v351 = vld [vmem:[#allocation2 + $0x158] sm:$0xff]
      %v352 = vld [vmem:[#allocation2 + $0x168] sm:$0xff]
      %v353 = vld [vmem:[#allocation2 + $0x170] sm:$0xff]
      %v354 = vld [vmem:[%s1] sm:$0x1]
      %v356 = vlaneseq
      %v357 = vshrl.u32 %v356, 7
      %v358 = vsub.s32 0, %v357
      %v359 = vrot.slane %v354, %v358
      %v361 = vmul.f32 %v322, %v359
      %v362 = vmul.f32 %v323, %v359
      %v363 = vmul.f32 %v324, %v359
      %v364 = vmul.f32 %v325, %v359
      %v365 = vmul.f32 %v326, %v359
      %v366 = vmul.f32 %v327, %v359
      %v367 = vmul.f32 %v328, %v359
      %v368 = vmul.f32 %v329, %v359
      %v369 = vmul.f32 %v330, %v359
      %v370 = vmul.f32 %v331, %v359
      %v371 = vmul.f32 %v332, %v359
      %v372 = vmul.f32 %v333, %v359
      %v373 = vmul.f32 %v334, %v359
      %v374 = vmul.f32 %v335, %v359
      %v375 = vmul.f32 %v336, %v359
      %v376 = vmul.f32 %v337, %v359
      %v377 = vmul.f32 %v338, %v359
      %v378 = vmul.f32 %v339, %v359
      %v379 = vmul.f32 %v340, %v359
      %v380 = vmul.f32 %v341, %v359
      %v381 = vmul.f32 %v342, %v359
      %v382 = vmul.f32 %v343, %v359
      %v383 = vmul.f32 %v344, %v359
      %v384 = vmul.f32 %v345, %v359
      %v385 = vmul.f32 %v346, %v359
      %v386 = vmul.f32 %v347, %v359
      %v387 = vmul.f32 %v348, %v359
      %v388 = vmul.f32 %v349, %v359
      %v389 = vmul.f32 %v350, %v359
      %v390 = vmul.f32 %v351, %v359
      %v391 = vmul.f32 %v352, %v359
      %v392 = vmul.f32 %v353, %v359
      %v393 = vadd.f32 %v321, %v361
      %v394 = vadd.f32 %v321, %v362
      %v395 = vadd.f32 %v321, %v363
      %v396 = vadd.f32 %v321, %v364
      %v397 = vadd.f32 %v321, %v365
      %v398 = vadd.f32 %v321, %v366
      %v399 = vadd.f32 %v321, %v367
      %v400 = vadd.f32 %v321, %v368
      %v401 = vadd.f32 %v321, %v369
      %v402 = vadd.f32 %v321, %v370
      %v403 = vadd.f32 %v321, %v371
      %v404 = vadd.f32 %v321, %v372
      %v405 = vadd.f32 %v321, %v373
      %v406 = vadd.f32 %v321, %v374
      %v407 = vadd.f32 %v321, %v375
      %v408 = vadd.f32 %v321, %v376
      %v409 = vadd.f32 %v321, %v377
      %v410 = vadd.f32 %v321, %v378
      %v411 = vadd.f32 %v321, %v379
      %v412 = vadd.f32 %v321, %v380
      %v413 = vadd.f32 %v321, %v381
      %v414 = vadd.f32 %v321, %v382
      %v415 = vadd.f32 %v321, %v383
      %v416 = vadd.f32 %v321, %v384
      %v417 = vadd.f32 %v321, %v385
      %v418 = vadd.f32 %v321, %v386
      %v419 = vadd.f32 %v321, %v387
      %v420 = vadd.f32 %v321, %v388
      %v421 = vadd.f32 %v321, %v389
      %v422 = vadd.f32 %v321, %v390
      %v423 = vadd.f32 %v321, %v391
      %v424 = vadd.f32 %v321, %v392
      %v425 = vld [vmem:[#allocation2 + $0x1] sm:$0xff]
      %v426 = vld [vmem:[#allocation2 + $0x9] sm:$0xff]
      %v427 = vld [vmem:[#allocation2 + $0x19] sm:$0xff]
      %v428 = vld [vmem:[#allocation2 + $0x21] sm:$0xff]
      %v429 = vld [vmem:[#allocation2 + $0x31] sm:$0xff]
      %v430 = vld [vmem:[#allocation2 + $0x39] sm:$0xff]
      %v431 = vld [vmem:[#allocation2 + $0x49] sm:$0xff]
      %v432 = vld [vmem:[#allocation2 + $0x51] sm:$0xff]
      %v433 = vld [vmem:[#allocation2 + $0x61] sm:$0xff]
      %v434 = vld [vmem:[#allocation2 + $0x69] sm:$0xff]
      %v435 = vld [vmem:[#allocation2 + $0x79] sm:$0xff]
      %v436 = vld [vmem:[#allocation2 + $0x81] sm:$0xff]
      %v437 = vld [vmem:[#allocation2 + $0x91] sm:$0xff]
      %v438 = vld [vmem:[#allocation2 + $0x99] sm:$0xff]
      %v439 = vld [vmem:[#allocation2 + $0xa9] sm:$0xff]
      %v440 = vld [vmem:[#allocation2 + $0xb1] sm:$0xff]
      %v441 = vld [vmem:[#allocation2 + $0xc1] sm:$0xff]
      %v442 = vld [vmem:[#allocation2 + $0xc9] sm:$0xff]
      %v443 = vld [vmem:[#allocation2 + $0xd9] sm:$0xff]
      %v444 = vld [vmem:[#allocation2 + $0xe1] sm:$0xff]
      %v445 = vld [vmem:[#allocation2 + $0xf1] sm:$0xff]
      %v446 = vld [vmem:[#allocation2 + $0xf9] sm:$0xff]
      %v447 = vld [vmem:[#allocation2 + $0x109] sm:$0xff]
      %v448 = vld [vmem:[#allocation2 + $0x111] sm:$0xff]
      %v449 = vld [vmem:[#allocation2 + $0x121] sm:$0xff]
      %v450 = vld [vmem:[#allocation2 + $0x129] sm:$0xff]
      %v451 = vld [vmem:[#allocation2 + $0x139] sm:$0xff]
      %v452 = vld [vmem:[#allocation2 + $0x141] sm:$0xff]
      %v453 = vld [vmem:[#allocation2 + $0x151] sm:$0xff]
      %v454 = vld [vmem:[#allocation2 + $0x159] sm:$0xff]
      %v455 = vld [vmem:[#allocation2 + $0x169] sm:$0xff]
      %v456 = vld [vmem:[#allocation2 + $0x171] sm:$0xff]
      %s457 = scalar_lea.vmem %s1, 1
      %v458 = vld [vmem:[%s457] sm:$0x1]
      %v460 = vlaneseq
      %v461 = vshrl.u32 %v460, 7
      %v462 = vsub.s32 0, %v461
      %v463 = vrot.slane %v458, %v462
      %v465 = vmul.f32 %v425, %v463
      %v466 = vmul.f32 %v426, %v463
      %v467 = vmul.f32 %v427, %v463
      %v468 = vmul.f32 %v428, %v463
      %v469 = vmul.f32 %v429, %v463
      %v470 = vmul.f32 %v430, %v463
      %v471 = vmul.f32 %v431, %v463
      %v472 = vmul.f32 %v432, %v463
      %v473 = vmul.f32 %v433, %v463
      %v474 = vmul.f32 %v434, %v463
      %v475 = vmul.f32 %v435, %v463
      %v476 = vmul.f32 %v436, %v463
      %v477 = vmul.f32 %v437, %v463
      %v478 = vmul.f32 %v438, %v463
      %v479 = vmul.f32 %v439, %v463
      %v480 = vmul.f32 %v440, %v463
      %v481 = vmul.f32 %v441, %v463
      %v482 = vmul.f32 %v442, %v463
      %v483 = vmul.f32 %v443, %v463
      %v484 = vmul.f32 %v444, %v463
      %v485 = vmul.f32 %v445, %v463
      %v486 = vmul.f32 %v446, %v463
      %v487 = vmul.f32 %v447, %v463
      %v488 = vmul.f32 %v448, %v463
      %v489 = vmul.f32 %v449, %v463
      %v490 = vmul.f32 %v450, %v463
      %v491 = vmul.f32 %v451, %v463
      %v492 = vmul.f32 %v452, %v463
      %v493 = vmul.f32 %v453, %v463
      %v494 = vmul.f32 %v454, %v463
      %v495 = vmul.f32 %v455, %v463
      %v496 = vmul.f32 %v456, %v463
      %v497 = vadd.f32 %v393, %v465
      %v498 = vadd.f32 %v394, %v466
      %v499 = vadd.f32 %v395, %v467
      %v500 = vadd.f32 %v396, %v468
      %v501 = vadd.f32 %v397, %v469
      %v502 = vadd.f32 %v398, %v470
      %v503 = vadd.f32 %v399, %v471
      %v504 = vadd.f32 %v400, %v472
      %v505 = vadd.f32 %v401, %v473
      %v506 = vadd.f32 %v402, %v474
      %v507 = vadd.f32 %v403, %v475
      %v508 = vadd.f32 %v404, %v476
      %v509 = vadd.f32 %v405, %v477
      %v510 = vadd.f32 %v406, %v478
      %v511 = vadd.f32 %v407, %v479
      %v512 = vadd.f32 %v408, %v480
      %v513 = vadd.f32 %v409, %v481
      %v514 = vadd.f32 %v410, %v482
      %v515 = vadd.f32 %v411, %v483
      %v516 = vadd.f32 %v412, %v484
      %v517 = vadd.f32 %v413, %v485
      %v518 = vadd.f32 %v414, %v486
      %v519 = vadd.f32 %v415, %v487
      %v520 = vadd.f32 %v416, %v488
      %v521 = vadd.f32 %v417, %v489
      %v522 = vadd.f32 %v418, %v490
      %v523 = vadd.f32 %v419, %v491
      %v524 = vadd.f32 %v420, %v492
      %v525 = vadd.f32 %v421, %v493
      %v526 = vadd.f32 %v422, %v494
      %v527 = vadd.f32 %v423, %v495
      %v528 = vadd.f32 %v424, %v496
      %v529 = vld [vmem:[#allocation2 + $0x2] sm:$0xff]
      %v530 = vld [vmem:[#allocation2 + $0xa] sm:$0xff]
      %v531 = vld [vmem:[#allocation2 + $0x1a] sm:$0xff]
      %v532 = vld [vmem:[#allocation2 + $0x22] sm:$0xff]
      %v533 = vld [vmem:[#allocation2 + $0x32] sm:$0xff]
      %v534 = vld [vmem:[#allocation2 + $0x3a] sm:$0xff]
      %v535 = vld [vmem:[#allocation2 + $0x4a] sm:$0xff]
      %v536 = vld [vmem:[#allocation2 + $0x52] sm:$0xff]
      %v537 = vld [vmem:[#allocation2 + $0x62] sm:$0xff]
      %v538 = vld [vmem:[#allocation2 + $0x6a] sm:$0xff]
      %v539 = vld [vmem:[#allocation2 + $0x7a] sm:$0xff]
      %v540 = vld [vmem:[#allocation2 + $0x82] sm:$0xff]
      %v541 = vld [vmem:[#allocation2 + $0x92] sm:$0xff]
      %v542 = vld [vmem:[#allocation2 + $0x9a] sm:$0xff]
      %v543 = vld [vmem:[#allocation2 + $0xaa] sm:$0xff]
      %v544 = vld [vmem:[#allocation2 + $0xb2] sm:$0xff]
      %v545 = vld [vmem:[#allocation2 + $0xc2] sm:$0xff]
      %v546 = vld [vmem:[#allocation2 + $0xca] sm:$0xff]
      %v547 = vld [vmem:[#allocation2 + $0xda] sm:$0xff]
      %v548 = vld [vmem:[#allocation2 + $0xe2] sm:$0xff]
      %v549 = vld [vmem:[#allocation2 + $0xf2] sm:$0xff]
      %v550 = vld [vmem:[#allocation2 + $0xfa] sm:$0xff]
      %v551 = vld [vmem:[#allocation2 + $0x10a] sm:$0xff]
      %v552 = vld [vmem:[#allocation2 + $0x112] sm:$0xff]
      %v553 = vld [vmem:[#allocation2 + $0x122] sm:$0xff]
      %v554 = vld [vmem:[#allocation2 + $0x12a] sm:$0xff]
      %v555 = vld [vmem:[#allocation2 + $0x13a] sm:$0xff]
      %v556 = vld [vmem:[#allocation2 + $0x142] sm:$0xff]
      %v557 = vld [vmem:[#allocation2 + $0x152] sm:$0xff]
      %v558 = vld [vmem:[#allocation2 + $0x15a] sm:$0xff]
      %v559 = vld [vmem:[#allocation2 + $0x16a] sm:$0xff]
      %v560 = vld [vmem:[#allocation2 + $0x172] sm:$0xff]
      %s561 = scalar_lea.vmem %s1, 2
      %v562 = vld [vmem:[%s561] sm:$0x1]
      %v564 = vlaneseq
      %v565 = vshrl.u32 %v564, 7
      %v566 = vsub.s32 0, %v565
      %v567 = vrot.slane %v562, %v566
      %v569 = vmul.f32 %v529, %v567
      %v570 = vmul.f32 %v530, %v567
      %v571 = vmul.f32 %v531, %v567
      %v572 = vmul.f32 %v532, %v567
      %v573 = vmul.f32 %v533, %v567
      %v574 = vmul.f32 %v534, %v567
      %v575 = vmul.f32 %v535, %v567
      %v576 = vmul.f32 %v536, %v567
      %v577 = vmul.f32 %v537, %v567
      %v578 = vmul.f32 %v538, %v567
      %v579 = vmul.f32 %v539, %v567
      %v580 = vmul.f32 %v540, %v567
      %v581 = vmul.f32 %v541, %v567
      %v582 = vmul.f32 %v542, %v567
      %v583 = vmul.f32 %v543, %v567
      %v584 = vmul.f32 %v544, %v567
      %v585 = vmul.f32 %v545, %v567
      %v586 = vmul.f32 %v546, %v567
      %v587 = vmul.f32 %v547, %v567
      %v588 = vmul.f32 %v548, %v567
      %v589 = vmul.f32 %v549, %v567
      %v590 = vmul.f32 %v550, %v567
      %v591 = vmul.f32 %v551, %v567
      %v592 = vmul.f32 %v552, %v567
      %v593 = vmul.f32 %v553, %v567
      %v594 = vmul.f32 %v554, %v567
      %v595 = vmul.f32 %v555, %v567
      %v596 = vmul.f32 %v556, %v567
      %v597 = vmul.f32 %v557, %v567
      %v598 = vmul.f32 %v558, %v567
      %v599 = vmul.f32 %v559, %v567
      %v600 = vmul.f32 %v560, %v567
      %v601 = vadd.f32 %v497, %v569
      %v602 = vadd.f32 %v498, %v570
      %v603 = vadd.f32 %v499, %v571
      %v604 = vadd.f32 %v500, %v572
      %v605 = vadd.f32 %v501, %v573
      %v606 = vadd.f32 %v502, %v574
      %v607 = vadd.f32 %v503, %v575
      %v608 = vadd.f32 %v504, %v576
      %v609 = vadd.f32 %v505, %v577
      %v610 = vadd.f32 %v506, %v578
      %v611 = vadd.f32 %v507, %v579
      %v612 = vadd.f32 %v508, %v580
      %v613 = vadd.f32 %v509, %v581
      %v614 = vadd.f32 %v510, %v582
      %v615 = vadd.f32 %v511, %v583
      %v616 = vadd.f32 %v512, %v584
      %v617 = vadd.f32 %v513, %v585
      %v618 = vadd.f32 %v514, %v586
      %v619 = vadd.f32 %v515, %v587
      %v620 = vadd.f32 %v516, %v588
      %v621 = vadd.f32 %v517, %v589
      %v622 = vadd.f32 %v518, %v590
      %v623 = vadd.f32 %v519, %v591
      %v624 = vadd.f32 %v520, %v592
      %v625 = vadd.f32 %v521, %v593
      %v626 = vadd.f32 %v522, %v594
      %v627 = vadd.f32 %v523, %v595
      %v628 = vadd.f32 %v524, %v596
      %v629 = vadd.f32 %v525, %v597
      %v630 = vadd.f32 %v526, %v598
      %v631 = vadd.f32 %v527, %v599
      %v632 = vadd.f32 %v528, %v600
      %v633 = vld [vmem:[%s281] sm:$0xff]
      %v634 = vld [vmem:[%s281 + $0x8] sm:$0xff]
      %v635 = vld [vmem:[%s281 + $0x18] sm:$0xff]
      %v636 = vld [vmem:[%s281 + $0x20] sm:$0xff]
      %v637 = vld [vmem:[%s281 + $0x30] sm:$0xff]
      %v638 = vld [vmem:[%s281 + $0x38] sm:$0xff]
      %v639 = vld [vmem:[%s281 + $0x48] sm:$0xff]
      %v640 = vld [vmem:[%s281 + $0x50] sm:$0xff]
      %v641 = vld [vmem:[%s281 + $0x60] sm:$0xff]
      %v642 = vld [vmem:[%s281 + $0x68] sm:$0xff]
      %v643 = vld [vmem:[%s281 + $0x78] sm:$0xff]
      %v644 = vld [vmem:[%s281 + $0x80] sm:$0xff]
      %v645 = vld [vmem:[%s281 + $0x90] sm:$0xff]
      %v646 = vld [vmem:[%s281 + $0x98] sm:$0xff]
      %v647 = vld [vmem:[%s281 + $0xa8] sm:$0xff]
      %v648 = vld [vmem:[%s281 + $0xb0] sm:$0xff]
      %v649 = vld [vmem:[%s281 + $0xc0] sm:$0xff]
      %v650 = vld [vmem:[%s281 + $0xc8] sm:$0xff]
      %v651 = vld [vmem:[%s281 + $0xd8] sm:$0xff]
      %v652 = vld [vmem:[%s281 + $0xe0] sm:$0xff]
      %v653 = vld [vmem:[%s281 + $0xf0] sm:$0xff]
      %v654 = vld [vmem:[%s281 + $0xf8] sm:$0xff]
      %v655 = vld [vmem:[%s281 + $0x108] sm:$0xff]
      %v656 = vld [vmem:[%s281 + $0x110] sm:$0xff]
      %v657 = vld [vmem:[%s281 + $0x120] sm:$0xff]
      %v658 = vld [vmem:[%s281 + $0x128] sm:$0xff]
      %v659 = vld [vmem:[%s281 + $0x138] sm:$0xff]
      %v660 = vld [vmem:[%s281 + $0x140] sm:$0xff]
      %v661 = vld [vmem:[%s281 + $0x150] sm:$0xff]
      %v662 = vld [vmem:[%s281 + $0x158] sm:$0xff]
      %v663 = vld [vmem:[%s281 + $0x168] sm:$0xff]
      %v664 = vld [vmem:[%s281 + $0x170] sm:$0xff]
      %s665 = scalar_lea.vmem %s1, 3
      %v666 = vld [vmem:[%s665] sm:$0x1]
      %v668 = vlaneseq
      %v669 = vshrl.u32 %v668, 7
      %v670 = vsub.s32 0, %v669
      %v671 = vrot.slane %v666, %v670
      %v673 = vmul.f32 %v633, %v671
      %v674 = vmul.f32 %v634, %v671
      %v675 = vmul.f32 %v635, %v671
      %v676 = vmul.f32 %v636, %v671
      %v677 = vmul.f32 %v637, %v671
      %v678 = vmul.f32 %v638, %v671
      %v679 = vmul.f32 %v639, %v671
      %v680 = vmul.f32 %v640, %v671
      %v681 = vmul.f32 %v641, %v671
      %v682 = vmul.f32 %v642, %v671
      %v683 = vmul.f32 %v643, %v671
      %v684 = vmul.f32 %v644, %v671
      %v685 = vmul.f32 %v645, %v671
      %v686 = vmul.f32 %v646, %v671
      %v687 = vmul.f32 %v647, %v671
      %v688 = vmul.f32 %v648, %v671
      %v689 = vmul.f32 %v649, %v671
      %v690 = vmul.f32 %v650, %v671
      %v691 = vmul.f32 %v651, %v671
      %v692 = vmul.f32 %v652, %v671
      %v693 = vmul.f32 %v653, %v671
      %v694 = vmul.f32 %v654, %v671
      %v695 = vmul.f32 %v655, %v671
      %v696 = vmul.f32 %v656, %v671
      %v697 = vmul.f32 %v657, %v671
      %v698 = vmul.f32 %v658, %v671
      %v699 = vmul.f32 %v659, %v671
      %v700 = vmul.f32 %v660, %v671
      %v701 = vmul.f32 %v661, %v671
      %v702 = vmul.f32 %v662, %v671
      %v703 = vmul.f32 %v663, %v671
      %v704 = vmul.f32 %v664, %v671
      %v705 = vadd.f32 %v601, %v673
      %v706 = vadd.f32 %v602, %v674
      %v707 = vadd.f32 %v603, %v675
      %v708 = vadd.f32 %v604, %v676
      %v709 = vadd.f32 %v605, %v677
      %v710 = vadd.f32 %v606, %v678
      %v711 = vadd.f32 %v607, %v679
      %v712 = vadd.f32 %v608, %v680
      %v713 = vadd.f32 %v609, %v681
      %v714 = vadd.f32 %v610, %v682
      %v715 = vadd.f32 %v611, %v683
      %v716 = vadd.f32 %v612, %v684
      %v717 = vadd.f32 %v613, %v685
      %v718 = vadd.f32 %v614, %v686
      %v719 = vadd.f32 %v615, %v687
      %v720 = vadd.f32 %v616, %v688
      %v721 = vadd.f32 %v617, %v689
      %v722 = vadd.f32 %v618, %v690
      %v723 = vadd.f32 %v619, %v691
      %v724 = vadd.f32 %v620, %v692
      %v725 = vadd.f32 %v621, %v693
      %v726 = vadd.f32 %v622, %v694
      %v727 = vadd.f32 %v623, %v695
      %v728 = vadd.f32 %v624, %v696
      %v729 = vadd.f32 %v625, %v697
      %v730 = vadd.f32 %v626, %v698
      %v731 = vadd.f32 %v627, %v699
      %v732 = vadd.f32 %v628, %v700
      %v733 = vadd.f32 %v629, %v701
      %v734 = vadd.f32 %v630, %v702
      %v735 = vadd.f32 %v631, %v703
      %v736 = vadd.f32 %v632, %v704
      %v737 = vld [vmem:[%s281 + $0x1] sm:$0xff]
      %v738 = vld [vmem:[%s281 + $0x9] sm:$0xff]
      %v739 = vld [vmem:[%s281 + $0x19] sm:$0xff]
      %v740 = vld [vmem:[%s281 + $0x21] sm:$0xff]
      %v741 = vld [vmem:[%s281 + $0x31] sm:$0xff]
      %v742 = vld [vmem:[%s281 + $0x39] sm:$0xff]
      %v743 = vld [vmem:[%s281 + $0x49] sm:$0xff]
      %v744 = vld [vmem:[%s281 + $0x51] sm:$0xff]
      %v745 = vld [vmem:[%s281 + $0x61] sm:$0xff]
      %v746 = vld [vmem:[%s281 + $0x69] sm:$0xff]
      %v747 = vld [vmem:[%s281 + $0x79] sm:$0xff]
      %v748 = vld [vmem:[%s281 + $0x81] sm:$0xff]
      %v749 = vld [vmem:[%s281 + $0x91] sm:$0xff]
      %v750 = vld [vmem:[%s281 + $0x99] sm:$0xff]
      %v751 = vld [vmem:[%s281 + $0xa9] sm:$0xff]
      %v752 = vld [vmem:[%s281 + $0xb1] sm:$0xff]
      %v753 = vld [vmem:[%s281 + $0xc1] sm:$0xff]
      %v754 = vld [vmem:[%s281 + $0xc9] sm:$0xff]
      %v755 = vld [vmem:[%s281 + $0xd9] sm:$0xff]
      %v756 = vld [vmem:[%s281 + $0xe1] sm:$0xff]
      %v757 = vld [vmem:[%s281 + $0xf1] sm:$0xff]
      %v758 = vld [vmem:[%s281 + $0xf9] sm:$0xff]
      %v759 = vld [vmem:[%s281 + $0x109] sm:$0xff]
      %v760 = vld [vmem:[%s281 + $0x111] sm:$0xff]
      %v761 = vld [vmem:[%s281 + $0x121] sm:$0xff]
      %v762 = vld [vmem:[%s281 + $0x129] sm:$0xff]
      %v763 = vld [vmem:[%s281 + $0x139] sm:$0xff]
      %v764 = vld [vmem:[%s281 + $0x141] sm:$0xff]
      %v765 = vld [vmem:[%s281 + $0x151] sm:$0xff]
      %v766 = vld [vmem:[%s281 + $0x159] sm:$0xff]
      %v767 = vld [vmem:[%s281 + $0x169] sm:$0xff]
      %v768 = vld [vmem:[%s281 + $0x171] sm:$0xff]
      %s769 = scalar_lea.vmem %s1, 4
      %v770 = vld [vmem:[%s769] sm:$0x1]
      %v772 = vlaneseq
      %v773 = vshrl.u32 %v772, 7
      %v774 = vsub.s32 0, %v773
      %v775 = vrot.slane %v770, %v774
      %v777 = vmul.f32 %v737, %v775
      %v778 = vmul.f32 %v738, %v775
      %v779 = vmul.f32 %v739, %v775
      %v780 = vmul.f32 %v740, %v775
      %v781 = vmul.f32 %v741, %v775
      %v782 = vmul.f32 %v742, %v775
      %v783 = vmul.f32 %v743, %v775
      %v784 = vmul.f32 %v744, %v775
      %v785 = vmul.f32 %v745, %v775
      %v786 = vmul.f32 %v746, %v775
      %v787 = vmul.f32 %v747, %v775
      %v788 = vmul.f32 %v748, %v775
      %v789 = vmul.f32 %v749, %v775
      %v790 = vmul.f32 %v750, %v775
      %v791 = vmul.f32 %v751, %v775
      %v792 = vmul.f32 %v752, %v775
      %v793 = vmul.f32 %v753, %v775
      %v794 = vmul.f32 %v754, %v775
      %v795 = vmul.f32 %v755, %v775
      %v796 = vmul.f32 %v756, %v775
      %v797 = vmul.f32 %v757, %v775
      %v798 = vmul.f32 %v758, %v775
      %v799 = vmul.f32 %v759, %v775
      %v800 = vmul.f32 %v760, %v775
      %v801 = vmul.f32 %v761, %v775
      %v802 = vmul.f32 %v762, %v775
      %v803 = vmul.f32 %v763, %v775
      %v804 = vmul.f32 %v764, %v775
      %v805 = vmul.f32 %v765, %v775
      %v806 = vmul.f32 %v766, %v775
      %v807 = vmul.f32 %v767, %v775
      %v808 = vmul.f32 %v768, %v775
      %v809 = vadd.f32 %v705, %v777
      %v810 = vadd.f32 %v706, %v778
      %v811 = vadd.f32 %v707, %v779
      %v812 = vadd.f32 %v708, %v780
      %v813 = vadd.f32 %v709, %v781
      %v814 = vadd.f32 %v710, %v782
      %v815 = vadd.f32 %v711, %v783
      %v816 = vadd.f32 %v712, %v784
      %v817 = vadd.f32 %v713, %v785
      %v818 = vadd.f32 %v714, %v786
      %v819 = vadd.f32 %v715, %v787
      %v820 = vadd.f32 %v716, %v788
      %v821 = vadd.f32 %v717, %v789
      %v822 = vadd.f32 %v718, %v790
      %v823 = vadd.f32 %v719, %v791
      %v824 = vadd.f32 %v720, %v792
      %v825 = vadd.f32 %v721, %v793
      %v826 = vadd.f32 %v722, %v794
      %v827 = vadd.f32 %v723, %v795
      %v828 = vadd.f32 %v724, %v796
      %v829 = vadd.f32 %v725, %v797
      %v830 = vadd.f32 %v726, %v798
      %v831 = vadd.f32 %v727, %v799
      %v832 = vadd.f32 %v728, %v800
      %v833 = vadd.f32 %v729, %v801
      %v834 = vadd.f32 %v730, %v802
      %v835 = vadd.f32 %v731, %v803
      %v836 = vadd.f32 %v732, %v804
      %v837 = vadd.f32 %v733, %v805
      %v838 = vadd.f32 %v734, %v806
      %v839 = vadd.f32 %v735, %v807
      %v840 = vadd.f32 %v736, %v808
      %v841 = vld [vmem:[%s281 + $0x2] sm:$0xff]
      %v842 = vld [vmem:[%s281 + $0xa] sm:$0xff]
      %v843 = vld [vmem:[%s281 + $0x1a] sm:$0xff]
      %v844 = vld [vmem:[%s281 + $0x22] sm:$0xff]
      %v845 = vld [vmem:[%s281 + $0x32] sm:$0xff]
      %v846 = vld [vmem:[%s281 + $0x3a] sm:$0xff]
      %v847 = vld [vmem:[%s281 + $0x4a] sm:$0xff]
      %v848 = vld [vmem:[%s281 + $0x52] sm:$0xff]
      %v849 = vld [vmem:[%s281 + $0x62] sm:$0xff]
      %v850 = vld [vmem:[%s281 + $0x6a] sm:$0xff]
      %v851 = vld [vmem:[%s281 + $0x7a] sm:$0xff]
      %v852 = vld [vmem:[%s281 + $0x82] sm:$0xff]
      %v853 = vld [vmem:[%s281 + $0x92] sm:$0xff]
      %v854 = vld [vmem:[%s281 + $0x9a] sm:$0xff]
      %v855 = vld [vmem:[%s281 + $0xaa] sm:$0xff]
      %v856 = vld [vmem:[%s281 + $0xb2] sm:$0xff]
      %v857 = vld [vmem:[%s281 + $0xc2] sm:$0xff]
      %v858 = vld [vmem:[%s281 + $0xca] sm:$0xff]
      %v859 = vld [vmem:[%s281 + $0xda] sm:$0xff]
      %v860 = vld [vmem:[%s281 + $0xe2] sm:$0xff]
      %v861 = vld [vmem:[%s281 + $0xf2] sm:$0xff]
      %v862 = vld [vmem:[%s281 + $0xfa] sm:$0xff]
      %v863 = vld [vmem:[%s281 + $0x10a] sm:$0xff]
      %v864 = vld [vmem:[%s281 + $0x112] sm:$0xff]
      %v865 = vld [vmem:[%s281 + $0x122] sm:$0xff]
      %v866 = vld [vmem:[%s281 + $0x12a] sm:$0xff]
      %v867 = vld [vmem:[%s281 + $0x13a] sm:$0xff]
      %v868 = vld [vmem:[%s281 + $0x142] sm:$0xff]
      %v869 = vld [vmem:[%s281 + $0x152] sm:$0xff]
      %v870 = vld [vmem:[%s281 + $0x15a] sm:$0xff]
      %v871 = vld [vmem:[%s281 + $0x16a] sm:$0xff]
      %v872 = vld [vmem:[%s281 + $0x172] sm:$0xff]
      %s873 = scalar_lea.vmem %s1, 5
      %v874 = vld [vmem:[%s873] sm:$0x1]
      %v876 = vlaneseq
      %v877 = vshrl.u32 %v876, 7
      %v878 = vsub.s32 0, %v877
      %v879 = vrot.slane %v874, %v878
      %v881 = vmul.f32 %v841, %v879
      %v882 = vmul.f32 %v842, %v879
      %v883 = vmul.f32 %v843, %v879
      %v884 = vmul.f32 %v844, %v879
      %v885 = vmul.f32 %v845, %v879
      %v886 = vmul.f32 %v846, %v879
      %v887 = vmul.f32 %v847, %v879
      %v888 = vmul.f32 %v848, %v879
      %v889 = vmul.f32 %v849, %v879
      %v890 = vmul.f32 %v850, %v879
      %v891 = vmul.f32 %v851, %v879
      %v892 = vmul.f32 %v852, %v879
      %v893 = vmul.f32 %v853, %v879
      %v894 = vmul.f32 %v854, %v879
      %v895 = vmul.f32 %v855, %v879
      %v896 = vmul.f32 %v856, %v879
      %v897 = vmul.f32 %v857, %v879
      %v898 = vmul.f32 %v858, %v879
      %v899 = vmul.f32 %v859, %v879
      %v900 = vmul.f32 %v860, %v879
      %v901 = vmul.f32 %v861, %v879
      %v902 = vmul.f32 %v862, %v879
      %v903 = vmul.f32 %v863, %v879
      %v904 = vmul.f32 %v864, %v879
      %v905 = vmul.f32 %v865, %v879
      %v906 = vmul.f32 %v866, %v879
      %v907 = vmul.f32 %v867, %v879
      %v908 = vmul.f32 %v868, %v879
      %v909 = vmul.f32 %v869, %v879
      %v910 = vmul.f32 %v870, %v879
      %v911 = vmul.f32 %v871, %v879
      %v912 = vmul.f32 %v872, %v879
      %v913 = vadd.f32 %v809, %v881
      %v914 = vadd.f32 %v810, %v882
      %v915 = vadd.f32 %v811, %v883
      %v916 = vadd.f32 %v812, %v884
      %v917 = vadd.f32 %v813, %v885
      %v918 = vadd.f32 %v814, %v886
      %v919 = vadd.f32 %v815, %v887
      %v920 = vadd.f32 %v816, %v888
      %v921 = vadd.f32 %v817, %v889
      %v922 = vadd.f32 %v818, %v890
      %v923 = vadd.f32 %v819, %v891
      %v924 = vadd.f32 %v820, %v892
      %v925 = vadd.f32 %v821, %v893
      %v926 = vadd.f32 %v822, %v894
      %v927 = vadd.f32 %v823, %v895
      %v928 = vadd.f32 %v824, %v896
      %v929 = vadd.f32 %v825, %v897
      %v930 = vadd.f32 %v826, %v898
      %v931 = vadd.f32 %v827, %v899
      %v932 = vadd.f32 %v828, %v900
      %v933 = vadd.f32 %v829, %v901
      %v934 = vadd.f32 %v830, %v902
      %v935 = vadd.f32 %v831, %v903
      %v936 = vadd.f32 %v832, %v904
      %v937 = vadd.f32 %v833, %v905
      %v938 = vadd.f32 %v834, %v906
      %v939 = vadd.f32 %v835, %v907
      %v940 = vadd.f32 %v836, %v908
      %v941 = vadd.f32 %v837, %v909
      %v942 = vadd.f32 %v838, %v910
      %v943 = vadd.f32 %v839, %v911
      %v944 = vadd.f32 %v840, %v912
      %s945 = scalar_lea.vmem [#allocation2], 48
      %v946 = vld [vmem:[%s945] sm:$0xff]
      %v947 = vld [vmem:[%s945 + $0x8] sm:$0xff]
      %v948 = vld [vmem:[%s945 + $0x18] sm:$0xff]
      %v949 = vld [vmem:[%s945 + $0x20] sm:$0xff]
      %v950 = vld [vmem:[%s945 + $0x30] sm:$0xff]
      %v951 = vld [vmem:[%s945 + $0x38] sm:$0xff]
      %v952 = vld [vmem:[%s945 + $0x48] sm:$0xff]
      %v953 = vld [vmem:[%s945 + $0x50] sm:$0xff]
      %v954 = vld [vmem:[%s945 + $0x60] sm:$0xff]
      %v955 = vld [vmem:[%s945 + $0x68] sm:$0xff]
      %v956 = vld [vmem:[%s945 + $0x78] sm:$0xff]
      %v957 = vld [vmem:[%s945 + $0x80] sm:$0xff]
      %v958 = vld [vmem:[%s945 + $0x90] sm:$0xff]
      %v959 = vld [vmem:[%s945 + $0x98] sm:$0xff]
      %v960 = vld [vmem:[%s945 + $0xa8] sm:$0xff]
      %v961 = vld [vmem:[%s945 + $0xb0] sm:$0xff]
      %v962 = vld [vmem:[%s945 + $0xc0] sm:$0xff]
      %v963 = vld [vmem:[%s945 + $0xc8] sm:$0xff]
      %v964 = vld [vmem:[%s945 + $0xd8] sm:$0xff]
      %v965 = vld [vmem:[%s945 + $0xe0] sm:$0xff]
      %v966 = vld [vmem:[%s945 + $0xf0] sm:$0xff]
      %v967 = vld [vmem:[%s945 + $0xf8] sm:$0xff]
      %v968 = vld [vmem:[%s945 + $0x108] sm:$0xff]
      %v969 = vld [vmem:[%s945 + $0x110] sm:$0xff]
      %v970 = vld [vmem:[%s945 + $0x120] sm:$0xff]
      %v971 = vld [vmem:[%s945 + $0x128] sm:$0xff]
      %v972 = vld [vmem:[%s945 + $0x138] sm:$0xff]
      %v973 = vld [vmem:[%s945 + $0x140] sm:$0xff]
      %v974 = vld [vmem:[%s945 + $0x150] sm:$0xff]
      %v975 = vld [vmem:[%s945 + $0x158] sm:$0xff]
      %v976 = vld [vmem:[%s945 + $0x168] sm:$0xff]
      %v977 = vld [vmem:[%s945 + $0x170] sm:$0xff]
      %s978 = scalar_lea.vmem %s1, 6
      %v979 = vld [vmem:[%s978] sm:$0x1]
      %v981 = vlaneseq
      %v982 = vshrl.u32 %v981, 7
      %v983 = vsub.s32 0, %v982
      %v984 = vrot.slane %v979, %v983
      %v986 = vmul.f32 %v946, %v984
      %v987 = vmul.f32 %v947, %v984
      %v988 = vmul.f32 %v948, %v984
      %v989 = vmul.f32 %v949, %v984
      %v990 = vmul.f32 %v950, %v984
      %v991 = vmul.f32 %v951, %v984
      %v992 = vmul.f32 %v952, %v984
      %v993 = vmul.f32 %v953, %v984
      %v994 = vmul.f32 %v954, %v984
      %v995 = vmul.f32 %v955, %v984
      %v996 = vmul.f32 %v956, %v984
      %v997 = vmul.f32 %v957, %v984
      %v998 = vmul.f32 %v958, %v984
      %v999 = vmul.f32 %v959, %v984
      %v1000 = vmul.f32 %v960, %v984
      %v1001 = vmul.f32 %v961, %v984
      %v1002 = vmul.f32 %v962, %v984
      %v1003 = vmul.f32 %v963, %v984
      %v1004 = vmul.f32 %v964, %v984
      %v1005 = vmul.f32 %v965, %v984
      %v1006 = vmul.f32 %v966, %v984
      %v1007 = vmul.f32 %v967, %v984
      %v1008 = vmul.f32 %v968, %v984
      %v1009 = vmul.f32 %v969, %v984
      %v1010 = vmul.f32 %v970, %v984
      %v1011 = vmul.f32 %v971, %v984
      %v1012 = vmul.f32 %v972, %v984
      %v1013 = vmul.f32 %v973, %v984
      %v1014 = vmul.f32 %v974, %v984
      %v1015 = vmul.f32 %v975, %v984
      %v1016 = vmul.f32 %v976, %v984
      %v1017 = vmul.f32 %v977, %v984
      %v1018 = vadd.f32 %v913, %v986
      %v1019 = vadd.f32 %v914, %v987
      %v1020 = vadd.f32 %v915, %v988
      %v1021 = vadd.f32 %v916, %v989
      %v1022 = vadd.f32 %v917, %v990
      %v1023 = vadd.f32 %v918, %v991
      %v1024 = vadd.f32 %v919, %v992
      %v1025 = vadd.f32 %v920, %v993
      %v1026 = vadd.f32 %v921, %v994
      %v1027 = vadd.f32 %v922, %v995
      %v1028 = vadd.f32 %v923, %v996
      %v1029 = vadd.f32 %v924, %v997
      %v1030 = vadd.f32 %v925, %v998
      %v1031 = vadd.f32 %v926, %v999
      %v1032 = vadd.f32 %v927, %v1000
      %v1033 = vadd.f32 %v928, %v1001
      %v1034 = vadd.f32 %v929, %v1002
      %v1035 = vadd.f32 %v930, %v1003
      %v1036 = vadd.f32 %v931, %v1004
      %v1037 = vadd.f32 %v932, %v1005
      %v1038 = vadd.f32 %v933, %v1006
      %v1039 = vadd.f32 %v934, %v1007
      %v1040 = vadd.f32 %v935, %v1008
      %v1041 = vadd.f32 %v936, %v1009
      %v1042 = vadd.f32 %v937, %v1010
      %v1043 = vadd.f32 %v938, %v1011
      %v1044 = vadd.f32 %v939, %v1012
      %v1045 = vadd.f32 %v940, %v1013
      %v1046 = vadd.f32 %v941, %v1014
      %v1047 = vadd.f32 %v942, %v1015
      %v1048 = vadd.f32 %v943, %v1016
      %v1049 = vadd.f32 %v944, %v1017
      %v1050 = vld [vmem:[%s945 + $0x1] sm:$0xff]
      %v1051 = vld [vmem:[%s945 + $0x9] sm:$0xff]
      %v1052 = vld [vmem:[%s945 + $0x19] sm:$0xff]
      %v1053 = vld [vmem:[%s945 + $0x21] sm:$0xff]
      %v1054 = vld [vmem:[%s945 + $0x31] sm:$0xff]
      %v1055 = vld [vmem:[%s945 + $0x39] sm:$0xff]
      %v1056 = vld [vmem:[%s945 + $0x49] sm:$0xff]
      %v1057 = vld [vmem:[%s945 + $0x51] sm:$0xff]
      %v1058 = vld [vmem:[%s945 + $0x61] sm:$0xff]
      %v1059 = vld [vmem:[%s945 + $0x69] sm:$0xff]
      %v1060 = vld [vmem:[%s945 + $0x79] sm:$0xff]
      %v1061 = vld [vmem:[%s945 + $0x81] sm:$0xff]
      %v1062 = vld [vmem:[%s945 + $0x91] sm:$0xff]
      %v1063 = vld [vmem:[%s945 + $0x99] sm:$0xff]
      %v1064 = vld [vmem:[%s945 + $0xa9] sm:$0xff]
      %v1065 = vld [vmem:[%s945 + $0xb1] sm:$0xff]
      %v1066 = vld [vmem:[%s945 + $0xc1] sm:$0xff]
      %v1067 = vld [vmem:[%s945 + $0xc9] sm:$0xff]
      %v1068 = vld [vmem:[%s945 + $0xd9] sm:$0xff]
      %v1069 = vld [vmem:[%s945 + $0xe1] sm:$0xff]
      %v1070 = vld [vmem:[%s945 + $0xf1] sm:$0xff]
      %v1071 = vld [vmem:[%s945 + $0xf9] sm:$0xff]
      %v1072 = vld [vmem:[%s945 + $0x109] sm:$0xff]
      %v1073 = vld [vmem:[%s945 + $0x111] sm:$0xff]
      %v1074 = vld [vmem:[%s945 + $0x121] sm:$0xff]
      %v1075 = vld [vmem:[%s945 + $0x129] sm:$0xff]
      %v1076 = vld [vmem:[%s945 + $0x139] sm:$0xff]
      %v1077 = vld [vmem:[%s945 + $0x141] sm:$0xff]
      %v1078 = vld [vmem:[%s945 + $0x151] sm:$0xff]
      %v1079 = vld [vmem:[%s945 + $0x159] sm:$0xff]
      %v1080 = vld [vmem:[%s945 + $0x169] sm:$0xff]
      %v1081 = vld [vmem:[%s945 + $0x171] sm:$0xff]
      %s1082 = scalar_lea.vmem %s1, 7
      %v1083 = vld [vmem:[%s1082] sm:$0x1]
      %v1085 = vlaneseq
      %v1086 = vshrl.u32 %v1085, 7
      %v1087 = vsub.s32 0, %v1086
      %v1088 = vrot.slane %v1083, %v1087
      %v1090 = vmul.f32 %v1050, %v1088
      %v1091 = vmul.f32 %v1051, %v1088
      %v1092 = vmul.f32 %v1052, %v1088
      %v1093 = vmul.f32 %v1053, %v1088
      %v1094 = vmul.f32 %v1054, %v1088
      %v1095 = vmul.f32 %v1055, %v1088
      %v1096 = vmul.f32 %v1056, %v1088
      %v1097 = vmul.f32 %v1057, %v1088
      %v1098 = vmul.f32 %v1058, %v1088
      %v1099 = vmul.f32 %v1059, %v1088
      %v1100 = vmul.f32 %v1060, %v1088
      %v1101 = vmul.f32 %v1061, %v1088
      %v1102 = vmul.f32 %v1062, %v1088
      %v1103 = vmul.f32 %v1063, %v1088
      %v1104 = vmul.f32 %v1064, %v1088
      %v1105 = vmul.f32 %v1065, %v1088
      %v1106 = vmul.f32 %v1066, %v1088
      %v1107 = vmul.f32 %v1067, %v1088
      %v1108 = vmul.f32 %v1068, %v1088
      %v1109 = vmul.f32 %v1069, %v1088
      %v1110 = vmul.f32 %v1070, %v1088
      %v1111 = vmul.f32 %v1071, %v1088
      %v1112 = vmul.f32 %v1072, %v1088
      %v1113 = vmul.f32 %v1073, %v1088
      %v1114 = vmul.f32 %v1074, %v1088
      %v1115 = vmul.f32 %v1075, %v1088
      %v1116 = vmul.f32 %v1076, %v1088
      %v1117 = vmul.f32 %v1077, %v1088
      %v1118 = vmul.f32 %v1078, %v1088
      %v1119 = vmul.f32 %v1079, %v1088
      %v1120 = vmul.f32 %v1080, %v1088
      %v1121 = vmul.f32 %v1081, %v1088
      %v1122 = vadd.f32 %v1018, %v1090
      %v1123 = vadd.f32 %v1019, %v1091
      %v1124 = vadd.f32 %v1020, %v1092
      %v1125 = vadd.f32 %v1021, %v1093
      %v1126 = vadd.f32 %v1022, %v1094
      %v1127 = vadd.f32 %v1023, %v1095
      %v1128 = vadd.f32 %v1024, %v1096
      %v1129 = vadd.f32 %v1025, %v1097
      %v1130 = vadd.f32 %v1026, %v1098
      %v1131 = vadd.f32 %v1027, %v1099
      %v1132 = vadd.f32 %v1028, %v1100
      %v1133 = vadd.f32 %v1029, %v1101
      %v1134 = vadd.f32 %v1030, %v1102
      %v1135 = vadd.f32 %v1031, %v1103
      %v1136 = vadd.f32 %v1032, %v1104
      %v1137 = vadd.f32 %v1033, %v1105
      %v1138 = vadd.f32 %v1034, %v1106
      %v1139 = vadd.f32 %v1035, %v1107
      %v1140 = vadd.f32 %v1036, %v1108
      %v1141 = vadd.f32 %v1037, %v1109
      %v1142 = vadd.f32 %v1038, %v1110
      %v1143 = vadd.f32 %v1039, %v1111
      %v1144 = vadd.f32 %v1040, %v1112
      %v1145 = vadd.f32 %v1041, %v1113
      %v1146 = vadd.f32 %v1042, %v1114
      %v1147 = vadd.f32 %v1043, %v1115
      %v1148 = vadd.f32 %v1044, %v1116
      %v1149 = vadd.f32 %v1045, %v1117
      %v1150 = vadd.f32 %v1046, %v1118
      %v1151 = vadd.f32 %v1047, %v1119
      %v1152 = vadd.f32 %v1048, %v1120
      %v1153 = vadd.f32 %v1049, %v1121
      %v1154 = vld [vmem:[%s945 + $0x2] sm:$0xff]
      %v1155 = vld [vmem:[%s945 + $0xa] sm:$0xff]
      %v1156 = vld [vmem:[%s945 + $0x1a] sm:$0xff]
      %v1157 = vld [vmem:[%s945 + $0x22] sm:$0xff]
      %v1158 = vld [vmem:[%s945 + $0x32] sm:$0xff]
      %v1159 = vld [vmem:[%s945 + $0x3a] sm:$0xff]
      %v1160 = vld [vmem:[%s945 + $0x4a] sm:$0xff]
      %v1161 = vld [vmem:[%s945 + $0x52] sm:$0xff]
      %v1162 = vld [vmem:[%s945 + $0x62] sm:$0xff]
      %v1163 = vld [vmem:[%s945 + $0x6a] sm:$0xff]
      %v1164 = vld [vmem:[%s945 + $0x7a] sm:$0xff]
      %v1165 = vld [vmem:[%s945 + $0x82] sm:$0xff]
      %v1166 = vld [vmem:[%s945 + $0x92] sm:$0xff]
      %v1167 = vld [vmem:[%s945 + $0x9a] sm:$0xff]
      %v1168 = vld [vmem:[%s945 + $0xaa] sm:$0xff]
      %v1169 = vld [vmem:[%s945 + $0xb2] sm:$0xff]
      %v1170 = vld [vmem:[%s945 + $0xc2] sm:$0xff]
      %v1171 = vld [vmem:[%s945 + $0xca] sm:$0xff]
      %v1172 = vld [vmem:[%s945 + $0xda] sm:$0xff]
      %v1173 = vld [vmem:[%s945 + $0xe2] sm:$0xff]
      %v1174 = vld [vmem:[%s945 + $0xf2] sm:$0xff]
      %v1175 = vld [vmem:[%s945 + $0xfa] sm:$0xff]
      %v1176 = vld [vmem:[%s945 + $0x10a] sm:$0xff]
      %v1177 = vld [vmem:[%s945 + $0x112] sm:$0xff]
      %v1178 = vld [vmem:[%s945 + $0x122] sm:$0xff]
      %v1179 = vld [vmem:[%s945 + $0x12a] sm:$0xff]
      %v1180 = vld [vmem:[%s945 + $0x13a] sm:$0xff]
      %v1181 = vld [vmem:[%s945 + $0x142] sm:$0xff]
      %v1182 = vld [vmem:[%s945 + $0x152] sm:$0xff]
      %v1183 = vld [vmem:[%s945 + $0x15a] sm:$0xff]
      %v1184 = vld [vmem:[%s945 + $0x16a] sm:$0xff]
      %v1185 = vld [vmem:[%s945 + $0x172] sm:$0xff]
      %s1186 = scalar_lea.vmem %s1, 8
      %v1187 = vld [vmem:[%s1186] sm:$0x1]
      %v1189 = vlaneseq
      %v1190 = vshrl.u32 %v1189, 7
      %v1191 = vsub.s32 0, %v1190
      %v1192 = vrot.slane %v1187, %v1191
      %v1194 = vmul.f32 %v1154, %v1192
      %v1195 = vmul.f32 %v1155, %v1192
      %v1196 = vmul.f32 %v1156, %v1192
      %v1197 = vmul.f32 %v1157, %v1192
      %v1198 = vmul.f32 %v1158, %v1192
      %v1199 = vmul.f32 %v1159, %v1192
      %v1200 = vmul.f32 %v1160, %v1192
      %v1201 = vmul.f32 %v1161, %v1192
      %v1202 = vmul.f32 %v1162, %v1192
      %v1203 = vmul.f32 %v1163, %v1192
      %v1204 = vmul.f32 %v1164, %v1192
      %v1205 = vmul.f32 %v1165, %v1192
      %v1206 = vmul.f32 %v1166, %v1192
      %v1207 = vmul.f32 %v1167, %v1192
      %v1208 = vmul.f32 %v1168, %v1192
      %v1209 = vmul.f32 %v1169, %v1192
      %v1210 = vmul.f32 %v1170, %v1192
      %v1211 = vmul.f32 %v1171, %v1192
      %v1212 = vmul.f32 %v1172, %v1192
      %v1213 = vmul.f32 %v1173, %v1192
      %v1214 = vmul.f32 %v1174, %v1192
      %v1215 = vmul.f32 %v1175, %v1192
      %v1216 = vmul.f32 %v1176, %v1192
      %v1217 = vmul.f32 %v1177, %v1192
      %v1218 = vmul.f32 %v1178, %v1192
      %v1219 = vmul.f32 %v1179, %v1192
      %v1220 = vmul.f32 %v1180, %v1192
      %v1221 = vmul.f32 %v1181, %v1192
      %v1222 = vmul.f32 %v1182, %v1192
      %v1223 = vmul.f32 %v1183, %v1192
      %v1224 = vmul.f32 %v1184, %v1192
      %v1225 = vmul.f32 %v1185, %v1192
      %v1226 = vadd.f32 %v1122, %v1194
      %v1227 = vadd.f32 %v1123, %v1195
      %v1228 = vadd.f32 %v1124, %v1196
      %v1229 = vadd.f32 %v1125, %v1197
      %v1230 = vadd.f32 %v1126, %v1198
      %v1231 = vadd.f32 %v1127, %v1199
      %v1232 = vadd.f32 %v1128, %v1200
      %v1233 = vadd.f32 %v1129, %v1201
      %v1234 = vadd.f32 %v1130, %v1202
      %v1235 = vadd.f32 %v1131, %v1203
      %v1236 = vadd.f32 %v1132, %v1204
      %v1237 = vadd.f32 %v1133, %v1205
      %v1238 = vadd.f32 %v1134, %v1206
      %v1239 = vadd.f32 %v1135, %v1207
      %v1240 = vadd.f32 %v1136, %v1208
      %v1241 = vadd.f32 %v1137, %v1209
      %v1242 = vadd.f32 %v1138, %v1210
      %v1243 = vadd.f32 %v1139, %v1211
      %v1244 = vadd.f32 %v1140, %v1212
      %v1245 = vadd.f32 %v1141, %v1213
      %v1246 = vadd.f32 %v1142, %v1214
      %v1247 = vadd.f32 %v1143, %v1215
      %v1248 = vadd.f32 %v1144, %v1216
      %v1249 = vadd.f32 %v1145, %v1217
      %v1250 = vadd.f32 %v1146, %v1218
      %v1251 = vadd.f32 %v1147, %v1219
      %v1252 = vadd.f32 %v1148, %v1220
      %v1253 = vadd.f32 %v1149, %v1221
      %v1254 = vadd.f32 %v1150, %v1222
      %v1255 = vadd.f32 %v1151, %v1223
      %v1256 = vadd.f32 %v1152, %v1224
      %v1257 = vadd.f32 %v1153, %v1225
      %v1258 = vpack.c.bf16 %v1227, %v1226
      %v1259 = vpack.c.bf16 %v1229, %v1228
      %v1260 = vpack.c.bf16 %v1231, %v1230
      %v1261 = vpack.c.bf16 %v1233, %v1232
      %v1262 = vpack.c.bf16 %v1235, %v1234
      %v1263 = vpack.c.bf16 %v1237, %v1236
      %v1264 = vpack.c.bf16 %v1239, %v1238
      %v1265 = vpack.c.bf16 %v1241, %v1240
      %v1266 = vpack.c.bf16 %v1243, %v1242
      %v1267 = vpack.c.bf16 %v1245, %v1244
      %v1268 = vpack.c.bf16 %v1247, %v1246
      %v1269 = vpack.c.bf16 %v1249, %v1248
      %v1270 = vpack.c.bf16 %v1251, %v1250
      %v1271 = vpack.c.bf16 %v1253, %v1252
      %v1272 = vpack.c.bf16 %v1255, %v1254
      %v1273 = vpack.c.bf16 %v1257, %v1256
      %v1290 = vunpack.c.l.b16 %v1258
      %v1291 = vunpack.c.h.b16 %v1258
      %v1292 = vunpack.c.l.b16 %v1259
      %v1293 = vunpack.c.h.b16 %v1259
      %v1294 = vunpack.c.l.b16 %v1260
      %v1295 = vunpack.c.h.b16 %v1260
      %v1296 = vunpack.c.l.b16 %v1261
      %v1297 = vunpack.c.h.b16 %v1261
      %v1298 = vunpack.c.l.b16 %v1262
      %v1299 = vunpack.c.h.b16 %v1262
      %v1300 = vunpack.c.l.b16 %v1263
      %v1301 = vunpack.c.h.b16 %v1263
      %v1302 = vunpack.c.l.b16 %v1264
      %v1303 = vunpack.c.h.b16 %v1264
      %v1304 = vunpack.c.l.b16 %v1265
      %v1305 = vunpack.c.h.b16 %v1265
      %v1306 = vunpack.c.l.b16 %v1266
      %v1307 = vunpack.c.h.b16 %v1266
      %v1308 = vunpack.c.l.b16 %v1267
      %v1309 = vunpack.c.h.b16 %v1267
      %v1310 = vunpack.c.l.b16 %v1268
      %v1311 = vunpack.c.h.b16 %v1268
      %v1312 = vunpack.c.l.b16 %v1269
      %v1313 = vunpack.c.h.b16 %v1269
      %v1314 = vunpack.c.l.b16 %v1270
      %v1315 = vunpack.c.h.b16 %v1270
      %v1316 = vunpack.c.l.b16 %v1271
      %v1317 = vunpack.c.h.b16 %v1271
      %v1318 = vunpack.c.l.b16 %v1272
      %v1319 = vunpack.c.h.b16 %v1272
      %v1320 = vunpack.c.l.b16 %v1273
      %v1321 = vunpack.c.h.b16 %v1273
      %v1322 = vpack.c.b16 %v1290, %v1290
      %v1323 = vpack.c.b16 %v1291, %v1291
      %v1324 = vpack.c.b16 %v1292, %v1292
      %v1325 = vpack.c.b16 %v1293, %v1293
      %v1326 = vpack.c.b16 %v1294, %v1294
      %v1327 = vpack.c.b16 %v1295, %v1295
      %v1328 = vpack.c.b16 %v1296, %v1296
      %v1329 = vpack.c.b16 %v1297, %v1297
      %v1330 = vpack.c.b16 %v1298, %v1298
      %v1331 = vpack.c.b16 %v1299, %v1299
      %v1332 = vpack.c.b16 %v1300, %v1300
      %v1333 = vpack.c.b16 %v1301, %v1301
      %v1334 = vpack.c.b16 %v1302, %v1302
      %v1335 = vpack.c.b16 %v1303, %v1303
      %v1336 = vpack.c.b16 %v1304, %v1304
      %v1337 = vpack.c.b16 %v1305, %v1305
      %v1338 = vpack.c.b16 %v1306, %v1306
      %v1339 = vpack.c.b16 %v1307, %v1307
      %v1340 = vpack.c.b16 %v1308, %v1308
      %v1341 = vpack.c.b16 %v1309, %v1309
      %v1342 = vpack.c.b16 %v1310, %v1310
      %v1343 = vpack.c.b16 %v1311, %v1311
      %v1344 = vpack.c.b16 %v1312, %v1312
      %v1345 = vpack.c.b16 %v1313, %v1313
      %v1346 = vpack.c.b16 %v1314, %v1314
      %v1347 = vpack.c.b16 %v1315, %v1315
      %v1348 = vpack.c.b16 %v1316, %v1316
      %v1349 = vpack.c.b16 %v1317, %v1317
      %v1350 = vpack.c.b16 %v1318, %v1318
      %v1351 = vpack.c.b16 %v1319, %v1319
      %v1352 = vpack.c.b16 %v1320, %v1320
      %v1353 = vpack.c.b16 %v1321, %v1321
      %vm1386 = vcmask 388096
      %1387 = vst.msk [vmem:[%s170] sm:$0xf] %vm1386, %v1322
      %1388 = vst.msk [vmem:[%s170 + $0x4] sm:$0xf] %vm1386, %v1323
      %1389 = vst.msk [vmem:[%s170 + $0x8] sm:$0xf] %vm1386, %v1324
      %1390 = vst.msk [vmem:[%s170 + $0xc] sm:$0xf] %vm1386, %v1325
      %1391 = vst.msk [vmem:[%s170 + $0x10] sm:$0xf] %vm1386, %v1326
      %1392 = vst.msk [vmem:[%s170 + $0x14] sm:$0xf] %vm1386, %v1327
      %1393 = vst.msk [vmem:[%s170 + $0x18] sm:$0xf] %vm1386, %v1328
      %1394 = vst.msk [vmem:[%s170 + $0x1c] sm:$0xf] %vm1386, %v1329
      %1395 = vst.msk [vmem:[%s170 + $0x20] sm:$0xf] %vm1386, %v1330
      %1396 = vst.msk [vmem:[%s170 + $0x24] sm:$0xf] %vm1386, %v1331
      %1397 = vst.msk [vmem:[%s170 + $0x28] sm:$0xf] %vm1386, %v1332
      %1398 = vst.msk [vmem:[%s170 + $0x2c] sm:$0xf] %vm1386, %v1333
      %1399 = vst.msk [vmem:[%s170 + $0x30] sm:$0xf] %vm1386, %v1334
      %1400 = vst.msk [vmem:[%s170 + $0x34] sm:$0xf] %vm1386, %v1335
      %1401 = vst.msk [vmem:[%s170 + $0x38] sm:$0xf] %vm1386, %v1336
      %1402 = vst.msk [vmem:[%s170 + $0x3c] sm:$0xf] %vm1386, %v1337
      %1403 = vst.msk [vmem:[%s170 + $0x40] sm:$0xf] %vm1386, %v1338
      %1404 = vst.msk [vmem:[%s170 + $0x44] sm:$0xf] %vm1386, %v1339
      %1405 = vst.msk [vmem:[%s170 + $0x48] sm:$0xf] %vm1386, %v1340
      %1406 = vst.msk [vmem:[%s170 + $0x4c] sm:$0xf] %vm1386, %v1341
      %1407 = vst.msk [vmem:[%s170 + $0x50] sm:$0xf] %vm1386, %v1342
      %1408 = vst.msk [vmem:[%s170 + $0x54] sm:$0xf] %vm1386, %v1343
      %1409 = vst.msk [vmem:[%s170 + $0x58] sm:$0xf] %vm1386, %v1344
      %1410 = vst.msk [vmem:[%s170 + $0x5c] sm:$0xf] %vm1386, %v1345
      %1411 = vst.msk [vmem:[%s170 + $0x60] sm:$0xf] %vm1386, %v1346
      %1412 = vst.msk [vmem:[%s170 + $0x64] sm:$0xf] %vm1386, %v1347
      %1413 = vst.msk [vmem:[%s170 + $0x68] sm:$0xf] %vm1386, %v1348
      %1414 = vst.msk [vmem:[%s170 + $0x6c] sm:$0xf] %vm1386, %v1349
      %1415 = vst.msk [vmem:[%s170 + $0x70] sm:$0xf] %vm1386, %v1350
      %1416 = vst.msk [vmem:[%s170 + $0x74] sm:$0xf] %vm1386, %v1351
      %1417 = vst.msk [vmem:[%s170 + $0x78] sm:$0xf] %vm1386, %v1352
      %1418 = vst.msk [vmem:[%s170 + $0x7c] sm:$0xf] %vm1386, %v1353
      %p1419 = scmp.lt.s32.totalorder %s14, 1
      %s1420 = scalar_select %p1419, %s14, 1
      %s1421 = smul.addr %s1420, 32
      %s1422 = smul.addr %s1421, 4
      %s1423 = scalar_lea.vmem %s3, %s1422
      // Predicated region
      $region33: #{transformer_block_forward.7} parent=31 // pred_check
        %p1424 = pneg %p100
      $region34: #{transformer_block_forward.7} parent=31 // pred_check_branch
        %1426 = sbr.rel (%p1424) target = $region36
      $region35: #{transformer_block_forward.7} parent=31 // pred_region
        _
      $region36: #{transformer_block_forward.7} parent=31 // pred_fallthru
        _
    $region32: #{transformer_block_forward.7} parent=5 // pred_fallthru
      _
    %p1427 = scmp.le.s32.totalorder 2, %s9
    // Predicated region
    $region37: #{transformer_block_forward.7} parent=5 // pred_check
      %p1428 = pneg %p1427
    $region38: #{transformer_block_forward.7} parent=5 // pred_check_branch
      %1430 = sbr.rel (%p1428) target = $region40
    $region39: #{transformer_block_forward.7} parent=5 // pred_region
      %s1431 = ssub.s32 %s9, 2
      // Predicated region
      $region41: #{transformer_block_forward.7} parent=39 // pred_check
        %p1432 = pneg %p106
      $region42: #{transformer_block_forward.7} parent=39 // pred_check_branch
        %1434 = sbr.rel (%p1432) target = $region44
      $region43: #{transformer_block_forward.7} parent=39 // pred_region
        %p1435 = scmp.lt.s32.totalorder %s15, 1
        %s1436 = scalar_select %p1435, %s15, 1
        %s1437 = smul.addr %s1436, 32
        %s1438 = smul.addr %s1437, 4
        %s1439 = scalar_lea.vmem %s3, %s1438
      $region44: #{transformer_block_forward.7} parent=39 // pred_fallthru
        _
    $region40: #{transformer_block_forward.7} parent=5 // pred_fallthru
      _
  $region6: #{transformer_block_forward.7} parent=0 // loop_footer
    %s13 = sadd.s32 1, %s9
  $region7: #{transformer_block_forward.7} parent=0 // loop_footer_branch
    %8 = sbr.rel target = $region3
  $region8: #{transformer_block_forward.7} parent=0 // loop_exit
    _

// kernel: transformer_block_forward.9
$region0: #{transformer_block_forward.9}
  #allocation0 [shape = 'u32[]', space=smem, size = 0x4, offset = 0x4, fixed_abs, tag = 'smem constant byte address 0x4 - core index']
  #allocation1 [shape = 'u32[144,128]{1,0:T(1,128)}', space=vmem, size = 0x12000, scoped, tag = 'internal scratch']
  %s0 = inlined_call_operand.vmem [shape: f32[2,256,16], index: 0, kind: input, shape index: {}]
  %s1 = inlined_call_operand.vmem [shape: f32[1,16], index: 1, kind: input, shape index: {}]
  %s2 = inlined_call_operand.vmem [shape: f32[1,16], index: 2, kind: input, shape index: {}]
  %s3 = inlined_call_operand.vmem [shape: bf16[16,64], index: 3, kind: input, shape index: {}]
  %s4 = inlined_call_operand.vmem [shape: f32[1,64], index: 4, kind: input, shape index: {}]
  %s5 = inlined_call_operand.vmem [shape: bf16[2,256,64], index: 5, kind: output, shape index: {}]
  %s6 = sld [smem:[#allocation0]]
  $region53: #{transformer_block_forward.9} parent=0
    _
  %s8 = ssub.s32 1, %s6
  %s9 = scalar_select 0, %s8, %s6
  loop: start=0, step=1, limit=4
  $region2: #{transformer_block_forward.9} parent=0 // loop_pre_header
    _
  $region3: #{transformer_block_forward.9} parent=0 // loop_header
    %s11 = sphi 0, %s15
    %p12 = scmp.ge.s32.totalorder %s11, 4
    %s18 = sphi 0, %s30
    %s19 = sphi 0, %s26
    %s20 = sphi 0, %s18
    %s21 = sphi 0, %s19
    %s22 = sphi 0, %s20
    %s23 = sphi 0, %s21
    %s35 = sphi 0, %s37
    %s38 = sphi 0, %s35
    %s39 = sphi 0, %s38
    %s55 = sphi 0, %s39
    %s59 = sphi 0, %s59
    %s61 = sphi 0, %s59
    %s62 = sphi 0, %s61
    %s76 = sphi 0, %s62
    %s80 = sphi 0, %s80
    %s82 = sphi 0, %s80
    %s83 = sphi 0, %s82
    %s97 = sphi 0, %s83
    %s101 = sphi 0, %s101
    %s103 = sphi 0, %s101
    %s104 = sphi 0, %s103
    %s118 = sphi 0, %s104
    %s122 = sphi 0, %s122
    %s124 = sphi 0, %s122
    %s125 = sphi 0, %s124
    %s139 = sphi 0, %s125
    %s147 = sphi 0, %s149
    %s150 = sphi 0, %s147
    %s151 = sphi 0, %s150
    %s167 = sphi 0, %s151
  $region4: #{transformer_block_forward.9} parent=0 // loop_header_branch
    %14 = sbr.rel (%p12) target = $region8
  $region5: #{transformer_block_forward.9} parent=0 // loop_body
    %s16 = ssub.s32 %s11, 1
    %s17 = ssub.s32 %s11, 2
    %s24 = sadd.s32 1, %s19
    %p25 = scmp.ge.s32.totalorder %s24, 1
    %s26 = scalar_select %p25, 0, %s24
    %s27 = sadd.s32 1, %s18
    %s28 = scalar_select %p25, %s27, %s18
    %p29 = scmp.ge.s32.totalorder %s28, 2
    %s30 = scalar_select %p29, 0, %s28
    %s31 = ssub.s32 %s18, %s30
    %s32 = ssub.s32 %s19, %s26
    %s33 = sor.u32 %s31, %s32
    %p34 = scmp.eq.s32.totalorder %s33, 0
    %s36 = sadd.s32 %s35, 1
    %s37 = scalar_select %p34, %s35, %s36
    %p40 = pneg %p34
    %p41 = scmp.eq.s32.totalorder %s11, 1
    %p42 = por %p40, %p41
    %p43 = scmp.ne.s32.totalorder %s35, %s38
    %p44 = scmp.eq.s32.totalorder %s11, 0
    %p45 = por %p43, %p44
    %p46 = scmp.ne.s32.totalorder %s35, %s38
    %p47 = scmp.eq.s32.totalorder %s16, 1
    %p48 = por %p46, %p47
    %p49 = scmp.ne.s32.totalorder %s38, %s39
    %p50 = scmp.eq.s32.totalorder %s16, 0
    %p51 = por %p49, %p50
    %p52 = scmp.ne.s32.totalorder %s38, %s39
    %p53 = scmp.eq.s32.totalorder %s17, 1
    %p54 = por %p52, %p53
    %p56 = scmp.ne.s32.totalorder %s39, %s55
    %p57 = scmp.eq.s32.totalorder %s17, 0
    %p58 = por %p56, %p57
    %s60 = sadd.s32 %s59, 1
    %p63 = scmp.eq.s32.totalorder %s11, 1
    %p64 = scmp.ne.s32.totalorder %s59, %s61
    %p65 = scmp.eq.s32.totalorder %s11, 0
    %p66 = por %p64, %p65
    %p67 = scmp.ne.s32.totalorder %s59, %s61
    %p68 = scmp.eq.s32.totalorder %s16, 1
    %p69 = por %p67, %p68
    %p70 = scmp.ne.s32.totalorder %s61, %s62
    %p71 = scmp.eq.s32.totalorder %s16, 0
    %p72 = por %p70, %p71
    %p73 = scmp.ne.s32.totalorder %s61, %s62
    %p74 = scmp.eq.s32.totalorder %s17, 1
    %p75 = por %p73, %p74
    %p77 = scmp.ne.s32.totalorder %s62, %s76
    %p78 = scmp.eq.s32.totalorder %s17, 0
    %p79 = por %p77, %p78
    %s81 = sadd.s32 %s80, 1
    %p84 = scmp.eq.s32.totalorder %s11, 1
    %p85 = scmp.ne.s32.totalorder %s80, %s82
    %p86 = scmp.eq.s32.totalorder %s11, 0
    %p87 = por %p85, %p86
    %p88 = scmp.ne.s32.totalorder %s80, %s82
    %p89 = scmp.eq.s32.totalorder %s16, 1
    %p90 = por %p88, %p89
    %p91 = scmp.ne.s32.totalorder %s82, %s83
    %p92 = scmp.eq.s32.totalorder %s16, 0
    %p93 = por %p91, %p92
    %p94 = scmp.ne.s32.totalorder %s82, %s83
    %p95 = scmp.eq.s32.totalorder %s17, 1
    %p96 = por %p94, %p95
    %p98 = scmp.ne.s32.totalorder %s83, %s97
    %p99 = scmp.eq.s32.totalorder %s17, 0
    %p100 = por %p98, %p99
    %s102 = sadd.s32 %s101, 1
    %p105 = scmp.eq.s32.totalorder %s11, 1
    %p106 = scmp.ne.s32.totalorder %s101, %s103
    %p107 = scmp.eq.s32.totalorder %s11, 0
    %p108 = por %p106, %p107
    %p109 = scmp.ne.s32.totalorder %s101, %s103
    %p110 = scmp.eq.s32.totalorder %s16, 1
    %p111 = por %p109, %p110
    %p112 = scmp.ne.s32.totalorder %s103, %s104
    %p113 = scmp.eq.s32.totalorder %s16, 0
    %p114 = por %p112, %p113
    %p115 = scmp.ne.s32.totalorder %s103, %s104
    %p116 = scmp.eq.s32.totalorder %s17, 1
    %p117 = por %p115, %p116
    %p119 = scmp.ne.s32.totalorder %s104, %s118
    %p120 = scmp.eq.s32.totalorder %s17, 0
    %p121 = por %p119, %p120
    %s123 = sadd.s32 %s122, 1
    %p126 = scmp.eq.s32.totalorder %s11, 1
    %p127 = scmp.ne.s32.totalorder %s122, %s124
    %p128 = scmp.eq.s32.totalorder %s11, 0
    %p129 = por %p127, %p128
    %p130 = scmp.ne.s32.totalorder %s122, %s124
    %p131 = scmp.eq.s32.totalorder %s16, 1
    %p132 = por %p130, %p131
    %p133 = scmp.ne.s32.totalorder %s124, %s125
    %p134 = scmp.eq.s32.totalorder %s16, 0
    %p135 = por %p133, %p134
    %p136 = scmp.ne.s32.totalorder %s124, %s125
    %p137 = scmp.eq.s32.totalorder %s17, 1
    %p138 = por %p136, %p137
    %p140 = scmp.ne.s32.totalorder %s125, %s139
    %p141 = scmp.eq.s32.totalorder %s17, 0
    %p142 = por %p140, %p141
    %s143 = ssub.s32 %s18, %s30
    %s144 = ssub.s32 %s19, %s26
    %s145 = sor.u32 %s143, %s144
    %p146 = scmp.eq.s32.totalorder %s145, 0
    %s148 = sadd.s32 %s147, 1
    %s149 = scalar_select %p146, %s147, %s148
    %p152 = pneg %p146
    %p153 = scmp.eq.s32.totalorder %s11, 1
    %p154 = por %p152, %p153
    %p155 = scmp.ne.s32.totalorder %s147, %s150
    %p156 = scmp.eq.s32.totalorder %s11, 0
    %p157 = por %p155, %p156
    %p158 = scmp.ne.s32.totalorder %s147, %s150
    %p159 = scmp.eq.s32.totalorder %s16, 1
    %p160 = por %p158, %p159
    %p161 = scmp.ne.s32.totalorder %s150, %s151
    %p162 = scmp.eq.s32.totalorder %s16, 0
    %p163 = por %p161, %p162
    %p164 = scmp.ne.s32.totalorder %s150, %s151
    %p165 = scmp.eq.s32.totalorder %s17, 1
    %p166 = por %p164, %p165
    %p168 = scmp.ne.s32.totalorder %s151, %s167
    %p169 = scmp.eq.s32.totalorder %s17, 0
    %p170 = por %p168, %p169
    %p171 = scmp.le.s32.totalorder 1, %s11
    %p172 = scmp.lt.s32.totalorder %s11, 3
    %p173 = pnand %p171, %p172
    %p174 = pneg %p173
    // Predicated region
    $region9: #{transformer_block_forward.9} parent=5 // pred_check
      _
    $region10: #{transformer_block_forward.9} parent=5 // pred_check_branch
      %176 = sbr.rel (%p173) target = $region12
    $region11: #{transformer_block_forward.9} parent=5 // pred_region
      %s177 = ssub.s32 %s11, 1
      // Predicated region
      $region13: #{transformer_block_forward.9} parent=11 // pred_check
        %p178 = pneg %p72
      $region14: #{transformer_block_forward.9} parent=11 // pred_check_branch
        %180 = sbr.rel (%p178) target = $region16
      $region15: #{transformer_block_forward.9} parent=11 // pred_region
        _
      $region16: #{transformer_block_forward.9} parent=11 // pred_fallthru
        _
      // Predicated region
      $region17: #{transformer_block_forward.9} parent=11 // pred_check
        %p181 = pneg %p93
      $region18: #{transformer_block_forward.9} parent=11 // pred_check_branch
        %183 = sbr.rel (%p181) target = $region20
      $region19: #{transformer_block_forward.9} parent=11 // pred_region
        _
      $region20: #{transformer_block_forward.9} parent=11 // pred_fallthru
        _
      // Predicated region
      $region21: #{transformer_block_forward.9} parent=11 // pred_check
        %p184 = pneg %p114
      $region22: #{transformer_block_forward.9} parent=11 // pred_check_branch
        %186 = sbr.rel (%p184) target = $region24
      $region23: #{transformer_block_forward.9} parent=11 // pred_region
        _
      $region24: #{transformer_block_forward.9} parent=11 // pred_fallthru
        _
      // Predicated region
      $region25: #{transformer_block_forward.9} parent=11 // pred_check
        %p187 = pneg %p135
      $region26: #{transformer_block_forward.9} parent=11 // pred_check_branch
        %189 = sbr.rel (%p187) target = $region28
      $region27: #{transformer_block_forward.9} parent=11 // pred_region
        _
      $region28: #{transformer_block_forward.9} parent=11 // pred_fallthru
        _
    $region12: #{transformer_block_forward.9} parent=5 // pred_fallthru
      _
    %p190 = scmp.lt.s32.totalorder %s11, 2
    // Predicated region
    $region29: #{transformer_block_forward.9} parent=5 // pred_check
      %p191 = pneg %p190
    $region30: #{transformer_block_forward.9} parent=5 // pred_check_branch
      %193 = sbr.rel (%p191) target = $region32
    $region31: #{transformer_block_forward.9} parent=5 // pred_region
      // Predicated region
      $region33: #{transformer_block_forward.9} parent=31 // pred_check
        %p194 = pneg %p45
      $region34: #{transformer_block_forward.9} parent=31 // pred_check_branch
        %196 = sbr.rel (%p194) target = $region36
      $region35: #{transformer_block_forward.9} parent=31 // pred_region
        %s197 = smul.u32 32, %s19
        %p198 = scmp.lt.s32.totalorder %s18, 1
        %s199 = scalar_select %p198, %s18, 1
        %p200 = scmp.lt.s32.totalorder %s197, 31
        %s201 = scalar_select %p200, %s197, 31
        %s202 = smul.addr %s199, 32
        %s203 = sadd.s32 %s201, %s202
        %s204 = smul.addr %s203, 8
        %s205 = scalar_lea.vmem %s0, %s204
        %s206 = smul.u32 32, %s19
      $region36: #{transformer_block_forward.9} parent=31 // pred_fallthru
        _
    $region32: #{transformer_block_forward.9} parent=5 // pred_fallthru
      _
    %p207 = scmp.le.s32.totalorder 1, %s11
    %p208 = scmp.lt.s32.totalorder %s11, 3
    %p209 = pnand %p207, %p208
    %p210 = pneg %p209
    // Predicated region
    $region37: #{transformer_block_forward.9} parent=5 // pred_check
      _
    $region38: #{transformer_block_forward.9} parent=5 // pred_check_branch
      %212 = sbr.rel (%p209) target = $region40
    $region39: #{transformer_block_forward.9} parent=5 // pred_region
      %s213 = ssub.s32 %s11, 1
      %s214 = smul.u32 32, %s21
      %p215 = scmp.lt.s32.totalorder %s20, 1
      %s216 = scalar_select %p215, %s20, 1
      %p217 = scmp.lt.s32.totalorder %s214, 31
      %s218 = scalar_select %p217, %s214, 31
      %s219 = smul.addr %s216, 32
      %s220 = sadd.s32 %s218, %s219
      %s221 = smul.addr %s220, 8
      %s222 = scalar_lea.vmem %s0, %s221
      %p223 = pneg %p51
      %p224 = pneg %p48
      %p225 = pneg %p72
      %p226 = pneg %p69
      %p227 = pneg %p93
      %p228 = pneg %p90
      %p229 = pneg %p114
      %p230 = pneg %p111
      %p231 = pneg %p135
      %p232 = pneg %p132
      %p233 = pneg %p163
      %p234 = pneg %p160
      %s235 = smul.u32 32, %s21
      %p236 = scmp.lt.s32.totalorder %s20, 1
      %s237 = scalar_select %p236, %s20, 1
      %p238 = scmp.lt.s32.totalorder %s235, 31
      %s239 = scalar_select %p238, %s235, 31
      %s240 = smul.addr %s237, 32
      %s241 = sadd.s32 %s239, %s240
      %s242 = smul.addr %s241, 4
      %s243 = scalar_lea.vmem %s5, %s242
      %s244 = smul.u32 32, %s21
      %p245 = scmp.lt.s32.totalorder %s20, 1
      %s246 = scalar_select %p245, %s20, 1
      %p247 = scmp.lt.s32.totalorder %s244, 31
      %s248 = scalar_select %p247, %s244, 31
      %s249 = smul.addr %s246, 32
      %s250 = sadd.s32 %s248, %s249
      %s251 = smul.addr %s250, 8
      %s252 = scalar_lea.vmem %s0, %s251
      %s253 = smul.u32 32, %s21
      %s254 = smul.u32 32, %s21
      %p255 = scmp.lt.s32.totalorder %s20, 1
      %s256 = scalar_select %p255, %s20, 1
      %p257 = scmp.lt.s32.totalorder %s254, 31
      %s258 = scalar_select %p257, %s254, 31
      %s259 = smul.addr %s256, 32
      %s260 = sadd.s32 %s258, %s259
      %s261 = smul.addr %s260, 4
      %s262 = scalar_lea.vmem %s5, %s261
      %s263 = smul.u32 32, %s21
      %v265 = vld [vmem:[%s252] sm:$0xff]
      %v266 = vld [vmem:[%s252 + $0x8] sm:$0xff]
      %v267 = vld [vmem:[%s252 + $0x10] sm:$0xff]
      %v268 = vld [vmem:[%s252 + $0x18] sm:$0xff]
      %v269 = vld [vmem:[%s252 + $0x20] sm:$0xff]
      %v270 = vld [vmem:[%s252 + $0x28] sm:$0xff]
      %v271 = vld [vmem:[%s252 + $0x30] sm:$0xff]
      %v272 = vld [vmem:[%s252 + $0x38] sm:$0xff]
      %v273 = vld [vmem:[%s252 + $0x40] sm:$0xff]
      %v274 = vld [vmem:[%s252 + $0x48] sm:$0xff]
      %v275 = vld [vmem:[%s252 + $0x50] sm:$0xff]
      %v276 = vld [vmem:[%s252 + $0x58] sm:$0xff]
      %v277 = vld [vmem:[%s252 + $0x60] sm:$0xff]
      %v278 = vld [vmem:[%s252 + $0x68] sm:$0xff]
      %v279 = vld [vmem:[%s252 + $0x70] sm:$0xff]
      %v280 = vld [vmem:[%s252 + $0x78] sm:$0xff]
      %v281 = vld [vmem:[%s252 + $0x80] sm:$0xff]
      %v282 = vld [vmem:[%s252 + $0x88] sm:$0xff]
      %v283 = vld [vmem:[%s252 + $0x90] sm:$0xff]
      %v284 = vld [vmem:[%s252 + $0x98] sm:$0xff]
      %v285 = vld [vmem:[%s252 + $0xa0] sm:$0xff]
      %v286 = vld [vmem:[%s252 + $0xa8] sm:$0xff]
      %v287 = vld [vmem:[%s252 + $0xb0] sm:$0xff]
      %v288 = vld [vmem:[%s252 + $0xb8] sm:$0xff]
      %v289 = vld [vmem:[%s252 + $0xc0] sm:$0xff]
      %v290 = vld [vmem:[%s252 + $0xc8] sm:$0xff]
      %v291 = vld [vmem:[%s252 + $0xd0] sm:$0xff]
      %v292 = vld [vmem:[%s252 + $0xd8] sm:$0xff]
      %v293 = vld [vmem:[%s252 + $0xe0] sm:$0xff]
      %v294 = vld [vmem:[%s252 + $0xe8] sm:$0xff]
      %v295 = vld [vmem:[%s252 + $0xf0] sm:$0xff]
      %v296 = vld [vmem:[%s252 + $0xf8] sm:$0xff]
      %vm297 = vcmask 130048
      %v298 = vsel %vm297, %v265, 0.0
      %299 = vadd.xlane.f32.xlu0 %v298
      %v300 = vpop.xlane.xlu0 %299
      %v301 = vsel %vm297, %v266, 0.0
      %302 = vadd.xlane.f32.xlu0 %v301
      %v303 = vpop.xlane.xlu0 %302
      %v304 = vsel %vm297, %v267, 0.0
      %305 = vadd.xlane.f32.xlu0 %v304
      %v306 = vpop.xlane.xlu0 %305
      %v307 = vsel %vm297, %v268, 0.0
      %308 = vadd.xlane.f32.xlu0 %v307
      %v309 = vpop.xlane.xlu0 %308
      %v310 = vsel %vm297, %v269, 0.0
      %311 = vadd.xlane.f32.xlu0 %v310
      %v312 = vpop.xlane.xlu0 %311
      %v313 = vsel %vm297, %v270, 0.0
      %314 = vadd.xlane.f32.xlu0 %v313
      %v315 = vpop.xlane.xlu0 %314
      %v316 = vsel %vm297, %v271, 0.0
      %317 = vadd.xlane.f32.xlu0 %v316
      %v318 = vpop.xlane.xlu0 %317
      %v319 = vsel %vm297, %v272, 0.0
      %320 = vadd.xlane.f32.xlu0 %v319
      %v321 = vpop.xlane.xlu0 %320
      %v322 = vsel %vm297, %v273, 0.0
      %323 = vadd.xlane.f32.xlu0 %v322
      %v324 = vpop.xlane.xlu0 %323
      %v325 = vsel %vm297, %v274, 0.0
      %326 = vadd.xlane.f32.xlu0 %v325
      %v327 = vpop.xlane.xlu0 %326
      %v328 = vsel %vm297, %v275, 0.0
      %329 = vadd.xlane.f32.xlu0 %v328
      %v330 = vpop.xlane.xlu0 %329
      %v331 = vsel %vm297, %v276, 0.0
      %332 = vadd.xlane.f32.xlu0 %v331
      %v333 = vpop.xlane.xlu0 %332
      %v334 = vsel %vm297, %v277, 0.0
      %335 = vadd.xlane.f32.xlu0 %v334
      %v336 = vpop.xlane.xlu0 %335
      %v337 = vsel %vm297, %v278, 0.0
      %338 = vadd.xlane.f32.xlu0 %v337
      %v339 = vpop.xlane.xlu0 %338
      %v340 = vsel %vm297, %v279, 0.0
      %341 = vadd.xlane.f32.xlu0 %v340
      %v342 = vpop.xlane.xlu0 %341
      %v343 = vsel %vm297, %v280, 0.0
      %344 = vadd.xlane.f32.xlu0 %v343
      %v345 = vpop.xlane.xlu0 %344
      %v346 = vsel %vm297, %v281, 0.0
      %347 = vadd.xlane.f32.xlu0 %v346
      %v348 = vpop.xlane.xlu0 %347
      %v349 = vsel %vm297, %v282, 0.0
      %350 = vadd.xlane.f32.xlu0 %v349
      %v351 = vpop.xlane.xlu0 %350
      %v352 = vsel %vm297, %v283, 0.0
      %353 = vadd.xlane.f32.xlu0 %v352
      %v354 = vpop.xlane.xlu0 %353
      %v355 = vsel %vm297, %v284, 0.0
      %356 = vadd.xlane.f32.xlu0 %v355
      %v357 = vpop.xlane.xlu0 %356
      %v358 = vsel %vm297, %v285, 0.0
      %359 = vadd.xlane.f32.xlu0 %v358
      %v360 = vpop.xlane.xlu0 %359
      %v361 = vsel %vm297, %v286, 0.0
      %362 = vadd.xlane.f32.xlu0 %v361
      %v363 = vpop.xlane.xlu0 %362
      %v364 = vsel %vm297, %v287, 0.0
      %365 = vadd.xlane.f32.xlu0 %v364
      %v366 = vpop.xlane.xlu0 %365
      %v367 = vsel %vm297, %v288, 0.0
      %368 = vadd.xlane.f32.xlu0 %v367
      %v369 = vpop.xlane.xlu0 %368
      %v370 = vsel %vm297, %v289, 0.0
      %371 = vadd.xlane.f32.xlu0 %v370
      %v372 = vpop.xlane.xlu0 %371
      %v373 = vsel %vm297, %v290, 0.0
      %374 = vadd.xlane.f32.xlu0 %v373
      %v375 = vpop.xlane.xlu0 %374
      %v376 = vsel %vm297, %v291, 0.0
      %377 = vadd.xlane.f32.xlu0 %v376
      %v378 = vpop.xlane.xlu0 %377
      %v379 = vsel %vm297, %v292, 0.0
      %380 = vadd.xlane.f32.xlu0 %v379
      %v381 = vpop.xlane.xlu0 %380
      %v382 = vsel %vm297, %v293, 0.0
      %383 = vadd.xlane.f32.xlu0 %v382
      %v384 = vpop.xlane.xlu0 %383
      %v385 = vsel %vm297, %v294, 0.0
      %386 = vadd.xlane.f32.xlu0 %v385
      %v387 = vpop.xlane.xlu0 %386
      %v388 = vsel %vm297, %v295, 0.0
      %389 = vadd.xlane.f32.xlu0 %v388
      %v390 = vpop.xlane.xlu0 %389
      %v391 = vsel %vm297, %v296, 0.0
      %392 = vadd.xlane.f32.xlu0 %v391
      %v393 = vpop.xlane.xlu0 %392
      %v394 = vrcp.pop 16.0
      %v395 = vmul.f32 %v300, %v394
      %v396 = vmul.f32 %v303, %v394
      %v397 = vmul.f32 %v306, %v394
      %v398 = vmul.f32 %v309, %v394
      %v399 = vmul.f32 %v312, %v394
      %v400 = vmul.f32 %v315, %v394
      %v401 = vmul.f32 %v318, %v394
      %v402 = vmul.f32 %v321, %v394
      %v403 = vmul.f32 %v324, %v394
      %v404 = vmul.f32 %v327, %v394
      %v405 = vmul.f32 %v330, %v394
      %v406 = vmul.f32 %v333, %v394
      %v407 = vmul.f32 %v336, %v394
      %v408 = vmul.f32 %v339, %v394
      %v409 = vmul.f32 %v342, %v394
      %v410 = vmul.f32 %v345, %v394
      %v411 = vmul.f32 %v348, %v394
      %v412 = vmul.f32 %v351, %v394
      %v413 = vmul.f32 %v354, %v394
      %v414 = vmul.f32 %v357, %v394
      %v415 = vmul.f32 %v360, %v394
      %v416 = vmul.f32 %v363, %v394
      %v417 = vmul.f32 %v366, %v394
      %v418 = vmul.f32 %v369, %v394
      %v419 = vmul.f32 %v372, %v394
      %v420 = vmul.f32 %v375, %v394
      %v421 = vmul.f32 %v378, %v394
      %v422 = vmul.f32 %v381, %v394
      %v423 = vmul.f32 %v384, %v394
      %v424 = vmul.f32 %v387, %v394
      %v425 = vmul.f32 %v390, %v394
      %v426 = vmul.f32 %v393, %v394
      %v427 = vsub.f32 %v265, %v395
      %v428 = vsub.f32 %v266, %v396
      %v429 = vsub.f32 %v267, %v397
      %v430 = vsub.f32 %v268, %v398
      %v431 = vsub.f32 %v269, %v399
      %v432 = vsub.f32 %v270, %v400
      %v433 = vsub.f32 %v271, %v401
      %v434 = vsub.f32 %v272, %v402
      %v435 = vsub.f32 %v273, %v403
      %v436 = vsub.f32 %v274, %v404
      %v437 = vsub.f32 %v275, %v405
      %v438 = vsub.f32 %v276, %v406
      %v439 = vsub.f32 %v277, %v407
      %v440 = vsub.f32 %v278, %v408
      %v441 = vsub.f32 %v279, %v409
      %v442 = vsub.f32 %v280, %v410
      %v443 = vsub.f32 %v281, %v411
      %v444 = vsub.f32 %v282, %v412
      %v445 = vsub.f32 %v283, %v413
      %v446 = vsub.f32 %v284, %v414
      %v447 = vsub.f32 %v285, %v415
      %v448 = vsub.f32 %v286, %v416
      %v449 = vsub.f32 %v287, %v417
      %v450 = vsub.f32 %v288, %v418
      %v451 = vsub.f32 %v289, %v419
      %v452 = vsub.f32 %v290, %v420
      %v453 = vsub.f32 %v291, %v421
      %v454 = vsub.f32 %v292, %v422
      %v455 = vsub.f32 %v293, %v423
      %v456 = vsub.f32 %v294, %v424
      %v457 = vsub.f32 %v295, %v425
      %v458 = vsub.f32 %v296, %v426
      %v459 = vmul.f32 %v427, %v427
      %v460 = vmul.f32 %v428, %v428
      %v461 = vmul.f32 %v429, %v429
      %v462 = vmul.f32 %v430, %v430
      %v463 = vmul.f32 %v431, %v431
      %v464 = vmul.f32 %v432, %v432
      %v465 = vmul.f32 %v433, %v433
      %v466 = vmul.f32 %v434, %v434
      %v467 = vmul.f32 %v435, %v435
      %v468 = vmul.f32 %v436, %v436
      %v469 = vmul.f32 %v437, %v437
      %v470 = vmul.f32 %v438, %v438
      %v471 = vmul.f32 %v439, %v439
      %v472 = vmul.f32 %v440, %v440
      %v473 = vmul.f32 %v441, %v441
      %v474 = vmul.f32 %v442, %v442
      %v475 = vmul.f32 %v443, %v443
      %v476 = vmul.f32 %v444, %v444
      %v477 = vmul.f32 %v445, %v445
      %v478 = vmul.f32 %v446, %v446
      %v479 = vmul.f32 %v447, %v447
      %v480 = vmul.f32 %v448, %v448
      %v481 = vmul.f32 %v449, %v449
      %v482 = vmul.f32 %v450, %v450
      %v483 = vmul.f32 %v451, %v451
      %v484 = vmul.f32 %v452, %v452
      %v485 = vmul.f32 %v453, %v453
      %v486 = vmul.f32 %v454, %v454
      %v487 = vmul.f32 %v455, %v455
      %v488 = vmul.f32 %v456, %v456
      %v489 = vmul.f32 %v457, %v457
      %v490 = vmul.f32 %v458, %v458
      %v491 = vsel %vm297, %v459, 0.0
      %492 = vadd.xlane.f32.xlu0 %v491
      %v493 = vpop.xlane.xlu0 %492
      %v494 = vsel %vm297, %v460, 0.0
      %495 = vadd.xlane.f32.xlu0 %v494
      %v496 = vpop.xlane.xlu0 %495
      %v497 = vsel %vm297, %v461, 0.0
      %498 = vadd.xlane.f32.xlu0 %v497
      %v499 = vpop.xlane.xlu0 %498
      %v500 = vsel %vm297, %v462, 0.0
      %501 = vadd.xlane.f32.xlu0 %v500
      %v502 = vpop.xlane.xlu0 %501
      %v503 = vsel %vm297, %v463, 0.0
      %504 = vadd.xlane.f32.xlu0 %v503
      %v505 = vpop.xlane.xlu0 %504
      %v506 = vsel %vm297, %v464, 0.0
      %507 = vadd.xlane.f32.xlu0 %v506
      %v508 = vpop.xlane.xlu0 %507
      %v509 = vsel %vm297, %v465, 0.0
      %510 = vadd.xlane.f32.xlu0 %v509
      %v511 = vpop.xlane.xlu0 %510
      %v512 = vsel %vm297, %v466, 0.0
      %513 = vadd.xlane.f32.xlu0 %v512
      %v514 = vpop.xlane.xlu0 %513
      %v515 = vsel %vm297, %v467, 0.0
      %516 = vadd.xlane.f32.xlu0 %v515
      %v517 = vpop.xlane.xlu0 %516
      %v518 = vsel %vm297, %v468, 0.0
      %519 = vadd.xlane.f32.xlu0 %v518
      %v520 = vpop.xlane.xlu0 %519
      %v521 = vsel %vm297, %v469, 0.0
      %522 = vadd.xlane.f32.xlu0 %v521
      %v523 = vpop.xlane.xlu0 %522
      %v524 = vsel %vm297, %v470, 0.0
      %525 = vadd.xlane.f32.xlu0 %v524
      %v526 = vpop.xlane.xlu0 %525
      %v527 = vsel %vm297, %v471, 0.0
      %528 = vadd.xlane.f32.xlu0 %v527
      %v529 = vpop.xlane.xlu0 %528
      %v530 = vsel %vm297, %v472, 0.0
      %531 = vadd.xlane.f32.xlu0 %v530
      %v532 = vpop.xlane.xlu0 %531
      %v533 = vsel %vm297, %v473, 0.0
      %534 = vadd.xlane.f32.xlu0 %v533
      %v535 = vpop.xlane.xlu0 %534
      %v536 = vsel %vm297, %v474, 0.0
      %537 = vadd.xlane.f32.xlu0 %v536
      %v538 = vpop.xlane.xlu0 %537
      %v539 = vsel %vm297, %v475, 0.0
      %540 = vadd.xlane.f32.xlu0 %v539
      %v541 = vpop.xlane.xlu0 %540
      %v542 = vsel %vm297, %v476, 0.0
      %543 = vadd.xlane.f32.xlu0 %v542
      %v544 = vpop.xlane.xlu0 %543
      %v545 = vsel %vm297, %v477, 0.0
      %546 = vadd.xlane.f32.xlu0 %v545
      %v547 = vpop.xlane.xlu0 %546
      %v548 = vsel %vm297, %v478, 0.0
      %549 = vadd.xlane.f32.xlu0 %v548
      %v550 = vpop.xlane.xlu0 %549
      %v551 = vsel %vm297, %v479, 0.0
      %552 = vadd.xlane.f32.xlu0 %v551
      %v553 = vpop.xlane.xlu0 %552
      %v554 = vsel %vm297, %v480, 0.0
      %555 = vadd.xlane.f32.xlu0 %v554
      %v556 = vpop.xlane.xlu0 %555
      %v557 = vsel %vm297, %v481, 0.0
      %558 = vadd.xlane.f32.xlu0 %v557
      %v559 = vpop.xlane.xlu0 %558
      %v560 = vsel %vm297, %v482, 0.0
      %561 = vadd.xlane.f32.xlu0 %v560
      %v562 = vpop.xlane.xlu0 %561
      %v563 = vsel %vm297, %v483, 0.0
      %564 = vadd.xlane.f32.xlu0 %v563
      %v565 = vpop.xlane.xlu0 %564
      %v566 = vsel %vm297, %v484, 0.0
      %567 = vadd.xlane.f32.xlu0 %v566
      %v568 = vpop.xlane.xlu0 %567
      %v569 = vsel %vm297, %v485, 0.0
      %570 = vadd.xlane.f32.xlu0 %v569
      %v571 = vpop.xlane.xlu0 %570
      %v572 = vsel %vm297, %v486, 0.0
      %573 = vadd.xlane.f32.xlu0 %v572
      %v574 = vpop.xlane.xlu0 %573
      %v575 = vsel %vm297, %v487, 0.0
      %576 = vadd.xlane.f32.xlu0 %v575
      %v577 = vpop.xlane.xlu0 %576
      %v578 = vsel %vm297, %v488, 0.0
      %579 = vadd.xlane.f32.xlu0 %v578
      %v580 = vpop.xlane.xlu0 %579
      %v581 = vsel %vm297, %v489, 0.0
      %582 = vadd.xlane.f32.xlu0 %v581
      %v583 = vpop.xlane.xlu0 %582
      %v584 = vsel %vm297, %v490, 0.0
      %585 = vadd.xlane.f32.xlu0 %v584
      %v586 = vpop.xlane.xlu0 %585
      %v587 = vmul.f32 %v493, %v394
      %v588 = vmul.f32 %v496, %v394
      %v589 = vmul.f32 %v499, %v394
      %v590 = vmul.f32 %v502, %v394
      %v591 = vmul.f32 %v505, %v394
      %v592 = vmul.f32 %v508, %v394
      %v593 = vmul.f32 %v511, %v394
      %v594 = vmul.f32 %v514, %v394
      %v595 = vmul.f32 %v517, %v394
      %v596 = vmul.f32 %v520, %v394
      %v597 = vmul.f32 %v523, %v394
      %v598 = vmul.f32 %v526, %v394
      %v599 = vmul.f32 %v529, %v394
      %v600 = vmul.f32 %v532, %v394
      %v601 = vmul.f32 %v535, %v394
      %v602 = vmul.f32 %v538, %v394
      %v603 = vmul.f32 %v541, %v394
      %v604 = vmul.f32 %v544, %v394
      %v605 = vmul.f32 %v547, %v394
      %v606 = vmul.f32 %v550, %v394
      %v607 = vmul.f32 %v553, %v394
      %v608 = vmul.f32 %v556, %v394
      %v609 = vmul.f32 %v559, %v394
      %v610 = vmul.f32 %v562, %v394
      %v611 = vmul.f32 %v565, %v394
      %v612 = vmul.f32 %v568, %v394
      %v613 = vmul.f32 %v571, %v394
      %v614 = vmul.f32 %v574, %v394
      %v615 = vmul.f32 %v577, %v394
      %v616 = vmul.f32 %v580, %v394
      %v617 = vmul.f32 %v583, %v394
      %v618 = vmul.f32 %v586, %v394
      %v619 = vadd.f32 %v587, 1e-05
      %v620 = vadd.f32 %v588, 1e-05
      %v621 = vadd.f32 %v589, 1e-05
      %v622 = vadd.f32 %v590, 1e-05
      %v623 = vadd.f32 %v591, 1e-05
      %v624 = vadd.f32 %v592, 1e-05
      %v625 = vadd.f32 %v593, 1e-05
      %v626 = vadd.f32 %v594, 1e-05
      %v627 = vadd.f32 %v595, 1e-05
      %v628 = vadd.f32 %v596, 1e-05
      %v629 = vadd.f32 %v597, 1e-05
      %v630 = vadd.f32 %v598, 1e-05
      %v631 = vadd.f32 %v599, 1e-05
      %v632 = vadd.f32 %v600, 1e-05
      %v633 = vadd.f32 %v601, 1e-05
      %v634 = vadd.f32 %v602, 1e-05
      %v635 = vadd.f32 %v603, 1e-05
      %v636 = vadd.f32 %v604, 1e-05
      %v637 = vadd.f32 %v605, 1e-05
      %v638 = vadd.f32 %v606, 1e-05
      %v639 = vadd.f32 %v607, 1e-05
      %v640 = vadd.f32 %v608, 1e-05
      %v641 = vadd.f32 %v609, 1e-05
      %v642 = vadd.f32 %v610, 1e-05
      %v643 = vadd.f32 %v611, 1e-05
      %v644 = vadd.f32 %v612, 1e-05
      %v645 = vadd.f32 %v613, 1e-05
      %v646 = vadd.f32 %v614, 1e-05
      %v647 = vadd.f32 %v615, 1e-05
      %v648 = vadd.f32 %v616, 1e-05
      %v649 = vadd.f32 %v617, 1e-05
      %v650 = vadd.f32 %v618, 1e-05
      %v651 = vrsqrt.pop %v619
      %v652 = vrsqrt.pop %v620
      %v653 = vrsqrt.pop %v621
      %v654 = vrsqrt.pop %v622
      %v655 = vrsqrt.pop %v623
      %v656 = vrsqrt.pop %v624
      %v657 = vrsqrt.pop %v625
      %v658 = vrsqrt.pop %v626
      %v659 = vrsqrt.pop %v627
      %v660 = vrsqrt.pop %v628
      %v661 = vrsqrt.pop %v629
      %v662 = vrsqrt.pop %v630
      %v663 = vrsqrt.pop %v631
      %v664 = vrsqrt.pop %v632
      %v665 = vrsqrt.pop %v633
      %v666 = vrsqrt.pop %v634
      %v667 = vrsqrt.pop %v635
      %v668 = vrsqrt.pop %v636
      %v669 = vrsqrt.pop %v637
      %v670 = vrsqrt.pop %v638
      %v671 = vrsqrt.pop %v639
      %v672 = vrsqrt.pop %v640
      %v673 = vrsqrt.pop %v641
      %v674 = vrsqrt.pop %v642
      %v675 = vrsqrt.pop %v643
      %v676 = vrsqrt.pop %v644
      %v677 = vrsqrt.pop %v645
      %v678 = vrsqrt.pop %v646
      %v679 = vrsqrt.pop %v647
      %v680 = vrsqrt.pop %v648
      %v681 = vrsqrt.pop %v649
      %v682 = vrsqrt.pop %v650
      %v683 = vmul.f32 %v427, %v651
      %v684 = vmul.f32 %v428, %v652
      %v685 = vmul.f32 %v429, %v653
      %v686 = vmul.f32 %v430, %v654
      %v687 = vmul.f32 %v431, %v655
      %v688 = vmul.f32 %v432, %v656
      %v689 = vmul.f32 %v433, %v657
      %v690 = vmul.f32 %v434, %v658
      %v691 = vmul.f32 %v435, %v659
      %v692 = vmul.f32 %v436, %v660
      %v693 = vmul.f32 %v437, %v661
      %v694 = vmul.f32 %v438, %v662
      %v695 = vmul.f32 %v439, %v663
      %v696 = vmul.f32 %v440, %v664
      %v697 = vmul.f32 %v441, %v665
      %v698 = vmul.f32 %v442, %v666
      %v699 = vmul.f32 %v443, %v667
      %v700 = vmul.f32 %v444, %v668
      %v701 = vmul.f32 %v445, %v669
      %v702 = vmul.f32 %v446, %v670
      %v703 = vmul.f32 %v447, %v671
      %v704 = vmul.f32 %v448, %v672
      %v705 = vmul.f32 %v449, %v673
      %v706 = vmul.f32 %v450, %v674
      %v707 = vmul.f32 %v451, %v675
      %v708 = vmul.f32 %v452, %v676
      %v709 = vmul.f32 %v453, %v677
      %v710 = vmul.f32 %v454, %v678
      %v711 = vmul.f32 %v455, %v679
      %v712 = vmul.f32 %v456, %v680
      %v713 = vmul.f32 %v457, %v681
      %v714 = vmul.f32 %v458, %v682
      %v715 = vld [vmem:[%s1] sm:$0x1]
      %v717 = vlaneseq
      %v718 = vshrl.u32 %v717, 7
      %v719 = vsub.s32 0, %v718
      %v720 = vrot.slane %v715, %v719
      %v722 = vmul.f32 %v683, %v720
      %v723 = vmul.f32 %v684, %v720
      %v724 = vmul.f32 %v685, %v720
      %v725 = vmul.f32 %v686, %v720
      %v726 = vmul.f32 %v687, %v720
      %v727 = vmul.f32 %v688, %v720
      %v728 = vmul.f32 %v689, %v720
      %v729 = vmul.f32 %v690, %v720
      %v730 = vmul.f32 %v691, %v720
      %v731 = vmul.f32 %v692, %v720
      %v732 = vmul.f32 %v693, %v720
      %v733 = vmul.f32 %v694, %v720
      %v734 = vmul.f32 %v695, %v720
      %v735 = vmul.f32 %v696, %v720
      %v736 = vmul.f32 %v697, %v720
      %v737 = vmul.f32 %v698, %v720
      %v738 = vmul.f32 %v699, %v720
      %v739 = vmul.f32 %v700, %v720
      %v740 = vmul.f32 %v701, %v720
      %v741 = vmul.f32 %v702, %v720
      %v742 = vmul.f32 %v703, %v720
      %v743 = vmul.f32 %v704, %v720
      %v744 = vmul.f32 %v705, %v720
      %v745 = vmul.f32 %v706, %v720
      %v746 = vmul.f32 %v707, %v720
      %v747 = vmul.f32 %v708, %v720
      %v748 = vmul.f32 %v709, %v720
      %v749 = vmul.f32 %v710, %v720
      %v750 = vmul.f32 %v711, %v720
      %v751 = vmul.f32 %v712, %v720
      %v752 = vmul.f32 %v713, %v720
      %v753 = vmul.f32 %v714, %v720
      %v754 = vld [vmem:[%s2] sm:$0x1]
      %v756 = vlaneseq
      %v757 = vshrl.u32 %v756, 7
      %v758 = vsub.s32 0, %v757
      %v759 = vrot.slane %v754, %v758
      %v761 = vadd.f32 %v722, %v759
      %v762 = vadd.f32 %v723, %v759
      %v763 = vadd.f32 %v724, %v759
      %v764 = vadd.f32 %v725, %v759
      %v765 = vadd.f32 %v726, %v759
      %v766 = vadd.f32 %v727, %v759
      %v767 = vadd.f32 %v728, %v759
      %v768 = vadd.f32 %v729, %v759
      %v769 = vadd.f32 %v730, %v759
      %v770 = vadd.f32 %v731, %v759
      %v771 = vadd.f32 %v732, %v759
      %v772 = vadd.f32 %v733, %v759
      %v773 = vadd.f32 %v734, %v759
      %v774 = vadd.f32 %v735, %v759
      %v775 = vadd.f32 %v736, %v759
      %v776 = vadd.f32 %v737, %v759
      %v777 = vadd.f32 %v738, %v759
      %v778 = vadd.f32 %v739, %v759
      %v779 = vadd.f32 %v740, %v759
      %v780 = vadd.f32 %v741, %v759
      %v781 = vadd.f32 %v742, %v759
      %v782 = vadd.f32 %v743, %v759
      %v783 = vadd.f32 %v744, %v759
      %v784 = vadd.f32 %v745, %v759
      %v785 = vadd.f32 %v746, %v759
      %v786 = vadd.f32 %v747, %v759
      %v787 = vadd.f32 %v748, %v759
      %v788 = vadd.f32 %v749, %v759
      %v789 = vadd.f32 %v750, %v759
      %v790 = vadd.f32 %v751, %v759
      %v791 = vadd.f32 %v752, %v759
      %v792 = vadd.f32 %v753, %v759
      %v793 = vpack.c.bf16 %v762, %v761
      %v794 = vpack.c.bf16 %v764, %v763
      %v795 = vpack.c.bf16 %v766, %v765
      %v796 = vpack.c.bf16 %v768, %v767
      %v797 = vpack.c.bf16 %v770, %v769
      %v798 = vpack.c.bf16 %v772, %v771
      %v799 = vpack.c.bf16 %v774, %v773
      %v800 = vpack.c.bf16 %v776, %v775
      %v801 = vpack.c.bf16 %v778, %v777
      %v802 = vpack.c.bf16 %v780, %v779
      %v803 = vpack.c.bf16 %v782, %v781
      %v804 = vpack.c.bf16 %v784, %v783
      %v805 = vpack.c.bf16 %v786, %v785
      %v806 = vpack.c.bf16 %v788, %v787
      %v807 = vpack.c.bf16 %v790, %v789
      %v808 = vpack.c.bf16 %v792, %v791
      %v809 = vld [vmem:[%s3] sm:$0xf]
      %v810 = vld [vmem:[%s3 + $0x4] sm:$0xf]
      %v811 = vld [vmem:[%s4] sm:$0x1]
      %v813 = vlaneseq
      %v814 = vshrl.u32 %v813, 7
      %v815 = vsub.s32 0, %v814
      %v816 = vrot.slane %v811, %v815
      %v820 = vunpack.c.l.b16 %v809
      %v821 = vunpack.c.l.b16 %v810
      %v822 = vpack.c.b16 %v821, %v820
      %v825 = vsel %vm297, %v793, 0
      %v828 = vsel %vm297, %v794, 0
      %v831 = vsel %vm297, %v795, 0
      %v834 = vsel %vm297, %v796, 0
      %v837 = vsel %vm297, %v797, 0
      %v840 = vsel %vm297, %v798, 0
      %v843 = vsel %vm297, %v799, 0
      %v846 = vsel %vm297, %v800, 0
      %v849 = vsel %vm297, %v801, 0
      %v852 = vsel %vm297, %v802, 0
      %v855 = vsel %vm297, %v803, 0
      %v858 = vsel %vm297, %v804, 0
      %v861 = vsel %vm297, %v805, 0
      %v864 = vsel %vm297, %v806, 0
      %v867 = vsel %vm297, %v807, 0
      %v870 = vsel %vm297, %v808, 0
      %872 = vmatprep.subr.bf16.mxu0 0
      %873 = vmatpush1.bf16.msra.mxu0 0
      %874 = vmatprep.subr.bf16.mxu0 0
      %875 = vmatpush1.bf16.msra.mxu0 0
      %876 = vmatprep.subr.bf16.mxu0 0
      %877 = vmatpush1.bf16.msra.mxu0 0
      %878 = vmatprep.subr.bf16.mxu0 0
      %879 = vmatpush1.bf16.msra.mxu0 0
      %880 = vmatprep.subr.bf16.mxu0 0
      %881 = vmatpush1.bf16.msra.mxu0 0
      %882 = vmatprep.subr.bf16.mxu0 0
      %883 = vmatpush1.bf16.msra.mxu0 0
      %884 = vmatprep.subr.bf16.mxu0 0
      %885 = vmatpush1.bf16.msra.mxu0 0
      %886 = vmatprep.subr.bf16.mxu0 0
      %887 = vmatpush1.bf16.msra.mxu0 %v822
      %888 = vmatprep.subr.bf16.mxu0 0
      %889 = vmatpush2.bf16.msra.mxu0 0
      %890 = vmatprep.subr.bf16.mxu0 0
      %891 = vmatpush2.bf16.msra.mxu0 0
      %892 = vmatprep.subr.bf16.mxu0 0
      %893 = vmatpush2.bf16.msra.mxu0 0
      %894 = vmatprep.subr.bf16.mxu0 0
      %895 = vmatpush2.bf16.msra.mxu0 0
      %896 = vmatprep.subr.bf16.mxu0 0
      %897 = vmatpush2.bf16.msra.mxu0 0
      %898 = vmatprep.subr.bf16.mxu0 0
      %899 = vmatpush2.bf16.msra.mxu0 0
      %900 = vmatprep.subr.bf16.mxu0 0
      %901 = vmatpush2.bf16.msra.mxu0 0
      %902 = vmatprep.subr.bf16.mxu0 0
      %903 = vmatpush2.bf16.msra.mxu0 0
      %904 = vmatprep.mubr.bf16.mxu0 0
      %905 = vmatmul.mubr.bf16.gmra.mxu0 %v825
      %v906 = vpop.f32.mrf.mxu0
      %v907 = vadd.f32 %v816, %v906
      %v908 = vpop.f32.mrf.mxu0
      %v909 = vpop.f32.mrf.mxu0
      %v910 = vadd.f32 %v816, %v909
      %v911 = vpop.f32.mrf.mxu0
      %912 = vmatprep.mubr.bf16.mxu0 0
      %913 = vmatmul.mubr.bf16.gmra.mxu0 %v828
      %v914 = vpop.f32.mrf.mxu0
      %v915 = vadd.f32 %v816, %v914
      %v916 = vpop.f32.mrf.mxu0
      %v917 = vpop.f32.mrf.mxu0
      %v918 = vadd.f32 %v816, %v917
      %v919 = vpop.f32.mrf.mxu0
      %920 = vmatprep.mubr.bf16.mxu0 0
      %921 = vmatmul.mubr.bf16.gmra.mxu0 %v831
      %v922 = vpop.f32.mrf.mxu0
      %v923 = vadd.f32 %v816, %v922
      %v924 = vpop.f32.mrf.mxu0
      %v925 = vpop.f32.mrf.mxu0
      %v926 = vadd.f32 %v816, %v925
      %v927 = vpop.f32.mrf.mxu0
      %928 = vmatprep.mubr.bf16.mxu0 0
      %929 = vmatmul.mubr.bf16.gmra.mxu0 %v834
      %v930 = vpop.f32.mrf.mxu0
      %v931 = vadd.f32 %v816, %v930
      %v932 = vpop.f32.mrf.mxu0
      %v933 = vpop.f32.mrf.mxu0
      %v934 = vadd.f32 %v816, %v933
      %v935 = vpop.f32.mrf.mxu0
      %936 = vmatprep.mubr.bf16.mxu0 0
      %937 = vmatmul.mubr.bf16.gmra.mxu0 %v837
      %v938 = vpop.f32.mrf.mxu0
      %v939 = vadd.f32 %v816, %v938
      %v940 = vpop.f32.mrf.mxu0
      %v941 = vpop.f32.mrf.mxu0
      %v942 = vadd.f32 %v816, %v941
      %v943 = vpop.f32.mrf.mxu0
      %944 = vmatprep.mubr.bf16.mxu0 0
      %945 = vmatmul.mubr.bf16.gmra.mxu0 %v840
      %v946 = vpop.f32.mrf.mxu0
      %v947 = vadd.f32 %v816, %v946
      %v948 = vpop.f32.mrf.mxu0
      %v949 = vpop.f32.mrf.mxu0
      %v950 = vadd.f32 %v816, %v949
      %v951 = vpop.f32.mrf.mxu0
      %952 = vmatprep.mubr.bf16.mxu0 0
      %953 = vmatmul.mubr.bf16.gmra.mxu0 %v843
      %v954 = vpop.f32.mrf.mxu0
      %v955 = vadd.f32 %v816, %v954
      %v956 = vpop.f32.mrf.mxu0
      %v957 = vpop.f32.mrf.mxu0
      %v958 = vadd.f32 %v816, %v957
      %v959 = vpop.f32.mrf.mxu0
      %960 = vmatprep.mubr.bf16.mxu0 0
      %961 = vmatmul.mubr.bf16.gmra.mxu0 %v846
      %v962 = vpop.f32.mrf.mxu0
      %v963 = vadd.f32 %v816, %v962
      %v964 = vpop.f32.mrf.mxu0
      %v965 = vpop.f32.mrf.mxu0
      %v966 = vadd.f32 %v816, %v965
      %v967 = vpop.f32.mrf.mxu0
      %968 = vmatprep.mubr.bf16.mxu0 0
      %969 = vmatmul.mubr.bf16.gmra.mxu0 %v849
      %v970 = vpop.f32.mrf.mxu0
      %v971 = vadd.f32 %v816, %v970
      %v972 = vpop.f32.mrf.mxu0
      %v973 = vpop.f32.mrf.mxu0
      %v974 = vadd.f32 %v816, %v973
      %v975 = vpop.f32.mrf.mxu0
      %976 = vmatprep.mubr.bf16.mxu0 0
      %977 = vmatmul.mubr.bf16.gmra.mxu0 %v852
      %v978 = vpop.f32.mrf.mxu0
      %v979 = vadd.f32 %v816, %v978
      %v980 = vpop.f32.mrf.mxu0
      %v981 = vpop.f32.mrf.mxu0
      %v982 = vadd.f32 %v816, %v981
      %v983 = vpop.f32.mrf.mxu0
      %984 = vmatprep.mubr.bf16.mxu0 0
      %985 = vmatmul.mubr.bf16.gmra.mxu0 %v855
      %v986 = vpop.f32.mrf.mxu0
      %v987 = vadd.f32 %v816, %v986
      %v988 = vpop.f32.mrf.mxu0
      %v989 = vpop.f32.mrf.mxu0
      %v990 = vadd.f32 %v816, %v989
      %v991 = vpop.f32.mrf.mxu0
      %992 = vmatprep.mubr.bf16.mxu0 0
      %993 = vmatmul.mubr.bf16.gmra.mxu0 %v858
      %v994 = vpop.f32.mrf.mxu0
      %v995 = vadd.f32 %v816, %v994
      %v996 = vpop.f32.mrf.mxu0
      %v997 = vpop.f32.mrf.mxu0
      %v998 = vadd.f32 %v816, %v997
      %v999 = vpop.f32.mrf.mxu0
      %1000 = vmatprep.mubr.bf16.mxu0 0
      %1001 = vmatmul.mubr.bf16.gmra.mxu0 %v861
      %v1002 = vpop.f32.mrf.mxu0
      %v1003 = vadd.f32 %v816, %v1002
      %v1004 = vpop.f32.mrf.mxu0
      %v1005 = vpop.f32.mrf.mxu0
      %v1006 = vadd.f32 %v816, %v1005
      %v1007 = vpop.f32.mrf.mxu0
      %1008 = vmatprep.mubr.bf16.mxu0 0
      %1009 = vmatmul.mubr.bf16.gmra.mxu0 %v864
      %v1010 = vpop.f32.mrf.mxu0
      %v1011 = vadd.f32 %v816, %v1010
      %v1012 = vpop.f32.mrf.mxu0
      %v1013 = vpop.f32.mrf.mxu0
      %v1014 = vadd.f32 %v816, %v1013
      %v1015 = vpop.f32.mrf.mxu0
      %1016 = vmatprep.mubr.bf16.mxu0 0
      %1017 = vmatmul.mubr.bf16.gmra.mxu0 %v867
      %v1018 = vpop.f32.mrf.mxu0
      %v1019 = vadd.f32 %v816, %v1018
      %v1020 = vpop.f32.mrf.mxu0
      %v1021 = vpop.f32.mrf.mxu0
      %v1022 = vadd.f32 %v816, %v1021
      %v1023 = vpop.f32.mrf.mxu0
      %1024 = vmatprep.mubr.bf16.mxu0 0
      %1025 = vmatmul.mubr.bf16.gmra.mxu0 %v870
      %v1026 = vpop.f32.mrf.mxu0
      %v1027 = vadd.f32 %v816, %v1026
      %v1028 = vpop.f32.mrf.mxu0
      %v1029 = vpop.f32.mrf.mxu0
      %v1030 = vadd.f32 %v816, %v1029
      %v1031 = vpop.f32.mrf.mxu0
      %1032 = vdwg.mxu0
      %v1033 = vpack.c.bf16 %v910, %v907
      %v1034 = vpack.c.bf16 %v918, %v915
      %v1035 = vpack.c.bf16 %v926, %v923
      %v1036 = vpack.c.bf16 %v934, %v931
      %v1037 = vpack.c.bf16 %v942, %v939
      %v1038 = vpack.c.bf16 %v950, %v947
      %v1039 = vpack.c.bf16 %v958, %v955
      %v1040 = vpack.c.bf16 %v966, %v963
      %v1041 = vpack.c.bf16 %v974, %v971
      %v1042 = vpack.c.bf16 %v982, %v979
      %v1043 = vpack.c.bf16 %v990, %v987
      %v1044 = vpack.c.bf16 %v998, %v995
      %v1045 = vpack.c.bf16 %v1006, %v1003
      %v1046 = vpack.c.bf16 %v1014, %v1011
      %v1047 = vpack.c.bf16 %v1022, %v1019
      %v1048 = vpack.c.bf16 %v1030, %v1027
      %v1065 = vunpack.c.l.b16 %v1033
      %v1066 = vunpack.c.h.b16 %v1033
      %v1067 = vunpack.c.l.b16 %v1034
      %v1068 = vunpack.c.h.b16 %v1034
      %v1069 = vunpack.c.l.b16 %v1035
      %v1070 = vunpack.c.h.b16 %v1035
      %v1071 = vunpack.c.l.b16 %v1036
      %v1072 = vunpack.c.h.b16 %v1036
      %v1073 = vunpack.c.l.b16 %v1037
      %v1074 = vunpack.c.h.b16 %v1037
      %v1075 = vunpack.c.l.b16 %v1038
      %v1076 = vunpack.c.h.b16 %v1038
      %v1077 = vunpack.c.l.b16 %v1039
      %v1078 = vunpack.c.h.b16 %v1039
      %v1079 = vunpack.c.l.b16 %v1040
      %v1080 = vunpack.c.h.b16 %v1040
      %v1081 = vunpack.c.l.b16 %v1041
      %v1082 = vunpack.c.h.b16 %v1041
      %v1083 = vunpack.c.l.b16 %v1042
      %v1084 = vunpack.c.h.b16 %v1042
      %v1085 = vunpack.c.l.b16 %v1043
      %v1086 = vunpack.c.h.b16 %v1043
      %v1087 = vunpack.c.l.b16 %v1044
      %v1088 = vunpack.c.h.b16 %v1044
      %v1089 = vunpack.c.l.b16 %v1045
      %v1090 = vunpack.c.h.b16 %v1045
      %v1091 = vunpack.c.l.b16 %v1046
      %v1092 = vunpack.c.h.b16 %v1046
      %v1093 = vunpack.c.l.b16 %v1047
      %v1094 = vunpack.c.h.b16 %v1047
      %v1095 = vunpack.c.l.b16 %v1048
      %v1096 = vunpack.c.h.b16 %v1048
      %v1097 = vpack.c.b16 %v1065, %v1065
      %v1098 = vpack.c.b16 %v1066, %v1066
      %v1099 = vpack.c.b16 %v1067, %v1067
      %v1100 = vpack.c.b16 %v1068, %v1068
      %v1101 = vpack.c.b16 %v1069, %v1069
      %v1102 = vpack.c.b16 %v1070, %v1070
      %v1103 = vpack.c.b16 %v1071, %v1071
      %v1104 = vpack.c.b16 %v1072, %v1072
      %v1105 = vpack.c.b16 %v1073, %v1073
      %v1106 = vpack.c.b16 %v1074, %v1074
      %v1107 = vpack.c.b16 %v1075, %v1075
      %v1108 = vpack.c.b16 %v1076, %v1076
      %v1109 = vpack.c.b16 %v1077, %v1077
      %v1110 = vpack.c.b16 %v1078, %v1078
      %v1111 = vpack.c.b16 %v1079, %v1079
      %v1112 = vpack.c.b16 %v1080, %v1080
      %v1113 = vpack.c.b16 %v1081, %v1081
      %v1114 = vpack.c.b16 %v1082, %v1082
      %v1115 = vpack.c.b16 %v1083, %v1083
      %v1116 = vpack.c.b16 %v1084, %v1084
      %v1117 = vpack.c.b16 %v1085, %v1085
      %v1118 = vpack.c.b16 %v1086, %v1086
      %v1119 = vpack.c.b16 %v1087, %v1087
      %v1120 = vpack.c.b16 %v1088, %v1088
      %v1121 = vpack.c.b16 %v1089, %v1089
      %v1122 = vpack.c.b16 %v1090, %v1090
      %v1123 = vpack.c.b16 %v1091, %v1091
      %v1124 = vpack.c.b16 %v1092, %v1092
      %v1125 = vpack.c.b16 %v1093, %v1093
      %v1126 = vpack.c.b16 %v1094, %v1094
      %v1127 = vpack.c.b16 %v1095, %v1095
      %v1128 = vpack.c.b16 %v1096, %v1096
      %vm1161 = vcmask 519168
      %1162 = vst.msk [vmem:[%s262] sm:$0xf] %vm1161, %v1097
      %1163 = vst.msk [vmem:[%s262 + $0x4] sm:$0xf] %vm1161, %v1098
      %1164 = vst.msk [vmem:[%s262 + $0x8] sm:$0xf] %vm1161, %v1099
      %1165 = vst.msk [vmem:[%s262 + $0xc] sm:$0xf] %vm1161, %v1100
      %1166 = vst.msk [vmem:[%s262 + $0x10] sm:$0xf] %vm1161, %v1101
      %1167 = vst.msk [vmem:[%s262 + $0x14] sm:$0xf] %vm1161, %v1102
      %1168 = vst.msk [vmem:[%s262 + $0x18] sm:$0xf] %vm1161, %v1103
      %1169 = vst.msk [vmem:[%s262 + $0x1c] sm:$0xf] %vm1161, %v1104
      %1170 = vst.msk [vmem:[%s262 + $0x20] sm:$0xf] %vm1161, %v1105
      %1171 = vst.msk [vmem:[%s262 + $0x24] sm:$0xf] %vm1161, %v1106
      %1172 = vst.msk [vmem:[%s262 + $0x28] sm:$0xf] %vm1161, %v1107
      %1173 = vst.msk [vmem:[%s262 + $0x2c] sm:$0xf] %vm1161, %v1108
      %1174 = vst.msk [vmem:[%s262 + $0x30] sm:$0xf] %vm1161, %v1109
      %1175 = vst.msk [vmem:[%s262 + $0x34] sm:$0xf] %vm1161, %v1110
      %1176 = vst.msk [vmem:[%s262 + $0x38] sm:$0xf] %vm1161, %v1111
      %1177 = vst.msk [vmem:[%s262 + $0x3c] sm:$0xf] %vm1161, %v1112
      %1178 = vst.msk [vmem:[%s262 + $0x40] sm:$0xf] %vm1161, %v1113
      %1179 = vst.msk [vmem:[%s262 + $0x44] sm:$0xf] %vm1161, %v1114
      %1180 = vst.msk [vmem:[%s262 + $0x48] sm:$0xf] %vm1161, %v1115
      %1181 = vst.msk [vmem:[%s262 + $0x4c] sm:$0xf] %vm1161, %v1116
      %1182 = vst.msk [vmem:[%s262 + $0x50] sm:$0xf] %vm1161, %v1117
      %1183 = vst.msk [vmem:[%s262 + $0x54] sm:$0xf] %vm1161, %v1118
      %1184 = vst.msk [vmem:[%s262 + $0x58] sm:$0xf] %vm1161, %v1119
      %1185 = vst.msk [vmem:[%s262 + $0x5c] sm:$0xf] %vm1161, %v1120
      %1186 = vst.msk [vmem:[%s262 + $0x60] sm:$0xf] %vm1161, %v1121
      %1187 = vst.msk [vmem:[%s262 + $0x64] sm:$0xf] %vm1161, %v1122
      %1188 = vst.msk [vmem:[%s262 + $0x68] sm:$0xf] %vm1161, %v1123
      %1189 = vst.msk [vmem:[%s262 + $0x6c] sm:$0xf] %vm1161, %v1124
      %1190 = vst.msk [vmem:[%s262 + $0x70] sm:$0xf] %vm1161, %v1125
      %1191 = vst.msk [vmem:[%s262 + $0x74] sm:$0xf] %vm1161, %v1126
      %1192 = vst.msk [vmem:[%s262 + $0x78] sm:$0xf] %vm1161, %v1127
      %1193 = vst.msk [vmem:[%s262 + $0x7c] sm:$0xf] %vm1161, %v1128
      %s1194 = smul.u32 32, %s21
      %p1195 = scmp.lt.s32.totalorder %s20, 1
      %s1196 = scalar_select %p1195, %s20, 1
      %p1197 = scmp.lt.s32.totalorder %s1194, 31
      %s1198 = scalar_select %p1197, %s1194, 31
      %s1199 = smul.addr %s1196, 32
      %s1200 = sadd.s32 %s1198, %s1199
      %s1201 = smul.addr %s1200, 4
      %s1202 = scalar_lea.vmem %s5, %s1201
      // Predicated region
      $region41: #{transformer_block_forward.9} parent=39 // pred_check
        %p1203 = pneg %p160
      $region42: #{transformer_block_forward.9} parent=39 // pred_check_branch
        %1205 = sbr.rel (%p1203) target = $region44
      $region43: #{transformer_block_forward.9} parent=39 // pred_region
        %s1206 = smul.u32 32, %s21
      $region44: #{transformer_block_forward.9} parent=39 // pred_fallthru
        _
    $region40: #{transformer_block_forward.9} parent=5 // pred_fallthru
      _
    %p1207 = scmp.le.s32.totalorder 2, %s11
    // Predicated region
    $region45: #{transformer_block_forward.9} parent=5 // pred_check
      %p1208 = pneg %p1207
    $region46: #{transformer_block_forward.9} parent=5 // pred_check_branch
      %1210 = sbr.rel (%p1208) target = $region48
    $region47: #{transformer_block_forward.9} parent=5 // pred_region
      %s1211 = ssub.s32 %s11, 2
      // Predicated region
      $region49: #{transformer_block_forward.9} parent=47 // pred_check
        %p1212 = pneg %p166
      $region50: #{transformer_block_forward.9} parent=47 // pred_check_branch
        %1214 = sbr.rel (%p1212) target = $region52
      $region51: #{transformer_block_forward.9} parent=47 // pred_region
        %s1215 = smul.u32 32, %s23
        %p1216 = scmp.lt.s32.totalorder %s22, 1
        %s1217 = scalar_select %p1216, %s22, 1
        %p1218 = scmp.lt.s32.totalorder %s1215, 31
        %s1219 = scalar_select %p1218, %s1215, 31
        %s1220 = smul.addr %s1217, 32
        %s1221 = sadd.s32 %s1219, %s1220
        %s1222 = smul.addr %s1221, 4
        %s1223 = scalar_lea.vmem %s5, %s1222
      $region52: #{transformer_block_forward.9} parent=47 // pred_fallthru
        _
    $region48: #{transformer_block_forward.9} parent=5 // pred_fallthru
      _
  $region6: #{transformer_block_forward.9} parent=0 // loop_footer
    %s15 = sadd.s32 1, %s11
  $region7: #{transformer_block_forward.9} parent=0 // loop_footer_branch
    %10 = sbr.rel target = $region3
  $region8: #{transformer_block_forward.9} parent=0 // loop_exit
    _

// kernel: transformer_block_forward.11
$region0: #{transformer_block_forward.11}
  #allocation0 [shape = 'u32[]', space=smem, size = 0x4, offset = 0x4, fixed_abs, tag = 'smem constant byte address 0x4 - core index']
  #allocation1 [shape = 'u32[144,128]{1,0:T(1,128)}', space=vmem, size = 0x12000, scoped, tag = 'internal scratch']
  %s0 = inlined_call_operand.vmem [shape: bf16[2,256,64], index: 0, kind: input, shape index: {}]
  %s1 = inlined_call_operand.vmem [shape: f32[2,256,16], index: 1, kind: input, shape index: {}]
  %s2 = inlined_call_operand.vmem [shape: bf16[32,16], index: 2, kind: input, shape index: {}]
  %s3 = inlined_call_operand.vmem [shape: f32[1,16], index: 3, kind: input, shape index: {}]
  %s4 = inlined_call_operand.vmem [shape: f32[2,256,16], index: 4, kind: output, shape index: {}]
  %s5 = sld [smem:[#allocation0]]
  $region49: #{transformer_block_forward.11} parent=0
    _
  %s7 = ssub.s32 1, %s5
  %s8 = scalar_select 0, %s7, %s5
  loop: start=0, step=1, limit=4
  $region2: #{transformer_block_forward.11} parent=0 // loop_pre_header
    _
  $region3: #{transformer_block_forward.11} parent=0 // loop_header
    %s10 = sphi 0, %s14
    %p11 = scmp.ge.s32.totalorder %s10, 4
    %s17 = sphi 0, %s29
    %s18 = sphi 0, %s25
    %s19 = sphi 0, %s17
    %s20 = sphi 0, %s18
    %s21 = sphi 0, %s19
    %s22 = sphi 0, %s20
    %s34 = sphi 0, %s36
    %s37 = sphi 0, %s34
    %s38 = sphi 0, %s37
    %s54 = sphi 0, %s38
    %s62 = sphi 0, %s64
    %s65 = sphi 0, %s62
    %s66 = sphi 0, %s65
    %s82 = sphi 0, %s66
    %s86 = sphi 0, %s86
    %s88 = sphi 0, %s86
    %s89 = sphi 0, %s88
    %s103 = sphi 0, %s89
    %s107 = sphi 0, %s107
    %s109 = sphi 0, %s107
    %s110 = sphi 0, %s109
    %s124 = sphi 0, %s110
    %s132 = sphi 0, %s134
    %s135 = sphi 0, %s132
    %s136 = sphi 0, %s135
    %s152 = sphi 0, %s136
  $region4: #{transformer_block_forward.11} parent=0 // loop_header_branch
    %13 = sbr.rel (%p11) target = $region8
  $region5: #{transformer_block_forward.11} parent=0 // loop_body
    %s15 = ssub.s32 %s10, 1
    %s16 = ssub.s32 %s10, 2
    %s23 = sadd.s32 1, %s18
    %p24 = scmp.ge.s32.totalorder %s23, 1
    %s25 = scalar_select %p24, 0, %s23
    %s26 = sadd.s32 1, %s17
    %s27 = scalar_select %p24, %s26, %s17
    %p28 = scmp.ge.s32.totalorder %s27, 2
    %s29 = scalar_select %p28, 0, %s27
    %s30 = ssub.s32 %s17, %s29
    %s31 = ssub.s32 %s18, %s25
    %s32 = sor.u32 %s30, %s31
    %p33 = scmp.eq.s32.totalorder %s32, 0
    %s35 = sadd.s32 %s34, 1
    %s36 = scalar_select %p33, %s34, %s35
    %p39 = pneg %p33
    %p40 = scmp.eq.s32.totalorder %s10, 1
    %p41 = por %p39, %p40
    %p42 = scmp.ne.s32.totalorder %s34, %s37
    %p43 = scmp.eq.s32.totalorder %s10, 0
    %p44 = por %p42, %p43
    %p45 = scmp.ne.s32.totalorder %s34, %s37
    %p46 = scmp.eq.s32.totalorder %s15, 1
    %p47 = por %p45, %p46
    %p48 = scmp.ne.s32.totalorder %s37, %s38
    %p49 = scmp.eq.s32.totalorder %s15, 0
    %p50 = por %p48, %p49
    %p51 = scmp.ne.s32.totalorder %s37, %s38
    %p52 = scmp.eq.s32.totalorder %s16, 1
    %p53 = por %p51, %p52
    %p55 = scmp.ne.s32.totalorder %s38, %s54
    %p56 = scmp.eq.s32.totalorder %s16, 0
    %p57 = por %p55, %p56
    %s58 = ssub.s32 %s17, %s29
    %s59 = ssub.s32 %s18, %s25
    %s60 = sor.u32 %s58, %s59
    %p61 = scmp.eq.s32.totalorder %s60, 0
    %s63 = sadd.s32 %s62, 1
    %s64 = scalar_select %p61, %s62, %s63
    %p67 = pneg %p61
    %p68 = scmp.eq.s32.totalorder %s10, 1
    %p69 = por %p67, %p68
    %p70 = scmp.ne.s32.totalorder %s62, %s65
    %p71 = scmp.eq.s32.totalorder %s10, 0
    %p72 = por %p70, %p71
    %p73 = scmp.ne.s32.totalorder %s62, %s65
    %p74 = scmp.eq.s32.totalorder %s15, 1
    %p75 = por %p73, %p74
    %p76 = scmp.ne.s32.totalorder %s65, %s66
    %p77 = scmp.eq.s32.totalorder %s15, 0
    %p78 = por %p76, %p77
    %p79 = scmp.ne.s32.totalorder %s65, %s66
    %p80 = scmp.eq.s32.totalorder %s16, 1
    %p81 = por %p79, %p80
    %p83 = scmp.ne.s32.totalorder %s66, %s82
    %p84 = scmp.eq.s32.totalorder %s16, 0
    %p85 = por %p83, %p84
    %s87 = sadd.s32 %s86, 1
    %p90 = scmp.eq.s32.totalorder %s10, 1
    %p91 = scmp.ne.s32.totalorder %s86, %s88
    %p92 = scmp.eq.s32.totalorder %s10, 0
    %p93 = por %p91, %p92
    %p94 = scmp.ne.s32.totalorder %s86, %s88
    %p95 = scmp.eq.s32.totalorder %s15, 1
    %p96 = por %p94, %p95
    %p97 = scmp.ne.s32.totalorder %s88, %s89
    %p98 = scmp.eq.s32.totalorder %s15, 0
    %p99 = por %p97, %p98
    %p100 = scmp.ne.s32.totalorder %s88, %s89
    %p101 = scmp.eq.s32.totalorder %s16, 1
    %p102 = por %p100, %p101
    %p104 = scmp.ne.s32.totalorder %s89, %s103
    %p105 = scmp.eq.s32.totalorder %s16, 0
    %p106 = por %p104, %p105
    %s108 = sadd.s32 %s107, 1
    %p111 = scmp.eq.s32.totalorder %s10, 1
    %p112 = scmp.ne.s32.totalorder %s107, %s109
    %p113 = scmp.eq.s32.totalorder %s10, 0
    %p114 = por %p112, %p113
    %p115 = scmp.ne.s32.totalorder %s107, %s109
    %p116 = scmp.eq.s32.totalorder %s15, 1
    %p117 = por %p115, %p116
    %p118 = scmp.ne.s32.totalorder %s109, %s110
    %p119 = scmp.eq.s32.totalorder %s15, 0
    %p120 = por %p118, %p119
    %p121 = scmp.ne.s32.totalorder %s109, %s110
    %p122 = scmp.eq.s32.totalorder %s16, 1
    %p123 = por %p121, %p122
    %p125 = scmp.ne.s32.totalorder %s110, %s124
    %p126 = scmp.eq.s32.totalorder %s16, 0
    %p127 = por %p125, %p126
    %s128 = ssub.s32 %s17, %s29
    %s129 = ssub.s32 %s18, %s25
    %s130 = sor.u32 %s128, %s129
    %p131 = scmp.eq.s32.totalorder %s130, 0
    %s133 = sadd.s32 %s132, 1
    %s134 = scalar_select %p131, %s132, %s133
    %p137 = pneg %p131
    %p138 = scmp.eq.s32.totalorder %s10, 1
    %p139 = por %p137, %p138
    %p140 = scmp.ne.s32.totalorder %s132, %s135
    %p141 = scmp.eq.s32.totalorder %s10, 0
    %p142 = por %p140, %p141
    %p143 = scmp.ne.s32.totalorder %s132, %s135
    %p144 = scmp.eq.s32.totalorder %s15, 1
    %p145 = por %p143, %p144
    %p146 = scmp.ne.s32.totalorder %s135, %s136
    %p147 = scmp.eq.s32.totalorder %s15, 0
    %p148 = por %p146, %p147
    %p149 = scmp.ne.s32.totalorder %s135, %s136
    %p150 = scmp.eq.s32.totalorder %s16, 1
    %p151 = por %p149, %p150
    %p153 = scmp.ne.s32.totalorder %s136, %s152
    %p154 = scmp.eq.s32.totalorder %s16, 0
    %p155 = por %p153, %p154
    %p156 = scmp.le.s32.totalorder 1, %s10
    %p157 = scmp.lt.s32.totalorder %s10, 3
    %p158 = pnand %p156, %p157
    %p159 = pneg %p158
    // Predicated region
    $region9: #{transformer_block_forward.11} parent=5 // pred_check
      _
    $region10: #{transformer_block_forward.11} parent=5 // pred_check_branch
      %161 = sbr.rel (%p158) target = $region12
    $region11: #{transformer_block_forward.11} parent=5 // pred_region
      %s162 = ssub.s32 %s10, 1
      // Predicated region
      $region13: #{transformer_block_forward.11} parent=11 // pred_check
        %p163 = pneg %p99
      $region14: #{transformer_block_forward.11} parent=11 // pred_check_branch
        %165 = sbr.rel (%p163) target = $region16
      $region15: #{transformer_block_forward.11} parent=11 // pred_region
        _
      $region16: #{transformer_block_forward.11} parent=11 // pred_fallthru
        _
      // Predicated region
      $region17: #{transformer_block_forward.11} parent=11 // pred_check
        %p166 = pneg %p120
      $region18: #{transformer_block_forward.11} parent=11 // pred_check_branch
        %168 = sbr.rel (%p166) target = $region20
      $region19: #{transformer_block_forward.11} parent=11 // pred_region
        _
      $region20: #{transformer_block_forward.11} parent=11 // pred_fallthru
        _
    $region12: #{transformer_block_forward.11} parent=5 // pred_fallthru
      _
    %p169 = scmp.lt.s32.totalorder %s10, 2
    // Predicated region
    $region21: #{transformer_block_forward.11} parent=5 // pred_check
      %p170 = pneg %p169
    $region22: #{transformer_block_forward.11} parent=5 // pred_check_branch
      %172 = sbr.rel (%p170) target = $region24
    $region23: #{transformer_block_forward.11} parent=5 // pred_region
      // Predicated region
      $region25: #{transformer_block_forward.11} parent=23 // pred_check
        %p173 = pneg %p44
      $region26: #{transformer_block_forward.11} parent=23 // pred_check_branch
        %175 = sbr.rel (%p173) target = $region28
      $region27: #{transformer_block_forward.11} parent=23 // pred_region
        %s176 = smul.u32 32, %s18
        %p177 = scmp.lt.s32.totalorder %s17, 1
        %s178 = scalar_select %p177, %s17, 1
        %p179 = scmp.lt.s32.totalorder %s176, 31
        %s180 = scalar_select %p179, %s176, 31
        %s181 = smul.addr %s178, 32
        %s182 = sadd.s32 %s180, %s181
        %s183 = smul.addr %s182, 4
        %s184 = scalar_lea.vmem %s0, %s183
        %s185 = smul.u32 32, %s18
      $region28: #{transformer_block_forward.11} parent=23 // pred_fallthru
        _
      // Predicated region
      $region29: #{transformer_block_forward.11} parent=23 // pred_check
        %p186 = pneg %p72
      $region30: #{transformer_block_forward.11} parent=23 // pred_check_branch
        %188 = sbr.rel (%p186) target = $region32
      $region31: #{transformer_block_forward.11} parent=23 // pred_region
        %s189 = smul.u32 32, %s18
        %p190 = scmp.lt.s32.totalorder %s17, 1
        %s191 = scalar_select %p190, %s17, 1
        %p192 = scmp.lt.s32.totalorder %s189, 31
        %s193 = scalar_select %p192, %s189, 31
        %s194 = smul.addr %s191, 32
        %s195 = sadd.s32 %s193, %s194
        %s196 = smul.addr %s195, 8
        %s197 = scalar_lea.vmem %s1, %s196
        %s198 = smul.u32 32, %s18
      $region32: #{transformer_block_forward.11} parent=23 // pred_fallthru
        _
    $region24: #{transformer_block_forward.11} parent=5 // pred_fallthru
      _
    %p199 = scmp.le.s32.totalorder 1, %s10
    %p200 = scmp.lt.s32.totalorder %s10, 3
    %p201 = pnand %p199, %p200
    %p202 = pneg %p201
    // Predicated region
    $region33: #{transformer_block_forward.11} parent=5 // pred_check
      _
    $region34: #{transformer_block_forward.11} parent=5 // pred_check_branch
      %204 = sbr.rel (%p201) target = $region36
    $region35: #{transformer_block_forward.11} parent=5 // pred_region
      %s205 = ssub.s32 %s10, 1
      %s206 = smul.u32 32, %s20
      %p207 = scmp.lt.s32.totalorder %s19, 1
      %s208 = scalar_select %p207, %s19, 1
      %p209 = scmp.lt.s32.totalorder %s206, 31
      %s210 = scalar_select %p209, %s206, 31
      %s211 = smul.addr %s208, 32
      %s212 = sadd.s32 %s210, %s211
      %s213 = smul.addr %s212, 4
      %s214 = scalar_lea.vmem %s0, %s213
      %p215 = pneg %p50
      %p216 = pneg %p47
      %s217 = smul.u32 32, %s20
      %p218 = scmp.lt.s32.totalorder %s19, 1
      %s219 = scalar_select %p218, %s19, 1
      %p220 = scmp.lt.s32.totalorder %s217, 31
      %s221 = scalar_select %p220, %s217, 31
      %s222 = smul.addr %s219, 32
      %s223 = sadd.s32 %s221, %s222
      %s224 = smul.addr %s223, 8
      %s225 = scalar_lea.vmem %s1, %s224
      %p226 = pneg %p78
      %p227 = pneg %p75
      %p228 = pneg %p99
      %p229 = pneg %p96
      %p230 = pneg %p120
      %p231 = pneg %p117
      %p232 = pneg %p148
      %p233 = pneg %p145
      %s234 = smul.u32 32, %s20
      %p235 = scmp.lt.s32.totalorder %s19, 1
      %s236 = scalar_select %p235, %s19, 1
      %p237 = scmp.lt.s32.totalorder %s234, 31
      %s238 = scalar_select %p237, %s234, 31
      %s239 = smul.addr %s236, 32
      %s240 = sadd.s32 %s238, %s239
      %s241 = smul.addr %s240, 8
      %s242 = scalar_lea.vmem %s4, %s241
      %s243 = smul.u32 32, %s20
      %p244 = scmp.lt.s32.totalorder %s19, 1
      %s245 = scalar_select %p244, %s19, 1
      %p246 = scmp.lt.s32.totalorder %s243, 31
      %s247 = scalar_select %p246, %s243, 31
      %s248 = smul.addr %s245, 32
      %s249 = sadd.s32 %s247, %s248
      %s250 = smul.addr %s249, 4
      %s251 = scalar_lea.vmem %s0, %s250
      %s252 = smul.u32 32, %s20
      %s253 = smul.u32 32, %s20
      %p254 = scmp.lt.s32.totalorder %s19, 1
      %s255 = scalar_select %p254, %s19, 1
      %p256 = scmp.lt.s32.totalorder %s253, 31
      %s257 = scalar_select %p256, %s253, 31
      %s258 = smul.addr %s255, 32
      %s259 = sadd.s32 %s257, %s258
      %s260 = smul.addr %s259, 8
      %s261 = scalar_lea.vmem %s1, %s260
      %s262 = smul.u32 32, %s20
      %s263 = smul.u32 32, %s20
      %p264 = scmp.lt.s32.totalorder %s19, 1
      %s265 = scalar_select %p264, %s19, 1
      %p266 = scmp.lt.s32.totalorder %s263, 31
      %s267 = scalar_select %p266, %s263, 31
      %s268 = smul.addr %s265, 32
      %s269 = sadd.s32 %s267, %s268
      %s270 = smul.addr %s269, 8
      %s271 = scalar_lea.vmem %s4, %s270
      %s272 = smul.u32 32, %s20
      %v274 = vld [vmem:[%s251] sm:$0xf]
      %v275 = vld [vmem:[%s251 + $0x4] sm:$0xf]
      %v276 = vld [vmem:[%s251 + $0x8] sm:$0xf]
      %v277 = vld [vmem:[%s251 + $0xc] sm:$0xf]
      %v278 = vld [vmem:[%s251 + $0x10] sm:$0xf]
      %v279 = vld [vmem:[%s251 + $0x14] sm:$0xf]
      %v280 = vld [vmem:[%s251 + $0x18] sm:$0xf]
      %v281 = vld [vmem:[%s251 + $0x1c] sm:$0xf]
      %v282 = vld [vmem:[%s251 + $0x20] sm:$0xf]
      %v283 = vld [vmem:[%s251 + $0x24] sm:$0xf]
      %v284 = vld [vmem:[%s251 + $0x28] sm:$0xf]
      %v285 = vld [vmem:[%s251 + $0x2c] sm:$0xf]
      %v286 = vld [vmem:[%s251 + $0x30] sm:$0xf]
      %v287 = vld [vmem:[%s251 + $0x34] sm:$0xf]
      %v288 = vld [vmem:[%s251 + $0x38] sm:$0xf]
      %v289 = vld [vmem:[%s251 + $0x3c] sm:$0xf]
      %v290 = vld [vmem:[%s251 + $0x40] sm:$0xf]
      %v291 = vld [vmem:[%s251 + $0x44] sm:$0xf]
      %v292 = vld [vmem:[%s251 + $0x48] sm:$0xf]
      %v293 = vld [vmem:[%s251 + $0x4c] sm:$0xf]
      %v294 = vld [vmem:[%s251 + $0x50] sm:$0xf]
      %v295 = vld [vmem:[%s251 + $0x54] sm:$0xf]
      %v296 = vld [vmem:[%s251 + $0x58] sm:$0xf]
      %v297 = vld [vmem:[%s251 + $0x5c] sm:$0xf]
      %v298 = vld [vmem:[%s251 + $0x60] sm:$0xf]
      %v299 = vld [vmem:[%s251 + $0x64] sm:$0xf]
      %v300 = vld [vmem:[%s251 + $0x68] sm:$0xf]
      %v301 = vld [vmem:[%s251 + $0x6c] sm:$0xf]
      %v302 = vld [vmem:[%s251 + $0x70] sm:$0xf]
      %v303 = vld [vmem:[%s251 + $0x74] sm:$0xf]
      %v304 = vld [vmem:[%s251 + $0x78] sm:$0xf]
      %v305 = vld [vmem:[%s251 + $0x7c] sm:$0xf]
      %v306 = vunpack.c.l.bf16 %v274
      %v307 = vunpack.c.l.bf16 %v275
      %v308 = vunpack.c.l.bf16 %v276
      %v309 = vunpack.c.l.bf16 %v277
      %v310 = vunpack.c.l.bf16 %v278
      %v311 = vunpack.c.l.bf16 %v279
      %v312 = vunpack.c.l.bf16 %v280
      %v313 = vunpack.c.l.bf16 %v281
      %v314 = vunpack.c.l.bf16 %v282
      %v315 = vunpack.c.l.bf16 %v283
      %v316 = vunpack.c.l.bf16 %v284
      %v317 = vunpack.c.l.bf16 %v285
      %v318 = vunpack.c.l.bf16 %v286
      %v319 = vunpack.c.l.bf16 %v287
      %v320 = vunpack.c.l.bf16 %v288
      %v321 = vunpack.c.l.bf16 %v289
      %v322 = vunpack.c.l.bf16 %v290
      %v323 = vunpack.c.l.bf16 %v291
      %v324 = vunpack.c.l.bf16 %v292
      %v325 = vunpack.c.l.bf16 %v293
      %v326 = vunpack.c.l.bf16 %v294
      %v327 = vunpack.c.l.bf16 %v295
      %v328 = vunpack.c.l.bf16 %v296
      %v329 = vunpack.c.l.bf16 %v297
      %v330 = vunpack.c.l.bf16 %v298
      %v331 = vunpack.c.l.bf16 %v299
      %v332 = vunpack.c.l.bf16 %v300
      %v333 = vunpack.c.l.bf16 %v301
      %v334 = vunpack.c.l.bf16 %v302
      %v335 = vunpack.c.l.bf16 %v303
      %v336 = vunpack.c.l.bf16 %v304
      %v337 = vunpack.c.l.bf16 %v305
      %v338 = vmul.f32 %v306, 0.5
      %v339 = vmul.f32 %v307, 0.5
      %v340 = vmul.f32 %v308, 0.5
      %v341 = vmul.f32 %v309, 0.5
      %v342 = vmul.f32 %v310, 0.5
      %v343 = vmul.f32 %v311, 0.5
      %v344 = vmul.f32 %v312, 0.5
      %v345 = vmul.f32 %v313, 0.5
      %v346 = vmul.f32 %v314, 0.5
      %v347 = vmul.f32 %v315, 0.5
      %v348 = vmul.f32 %v316, 0.5
      %v349 = vmul.f32 %v317, 0.5
      %v350 = vmul.f32 %v318, 0.5
      %v351 = vmul.f32 %v319, 0.5
      %v352 = vmul.f32 %v320, 0.5
      %v353 = vmul.f32 %v321, 0.5
      %v354 = vmul.f32 %v322, 0.5
      %v355 = vmul.f32 %v323, 0.5
      %v356 = vmul.f32 %v324, 0.5
      %v357 = vmul.f32 %v325, 0.5
      %v358 = vmul.f32 %v326, 0.5
      %v359 = vmul.f32 %v327, 0.5
      %v360 = vmul.f32 %v328, 0.5
      %v361 = vmul.f32 %v329, 0.5
      %v362 = vmul.f32 %v330, 0.5
      %v363 = vmul.f32 %v331, 0.5
      %v364 = vmul.f32 %v332, 0.5
      %v365 = vmul.f32 %v333, 0.5
      %v366 = vmul.f32 %v334, 0.5
      %v367 = vmul.f32 %v335, 0.5
      %v368 = vmul.f32 %v336, 0.5
      %v369 = vmul.f32 %v337, 0.5
      %v370 = vmul.f32 %v306, 0.044715
      %v371 = vmul.f32 %v307, 0.044715
      %v372 = vmul.f32 %v308, 0.044715
      %v373 = vmul.f32 %v309, 0.044715
      %v374 = vmul.f32 %v310, 0.044715
      %v375 = vmul.f32 %v311, 0.044715
      %v376 = vmul.f32 %v312, 0.044715
      %v377 = vmul.f32 %v313, 0.044715
      %v378 = vmul.f32 %v314, 0.044715
      %v379 = vmul.f32 %v315, 0.044715
      %v380 = vmul.f32 %v316, 0.044715
      %v381 = vmul.f32 %v317, 0.044715
      %v382 = vmul.f32 %v318, 0.044715
      %v383 = vmul.f32 %v319, 0.044715
      %v384 = vmul.f32 %v320, 0.044715
      %v385 = vmul.f32 %v321, 0.044715
      %v386 = vmul.f32 %v322, 0.044715
      %v387 = vmul.f32 %v323, 0.044715
      %v388 = vmul.f32 %v324, 0.044715
      %v389 = vmul.f32 %v325, 0.044715
      %v390 = vmul.f32 %v326, 0.044715
      %v391 = vmul.f32 %v327, 0.044715
      %v392 = vmul.f32 %v328, 0.044715
      %v393 = vmul.f32 %v329, 0.044715
      %v394 = vmul.f32 %v330, 0.044715
      %v395 = vmul.f32 %v331, 0.044715
      %v396 = vmul.f32 %v332, 0.044715
      %v397 = vmul.f32 %v333, 0.044715
      %v398 = vmul.f32 %v334, 0.044715
      %v399 = vmul.f32 %v335, 0.044715
      %v400 = vmul.f32 %v336, 0.044715
      %v401 = vmul.f32 %v337, 0.044715
      %v402 = vmul.f32 %v370, %v306
      %v403 = vmul.f32 %v371, %v307
      %v404 = vmul.f32 %v372, %v308
      %v405 = vmul.f32 %v373, %v309
      %v406 = vmul.f32 %v374, %v310
      %v407 = vmul.f32 %v375, %v311
      %v408 = vmul.f32 %v376, %v312
      %v409 = vmul.f32 %v377, %v313
      %v410 = vmul.f32 %v378, %v314
      %v411 = vmul.f32 %v379, %v315
      %v412 = vmul.f32 %v380, %v316
      %v413 = vmul.f32 %v381, %v317
      %v414 = vmul.f32 %v382, %v318
      %v415 = vmul.f32 %v383, %v319
      %v416 = vmul.f32 %v384, %v320
      %v417 = vmul.f32 %v385, %v321
      %v418 = vmul.f32 %v386, %v322
      %v419 = vmul.f32 %v387, %v323
      %v420 = vmul.f32 %v388, %v324
      %v421 = vmul.f32 %v389, %v325
      %v422 = vmul.f32 %v390, %v326
      %v423 = vmul.f32 %v391, %v327
      %v424 = vmul.f32 %v392, %v328
      %v425 = vmul.f32 %v393, %v329
      %v426 = vmul.f32 %v394, %v330
      %v427 = vmul.f32 %v395, %v331
      %v428 = vmul.f32 %v396, %v332
      %v429 = vmul.f32 %v397, %v333
      %v430 = vmul.f32 %v398, %v334
      %v431 = vmul.f32 %v399, %v335
      %v432 = vmul.f32 %v400, %v336
      %v433 = vmul.f32 %v401, %v337
      %v434 = vmul.f32 %v402, %v306
      %v435 = vmul.f32 %v403, %v307
      %v436 = vmul.f32 %v404, %v308
      %v437 = vmul.f32 %v405, %v309
      %v438 = vmul.f32 %v406, %v310
      %v439 = vmul.f32 %v407, %v311
      %v440 = vmul.f32 %v408, %v312
      %v441 = vmul.f32 %v409, %v313
      %v442 = vmul.f32 %v410, %v314
      %v443 = vmul.f32 %v411, %v315
      %v444 = vmul.f32 %v412, %v316
      %v445 = vmul.f32 %v413, %v317
      %v446 = vmul.f32 %v414, %v318
      %v447 = vmul.f32 %v415, %v319
      %v448 = vmul.f32 %v416, %v320
      %v449 = vmul.f32 %v417, %v321
      %v450 = vmul.f32 %v418, %v322
      %v451 = vmul.f32 %v419, %v323
      %v452 = vmul.f32 %v420, %v324
      %v453 = vmul.f32 %v421, %v325
      %v454 = vmul.f32 %v422, %v326
      %v455 = vmul.f32 %v423, %v327
      %v456 = vmul.f32 %v424, %v328
      %v457 = vmul.f32 %v425, %v329
      %v458 = vmul.f32 %v426, %v330
      %v459 = vmul.f32 %v427, %v331
      %v460 = vmul.f32 %v428, %v332
      %v461 = vmul.f32 %v429, %v333
      %v462 = vmul.f32 %v430, %v334
      %v463 = vmul.f32 %v431, %v335
      %v464 = vmul.f32 %v432, %v336
      %v465 = vmul.f32 %v433, %v337
      %v466 = vadd.f32 %v306, %v434
      %v467 = vadd.f32 %v307, %v435
      %v468 = vadd.f32 %v308, %v436
      %v469 = vadd.f32 %v309, %v437
      %v470 = vadd.f32 %v310, %v438
      %v471 = vadd.f32 %v311, %v439
      %v472 = vadd.f32 %v312, %v440
      %v473 = vadd.f32 %v313, %v441
      %v474 = vadd.f32 %v314, %v442
      %v475 = vadd.f32 %v315, %v443
      %v476 = vadd.f32 %v316, %v444
      %v477 = vadd.f32 %v317, %v445
      %v478 = vadd.f32 %v318, %v446
      %v479 = vadd.f32 %v319, %v447
      %v480 = vadd.f32 %v320, %v448
      %v481 = vadd.f32 %v321, %v449
      %v482 = vadd.f32 %v322, %v450
      %v483 = vadd.f32 %v323, %v451
      %v484 = vadd.f32 %v324, %v452
      %v485 = vadd.f32 %v325, %v453
      %v486 = vadd.f32 %v326, %v454
      %v487 = vadd.f32 %v327, %v455
      %v488 = vadd.f32 %v328, %v456
      %v489 = vadd.f32 %v329, %v457
      %v490 = vadd.f32 %v330, %v458
      %v491 = vadd.f32 %v331, %v459
      %v492 = vadd.f32 %v332, %v460
      %v493 = vadd.f32 %v333, %v461
      %v494 = vadd.f32 %v334, %v462
      %v495 = vadd.f32 %v335, %v463
      %v496 = vadd.f32 %v336, %v464
      %v497 = vadd.f32 %v337, %v465
      %v498 = vmul.f32 %v466, 0.7978846
      %v499 = vmul.f32 %v467, 0.7978846
      %v500 = vmul.f32 %v468, 0.7978846
      %v501 = vmul.f32 %v469, 0.7978846
      %v502 = vmul.f32 %v470, 0.7978846
      %v503 = vmul.f32 %v471, 0.7978846
      %v504 = vmul.f32 %v472, 0.7978846
      %v505 = vmul.f32 %v473, 0.7978846
      %v506 = vmul.f32 %v474, 0.7978846
      %v507 = vmul.f32 %v475, 0.7978846
      %v508 = vmul.f32 %v476, 0.7978846
      %v509 = vmul.f32 %v477, 0.7978846
      %v510 = vmul.f32 %v478, 0.7978846
      %v511 = vmul.f32 %v479, 0.7978846
      %v512 = vmul.f32 %v480, 0.7978846
      %v513 = vmul.f32 %v481, 0.7978846
      %v514 = vmul.f32 %v482, 0.7978846
      %v515 = vmul.f32 %v483, 0.7978846
      %v516 = vmul.f32 %v484, 0.7978846
      %v517 = vmul.f32 %v485, 0.7978846
      %v518 = vmul.f32 %v486, 0.7978846
      %v519 = vmul.f32 %v487, 0.7978846
      %v520 = vmul.f32 %v488, 0.7978846
      %v521 = vmul.f32 %v489, 0.7978846
      %v522 = vmul.f32 %v490, 0.7978846
      %v523 = vmul.f32 %v491, 0.7978846
      %v524 = vmul.f32 %v492, 0.7978846
      %v525 = vmul.f32 %v493, 0.7978846
      %v526 = vmul.f32 %v494, 0.7978846
      %v527 = vmul.f32 %v495, 0.7978846
      %v528 = vmul.f32 %v496, 0.7978846
      %v529 = vmul.f32 %v497, 0.7978846
      %v530 = vtanh.pop %v498
      %v531 = vtanh.pop %v499
      %v532 = vtanh.pop %v500
      %v533 = vtanh.pop %v501
      %v534 = vtanh.pop %v502
      %v535 = vtanh.pop %v503
      %v536 = vtanh.pop %v504
      %v537 = vtanh.pop %v505
      %v538 = vtanh.pop %v506
      %v539 = vtanh.pop %v507
      %v540 = vtanh.pop %v508
      %v541 = vtanh.pop %v509
      %v542 = vtanh.pop %v510
      %v543 = vtanh.pop %v511
      %v544 = vtanh.pop %v512
      %v545 = vtanh.pop %v513
      %v546 = vtanh.pop %v514
      %v547 = vtanh.pop %v515
      %v548 = vtanh.pop %v516
      %v549 = vtanh.pop %v517
      %v550 = vtanh.pop %v518
      %v551 = vtanh.pop %v519
      %v552 = vtanh.pop %v520
      %v553 = vtanh.pop %v521
      %v554 = vtanh.pop %v522
      %v555 = vtanh.pop %v523
      %v556 = vtanh.pop %v524
      %v557 = vtanh.pop %v525
      %v558 = vtanh.pop %v526
      %v559 = vtanh.pop %v527
      %v560 = vtanh.pop %v528
      %v561 = vtanh.pop %v529
      %v562 = vadd.f32 %v530, 1.0
      %v563 = vadd.f32 %v531, 1.0
      %v564 = vadd.f32 %v532, 1.0
      %v565 = vadd.f32 %v533, 1.0
      %v566 = vadd.f32 %v534, 1.0
      %v567 = vadd.f32 %v535, 1.0
      %v568 = vadd.f32 %v536, 1.0
      %v569 = vadd.f32 %v537, 1.0
      %v570 = vadd.f32 %v538, 1.0
      %v571 = vadd.f32 %v539, 1.0
      %v572 = vadd.f32 %v540, 1.0
      %v573 = vadd.f32 %v541, 1.0
      %v574 = vadd.f32 %v542, 1.0
      %v575 = vadd.f32 %v543, 1.0
      %v576 = vadd.f32 %v544, 1.0
      %v577 = vadd.f32 %v545, 1.0
      %v578 = vadd.f32 %v546, 1.0
      %v579 = vadd.f32 %v547, 1.0
      %v580 = vadd.f32 %v548, 1.0
      %v581 = vadd.f32 %v549, 1.0
      %v582 = vadd.f32 %v550, 1.0
      %v583 = vadd.f32 %v551, 1.0
      %v584 = vadd.f32 %v552, 1.0
      %v585 = vadd.f32 %v553, 1.0
      %v586 = vadd.f32 %v554, 1.0
      %v587 = vadd.f32 %v555, 1.0
      %v588 = vadd.f32 %v556, 1.0
      %v589 = vadd.f32 %v557, 1.0
      %v590 = vadd.f32 %v558, 1.0
      %v591 = vadd.f32 %v559, 1.0
      %v592 = vadd.f32 %v560, 1.0
      %v593 = vadd.f32 %v561, 1.0
      %v594 = vmul.f32 %v338, %v562
      %v595 = vmul.f32 %v339, %v563
      %v596 = vmul.f32 %v340, %v564
      %v597 = vmul.f32 %v341, %v565
      %v598 = vmul.f32 %v342, %v566
      %v599 = vmul.f32 %v343, %v567
      %v600 = vmul.f32 %v344, %v568
      %v601 = vmul.f32 %v345, %v569
      %v602 = vmul.f32 %v346, %v570
      %v603 = vmul.f32 %v347, %v571
      %v604 = vmul.f32 %v348, %v572
      %v605 = vmul.f32 %v349, %v573
      %v606 = vmul.f32 %v350, %v574
      %v607 = vmul.f32 %v351, %v575
      %v608 = vmul.f32 %v352, %v576
      %v609 = vmul.f32 %v353, %v577
      %v610 = vmul.f32 %v354, %v578
      %v611 = vmul.f32 %v355, %v579
      %v612 = vmul.f32 %v356, %v580
      %v613 = vmul.f32 %v357, %v581
      %v614 = vmul.f32 %v358, %v582
      %v615 = vmul.f32 %v359, %v583
      %v616 = vmul.f32 %v360, %v584
      %v617 = vmul.f32 %v361, %v585
      %v618 = vmul.f32 %v362, %v586
      %v619 = vmul.f32 %v363, %v587
      %v620 = vmul.f32 %v364, %v588
      %v621 = vmul.f32 %v365, %v589
      %v622 = vmul.f32 %v366, %v590
      %v623 = vmul.f32 %v367, %v591
      %v624 = vmul.f32 %v368, %v592
      %v625 = vmul.f32 %v369, %v593
      %658 = vrot.lane.b32.xlu0 %v306, 96
      %v659 = vpop.permute.xlu0 %658
      %660 = vrot.lane.b32.xlu0 %v307, 96
      %v661 = vpop.permute.xlu0 %660
      %662 = vrot.lane.b32.xlu0 %v308, 96
      %v663 = vpop.permute.xlu0 %662
      %664 = vrot.lane.b32.xlu0 %v309, 96
      %v665 = vpop.permute.xlu0 %664
      %666 = vrot.lane.b32.xlu0 %v310, 96
      %v667 = vpop.permute.xlu0 %666
      %668 = vrot.lane.b32.xlu0 %v311, 96
      %v669 = vpop.permute.xlu0 %668
      %670 = vrot.lane.b32.xlu0 %v312, 96
      %v671 = vpop.permute.xlu0 %670
      %672 = vrot.lane.b32.xlu0 %v313, 96
      %v673 = vpop.permute.xlu0 %672
      %674 = vrot.lane.b32.xlu0 %v314, 96
      %v675 = vpop.permute.xlu0 %674
      %676 = vrot.lane.b32.xlu0 %v315, 96
      %v677 = vpop.permute.xlu0 %676
      %678 = vrot.lane.b32.xlu0 %v316, 96
      %v679 = vpop.permute.xlu0 %678
      %680 = vrot.lane.b32.xlu0 %v317, 96
      %v681 = vpop.permute.xlu0 %680
      %682 = vrot.lane.b32.xlu0 %v318, 96
      %v683 = vpop.permute.xlu0 %682
      %684 = vrot.lane.b32.xlu0 %v319, 96
      %v685 = vpop.permute.xlu0 %684
      %686 = vrot.lane.b32.xlu0 %v320, 96
      %v687 = vpop.permute.xlu0 %686
      %688 = vrot.lane.b32.xlu0 %v321, 96
      %v689 = vpop.permute.xlu0 %688
      %690 = vrot.lane.b32.xlu0 %v322, 96
      %v691 = vpop.permute.xlu0 %690
      %692 = vrot.lane.b32.xlu0 %v323, 96
      %v693 = vpop.permute.xlu0 %692
      %694 = vrot.lane.b32.xlu0 %v324, 96
      %v695 = vpop.permute.xlu0 %694
      %696 = vrot.lane.b32.xlu0 %v325, 96
      %v697 = vpop.permute.xlu0 %696
      %698 = vrot.lane.b32.xlu0 %v326, 96
      %v699 = vpop.permute.xlu0 %698
      %700 = vrot.lane.b32.xlu0 %v327, 96
      %v701 = vpop.permute.xlu0 %700
      %702 = vrot.lane.b32.xlu0 %v328, 96
      %v703 = vpop.permute.xlu0 %702
      %704 = vrot.lane.b32.xlu0 %v329, 96
      %v705 = vpop.permute.xlu0 %704
      %706 = vrot.lane.b32.xlu0 %v330, 96
      %v707 = vpop.permute.xlu0 %706
      %708 = vrot.lane.b32.xlu0 %v331, 96
      %v709 = vpop.permute.xlu0 %708
      %710 = vrot.lane.b32.xlu0 %v332, 96
      %v711 = vpop.permute.xlu0 %710
      %712 = vrot.lane.b32.xlu0 %v333, 96
      %v713 = vpop.permute.xlu0 %712
      %714 = vrot.lane.b32.xlu0 %v334, 96
      %v715 = vpop.permute.xlu0 %714
      %716 = vrot.lane.b32.xlu0 %v335, 96
      %v717 = vpop.permute.xlu0 %716
      %718 = vrot.lane.b32.xlu0 %v336, 96
      %v719 = vpop.permute.xlu0 %718
      %720 = vrot.lane.b32.xlu0 %v337, 96
      %v721 = vpop.permute.xlu0 %720
      %v754 = vmul.f32 %v594, %v659
      %v755 = vmul.f32 %v595, %v661
      %v756 = vmul.f32 %v596, %v663
      %v757 = vmul.f32 %v597, %v665
      %v758 = vmul.f32 %v598, %v667
      %v759 = vmul.f32 %v599, %v669
      %v760 = vmul.f32 %v600, %v671
      %v761 = vmul.f32 %v601, %v673
      %v762 = vmul.f32 %v602, %v675
      %v763 = vmul.f32 %v603, %v677
      %v764 = vmul.f32 %v604, %v679
      %v765 = vmul.f32 %v605, %v681
      %v766 = vmul.f32 %v606, %v683
      %v767 = vmul.f32 %v607, %v685
      %v768 = vmul.f32 %v608, %v687
      %v769 = vmul.f32 %v609, %v689
      %v770 = vmul.f32 %v610, %v691
      %v771 = vmul.f32 %v611, %v693
      %v772 = vmul.f32 %v612, %v695
      %v773 = vmul.f32 %v613, %v697
      %v774 = vmul.f32 %v614, %v699
      %v775 = vmul.f32 %v615, %v701
      %v776 = vmul.f32 %v616, %v703
      %v777 = vmul.f32 %v617, %v705
      %v778 = vmul.f32 %v618, %v707
      %v779 = vmul.f32 %v619, %v709
      %v780 = vmul.f32 %v620, %v711
      %v781 = vmul.f32 %v621, %v713
      %v782 = vmul.f32 %v622, %v715
      %v783 = vmul.f32 %v623, %v717
      %v784 = vmul.f32 %v624, %v719
      %v785 = vmul.f32 %v625, %v721
      %v786 = vpack.c.bf16 %v755, %v754
      %v787 = vpack.c.bf16 %v757, %v756
      %v788 = vpack.c.bf16 %v759, %v758
      %v789 = vpack.c.bf16 %v761, %v760
      %v790 = vpack.c.bf16 %v763, %v762
      %v791 = vpack.c.bf16 %v765, %v764
      %v792 = vpack.c.bf16 %v767, %v766
      %v793 = vpack.c.bf16 %v769, %v768
      %v794 = vpack.c.bf16 %v771, %v770
      %v795 = vpack.c.bf16 %v773, %v772
      %v796 = vpack.c.bf16 %v775, %v774
      %v797 = vpack.c.bf16 %v777, %v776
      %v798 = vpack.c.bf16 %v779, %v778
      %v799 = vpack.c.bf16 %v781, %v780
      %v800 = vpack.c.bf16 %v783, %v782
      %v801 = vpack.c.bf16 %v785, %v784
      %v802 = vld [vmem:[%s2] sm:$0xf]
      %v803 = vld [vmem:[%s2 + $0x4] sm:$0xf]
      %v804 = vld [vmem:[%s2 + $0x8] sm:$0xf]
      %v805 = vld [vmem:[%s2 + $0xc] sm:$0xf]
      %v810 = vunpack.c.l.b16 %v802
      %v811 = vunpack.c.l.b16 %v803
      %v812 = vunpack.c.l.b16 %v804
      %v813 = vunpack.c.l.b16 %v805
      %v814 = vpack.c.b16 %v811, %v810
      %v815 = vpack.c.b16 %v813, %v812
      %vm818 = vcmask 261120
      %v820 = vsel %vm818, %v786, 0
      %v823 = vsel %vm818, %v787, 0
      %v826 = vsel %vm818, %v788, 0
      %v829 = vsel %vm818, %v789, 0
      %v832 = vsel %vm818, %v790, 0
      %v835 = vsel %vm818, %v791, 0
      %v838 = vsel %vm818, %v792, 0
      %v841 = vsel %vm818, %v793, 0
      %v844 = vsel %vm818, %v794, 0
      %v847 = vsel %vm818, %v795, 0
      %v850 = vsel %vm818, %v796, 0
      %v853 = vsel %vm818, %v797, 0
      %v856 = vsel %vm818, %v798, 0
      %v859 = vsel %vm818, %v799, 0
      %v862 = vsel %vm818, %v800, 0
      %v865 = vsel %vm818, %v801, 0
      %867 = vmatprep.subr.bf16.mxu0 0
      %868 = vmatpush1.bf16.msra.mxu0 0
      %869 = vmatprep.subr.bf16.mxu0 0
      %870 = vmatpush1.bf16.msra.mxu0 0
      %871 = vmatprep.subr.bf16.mxu0 0
      %872 = vmatpush1.bf16.msra.mxu0 0
      %873 = vmatprep.subr.bf16.mxu0 0
      %874 = vmatpush1.bf16.msra.mxu0 0
      %875 = vmatprep.subr.bf16.mxu0 0
      %876 = vmatpush1.bf16.msra.mxu0 0
      %877 = vmatprep.subr.bf16.mxu0 0
      %878 = vmatpush1.bf16.msra.mxu0 0
      %879 = vmatprep.subr.bf16.mxu0 0
      %880 = vmatpush1.bf16.msra.mxu0 %v815
      %881 = vmatprep.subr.bf16.mxu0 0
      %882 = vmatpush1.bf16.msra.mxu0 %v814
      %883 = vmatprep.subr.bf16.mxu0 0
      %884 = vmatpush2.bf16.msra.mxu0 0
      %885 = vmatprep.subr.bf16.mxu0 0
      %886 = vmatpush2.bf16.msra.mxu0 0
      %887 = vmatprep.subr.bf16.mxu0 0
      %888 = vmatpush2.bf16.msra.mxu0 0
      %889 = vmatprep.subr.bf16.mxu0 0
      %890 = vmatpush2.bf16.msra.mxu0 0
      %891 = vmatprep.subr.bf16.mxu0 0
      %892 = vmatpush2.bf16.msra.mxu0 0
      %893 = vmatprep.subr.bf16.mxu0 0
      %894 = vmatpush2.bf16.msra.mxu0 0
      %895 = vmatprep.subr.bf16.mxu0 0
      %896 = vmatpush2.bf16.msra.mxu0 0
      %897 = vmatprep.subr.bf16.mxu0 0
      %898 = vmatpush2.bf16.msra.mxu0 0
      %899 = vmatprep.mubr.bf16.mxu0 0
      %900 = vmatmul.mubr.bf16.gmra.mxu0 %v820
      %v901 = vpop.f32.mrf.mxu0
      %v902 = vadd.f32 0.0, %v901
      %v903 = vpop.f32.mrf.mxu0
      %v904 = vpop.f32.mrf.mxu0
      %v905 = vadd.f32 0.0, %v904
      %v906 = vpop.f32.mrf.mxu0
      %907 = vmatprep.mubr.bf16.mxu0 0
      %908 = vmatmul.mubr.bf16.gmra.mxu0 %v823
      %v909 = vpop.f32.mrf.mxu0
      %v910 = vadd.f32 0.0, %v909
      %v911 = vpop.f32.mrf.mxu0
      %v912 = vpop.f32.mrf.mxu0
      %v913 = vadd.f32 0.0, %v912
      %v914 = vpop.f32.mrf.mxu0
      %915 = vmatprep.mubr.bf16.mxu0 0
      %916 = vmatmul.mubr.bf16.gmra.mxu0 %v826
      %v917 = vpop.f32.mrf.mxu0
      %v918 = vadd.f32 0.0, %v917
      %v919 = vpop.f32.mrf.mxu0
      %v920 = vpop.f32.mrf.mxu0
      %v921 = vadd.f32 0.0, %v920
      %v922 = vpop.f32.mrf.mxu0
      %923 = vmatprep.mubr.bf16.mxu0 0
      %924 = vmatmul.mubr.bf16.gmra.mxu0 %v829
      %v925 = vpop.f32.mrf.mxu0
      %v926 = vadd.f32 0.0, %v925
      %v927 = vpop.f32.mrf.mxu0
      %v928 = vpop.f32.mrf.mxu0
      %v929 = vadd.f32 0.0, %v928
      %v930 = vpop.f32.mrf.mxu0
      %931 = vmatprep.mubr.bf16.mxu0 0
      %932 = vmatmul.mubr.bf16.gmra.mxu0 %v832
      %v933 = vpop.f32.mrf.mxu0
      %v934 = vadd.f32 0.0, %v933
      %v935 = vpop.f32.mrf.mxu0
      %v936 = vpop.f32.mrf.mxu0
      %v937 = vadd.f32 0.0, %v936
      %v938 = vpop.f32.mrf.mxu0
      %939 = vmatprep.mubr.bf16.mxu0 0
      %940 = vmatmul.mubr.bf16.gmra.mxu0 %v835
      %v941 = vpop.f32.mrf.mxu0
      %v942 = vadd.f32 0.0, %v941
      %v943 = vpop.f32.mrf.mxu0
      %v944 = vpop.f32.mrf.mxu0
      %v945 = vadd.f32 0.0, %v944
      %v946 = vpop.f32.mrf.mxu0
      %947 = vmatprep.mubr.bf16.mxu0 0
      %948 = vmatmul.mubr.bf16.gmra.mxu0 %v838
      %v949 = vpop.f32.mrf.mxu0
      %v950 = vadd.f32 0.0, %v949
      %v951 = vpop.f32.mrf.mxu0
      %v952 = vpop.f32.mrf.mxu0
      %v953 = vadd.f32 0.0, %v952
      %v954 = vpop.f32.mrf.mxu0
      %955 = vmatprep.mubr.bf16.mxu0 0
      %956 = vmatmul.mubr.bf16.gmra.mxu0 %v841
      %v957 = vpop.f32.mrf.mxu0
      %v958 = vadd.f32 0.0, %v957
      %v959 = vpop.f32.mrf.mxu0
      %v960 = vpop.f32.mrf.mxu0
      %v961 = vadd.f32 0.0, %v960
      %v962 = vpop.f32.mrf.mxu0
      %963 = vmatprep.mubr.bf16.mxu0 0
      %964 = vmatmul.mubr.bf16.gmra.mxu0 %v844
      %v965 = vpop.f32.mrf.mxu0
      %v966 = vadd.f32 0.0, %v965
      %v967 = vpop.f32.mrf.mxu0
      %v968 = vpop.f32.mrf.mxu0
      %v969 = vadd.f32 0.0, %v968
      %v970 = vpop.f32.mrf.mxu0
      %971 = vmatprep.mubr.bf16.mxu0 0
      %972 = vmatmul.mubr.bf16.gmra.mxu0 %v847
      %v973 = vpop.f32.mrf.mxu0
      %v974 = vadd.f32 0.0, %v973
      %v975 = vpop.f32.mrf.mxu0
      %v976 = vpop.f32.mrf.mxu0
      %v977 = vadd.f32 0.0, %v976
      %v978 = vpop.f32.mrf.mxu0
      %979 = vmatprep.mubr.bf16.mxu0 0
      %980 = vmatmul.mubr.bf16.gmra.mxu0 %v850
      %v981 = vpop.f32.mrf.mxu0
      %v982 = vadd.f32 0.0, %v981
      %v983 = vpop.f32.mrf.mxu0
      %v984 = vpop.f32.mrf.mxu0
      %v985 = vadd.f32 0.0, %v984
      %v986 = vpop.f32.mrf.mxu0
      %987 = vmatprep.mubr.bf16.mxu0 0
      %988 = vmatmul.mubr.bf16.gmra.mxu0 %v853
      %v989 = vpop.f32.mrf.mxu0
      %v990 = vadd.f32 0.0, %v989
      %v991 = vpop.f32.mrf.mxu0
      %v992 = vpop.f32.mrf.mxu0
      %v993 = vadd.f32 0.0, %v992
      %v994 = vpop.f32.mrf.mxu0
      %995 = vmatprep.mubr.bf16.mxu0 0
      %996 = vmatmul.mubr.bf16.gmra.mxu0 %v856
      %v997 = vpop.f32.mrf.mxu0
      %v998 = vadd.f32 0.0, %v997
      %v999 = vpop.f32.mrf.mxu0
      %v1000 = vpop.f32.mrf.mxu0
      %v1001 = vadd.f32 0.0, %v1000
      %v1002 = vpop.f32.mrf.mxu0
      %1003 = vmatprep.mubr.bf16.mxu0 0
      %1004 = vmatmul.mubr.bf16.gmra.mxu0 %v859
      %v1005 = vpop.f32.mrf.mxu0
      %v1006 = vadd.f32 0.0, %v1005
      %v1007 = vpop.f32.mrf.mxu0
      %v1008 = vpop.f32.mrf.mxu0
      %v1009 = vadd.f32 0.0, %v1008
      %v1010 = vpop.f32.mrf.mxu0
      %1011 = vmatprep.mubr.bf16.mxu0 0
      %1012 = vmatmul.mubr.bf16.gmra.mxu0 %v862
      %v1013 = vpop.f32.mrf.mxu0
      %v1014 = vadd.f32 0.0, %v1013
      %v1015 = vpop.f32.mrf.mxu0
      %v1016 = vpop.f32.mrf.mxu0
      %v1017 = vadd.f32 0.0, %v1016
      %v1018 = vpop.f32.mrf.mxu0
      %1019 = vmatprep.mubr.bf16.mxu0 0
      %1020 = vmatmul.mubr.bf16.gmra.mxu0 %v865
      %v1021 = vpop.f32.mrf.mxu0
      %v1022 = vadd.f32 0.0, %v1021
      %v1023 = vpop.f32.mrf.mxu0
      %v1024 = vpop.f32.mrf.mxu0
      %v1025 = vadd.f32 0.0, %v1024
      %v1026 = vpop.f32.mrf.mxu0
      %1027 = vdwg.mxu0
      %v1028 = vld [vmem:[%s261] sm:$0xff]
      %v1029 = vld [vmem:[%s261 + $0x8] sm:$0xff]
      %v1030 = vld [vmem:[%s261 + $0x10] sm:$0xff]
      %v1031 = vld [vmem:[%s261 + $0x18] sm:$0xff]
      %v1032 = vld [vmem:[%s261 + $0x20] sm:$0xff]
      %v1033 = vld [vmem:[%s261 + $0x28] sm:$0xff]
      %v1034 = vld [vmem:[%s261 + $0x30] sm:$0xff]
      %v1035 = vld [vmem:[%s261 + $0x38] sm:$0xff]
      %v1036 = vld [vmem:[%s261 + $0x40] sm:$0xff]
      %v1037 = vld [vmem:[%s261 + $0x48] sm:$0xff]
      %v1038 = vld [vmem:[%s261 + $0x50] sm:$0xff]
      %v1039 = vld [vmem:[%s261 + $0x58] sm:$0xff]
      %v1040 = vld [vmem:[%s261 + $0x60] sm:$0xff]
      %v1041 = vld [vmem:[%s261 + $0x68] sm:$0xff]
      %v1042 = vld [vmem:[%s261 + $0x70] sm:$0xff]
      %v1043 = vld [vmem:[%s261 + $0x78] sm:$0xff]
      %v1044 = vld [vmem:[%s261 + $0x80] sm:$0xff]
      %v1045 = vld [vmem:[%s261 + $0x88] sm:$0xff]
      %v1046 = vld [vmem:[%s261 + $0x90] sm:$0xff]
      %v1047 = vld [vmem:[%s261 + $0x98] sm:$0xff]
      %v1048 = vld [vmem:[%s261 + $0xa0] sm:$0xff]
      %v1049 = vld [vmem:[%s261 + $0xa8] sm:$0xff]
      %v1050 = vld [vmem:[%s261 + $0xb0] sm:$0xff]
      %v1051 = vld [vmem:[%s261 + $0xb8] sm:$0xff]
      %v1052 = vld [vmem:[%s261 + $0xc0] sm:$0xff]
      %v1053 = vld [vmem:[%s261 + $0xc8] sm:$0xff]
      %v1054 = vld [vmem:[%s261 + $0xd0] sm:$0xff]
      %v1055 = vld [vmem:[%s261 + $0xd8] sm:$0xff]
      %v1056 = vld [vmem:[%s261 + $0xe0] sm:$0xff]
      %v1057 = vld [vmem:[%s261 + $0xe8] sm:$0xff]
      %v1058 = vld [vmem:[%s261 + $0xf0] sm:$0xff]
      %v1059 = vld [vmem:[%s261 + $0xf8] sm:$0xff]
      %v1060 = vadd.f32 %v1028, %v902
      %v1061 = vadd.f32 %v1029, %v905
      %v1062 = vadd.f32 %v1030, %v910
      %v1063 = vadd.f32 %v1031, %v913
      %v1064 = vadd.f32 %v1032, %v918
      %v1065 = vadd.f32 %v1033, %v921
      %v1066 = vadd.f32 %v1034, %v926
      %v1067 = vadd.f32 %v1035, %v929
      %v1068 = vadd.f32 %v1036, %v934
      %v1069 = vadd.f32 %v1037, %v937
      %v1070 = vadd.f32 %v1038, %v942
      %v1071 = vadd.f32 %v1039, %v945
      %v1072 = vadd.f32 %v1040, %v950
      %v1073 = vadd.f32 %v1041, %v953
      %v1074 = vadd.f32 %v1042, %v958
      %v1075 = vadd.f32 %v1043, %v961
      %v1076 = vadd.f32 %v1044, %v966
      %v1077 = vadd.f32 %v1045, %v969
      %v1078 = vadd.f32 %v1046, %v974
      %v1079 = vadd.f32 %v1047, %v977
      %v1080 = vadd.f32 %v1048, %v982
      %v1081 = vadd.f32 %v1049, %v985
      %v1082 = vadd.f32 %v1050, %v990
      %v1083 = vadd.f32 %v1051, %v993
      %v1084 = vadd.f32 %v1052, %v998
      %v1085 = vadd.f32 %v1053, %v1001
      %v1086 = vadd.f32 %v1054, %v1006
      %v1087 = vadd.f32 %v1055, %v1009
      %v1088 = vadd.f32 %v1056, %v1014
      %v1089 = vadd.f32 %v1057, %v1017
      %v1090 = vadd.f32 %v1058, %v1022
      %v1091 = vadd.f32 %v1059, %v1025
      %v1092 = vld [vmem:[%s3] sm:$0x1]
      %v1094 = vlaneseq
      %v1095 = vshrl.u32 %v1094, 7
      %v1096 = vsub.s32 0, %v1095
      %v1097 = vrot.slane %v1092, %v1096
      %v1099 = vadd.f32 %v1060, %v1097
      %v1100 = vadd.f32 %v1061, %v1097
      %v1101 = vadd.f32 %v1062, %v1097
      %v1102 = vadd.f32 %v1063, %v1097
      %v1103 = vadd.f32 %v1064, %v1097
      %v1104 = vadd.f32 %v1065, %v1097
      %v1105 = vadd.f32 %v1066, %v1097
      %v1106 = vadd.f32 %v1067, %v1097
      %v1107 = vadd.f32 %v1068, %v1097
      %v1108 = vadd.f32 %v1069, %v1097
      %v1109 = vadd.f32 %v1070, %v1097
      %v1110 = vadd.f32 %v1071, %v1097
      %v1111 = vadd.f32 %v1072, %v1097
      %v1112 = vadd.f32 %v1073, %v1097
      %v1113 = vadd.f32 %v1074, %v1097
      %v1114 = vadd.f32 %v1075, %v1097
      %v1115 = vadd.f32 %v1076, %v1097
      %v1116 = vadd.f32 %v1077, %v1097
      %v1117 = vadd.f32 %v1078, %v1097
      %v1118 = vadd.f32 %v1079, %v1097
      %v1119 = vadd.f32 %v1080, %v1097
      %v1120 = vadd.f32 %v1081, %v1097
      %v1121 = vadd.f32 %v1082, %v1097
      %v1122 = vadd.f32 %v1083, %v1097
      %v1123 = vadd.f32 %v1084, %v1097
      %v1124 = vadd.f32 %v1085, %v1097
      %v1125 = vadd.f32 %v1086, %v1097
      %v1126 = vadd.f32 %v1087, %v1097
      %v1127 = vadd.f32 %v1088, %v1097
      %v1128 = vadd.f32 %v1089, %v1097
      %v1129 = vadd.f32 %v1090, %v1097
      %v1130 = vadd.f32 %v1091, %v1097
      %vm1131 = vcmask 130048
      %1132 = vst.msk [vmem:[%s271] sm:$0xff] %vm1131, %v1099
      %1133 = vst.msk [vmem:[%s271 + $0x8] sm:$0xff] %vm1131, %v1100
      %1134 = vst.msk [vmem:[%s271 + $0x10] sm:$0xff] %vm1131, %v1101
      %1135 = vst.msk [vmem:[%s271 + $0x18] sm:$0xff] %vm1131, %v1102
      %1136 = vst.msk [vmem:[%s271 + $0x20] sm:$0xff] %vm1131, %v1103
      %1137 = vst.msk [vmem:[%s271 + $0x28] sm:$0xff] %vm1131, %v1104
      %1138 = vst.msk [vmem:[%s271 + $0x30] sm:$0xff] %vm1131, %v1105
      %1139 = vst.msk [vmem:[%s271 + $0x38] sm:$0xff] %vm1131, %v1106
      %1140 = vst.msk [vmem:[%s271 + $0x40] sm:$0xff] %vm1131, %v1107
      %1141 = vst.msk [vmem:[%s271 + $0x48] sm:$0xff] %vm1131, %v1108
      %1142 = vst.msk [vmem:[%s271 + $0x50] sm:$0xff] %vm1131, %v1109
      %1143 = vst.msk [vmem:[%s271 + $0x58] sm:$0xff] %vm1131, %v1110
      %1144 = vst.msk [vmem:[%s271 + $0x60] sm:$0xff] %vm1131, %v1111
      %1145 = vst.msk [vmem:[%s271 + $0x68] sm:$0xff] %vm1131, %v1112
      %1146 = vst.msk [vmem:[%s271 + $0x70] sm:$0xff] %vm1131, %v1113
      %1147 = vst.msk [vmem:[%s271 + $0x78] sm:$0xff] %vm1131, %v1114
      %1148 = vst.msk [vmem:[%s271 + $0x80] sm:$0xff] %vm1131, %v1115
      %1149 = vst.msk [vmem:[%s271 + $0x88] sm:$0xff] %vm1131, %v1116
      %1150 = vst.msk [vmem:[%s271 + $0x90] sm:$0xff] %vm1131, %v1117
      %1151 = vst.msk [vmem:[%s271 + $0x98] sm:$0xff] %vm1131, %v1118
      %1152 = vst.msk [vmem:[%s271 + $0xa0] sm:$0xff] %vm1131, %v1119
      %1153 = vst.msk [vmem:[%s271 + $0xa8] sm:$0xff] %vm1131, %v1120
      %1154 = vst.msk [vmem:[%s271 + $0xb0] sm:$0xff] %vm1131, %v1121
      %1155 = vst.msk [vmem:[%s271 + $0xb8] sm:$0xff] %vm1131, %v1122
      %1156 = vst.msk [vmem:[%s271 + $0xc0] sm:$0xff] %vm1131, %v1123
      %1157 = vst.msk [vmem:[%s271 + $0xc8] sm:$0xff] %vm1131, %v1124
      %1158 = vst.msk [vmem:[%s271 + $0xd0] sm:$0xff] %vm1131, %v1125
      %1159 = vst.msk [vmem:[%s271 + $0xd8] sm:$0xff] %vm1131, %v1126
      %1160 = vst.msk [vmem:[%s271 + $0xe0] sm:$0xff] %vm1131, %v1127
      %1161 = vst.msk [vmem:[%s271 + $0xe8] sm:$0xff] %vm1131, %v1128
      %1162 = vst.msk [vmem:[%s271 + $0xf0] sm:$0xff] %vm1131, %v1129
      %1163 = vst.msk [vmem:[%s271 + $0xf8] sm:$0xff] %vm1131, %v1130
      %s1164 = smul.u32 32, %s20
      %p1165 = scmp.lt.s32.totalorder %s19, 1
      %s1166 = scalar_select %p1165, %s19, 1
      %p1167 = scmp.lt.s32.totalorder %s1164, 31
      %s1168 = scalar_select %p1167, %s1164, 31
      %s1169 = smul.addr %s1166, 32
      %s1170 = sadd.s32 %s1168, %s1169
      %s1171 = smul.addr %s1170, 8
      %s1172 = scalar_lea.vmem %s4, %s1171
      // Predicated region
      $region37: #{transformer_block_forward.11} parent=35 // pred_check
        %p1173 = pneg %p145
      $region38: #{transformer_block_forward.11} parent=35 // pred_check_branch
        %1175 = sbr.rel (%p1173) target = $region40
      $region39: #{transformer_block_forward.11} parent=35 // pred_region
        %s1176 = smul.u32 32, %s20
      $region40: #{transformer_block_forward.11} parent=35 // pred_fallthru
        _
    $region36: #{transformer_block_forward.11} parent=5 // pred_fallthru
      _
    %p1177 = scmp.le.s32.totalorder 2, %s10
    // Predicated region
    $region41: #{transformer_block_forward.11} parent=5 // pred_check
      %p1178 = pneg %p1177
    $region42: #{transformer_block_forward.11} parent=5 // pred_check_branch
      %1180 = sbr.rel (%p1178) target = $region44
    $region43: #{transformer_block_forward.11} parent=5 // pred_region
      %s1181 = ssub.s32 %s10, 2
      // Predicated region
      $region45: #{transformer_block_forward.11} parent=43 // pred_check
        %p1182 = pneg %p151
      $region46: #{transformer_block_forward.11} parent=43 // pred_check_branch
        %1184 = sbr.rel (%p1182) target = $region48
      $region47: #{transformer_block_forward.11} parent=43 // pred_region
        %s1185 = smul.u32 32, %s22
        %p1186 = scmp.lt.s32.totalorder %s21, 1
        %s1187 = scalar_select %p1186, %s21, 1
        %p1188 = scmp.lt.s32.totalorder %s1185, 31
        %s1189 = scalar_select %p1188, %s1185, 31
        %s1190 = smul.addr %s1187, 32
        %s1191 = sadd.s32 %s1189, %s1190
        %s1192 = smul.addr %s1191, 8
        %s1193 = scalar_lea.vmem %s4, %s1192
      $region48: #{transformer_block_forward.11} parent=43 // pred_fallthru
        _
    $region44: #{transformer_block_forward.11} parent=5 // pred_fallthru
      _
  $region6: #{transformer_block_forward.11} parent=0 // loop_footer
    %s14 = sadd.s32 1, %s10
  $region7: #{transformer_block_forward.11} parent=0 // loop_footer_branch
    %9 = sbr.rel target = $region3
  $region8: #{transformer_block_forward.11} parent=0 // loop_exit
    _

// kernel: transformer_block_forward.10
$region0: #{transformer_block_forward.10}
  #allocation0 [shape = 'u32[]', space=smem, size = 0x4, offset = 0x4, fixed_abs, tag = 'smem constant byte address 0x4 - core index']
  #allocation1 [shape = 'u32[144,128]{1,0:T(1,128)}', space=vmem, size = 0x12000, scoped, tag = 'internal scratch']
  #allocation2 [shape = 'f32[18,18,64]{2,1,0:T(8,128)}', space=vmem, size = 0x36000, scoped, tag = 'scratch operand']
  %s0 = inlined_call_operand.vmem [shape: bf16[2,16,16,64], index: 0, kind: input, shape index: {}]
  %s1 = inlined_call_operand.vmem [shape: f32[9,1,64], index: 1, kind: input, shape index: {}]
  %s2 = inlined_call_operand.vmem [shape: f32[1,64], index: 2, kind: input, shape index: {}]
  %s3 = inlined_call_operand.vmem [shape: bf16[2,16,16,64], index: 3, kind: output, shape index: {}]
  %s4 = sld [smem:[#allocation0]]
  $region45: #{transformer_block_forward.10} parent=0
    _
  %s6 = ssub.s32 1, %s4
  %s7 = scalar_select 0, %s6, %s4
  loop: start=0, step=1, limit=4
  $region2: #{transformer_block_forward.10} parent=0 // loop_pre_header
    _
  $region3: #{transformer_block_forward.10} parent=0 // loop_header
    %s9 = sphi 0, %s13
    %p10 = scmp.ge.s32.totalorder %s9, 4
    %s19 = sphi 0, %s21
    %s22 = sphi 0, %s19
    %s23 = sphi 0, %s22
    %s39 = sphi 0, %s23
    %s43 = sphi 0, %s43
    %s45 = sphi 0, %s43
    %s46 = sphi 0, %s45
    %s60 = sphi 0, %s46
    %s64 = sphi 0, %s64
    %s66 = sphi 0, %s64
    %s67 = sphi 0, %s66
    %s81 = sphi 0, %s67
    %s87 = sphi 0, %s89
    %s90 = sphi 0, %s87
    %s91 = sphi 0, %s90
    %s107 = sphi 0, %s91
  $region4: #{transformer_block_forward.10} parent=0 // loop_header_branch
    %12 = sbr.rel (%p10) target = $region8
  $region5: #{transformer_block_forward.10} parent=0 // loop_body
    %s14 = ssub.s32 %s9, 1
    %s15 = ssub.s32 %s9, 2
    %s16 = sadd.s32 %s9, 1
    %s17 = ssub.s32 %s9, %s16
    %p18 = scmp.eq.s32.totalorder %s17, 0
    %s20 = sadd.s32 %s19, 1
    %s21 = scalar_select %p18, %s19, %s20
    %p24 = pneg %p18
    %p25 = scmp.eq.s32.totalorder %s9, 1
    %p26 = por %p24, %p25
    %p27 = scmp.ne.s32.totalorder %s19, %s22
    %p28 = scmp.eq.s32.totalorder %s9, 0
    %p29 = por %p27, %p28
    %p30 = scmp.ne.s32.totalorder %s19, %s22
    %p31 = scmp.eq.s32.totalorder %s14, 1
    %p32 = por %p30, %p31
    %p33 = scmp.ne.s32.totalorder %s22, %s23
    %p34 = scmp.eq.s32.totalorder %s14, 0
    %p35 = por %p33, %p34
    %p36 = scmp.ne.s32.totalorder %s22, %s23
    %p37 = scmp.eq.s32.totalorder %s15, 1
    %p38 = por %p36, %p37
    %p40 = scmp.ne.s32.totalorder %s23, %s39
    %p41 = scmp.eq.s32.totalorder %s15, 0
    %p42 = por %p40, %p41
    %s44 = sadd.s32 %s43, 1
    %p47 = scmp.eq.s32.totalorder %s9, 1
    %p48 = scmp.ne.s32.totalorder %s43, %s45
    %p49 = scmp.eq.s32.totalorder %s9, 0
    %p50 = por %p48, %p49
    %p51 = scmp.ne.s32.totalorder %s43, %s45
    %p52 = scmp.eq.s32.totalorder %s14, 1
    %p53 = por %p51, %p52
    %p54 = scmp.ne.s32.totalorder %s45, %s46
    %p55 = scmp.eq.s32.totalorder %s14, 0
    %p56 = por %p54, %p55
    %p57 = scmp.ne.s32.totalorder %s45, %s46
    %p58 = scmp.eq.s32.totalorder %s15, 1
    %p59 = por %p57, %p58
    %p61 = scmp.ne.s32.totalorder %s46, %s60
    %p62 = scmp.eq.s32.totalorder %s15, 0
    %p63 = por %p61, %p62
    %s65 = sadd.s32 %s64, 1
    %p68 = scmp.eq.s32.totalorder %s9, 1
    %p69 = scmp.ne.s32.totalorder %s64, %s66
    %p70 = scmp.eq.s32.totalorder %s9, 0
    %p71 = por %p69, %p70
    %p72 = scmp.ne.s32.totalorder %s64, %s66
    %p73 = scmp.eq.s32.totalorder %s14, 1
    %p74 = por %p72, %p73
    %p75 = scmp.ne.s32.totalorder %s66, %s67
    %p76 = scmp.eq.s32.totalorder %s14, 0
    %p77 = por %p75, %p76
    %p78 = scmp.ne.s32.totalorder %s66, %s67
    %p79 = scmp.eq.s32.totalorder %s15, 1
    %p80 = por %p78, %p79
    %p82 = scmp.ne.s32.totalorder %s67, %s81
    %p83 = scmp.eq.s32.totalorder %s15, 0
    %p84 = por %p82, %p83
    %s85 = ssub.s32 %s9, %s16
    %p86 = scmp.eq.s32.totalorder %s85, 0
    %s88 = sadd.s32 %s87, 1
    %s89 = scalar_select %p86, %s87, %s88
    %p92 = pneg %p86
    %p93 = scmp.eq.s32.totalorder %s9, 1
    %p94 = por %p92, %p93
    %p95 = scmp.ne.s32.totalorder %s87, %s90
    %p96 = scmp.eq.s32.totalorder %s9, 0
    %p97 = por %p95, %p96
    %p98 = scmp.ne.s32.totalorder %s87, %s90
    %p99 = scmp.eq.s32.totalorder %s14, 1
    %p100 = por %p98, %p99
    %p101 = scmp.ne.s32.totalorder %s90, %s91
    %p102 = scmp.eq.s32.totalorder %s14, 0
    %p103 = por %p101, %p102
    %p104 = scmp.ne.s32.totalorder %s90, %s91
    %p105 = scmp.eq.s32.totalorder %s15, 1
    %p106 = por %p104, %p105
    %p108 = scmp.ne.s32.totalorder %s91, %s107
    %p109 = scmp.eq.s32.totalorder %s15, 0
    %p110 = por %p108, %p109
    %p111 = scmp.le.s32.totalorder 1, %s9
    %p112 = scmp.lt.s32.totalorder %s9, 3
    %p113 = pnand %p111, %p112
    %p114 = pneg %p113
    // Predicated region
    $region9: #{transformer_block_forward.10} parent=5 // pred_check
      _
    $region10: #{transformer_block_forward.10} parent=5 // pred_check_branch
      %116 = sbr.rel (%p113) target = $region12
    $region11: #{transformer_block_forward.10} parent=5 // pred_region
      %s117 = ssub.s32 %s9, 1
      // Predicated region
      $region13: #{transformer_block_forward.10} parent=11 // pred_check
        %p118 = pneg %p56
      $region14: #{transformer_block_forward.10} parent=11 // pred_check_branch
        %120 = sbr.rel (%p118) target = $region16
      $region15: #{transformer_block_forward.10} parent=11 // pred_region
        _
      $region16: #{transformer_block_forward.10} parent=11 // pred_fallthru
        _
      // Predicated region
      $region17: #{transformer_block_forward.10} parent=11 // pred_check
        %p121 = pneg %p77
      $region18: #{transformer_block_forward.10} parent=11 // pred_check_branch
        %123 = sbr.rel (%p121) target = $region20
      $region19: #{transformer_block_forward.10} parent=11 // pred_region
        _
      $region20: #{transformer_block_forward.10} parent=11 // pred_fallthru
        _
    $region12: #{transformer_block_forward.10} parent=5 // pred_fallthru
      _
    %p124 = scmp.lt.s32.totalorder %s9, 2
    // Predicated region
    $region21: #{transformer_block_forward.10} parent=5 // pred_check
      %p125 = pneg %p124
    $region22: #{transformer_block_forward.10} parent=5 // pred_check_branch
      %127 = sbr.rel (%p125) target = $region24
    $region23: #{transformer_block_forward.10} parent=5 // pred_region
      // Predicated region
      $region25: #{transformer_block_forward.10} parent=23 // pred_check
        %p128 = pneg %p29
      $region26: #{transformer_block_forward.10} parent=23 // pred_check_branch
        %130 = sbr.rel (%p128) target = $region28
      $region27: #{transformer_block_forward.10} parent=23 // pred_region
        %p131 = scmp.lt.s32.totalorder %s9, 1
        %s132 = scalar_select %p131, %s9, 1
        %s133 = smul.addr %s132, 32
        %s134 = smul.addr %s133, 4
        %s135 = scalar_lea.vmem %s0, %s134
      $region28: #{transformer_block_forward.10} parent=23 // pred_fallthru
        _
    $region24: #{transformer_block_forward.10} parent=5 // pred_fallthru
      _
    %p136 = scmp.le.s32.totalorder 1, %s9
    %p137 = scmp.lt.s32.totalorder %s9, 3
    %p138 = pnand %p136, %p137
    %p139 = pneg %p138
    // Predicated region
    $region29: #{transformer_block_forward.10} parent=5 // pred_check
      _
    $region30: #{transformer_block_forward.10} parent=5 // pred_check_branch
      %141 = sbr.rel (%p138) target = $region32
    $region31: #{transformer_block_forward.10} parent=5 // pred_region
      %s142 = ssub.s32 %s9, 1
      %p143 = scmp.lt.s32.totalorder %s14, 1
      %s144 = scalar_select %p143, %s14, 1
      %s145 = smul.addr %s144, 32
      %s146 = smul.addr %s145, 4
      %s147 = scalar_lea.vmem %s0, %s146
      %p148 = pneg %p35
      %p149 = pneg %p32
      %p150 = pneg %p56
      %p151 = pneg %p53
      %p152 = pneg %p77
      %p153 = pneg %p74
      %p154 = pneg %p103
      %p155 = pneg %p100
      %p156 = scmp.lt.s32.totalorder %s14, 1
      %s157 = scalar_select %p156, %s14, 1
      %s158 = smul.addr %s157, 32
      %s159 = smul.addr %s158, 4
      %s160 = scalar_lea.vmem %s3, %s159
      %p161 = scmp.lt.s32.totalorder %s14, 1
      %s162 = scalar_select %p161, %s14, 1
      %s163 = smul.addr %s162, 32
      %s164 = smul.addr %s163, 4
      %s165 = scalar_lea.vmem %s0, %s164
      %p166 = scmp.lt.s32.totalorder %s14, 1
      %s167 = scalar_select %p166, %s14, 1
      %s168 = smul.addr %s167, 32
      %s169 = smul.addr %s168, 4
      %s170 = scalar_lea.vmem %s3, %s169
      %vm171 = vcmask 523264
      %172 = vst.msk [vmem:[#allocation2] sm:$0xff] %vm171, 0.0
      %173 = vst.msk [vmem:[#allocation2 + $0x8] sm:$0xff] %vm171, 0.0
      %vm174 = vcmask 517120
      %175 = vst.msk [vmem:[#allocation2 + $0x10] sm:$0x3] %vm174, 0.0
      %s176 = scalar_lea.vmem [#allocation2], 408
      %177 = vst.msk [vmem:[%s176] sm:$0xff] %vm171, 0.0
      %178 = vst.msk [vmem:[%s176 + $0x8] sm:$0xff] %vm171, 0.0
      %179 = vst.msk [vmem:[%s176 + $0x10] sm:$0x3] %vm174, 0.0
      %vm180 = vcmask 516096
      %181 = vst.msk [vmem:[#allocation2] sm:$0x1] %vm180, 0.0
      %182 = vst.msk [vmem:[#allocation2 + $0x18] sm:$0x1] %vm180, 0.0
      %183 = vst.msk [vmem:[#allocation2 + $0x30] sm:$0x1] %vm180, 0.0
      %184 = vst.msk [vmem:[#allocation2 + $0x48] sm:$0x1] %vm180, 0.0
      %185 = vst.msk [vmem:[#allocation2 + $0x60] sm:$0x1] %vm180, 0.0
      %186 = vst.msk [vmem:[#allocation2 + $0x78] sm:$0x1] %vm180, 0.0
      %187 = vst.msk [vmem:[#allocation2 + $0x90] sm:$0x1] %vm180, 0.0
      %188 = vst.msk [vmem:[#allocation2 + $0xa8] sm:$0x1] %vm180, 0.0
      %189 = vst.msk [vmem:[#allocation2 + $0xc0] sm:$0x1] %vm180, 0.0
      %190 = vst.msk [vmem:[#allocation2 + $0xd8] sm:$0x1] %vm180, 0.0
      %191 = vst.msk [vmem:[#allocation2 + $0xf0] sm:$0x1] %vm180, 0.0
      %192 = vst.msk [vmem:[#allocation2 + $0x108] sm:$0x1] %vm180, 0.0
      %193 = vst.msk [vmem:[#allocation2 + $0x120] sm:$0x1] %vm180, 0.0
      %194 = vst.msk [vmem:[#allocation2 + $0x138] sm:$0x1] %vm180, 0.0
      %195 = vst.msk [vmem:[#allocation2 + $0x150] sm:$0x1] %vm180, 0.0
      %196 = vst.msk [vmem:[#allocation2 + $0x168] sm:$0x1] %vm180, 0.0
      %197 = vst.msk [vmem:[#allocation2 + $0x180] sm:$0x1] %vm180, 0.0
      %198 = vst.msk [vmem:[#allocation2 + $0x198] sm:$0x1] %vm180, 0.0
      %199 = vst.msk [vmem:[#allocation2 + $0x11] sm:$0x1] %vm180, 0.0
      %200 = vst.msk [vmem:[#allocation2 + $0x29] sm:$0x1] %vm180, 0.0
      %201 = vst.msk [vmem:[#allocation2 + $0x41] sm:$0x1] %vm180, 0.0
      %202 = vst.msk [vmem:[#allocation2 + $0x59] sm:$0x1] %vm180, 0.0
      %203 = vst.msk [vmem:[#allocation2 + $0x71] sm:$0x1] %vm180, 0.0
      %204 = vst.msk [vmem:[#allocation2 + $0x89] sm:$0x1] %vm180, 0.0
      %205 = vst.msk [vmem:[#allocation2 + $0xa1] sm:$0x1] %vm180, 0.0
      %206 = vst.msk [vmem:[#allocation2 + $0xb9] sm:$0x1] %vm180, 0.0
      %207 = vst.msk [vmem:[#allocation2 + $0xd1] sm:$0x1] %vm180, 0.0
      %208 = vst.msk [vmem:[#allocation2 + $0xe9] sm:$0x1] %vm180, 0.0
      %209 = vst.msk [vmem:[#allocation2 + $0x101] sm:$0x1] %vm180, 0.0
      %210 = vst.msk [vmem:[#allocation2 + $0x119] sm:$0x1] %vm180, 0.0
      %211 = vst.msk [vmem:[#allocation2 + $0x131] sm:$0x1] %vm180, 0.0
      %212 = vst.msk [vmem:[#allocation2 + $0x149] sm:$0x1] %vm180, 0.0
      %213 = vst.msk [vmem:[#allocation2 + $0x161] sm:$0x1] %vm180, 0.0
      %214 = vst.msk [vmem:[#allocation2 + $0x179] sm:$0x1] %vm180, 0.0
      %215 = vst.msk [vmem:[#allocation2 + $0x191] sm:$0x1] %vm180, 0.0
      %216 = vst.msk [vmem:[#allocation2 + $0x1a9] sm:$0x1] %vm180, 0.0
      %v217 = vld [vmem:[%s165] sm:$0xf]
      %v218 = vld [vmem:[%s165 + $0x4] sm:$0xf]
      %v219 = vld [vmem:[%s165 + $0x8] sm:$0xf]
      %v220 = vld [vmem:[%s165 + $0xc] sm:$0xf]
      %v221 = vld [vmem:[%s165 + $0x10] sm:$0xf]
      %v222 = vld [vmem:[%s165 + $0x14] sm:$0xf]
      %v223 = vld [vmem:[%s165 + $0x18] sm:$0xf]
      %v224 = vld [vmem:[%s165 + $0x1c] sm:$0xf]
      %v225 = vld [vmem:[%s165 + $0x20] sm:$0xf]
      %v226 = vld [vmem:[%s165 + $0x24] sm:$0xf]
      %v227 = vld [vmem:[%s165 + $0x28] sm:$0xf]
      %v228 = vld [vmem:[%s165 + $0x2c] sm:$0xf]
      %v229 = vld [vmem:[%s165 + $0x30] sm:$0xf]
      %v230 = vld [vmem:[%s165 + $0x34] sm:$0xf]
      %v231 = vld [vmem:[%s165 + $0x38] sm:$0xf]
      %v232 = vld [vmem:[%s165 + $0x3c] sm:$0xf]
      %v233 = vld [vmem:[%s165 + $0x40] sm:$0xf]
      %v234 = vld [vmem:[%s165 + $0x44] sm:$0xf]
      %v235 = vld [vmem:[%s165 + $0x48] sm:$0xf]
      %v236 = vld [vmem:[%s165 + $0x4c] sm:$0xf]
      %v237 = vld [vmem:[%s165 + $0x50] sm:$0xf]
      %v238 = vld [vmem:[%s165 + $0x54] sm:$0xf]
      %v239 = vld [vmem:[%s165 + $0x58] sm:$0xf]
      %v240 = vld [vmem:[%s165 + $0x5c] sm:$0xf]
      %v241 = vld [vmem:[%s165 + $0x60] sm:$0xf]
      %v242 = vld [vmem:[%s165 + $0x64] sm:$0xf]
      %v243 = vld [vmem:[%s165 + $0x68] sm:$0xf]
      %v244 = vld [vmem:[%s165 + $0x6c] sm:$0xf]
      %v245 = vld [vmem:[%s165 + $0x70] sm:$0xf]
      %v246 = vld [vmem:[%s165 + $0x74] sm:$0xf]
      %v247 = vld [vmem:[%s165 + $0x78] sm:$0xf]
      %v248 = vld [vmem:[%s165 + $0x7c] sm:$0xf]
      %v249 = vunpack.c.l.bf16 %v217
      %v250 = vunpack.c.l.bf16 %v218
      %v251 = vunpack.c.l.bf16 %v219
      %v252 = vunpack.c.l.bf16 %v220
      %v253 = vunpack.c.l.bf16 %v221
      %v254 = vunpack.c.l.bf16 %v222
      %v255 = vunpack.c.l.bf16 %v223
      %v256 = vunpack.c.l.bf16 %v224
      %v257 = vunpack.c.l.bf16 %v225
      %v258 = vunpack.c.l.bf16 %v226
      %v259 = vunpack.c.l.bf16 %v227
      %v260 = vunpack.c.l.bf16 %v228
      %v261 = vunpack.c.l.bf16 %v229
      %v262 = vunpack.c.l.bf16 %v230
      %v263 = vunpack.c.l.bf16 %v231
      %v264 = vunpack.c.l.bf16 %v232
      %v265 = vunpack.c.l.bf16 %v233
      %v266 = vunpack.c.l.bf16 %v234
      %v267 = vunpack.c.l.bf16 %v235
      %v268 = vunpack.c.l.bf16 %v236
      %v269 = vunpack.c.l.bf16 %v237
      %v270 = vunpack.c.l.bf16 %v238
      %v271 = vunpack.c.l.bf16 %v239
      %v272 = vunpack.c.l.bf16 %v240
      %v273 = vunpack.c.l.bf16 %v241
      %v274 = vunpack.c.l.bf16 %v242
      %v275 = vunpack.c.l.bf16 %v243
      %v276 = vunpack.c.l.bf16 %v244
      %v277 = vunpack.c.l.bf16 %v245
      %v278 = vunpack.c.l.bf16 %v246
      %v279 = vunpack.c.l.bf16 %v247
      %v280 = vunpack.c.l.bf16 %v248
      %s281 = scalar_lea.vmem [#allocation2], 24
      %282 = vst.msk [vmem:[%s281 + $0x1] sm:$0xff] %vm171, %v249
      %283 = vst.msk [vmem:[%s281 + $0x9] sm:$0xff] %vm171, %v250
      %284 = vst.msk [vmem:[%s281 + $0x19] sm:$0xff] %vm171, %v251
      %285 = vst.msk [vmem:[%s281 + $0x21] sm:$0xff] %vm171, %v252
      %286 = vst.msk [vmem:[%s281 + $0x31] sm:$0xff] %vm171, %v253
      %287 = vst.msk [vmem:[%s281 + $0x39] sm:$0xff] %vm171, %v254
      %288 = vst.msk [vmem:[%s281 + $0x49] sm:$0xff] %vm171, %v255
      %289 = vst.msk [vmem:[%s281 + $0x51] sm:$0xff] %vm171, %v256
      %290 = vst.msk [vmem:[%s281 + $0x61] sm:$0xff] %vm171, %v257
      %291 = vst.msk [vmem:[%s281 + $0x69] sm:$0xff] %vm171, %v258
      %292 = vst.msk [vmem:[%s281 + $0x79] sm:$0xff] %vm171, %v259
      %293 = vst.msk [vmem:[%s281 + $0x81] sm:$0xff] %vm171, %v260
      %294 = vst.msk [vmem:[%s281 + $0x91] sm:$0xff] %vm171, %v261
      %295 = vst.msk [vmem:[%s281 + $0x99] sm:$0xff] %vm171, %v262
      %296 = vst.msk [vmem:[%s281 + $0xa9] sm:$0xff] %vm171, %v263
      %297 = vst.msk [vmem:[%s281 + $0xb1] sm:$0xff] %vm171, %v264
      %298 = vst.msk [vmem:[%s281 + $0xc1] sm:$0xff] %vm171, %v265
      %299 = vst.msk [vmem:[%s281 + $0xc9] sm:$0xff] %vm171, %v266
      %300 = vst.msk [vmem:[%s281 + $0xd9] sm:$0xff] %vm171, %v267
      %301 = vst.msk [vmem:[%s281 + $0xe1] sm:$0xff] %vm171, %v268
      %302 = vst.msk [vmem:[%s281 + $0xf1] sm:$0xff] %vm171, %v269
      %303 = vst.msk [vmem:[%s281 + $0xf9] sm:$0xff] %vm171, %v270
      %304 = vst.msk [vmem:[%s281 + $0x109] sm:$0xff] %vm171, %v271
      %305 = vst.msk [vmem:[%s281 + $0x111] sm:$0xff] %vm171, %v272
      %306 = vst.msk [vmem:[%s281 + $0x121] sm:$0xff] %vm171, %v273
      %307 = vst.msk [vmem:[%s281 + $0x129] sm:$0xff] %vm171, %v274
      %308 = vst.msk [vmem:[%s281 + $0x139] sm:$0xff] %vm171, %v275
      %309 = vst.msk [vmem:[%s281 + $0x141] sm:$0xff] %vm171, %v276
      %310 = vst.msk [vmem:[%s281 + $0x151] sm:$0xff] %vm171, %v277
      %311 = vst.msk [vmem:[%s281 + $0x159] sm:$0xff] %vm171, %v278
      %312 = vst.msk [vmem:[%s281 + $0x169] sm:$0xff] %vm171, %v279
      %313 = vst.msk [vmem:[%s281 + $0x171] sm:$0xff] %vm171, %v280
      %v314 = vld [vmem:[%s2] sm:$0x1]
      %v316 = vlaneseq
      %v317 = vshrl.u32 %v316, 7
      %v318 = vsub.s32 0, %v317
      %v319 = vrot.slane %v314, %v318
      %v321 = vadd.f32 %v319, 0.0
      %v322 = vld [vmem:[#allocation2] sm:$0xff]
      %v323 = vld [vmem:[#allocation2 + $0x8] sm:$0xff]
      %v324 = vld [vmem:[#allocation2 + $0x18] sm:$0xff]
      %v325 = vld [vmem:[#allocation2 + $0x20] sm:$0xff]
      %v326 = vld [vmem:[#allocation2 + $0x30] sm:$0xff]
      %v327 = vld [vmem:[#allocation2 + $0x38] sm:$0xff]
      %v328 = vld [vmem:[#allocation2 + $0x48] sm:$0xff]
      %v329 = vld [vmem:[#allocation2 + $0x50] sm:$0xff]
      %v330 = vld [vmem:[#allocation2 + $0x60] sm:$0xff]
      %v331 = vld [vmem:[#allocation2 + $0x68] sm:$0xff]
      %v332 = vld [vmem:[#allocation2 + $0x78] sm:$0xff]
      %v333 = vld [vmem:[#allocation2 + $0x80] sm:$0xff]
      %v334 = vld [vmem:[#allocation2 + $0x90] sm:$0xff]
      %v335 = vld [vmem:[#allocation2 + $0x98] sm:$0xff]
      %v336 = vld [vmem:[#allocation2 + $0xa8] sm:$0xff]
      %v337 = vld [vmem:[#allocation2 + $0xb0] sm:$0xff]
      %v338 = vld [vmem:[#allocation2 + $0xc0] sm:$0xff]
      %v339 = vld [vmem:[#allocation2 + $0xc8] sm:$0xff]
      %v340 = vld [vmem:[#allocation2 + $0xd8] sm:$0xff]
      %v341 = vld [vmem:[#allocation2 + $0xe0] sm:$0xff]
      %v342 = vld [vmem:[#allocation2 + $0xf0] sm:$0xff]
      %v343 = vld [vmem:[#allocation2 + $0xf8] sm:$0xff]
      %v344 = vld [vmem:[#allocation2 + $0x108] sm:$0xff]
      %v345 = vld [vmem:[#allocation2 + $0x110] sm:$0xff]
      %v346 = vld [vmem:[#allocation2 + $0x120] sm:$0xff]
      %v347 = vld [vmem:[#allocation2 + $0x128] sm:$0xff]
      %v348 = vld [vmem:[#allocation2 + $0x138] sm:$0xff]
      %v349 = vld [vmem:[#allocation2 + $0x140] sm:$0xff]
      %v350 = vld [vmem:[#allocation2 + $0x150] sm:$0xff]
      %v351 = vld [vmem:[#allocation2 + $0x158] sm:$0xff]
      %v352 = vld [vmem:[#allocation2 + $0x168] sm:$0xff]
      %v353 = vld [vmem:[#allocation2 + $0x170] sm:$0xff]
      %v354 = vld [vmem:[%s1] sm:$0x1]
      %v356 = vlaneseq
      %v357 = vshrl.u32 %v356, 7
      %v358 = vsub.s32 0, %v357
      %v359 = vrot.slane %v354, %v358
      %v361 = vmul.f32 %v322, %v359
      %v362 = vmul.f32 %v323, %v359
      %v363 = vmul.f32 %v324, %v359
      %v364 = vmul.f32 %v325, %v359
      %v365 = vmul.f32 %v326, %v359
      %v366 = vmul.f32 %v327, %v359
      %v367 = vmul.f32 %v328, %v359
      %v368 = vmul.f32 %v329, %v359
      %v369 = vmul.f32 %v330, %v359
      %v370 = vmul.f32 %v331, %v359
      %v371 = vmul.f32 %v332, %v359
      %v372 = vmul.f32 %v333, %v359
      %v373 = vmul.f32 %v334, %v359
      %v374 = vmul.f32 %v335, %v359
      %v375 = vmul.f32 %v336, %v359
      %v376 = vmul.f32 %v337, %v359
      %v377 = vmul.f32 %v338, %v359
      %v378 = vmul.f32 %v339, %v359
      %v379 = vmul.f32 %v340, %v359
      %v380 = vmul.f32 %v341, %v359
      %v381 = vmul.f32 %v342, %v359
      %v382 = vmul.f32 %v343, %v359
      %v383 = vmul.f32 %v344, %v359
      %v384 = vmul.f32 %v345, %v359
      %v385 = vmul.f32 %v346, %v359
      %v386 = vmul.f32 %v347, %v359
      %v387 = vmul.f32 %v348, %v359
      %v388 = vmul.f32 %v349, %v359
      %v389 = vmul.f32 %v350, %v359
      %v390 = vmul.f32 %v351, %v359
      %v391 = vmul.f32 %v352, %v359
      %v392 = vmul.f32 %v353, %v359
      %v393 = vadd.f32 %v321, %v361
      %v394 = vadd.f32 %v321, %v362
      %v395 = vadd.f32 %v321, %v363
      %v396 = vadd.f32 %v321, %v364
      %v397 = vadd.f32 %v321, %v365
      %v398 = vadd.f32 %v321, %v366
      %v399 = vadd.f32 %v321, %v367
      %v400 = vadd.f32 %v321, %v368
      %v401 = vadd.f32 %v321, %v369
      %v402 = vadd.f32 %v321, %v370
      %v403 = vadd.f32 %v321, %v371
      %v404 = vadd.f32 %v321, %v372
      %v405 = vadd.f32 %v321, %v373
      %v406 = vadd.f32 %v321, %v374
      %v407 = vadd.f32 %v321, %v375
      %v408 = vadd.f32 %v321, %v376
      %v409 = vadd.f32 %v321, %v377
      %v410 = vadd.f32 %v321, %v378
      %v411 = vadd.f32 %v321, %v379
      %v412 = vadd.f32 %v321, %v380
      %v413 = vadd.f32 %v321, %v381
      %v414 = vadd.f32 %v321, %v382
      %v415 = vadd.f32 %v321, %v383
      %v416 = vadd.f32 %v321, %v384
      %v417 = vadd.f32 %v321, %v385
      %v418 = vadd.f32 %v321, %v386
      %v419 = vadd.f32 %v321, %v387
      %v420 = vadd.f32 %v321, %v388
      %v421 = vadd.f32 %v321, %v389
      %v422 = vadd.f32 %v321, %v390
      %v423 = vadd.f32 %v321, %v391
      %v424 = vadd.f32 %v321, %v392
      %v425 = vld [vmem:[#allocation2 + $0x1] sm:$0xff]
      %v426 = vld [vmem:[#allocation2 + $0x9] sm:$0xff]
      %v427 = vld [vmem:[#allocation2 + $0x19] sm:$0xff]
      %v428 = vld [vmem:[#allocation2 + $0x21] sm:$0xff]
      %v429 = vld [vmem:[#allocation2 + $0x31] sm:$0xff]
      %v430 = vld [vmem:[#allocation2 + $0x39] sm:$0xff]
      %v431 = vld [vmem:[#allocation2 + $0x49] sm:$0xff]
      %v432 = vld [vmem:[#allocation2 + $0x51] sm:$0xff]
      %v433 = vld [vmem:[#allocation2 + $0x61] sm:$0xff]
      %v434 = vld [vmem:[#allocation2 + $0x69] sm:$0xff]
      %v435 = vld [vmem:[#allocation2 + $0x79] sm:$0xff]
      %v436 = vld [vmem:[#allocation2 + $0x81] sm:$0xff]
      %v437 = vld [vmem:[#allocation2 + $0x91] sm:$0xff]
      %v438 = vld [vmem:[#allocation2 + $0x99] sm:$0xff]
      %v439 = vld [vmem:[#allocation2 + $0xa9] sm:$0xff]
      %v440 = vld [vmem:[#allocation2 + $0xb1] sm:$0xff]
      %v441 = vld [vmem:[#allocation2 + $0xc1] sm:$0xff]
      %v442 = vld [vmem:[#allocation2 + $0xc9] sm:$0xff]
      %v443 = vld [vmem:[#allocation2 + $0xd9] sm:$0xff]
      %v444 = vld [vmem:[#allocation2 + $0xe1] sm:$0xff]
      %v445 = vld [vmem:[#allocation2 + $0xf1] sm:$0xff]
      %v446 = vld [vmem:[#allocation2 + $0xf9] sm:$0xff]
      %v447 = vld [vmem:[#allocation2 + $0x109] sm:$0xff]
      %v448 = vld [vmem:[#allocation2 + $0x111] sm:$0xff]
      %v449 = vld [vmem:[#allocation2 + $0x121] sm:$0xff]
      %v450 = vld [vmem:[#allocation2 + $0x129] sm:$0xff]
      %v451 = vld [vmem:[#allocation2 + $0x139] sm:$0xff]
      %v452 = vld [vmem:[#allocation2 + $0x141] sm:$0xff]
      %v453 = vld [vmem:[#allocation2 + $0x151] sm:$0xff]
      %v454 = vld [vmem:[#allocation2 + $0x159] sm:$0xff]
      %v455 = vld [vmem:[#allocation2 + $0x169] sm:$0xff]
      %v456 = vld [vmem:[#allocation2 + $0x171] sm:$0xff]
      %s457 = scalar_lea.vmem %s1, 1
      %v458 = vld [vmem:[%s457] sm:$0x1]
      %v460 = vlaneseq
      %v461 = vshrl.u32 %v460, 7
      %v462 = vsub.s32 0, %v461
      %v463 = vrot.slane %v458, %v462
      %v465 = vmul.f32 %v425, %v463
      %v466 = vmul.f32 %v426, %v463
      %v467 = vmul.f32 %v427, %v463
      %v468 = vmul.f32 %v428, %v463
      %v469 = vmul.f32 %v429, %v463
      %v470 = vmul.f32 %v430, %v463
      %v471 = vmul.f32 %v431, %v463
      %v472 = vmul.f32 %v432, %v463
      %v473 = vmul.f32 %v433, %v463
      %v474 = vmul.f32 %v434, %v463
      %v475 = vmul.f32 %v435, %v463
      %v476 = vmul.f32 %v436, %v463
      %v477 = vmul.f32 %v437, %v463
      %v478 = vmul.f32 %v438, %v463
      %v479 = vmul.f32 %v439, %v463
      %v480 = vmul.f32 %v440, %v463
      %v481 = vmul.f32 %v441, %v463
      %v482 = vmul.f32 %v442, %v463
      %v483 = vmul.f32 %v443, %v463
      %v484 = vmul.f32 %v444, %v463
      %v485 = vmul.f32 %v445, %v463
      %v486 = vmul.f32 %v446, %v463
      %v487 = vmul.f32 %v447, %v463
      %v488 = vmul.f32 %v448, %v463
      %v489 = vmul.f32 %v449, %v463
      %v490 = vmul.f32 %v450, %v463
      %v491 = vmul.f32 %v451, %v463
      %v492 = vmul.f32 %v452, %v463
      %v493 = vmul.f32 %v453, %v463
      %v494 = vmul.f32 %v454, %v463
      %v495 = vmul.f32 %v455, %v463
      %v496 = vmul.f32 %v456, %v463
      %v497 = vadd.f32 %v393, %v465
      %v498 = vadd.f32 %v394, %v466
      %v499 = vadd.f32 %v395, %v467
      %v500 = vadd.f32 %v396, %v468
      %v501 = vadd.f32 %v397, %v469
      %v502 = vadd.f32 %v398, %v470
      %v503 = vadd.f32 %v399, %v471
      %v504 = vadd.f32 %v400, %v472
      %v505 = vadd.f32 %v401, %v473
      %v506 = vadd.f32 %v402, %v474
      %v507 = vadd.f32 %v403, %v475
      %v508 = vadd.f32 %v404, %v476
      %v509 = vadd.f32 %v405, %v477
      %v510 = vadd.f32 %v406, %v478
      %v511 = vadd.f32 %v407, %v479
      %v512 = vadd.f32 %v408, %v480
      %v513 = vadd.f32 %v409, %v481
      %v514 = vadd.f32 %v410, %v482
      %v515 = vadd.f32 %v411, %v483
      %v516 = vadd.f32 %v412, %v484
      %v517 = vadd.f32 %v413, %v485
      %v518 = vadd.f32 %v414, %v486
      %v519 = vadd.f32 %v415, %v487
      %v520 = vadd.f32 %v416, %v488
      %v521 = vadd.f32 %v417, %v489
      %v522 = vadd.f32 %v418, %v490
      %v523 = vadd.f32 %v419, %v491
      %v524 = vadd.f32 %v420, %v492
      %v525 = vadd.f32 %v421, %v493
      %v526 = vadd.f32 %v422, %v494
      %v527 = vadd.f32 %v423, %v495
      %v528 = vadd.f32 %v424, %v496
      %v529 = vld [vmem:[#allocation2 + $0x2] sm:$0xff]
      %v530 = vld [vmem:[#allocation2 + $0xa] sm:$0xff]
      %v531 = vld [vmem:[#allocation2 + $0x1a] sm:$0xff]
      %v532 = vld [vmem:[#allocation2 + $0x22] sm:$0xff]
      %v533 = vld [vmem:[#allocation2 + $0x32] sm:$0xff]
      %v534 = vld [vmem:[#allocation2 + $0x3a] sm:$0xff]
      %v535 = vld [vmem:[#allocation2 + $0x4a] sm:$0xff]
      %v536 = vld [vmem:[#allocation2 + $0x52] sm:$0xff]
      %v537 = vld [vmem:[#allocation2 + $0x62] sm:$0xff]
      %v538 = vld [vmem:[#allocation2 + $0x6a] sm:$0xff]
      %v539 = vld [vmem:[#allocation2 + $0x7a] sm:$0xff]
      %v540 = vld [vmem:[#allocation2 + $0x82] sm:$0xff]
      %v541 = vld [vmem:[#allocation2 + $0x92] sm:$0xff]
      %v542 = vld [vmem:[#allocation2 + $0x9a] sm:$0xff]
      %v543 = vld [vmem:[#allocation2 + $0xaa] sm:$0xff]
      %v544 = vld [vmem:[#allocation2 + $0xb2] sm:$0xff]
      %v545 = vld [vmem:[#allocation2 + $0xc2] sm:$0xff]
      %v546 = vld [vmem:[#allocation2 + $0xca] sm:$0xff]
      %v547 = vld [vmem:[#allocation2 + $0xda] sm:$0xff]
      %v548 = vld [vmem:[#allocation2 + $0xe2] sm:$0xff]
      %v549 = vld [vmem:[#allocation2 + $0xf2] sm:$0xff]
      %v550 = vld [vmem:[#allocation2 + $0xfa] sm:$0xff]
      %v551 = vld [vmem:[#allocation2 + $0x10a] sm:$0xff]
      %v552 = vld [vmem:[#allocation2 + $0x112] sm:$0xff]
      %v553 = vld [vmem:[#allocation2 + $0x122] sm:$0xff]
      %v554 = vld [vmem:[#allocation2 + $0x12a] sm:$0xff]
      %v555 = vld [vmem:[#allocation2 + $0x13a] sm:$0xff]
      %v556 = vld [vmem:[#allocation2 + $0x142] sm:$0xff]
      %v557 = vld [vmem:[#allocation2 + $0x152] sm:$0xff]
      %v558 = vld [vmem:[#allocation2 + $0x15a] sm:$0xff]
      %v559 = vld [vmem:[#allocation2 + $0x16a] sm:$0xff]
      %v560 = vld [vmem:[#allocation2 + $0x172] sm:$0xff]
      %s561 = scalar_lea.vmem %s1, 2
      %v562 = vld [vmem:[%s561] sm:$0x1]
      %v564 = vlaneseq
      %v565 = vshrl.u32 %v564, 7
      %v566 = vsub.s32 0, %v565
      %v567 = vrot.slane %v562, %v566
      %v569 = vmul.f32 %v529, %v567
      %v570 = vmul.f32 %v530, %v567
      %v571 = vmul.f32 %v531, %v567
      %v572 = vmul.f32 %v532, %v567
      %v573 = vmul.f32 %v533, %v567
      %v574 = vmul.f32 %v534, %v567
      %v575 = vmul.f32 %v535, %v567
      %v576 = vmul.f32 %v536, %v567
      %v577 = vmul.f32 %v537, %v567
      %v578 = vmul.f32 %v538, %v567
      %v579 = vmul.f32 %v539, %v567
      %v580 = vmul.f32 %v540, %v567
      %v581 = vmul.f32 %v541, %v567
      %v582 = vmul.f32 %v542, %v567
      %v583 = vmul.f32 %v543, %v567
      %v584 = vmul.f32 %v544, %v567
      %v585 = vmul.f32 %v545, %v567
      %v586 = vmul.f32 %v546, %v567
      %v587 = vmul.f32 %v547, %v567
      %v588 = vmul.f32 %v548, %v567
      %v589 = vmul.f32 %v549, %v567
      %v590 = vmul.f32 %v550, %v567
      %v591 = vmul.f32 %v551, %v567
      %v592 = vmul.f32 %v552, %v567
      %v593 = vmul.f32 %v553, %v567
      %v594 = vmul.f32 %v554, %v567
      %v595 = vmul.f32 %v555, %v567
      %v596 = vmul.f32 %v556, %v567
      %v597 = vmul.f32 %v557, %v567
      %v598 = vmul.f32 %v558, %v567
      %v599 = vmul.f32 %v559, %v567
      %v600 = vmul.f32 %v560, %v567
      %v601 = vadd.f32 %v497, %v569
      %v602 = vadd.f32 %v498, %v570
      %v603 = vadd.f32 %v499, %v571
      %v604 = vadd.f32 %v500, %v572
      %v605 = vadd.f32 %v501, %v573
      %v606 = vadd.f32 %v502, %v574
      %v607 = vadd.f32 %v503, %v575
      %v608 = vadd.f32 %v504, %v576
      %v609 = vadd.f32 %v505, %v577
      %v610 = vadd.f32 %v506, %v578
      %v611 = vadd.f32 %v507, %v579
      %v612 = vadd.f32 %v508, %v580
      %v613 = vadd.f32 %v509, %v581
      %v614 = vadd.f32 %v510, %v582
      %v615 = vadd.f32 %v511, %v583
      %v616 = vadd.f32 %v512, %v584
      %v617 = vadd.f32 %v513, %v585
      %v618 = vadd.f32 %v514, %v586
      %v619 = vadd.f32 %v515, %v587
      %v620 = vadd.f32 %v516, %v588
      %v621 = vadd.f32 %v517, %v589
      %v622 = vadd.f32 %v518, %v590
      %v623 = vadd.f32 %v519, %v591
      %v624 = vadd.f32 %v520, %v592
      %v625 = vadd.f32 %v521, %v593
      %v626 = vadd.f32 %v522, %v594
      %v627 = vadd.f32 %v523, %v595
      %v628 = vadd.f32 %v524, %v596
      %v629 = vadd.f32 %v525, %v597
      %v630 = vadd.f32 %v526, %v598
      %v631 = vadd.f32 %v527, %v599
      %v632 = vadd.f32 %v528, %v600
      %v633 = vld [vmem:[%s281] sm:$0xff]
      %v634 = vld [vmem:[%s281 + $0x8] sm:$0xff]
      %v635 = vld [vmem:[%s281 + $0x18] sm:$0xff]
      %v636 = vld [vmem:[%s281 + $0x20] sm:$0xff]
      %v637 = vld [vmem:[%s281 + $0x30] sm:$0xff]
      %v638 = vld [vmem:[%s281 + $0x38] sm:$0xff]
      %v639 = vld [vmem:[%s281 + $0x48] sm:$0xff]
      %v640 = vld [vmem:[%s281 + $0x50] sm:$0xff]
      %v641 = vld [vmem:[%s281 + $0x60] sm:$0xff]
      %v642 = vld [vmem:[%s281 + $0x68] sm:$0xff]
      %v643 = vld [vmem:[%s281 + $0x78] sm:$0xff]
      %v644 = vld [vmem:[%s281 + $0x80] sm:$0xff]
      %v645 = vld [vmem:[%s281 + $0x90] sm:$0xff]
      %v646 = vld [vmem:[%s281 + $0x98] sm:$0xff]
      %v647 = vld [vmem:[%s281 + $0xa8] sm:$0xff]
      %v648 = vld [vmem:[%s281 + $0xb0] sm:$0xff]
      %v649 = vld [vmem:[%s281 + $0xc0] sm:$0xff]
      %v650 = vld [vmem:[%s281 + $0xc8] sm:$0xff]
      %v651 = vld [vmem:[%s281 + $0xd8] sm:$0xff]
      %v652 = vld [vmem:[%s281 + $0xe0] sm:$0xff]
      %v653 = vld [vmem:[%s281 + $0xf0] sm:$0xff]
      %v654 = vld [vmem:[%s281 + $0xf8] sm:$0xff]
      %v655 = vld [vmem:[%s281 + $0x108] sm:$0xff]
      %v656 = vld [vmem:[%s281 + $0x110] sm:$0xff]
      %v657 = vld [vmem:[%s281 + $0x120] sm:$0xff]
      %v658 = vld [vmem:[%s281 + $0x128] sm:$0xff]
      %v659 = vld [vmem:[%s281 + $0x138] sm:$0xff]
      %v660 = vld [vmem:[%s281 + $0x140] sm:$0xff]
      %v661 = vld [vmem:[%s281 + $0x150] sm:$0xff]
      %v662 = vld [vmem:[%s281 + $0x158] sm:$0xff]
      %v663 = vld [vmem:[%s281 + $0x168] sm:$0xff]
      %v664 = vld [vmem:[%s281 + $0x170] sm:$0xff]
      %s665 = scalar_lea.vmem %s1, 3
      %v666 = vld [vmem:[%s665] sm:$0x1]
      %v668 = vlaneseq
      %v669 = vshrl.u32 %v668, 7
      %v670 = vsub.s32 0, %v669
      %v671 = vrot.slane %v666, %v670
      %v673 = vmul.f32 %v633, %v671
      %v674 = vmul.f32 %v634, %v671
      %v675 = vmul.f32 %v635, %v671
      %v676 = vmul.f32 %v636, %v671
      %v677 = vmul.f32 %v637, %v671
      %v678 = vmul.f32 %v638, %v671
      %v679 = vmul.f32 %v639, %v671
      %v680 = vmul.f32 %v640, %v671
      %v681 = vmul.f32 %v641, %v671
      %v682 = vmul.f32 %v642, %v671
      %v683 = vmul.f32 %v643, %v671
      %v684 = vmul.f32 %v644, %v671
      %v685 = vmul.f32 %v645, %v671
      %v686 = vmul.f32 %v646, %v671
      %v687 = vmul.f32 %v647, %v671
      %v688 = vmul.f32 %v648, %v671
      %v689 = vmul.f32 %v649, %v671
      %v690 = vmul.f32 %v650, %v671
      %v691 = vmul.f32 %v651, %v671
      %v692 = vmul.f32 %v652, %v671
      %v693 = vmul.f32 %v653, %v671
      %v694 = vmul.f32 %v654, %v671
      %v695 = vmul.f32 %v655, %v671
      %v696 = vmul.f32 %v656, %v671
      %v697 = vmul.f32 %v657, %v671
      %v698 = vmul.f32 %v658, %v671
      %v699 = vmul.f32 %v659, %v671
      %v700 = vmul.f32 %v660, %v671
      %v701 = vmul.f32 %v661, %v671
      %v702 = vmul.f32 %v662, %v671
      %v703 = vmul.f32 %v663, %v671
      %v704 = vmul.f32 %v664, %v671
      %v705 = vadd.f32 %v601, %v673
      %v706 = vadd.f32 %v602, %v674
      %v707 = vadd.f32 %v603, %v675
      %v708 = vadd.f32 %v604, %v676
      %v709 = vadd.f32 %v605, %v677
      %v710 = vadd.f32 %v606, %v678
      %v711 = vadd.f32 %v607, %v679
      %v712 = vadd.f32 %v608, %v680
      %v713 = vadd.f32 %v609, %v681
      %v714 = vadd.f32 %v610, %v682
      %v715 = vadd.f32 %v611, %v683
      %v716 = vadd.f32 %v612, %v684
      %v717 = vadd.f32 %v613, %v685
      %v718 = vadd.f32 %v614, %v686
      %v719 = vadd.f32 %v615, %v687
      %v720 = vadd.f32 %v616, %v688
      %v721 = vadd.f32 %v617, %v689
      %v722 = vadd.f32 %v618, %v690
      %v723 = vadd.f32 %v619, %v691
      %v724 = vadd.f32 %v620, %v692
      %v725 = vadd.f32 %v621, %v693
      %v726 = vadd.f32 %v622, %v694
      %v727 = vadd.f32 %v623, %v695
      %v728 = vadd.f32 %v624, %v696
      %v729 = vadd.f32 %v625, %v697
      %v730 = vadd.f32 %v626, %v698
      %v731 = vadd.f32 %v627, %v699
      %v732 = vadd.f32 %v628, %v700
      %v733 = vadd.f32 %v629, %v701
      %v734 = vadd.f32 %v630, %v702
      %v735 = vadd.f32 %v631, %v703
      %v736 = vadd.f32 %v632, %v704
      %v737 = vld [vmem:[%s281 + $0x1] sm:$0xff]
      %v738 = vld [vmem:[%s281 + $0x9] sm:$0xff]
      %v739 = vld [vmem:[%s281 + $0x19] sm:$0xff]
      %v740 = vld [vmem:[%s281 + $0x21] sm:$0xff]
      %v741 = vld [vmem:[%s281 + $0x31] sm:$0xff]
      %v742 = vld [vmem:[%s281 + $0x39] sm:$0xff]
      %v743 = vld [vmem:[%s281 + $0x49] sm:$0xff]
      %v744 = vld [vmem:[%s281 + $0x51] sm:$0xff]
      %v745 = vld [vmem:[%s281 + $0x61] sm:$0xff]
      %v746 = vld [vmem:[%s281 + $0x69] sm:$0xff]
      %v747 = vld [vmem:[%s281 + $0x79] sm:$0xff]
      %v748 = vld [vmem:[%s281 + $0x81] sm:$0xff]
      %v749 = vld [vmem:[%s281 + $0x91] sm:$0xff]
      %v750 = vld [vmem:[%s281 + $0x99] sm:$0xff]
      %v751 = vld [vmem:[%s281 + $0xa9] sm:$0xff]
      %v752 = vld [vmem:[%s281 + $0xb1] sm:$0xff]
      %v753 = vld [vmem:[%s281 + $0xc1] sm:$0xff]
      %v754 = vld [vmem:[%s281 + $0xc9] sm:$0xff]
      %v755 = vld [vmem:[%s281 + $0xd9] sm:$0xff]
      %v756 = vld [vmem:[%s281 + $0xe1] sm:$0xff]
      %v757 = vld [vmem:[%s281 + $0xf1] sm:$0xff]
      %v758 = vld [vmem:[%s281 + $0xf9] sm:$0xff]
      %v759 = vld [vmem:[%s281 + $0x109] sm:$0xff]
      %v760 = vld [vmem:[%s281 + $0x111] sm:$0xff]
      %v761 = vld [vmem:[%s281 + $0x121] sm:$0xff]
      %v762 = vld [vmem:[%s281 + $0x129] sm:$0xff]
      %v763 = vld [vmem:[%s281 + $0x139] sm:$0xff]
      %v764 = vld [vmem:[%s281 + $0x141] sm:$0xff]
      %v765 = vld [vmem:[%s281 + $0x151] sm:$0xff]
      %v766 = vld [vmem:[%s281 + $0x159] sm:$0xff]
      %v767 = vld [vmem:[%s281 + $0x169] sm:$0xff]
      %v768 = vld [vmem:[%s281 + $0x171] sm:$0xff]
      %s769 = scalar_lea.vmem %s1, 4
      %v770 = vld [vmem:[%s769] sm:$0x1]
      %v772 = vlaneseq
      %v773 = vshrl.u32 %v772, 7
      %v774 = vsub.s32 0, %v773
      %v775 = vrot.slane %v770, %v774
      %v777 = vmul.f32 %v737, %v775
      %v778 = vmul.f32 %v738, %v775
      %v779 = vmul.f32 %v739, %v775
      %v780 = vmul.f32 %v740, %v775
      %v781 = vmul.f32 %v741, %v775
      %v782 = vmul.f32 %v742, %v775
      %v783 = vmul.f32 %v743, %v775
      %v784 = vmul.f32 %v744, %v775
      %v785 = vmul.f32 %v745, %v775
      %v786 = vmul.f32 %v746, %v775
      %v787 = vmul.f32 %v747, %v775
      %v788 = vmul.f32 %v748, %v775
      %v789 = vmul.f32 %v749, %v775
      %v790 = vmul.f32 %v750, %v775
      %v791 = vmul.f32 %v751, %v775
      %v792 = vmul.f32 %v752, %v775
      %v793 = vmul.f32 %v753, %v775
      %v794 = vmul.f32 %v754, %v775
      %v795 = vmul.f32 %v755, %v775
      %v796 = vmul.f32 %v756, %v775
      %v797 = vmul.f32 %v757, %v775
      %v798 = vmul.f32 %v758, %v775
      %v799 = vmul.f32 %v759, %v775
      %v800 = vmul.f32 %v760, %v775
      %v801 = vmul.f32 %v761, %v775
      %v802 = vmul.f32 %v762, %v775
      %v803 = vmul.f32 %v763, %v775
      %v804 = vmul.f32 %v764, %v775
      %v805 = vmul.f32 %v765, %v775
      %v806 = vmul.f32 %v766, %v775
      %v807 = vmul.f32 %v767, %v775
      %v808 = vmul.f32 %v768, %v775
      %v809 = vadd.f32 %v705, %v777
      %v810 = vadd.f32 %v706, %v778
      %v811 = vadd.f32 %v707, %v779
      %v812 = vadd.f32 %v708, %v780
      %v813 = vadd.f32 %v709, %v781
      %v814 = vadd.f32 %v710, %v782
      %v815 = vadd.f32 %v711, %v783
      %v816 = vadd.f32 %v712, %v784
      %v817 = vadd.f32 %v713, %v785
      %v818 = vadd.f32 %v714, %v786
      %v819 = vadd.f32 %v715, %v787
      %v820 = vadd.f32 %v716, %v788
      %v821 = vadd.f32 %v717, %v789
      %v822 = vadd.f32 %v718, %v790
      %v823 = vadd.f32 %v719, %v791
      %v824 = vadd.f32 %v720, %v792
      %v825 = vadd.f32 %v721, %v793
      %v826 = vadd.f32 %v722, %v794
      %v827 = vadd.f32 %v723, %v795
      %v828 = vadd.f32 %v724, %v796
      %v829 = vadd.f32 %v725, %v797
      %v830 = vadd.f32 %v726, %v798
      %v831 = vadd.f32 %v727, %v799
      %v832 = vadd.f32 %v728, %v800
      %v833 = vadd.f32 %v729, %v801
      %v834 = vadd.f32 %v730, %v802
      %v835 = vadd.f32 %v731, %v803
      %v836 = vadd.f32 %v732, %v804
      %v837 = vadd.f32 %v733, %v805
      %v838 = vadd.f32 %v734, %v806
      %v839 = vadd.f32 %v735, %v807
      %v840 = vadd.f32 %v736, %v808
      %v841 = vld [vmem:[%s281 + $0x2] sm:$0xff]
      %v842 = vld [vmem:[%s281 + $0xa] sm:$0xff]
      %v843 = vld [vmem:[%s281 + $0x1a] sm:$0xff]
      %v844 = vld [vmem:[%s281 + $0x22] sm:$0xff]
      %v845 = vld [vmem:[%s281 + $0x32] sm:$0xff]
      %v846 = vld [vmem:[%s281 + $0x3a] sm:$0xff]
      %v847 = vld [vmem:[%s281 + $0x4a] sm:$0xff]
      %v848 = vld [vmem:[%s281 + $0x52] sm:$0xff]
      %v849 = vld [vmem:[%s281 + $0x62] sm:$0xff]
      %v850 = vld [vmem:[%s281 + $0x6a] sm:$0xff]
      %v851 = vld [vmem:[%s281 + $0x7a] sm:$0xff]
      %v852 = vld [vmem:[%s281 + $0x82] sm:$0xff]
      %v853 = vld [vmem:[%s281 + $0x92] sm:$0xff]
      %v854 = vld [vmem:[%s281 + $0x9a] sm:$0xff]
      %v855 = vld [vmem:[%s281 + $0xaa] sm:$0xff]
      %v856 = vld [vmem:[%s281 + $0xb2] sm:$0xff]
      %v857 = vld [vmem:[%s281 + $0xc2] sm:$0xff]
      %v858 = vld [vmem:[%s281 + $0xca] sm:$0xff]
      %v859 = vld [vmem:[%s281 + $0xda] sm:$0xff]
      %v860 = vld [vmem:[%s281 + $0xe2] sm:$0xff]
      %v861 = vld [vmem:[%s281 + $0xf2] sm:$0xff]
      %v862 = vld [vmem:[%s281 + $0xfa] sm:$0xff]
      %v863 = vld [vmem:[%s281 + $0x10a] sm:$0xff]
      %v864 = vld [vmem:[%s281 + $0x112] sm:$0xff]
      %v865 = vld [vmem:[%s281 + $0x122] sm:$0xff]
      %v866 = vld [vmem:[%s281 + $0x12a] sm:$0xff]
      %v867 = vld [vmem:[%s281 + $0x13a] sm:$0xff]
      %v868 = vld [vmem:[%s281 + $0x142] sm:$0xff]
      %v869 = vld [vmem:[%s281 + $0x152] sm:$0xff]
      %v870 = vld [vmem:[%s281 + $0x15a] sm:$0xff]
      %v871 = vld [vmem:[%s281 + $0x16a] sm:$0xff]
      %v872 = vld [vmem:[%s281 + $0x172] sm:$0xff]
      %s873 = scalar_lea.vmem %s1, 5
      %v874 = vld [vmem:[%s873] sm:$0x1]
      %v876 = vlaneseq
      %v877 = vshrl.u32 %v876, 7
      %v878 = vsub.s32 0, %v877
      %v879 = vrot.slane %v874, %v878
      %v881 = vmul.f32 %v841, %v879
      %v882 = vmul.f32 %v842, %v879
      %v883 = vmul.f32 %v843, %v879
      %v884 = vmul.f32 %v844, %v879
      %v885 = vmul.f32 %v845, %v879
      %v886 = vmul.f32 %v846, %v879
      %v887 = vmul.f32 %v847, %v879
      %v888 = vmul.f32 %v848, %v879
      %v889 = vmul.f32 %v849, %v879
      %v890 = vmul.f32 %v850, %v879
      %v891 = vmul.f32 %v851, %v879
      %v892 = vmul.f32 %v852, %v879
      %v893 = vmul.f32 %v853, %v879
      %v894 = vmul.f32 %v854, %v879
      %v895 = vmul.f32 %v855, %v879
      %v896 = vmul.f32 %v856, %v879
      %v897 = vmul.f32 %v857, %v879
      %v898 = vmul.f32 %v858, %v879
      %v899 = vmul.f32 %v859, %v879
      %v900 = vmul.f32 %v860, %v879
      %v901 = vmul.f32 %v861, %v879
      %v902 = vmul.f32 %v862, %v879
      %v903 = vmul.f32 %v863, %v879
      %v904 = vmul.f32 %v864, %v879
      %v905 = vmul.f32 %v865, %v879
      %v906 = vmul.f32 %v866, %v879
      %v907 = vmul.f32 %v867, %v879
      %v908 = vmul.f32 %v868, %v879
      %v909 = vmul.f32 %v869, %v879
      %v910 = vmul.f32 %v870, %v879
      %v911 = vmul.f32 %v871, %v879
      %v912 = vmul.f32 %v872, %v879
      %v913 = vadd.f32 %v809, %v881
      %v914 = vadd.f32 %v810, %v882
      %v915 = vadd.f32 %v811, %v883
      %v916 = vadd.f32 %v812, %v884
      %v917 = vadd.f32 %v813, %v885
      %v918 = vadd.f32 %v814, %v886
      %v919 = vadd.f32 %v815, %v887
      %v920 = vadd.f32 %v816, %v888
      %v921 = vadd.f32 %v817, %v889
      %v922 = vadd.f32 %v818, %v890
      %v923 = vadd.f32 %v819, %v891
      %v924 = vadd.f32 %v820, %v892
      %v925 = vadd.f32 %v821, %v893
      %v926 = vadd.f32 %v822, %v894
      %v927 = vadd.f32 %v823, %v895
      %v928 = vadd.f32 %v824, %v896
      %v929 = vadd.f32 %v825, %v897
      %v930 = vadd.f32 %v826, %v898
      %v931 = vadd.f32 %v827, %v899
      %v932 = vadd.f32 %v828, %v900
      %v933 = vadd.f32 %v829, %v901
      %v934 = vadd.f32 %v830, %v902
      %v935 = vadd.f32 %v831, %v903
      %v936 = vadd.f32 %v832, %v904
      %v937 = vadd.f32 %v833, %v905
      %v938 = vadd.f32 %v834, %v906
      %v939 = vadd.f32 %v835, %v907
      %v940 = vadd.f32 %v836, %v908
      %v941 = vadd.f32 %v837, %v909
      %v942 = vadd.f32 %v838, %v910
      %v943 = vadd.f32 %v839, %v911
      %v944 = vadd.f32 %v840, %v912
      %s945 = scalar_lea.vmem [#allocation2], 48
      %v946 = vld [vmem:[%s945] sm:$0xff]
      %v947 = vld [vmem:[%s945 + $0x8] sm:$0xff]
      %v948 = vld [vmem:[%s945 + $0x18] sm:$0xff]
      %v949 = vld [vmem:[%s945 + $0x20] sm:$0xff]
      %v950 = vld [vmem:[%s945 + $0x30] sm:$0xff]
      %v951 = vld [vmem:[%s945 + $0x38] sm:$0xff]
      %v952 = vld [vmem:[%s945 + $0x48] sm:$0xff]
      %v953 = vld [vmem:[%s945 + $0x50] sm:$0xff]
      %v954 = vld [vmem:[%s945 + $0x60] sm:$0xff]
      %v955 = vld [vmem:[%s945 + $0x68] sm:$0xff]
      %v956 = vld [vmem:[%s945 + $0x78] sm:$0xff]
      %v957 = vld [vmem:[%s945 + $0x80] sm:$0xff]
      %v958 = vld [vmem:[%s945 + $0x90] sm:$0xff]
      %v959 = vld [vmem:[%s945 + $0x98] sm:$0xff]
      %v960 = vld [vmem:[%s945 + $0xa8] sm:$0xff]
      %v961 = vld [vmem:[%s945 + $0xb0] sm:$0xff]
      %v962 = vld [vmem:[%s945 + $0xc0] sm:$0xff]
      %v963 = vld [vmem:[%s945 + $0xc8] sm:$0xff]
      %v964 = vld [vmem:[%s945 + $0xd8] sm:$0xff]
      %v965 = vld [vmem:[%s945 + $0xe0] sm:$0xff]
      %v966 = vld [vmem:[%s945 + $0xf0] sm:$0xff]
      %v967 = vld [vmem:[%s945 + $0xf8] sm:$0xff]
      %v968 = vld [vmem:[%s945 + $0x108] sm:$0xff]
      %v969 = vld [vmem:[%s945 + $0x110] sm:$0xff]
      %v970 = vld [vmem:[%s945 + $0x120] sm:$0xff]
      %v971 = vld [vmem:[%s945 + $0x128] sm:$0xff]
      %v972 = vld [vmem:[%s945 + $0x138] sm:$0xff]
      %v973 = vld [vmem:[%s945 + $0x140] sm:$0xff]
      %v974 = vld [vmem:[%s945 + $0x150] sm:$0xff]
      %v975 = vld [vmem:[%s945 + $0x158] sm:$0xff]
      %v976 = vld [vmem:[%s945 + $0x168] sm:$0xff]
      %v977 = vld [vmem:[%s945 + $0x170] sm:$0xff]
      %s978 = scalar_lea.vmem %s1, 6
      %v979 = vld [vmem:[%s978] sm:$0x1]
      %v981 = vlaneseq
      %v982 = vshrl.u32 %v981, 7
      %v983 = vsub.s32 0, %v982
      %v984 = vrot.slane %v979, %v983
      %v986 = vmul.f32 %v946, %v984
      %v987 = vmul.f32 %v947, %v984
      %v988 = vmul.f32 %v948, %v984
      %v989 = vmul.f32 %v949, %v984
      %v990 = vmul.f32 %v950, %v984
      %v991 = vmul.f32 %v951, %v984
      %v992 = vmul.f32 %v952, %v984
      %v993 = vmul.f32 %v953, %v984
      %v994 = vmul.f32 %v954, %v984
      %v995 = vmul.f32 %v955, %v984
      %v996 = vmul.f32 %v956, %v984
      %v997 = vmul.f32 %v957, %v984
      %v998 = vmul.f32 %v958, %v984
      %v999 = vmul.f32 %v959, %v984
      %v1000 = vmul.f32 %v960, %v984
      %v1001 = vmul.f32 %v961, %v984
      %v1002 = vmul.f32 %v962, %v984
      %v1003 = vmul.f32 %v963, %v984
      %v1004 = vmul.f32 %v964, %v984
      %v1005 = vmul.f32 %v965, %v984
      %v1006 = vmul.f32 %v966, %v984
      %v1007 = vmul.f32 %v967, %v984
      %v1008 = vmul.f32 %v968, %v984
      %v1009 = vmul.f32 %v969, %v984
      %v1010 = vmul.f32 %v970, %v984
      %v1011 = vmul.f32 %v971, %v984
      %v1012 = vmul.f32 %v972, %v984
      %v1013 = vmul.f32 %v973, %v984
      %v1014 = vmul.f32 %v974, %v984
      %v1015 = vmul.f32 %v975, %v984
      %v1016 = vmul.f32 %v976, %v984
      %v1017 = vmul.f32 %v977, %v984
      %v1018 = vadd.f32 %v913, %v986
      %v1019 = vadd.f32 %v914, %v987
      %v1020 = vadd.f32 %v915, %v988
      %v1021 = vadd.f32 %v916, %v989
      %v1022 = vadd.f32 %v917, %v990
      %v1023 = vadd.f32 %v918, %v991
      %v1024 = vadd.f32 %v919, %v992
      %v1025 = vadd.f32 %v920, %v993
      %v1026 = vadd.f32 %v921, %v994
      %v1027 = vadd.f32 %v922, %v995
      %v1028 = vadd.f32 %v923, %v996
      %v1029 = vadd.f32 %v924, %v997
      %v1030 = vadd.f32 %v925, %v998
      %v1031 = vadd.f32 %v926, %v999
      %v1032 = vadd.f32 %v927, %v1000
      %v1033 = vadd.f32 %v928, %v1001
      %v1034 = vadd.f32 %v929, %v1002
      %v1035 = vadd.f32 %v930, %v1003
      %v1036 = vadd.f32 %v931, %v1004
      %v1037 = vadd.f32 %v932, %v1005
      %v1038 = vadd.f32 %v933, %v1006
      %v1039 = vadd.f32 %v934, %v1007
      %v1040 = vadd.f32 %v935, %v1008
      %v1041 = vadd.f32 %v936, %v1009
      %v1042 = vadd.f32 %v937, %v1010
      %v1043 = vadd.f32 %v938, %v1011
      %v1044 = vadd.f32 %v939, %v1012
      %v1045 = vadd.f32 %v940, %v1013
      %v1046 = vadd.f32 %v941, %v1014
      %v1047 = vadd.f32 %v942, %v1015
      %v1048 = vadd.f32 %v943, %v1016
      %v1049 = vadd.f32 %v944, %v1017
      %v1050 = vld [vmem:[%s945 + $0x1] sm:$0xff]
      %v1051 = vld [vmem:[%s945 + $0x9] sm:$0xff]
      %v1052 = vld [vmem:[%s945 + $0x19] sm:$0xff]
      %v1053 = vld [vmem:[%s945 + $0x21] sm:$0xff]
      %v1054 = vld [vmem:[%s945 + $0x31] sm:$0xff]
      %v1055 = vld [vmem:[%s945 + $0x39] sm:$0xff]
      %v1056 = vld [vmem:[%s945 + $0x49] sm:$0xff]
      %v1057 = vld [vmem:[%s945 + $0x51] sm:$0xff]
      %v1058 = vld [vmem:[%s945 + $0x61] sm:$0xff]
      %v1059 = vld [vmem:[%s945 + $0x69] sm:$0xff]
      %v1060 = vld [vmem:[%s945 + $0x79] sm:$0xff]
      %v1061 = vld [vmem:[%s945 + $0x81] sm:$0xff]
      %v1062 = vld [vmem:[%s945 + $0x91] sm:$0xff]
      %v1063 = vld [vmem:[%s945 + $0x99] sm:$0xff]
      %v1064 = vld [vmem:[%s945 + $0xa9] sm:$0xff]
      %v1065 = vld [vmem:[%s945 + $0xb1] sm:$0xff]
      %v1066 = vld [vmem:[%s945 + $0xc1] sm:$0xff]
      %v1067 = vld [vmem:[%s945 + $0xc9] sm:$0xff]
      %v1068 = vld [vmem:[%s945 + $0xd9] sm:$0xff]
      %v1069 = vld [vmem:[%s945 + $0xe1] sm:$0xff]
      %v1070 = vld [vmem:[%s945 + $0xf1] sm:$0xff]
      %v1071 = vld [vmem:[%s945 + $0xf9] sm:$0xff]
      %v1072 = vld [vmem:[%s945 + $0x109] sm:$0xff]
      %v1073 = vld [vmem:[%s945 + $0x111] sm:$0xff]
      %v1074 = vld [vmem:[%s945 + $0x121] sm:$0xff]
      %v1075 = vld [vmem:[%s945 + $0x129] sm:$0xff]
      %v1076 = vld [vmem:[%s945 + $0x139] sm:$0xff]
      %v1077 = vld [vmem:[%s945 + $0x141] sm:$0xff]
      %v1078 = vld [vmem:[%s945 + $0x151] sm:$0xff]
      %v1079 = vld [vmem:[%s945 + $0x159] sm:$0xff]
      %v1080 = vld [vmem:[%s945 + $0x169] sm:$0xff]
      %v1081 = vld [vmem:[%s945 + $0x171] sm:$0xff]
      %s1082 = scalar_lea.vmem %s1, 7
      %v1083 = vld [vmem:[%s1082] sm:$0x1]
      %v1085 = vlaneseq
      %v1086 = vshrl.u32 %v1085, 7
      %v1087 = vsub.s32 0, %v1086
      %v1088 = vrot.slane %v1083, %v1087
      %v1090 = vmul.f32 %v1050, %v1088
      %v1091 = vmul.f32 %v1051, %v1088
      %v1092 = vmul.f32 %v1052, %v1088
      %v1093 = vmul.f32 %v1053, %v1088
      %v1094 = vmul.f32 %v1054, %v1088
      %v1095 = vmul.f32 %v1055, %v1088
      %v1096 = vmul.f32 %v1056, %v1088
      %v1097 = vmul.f32 %v1057, %v1088
      %v1098 = vmul.f32 %v1058, %v1088
      %v1099 = vmul.f32 %v1059, %v1088
      %v1100 = vmul.f32 %v1060, %v1088
      %v1101 = vmul.f32 %v1061, %v1088
      %v1102 = vmul.f32 %v1062, %v1088
      %v1103 = vmul.f32 %v1063, %v1088
      %v1104 = vmul.f32 %v1064, %v1088
      %v1105 = vmul.f32 %v1065, %v1088
      %v1106 = vmul.f32 %v1066, %v1088
      %v1107 = vmul.f32 %v1067, %v1088
      %v1108 = vmul.f32 %v1068, %v1088
      %v1109 = vmul.f32 %v1069, %v1088
      %v1110 = vmul.f32 %v1070, %v1088
      %v1111 = vmul.f32 %v1071, %v1088
      %v1112 = vmul.f32 %v1072, %v1088
      %v1113 = vmul.f32 %v1073, %v1088
      %v1114 = vmul.f32 %v1074, %v1088
      %v1115 = vmul.f32 %v1075, %v1088
      %v1116 = vmul.f32 %v1076, %v1088
      %v1117 = vmul.f32 %v1077, %v1088
      %v1118 = vmul.f32 %v1078, %v1088
      %v1119 = vmul.f32 %v1079, %v1088
      %v1120 = vmul.f32 %v1080, %v1088
      %v1121 = vmul.f32 %v1081, %v1088
      %v1122 = vadd.f32 %v1018, %v1090
      %v1123 = vadd.f32 %v1019, %v1091
      %v1124 = vadd.f32 %v1020, %v1092
      %v1125 = vadd.f32 %v1021, %v1093
      %v1126 = vadd.f32 %v1022, %v1094
      %v1127 = vadd.f32 %v1023, %v1095
      %v1128 = vadd.f32 %v1024, %v1096
      %v1129 = vadd.f32 %v1025, %v1097
      %v1130 = vadd.f32 %v1026, %v1098
      %v1131 = vadd.f32 %v1027, %v1099
      %v1132 = vadd.f32 %v1028, %v1100
      %v1133 = vadd.f32 %v1029, %v1101
      %v1134 = vadd.f32 %v1030, %v1102
      %v1135 = vadd.f32 %v1031, %v1103
      %v1136 = vadd.f32 %v1032, %v1104
      %v1137 = vadd.f32 %v1033, %v1105
      %v1138 = vadd.f32 %v1034, %v1106
      %v1139 = vadd.f32 %v1035, %v1107
      %v1140 = vadd.f32 %v1036, %v1108
      %v1141 = vadd.f32 %v1037, %v1109
      %v1142 = vadd.f32 %v1038, %v1110
      %v1143 = vadd.f32 %v1039, %v1111
      %v1144 = vadd.f32 %v1040, %v1112
      %v1145 = vadd.f32 %v1041, %v1113
      %v1146 = vadd.f32 %v1042, %v1114
      %v1147 = vadd.f32 %v1043, %v1115
      %v1148 = vadd.f32 %v1044, %v1116
      %v1149 = vadd.f32 %v1045, %v1117
      %v1150 = vadd.f32 %v1046, %v1118
      %v1151 = vadd.f32 %v1047, %v1119
      %v1152 = vadd.f32 %v1048, %v1120
      %v1153 = vadd.f32 %v1049, %v1121
      %v1154 = vld [vmem:[%s945 + $0x2] sm:$0xff]
      %v1155 = vld [vmem:[%s945 + $0xa] sm:$0xff]
      %v1156 = vld [vmem:[%s945 + $0x1a] sm:$0xff]
      %v1157 = vld [vmem:[%s945 + $0x22] sm:$0xff]
      %v1158 = vld [vmem:[%s945 + $0x32] sm:$0xff]
      %v1159 = vld [vmem:[%s945 + $0x3a] sm:$0xff]
      %v1160 = vld [vmem:[%s945 + $0x4a] sm:$0xff]
      %v1161 = vld [vmem:[%s945 + $0x52] sm:$0xff]
      %v1162 = vld [vmem:[%s945 + $0x62] sm:$0xff]
      %v1163 = vld [vmem:[%s945 + $0x6a] sm:$0xff]
      %v1164 = vld [vmem:[%s945 + $0x7a] sm:$0xff]
      %v1165 = vld [vmem:[%s945 + $0x82] sm:$0xff]
      %v1166 = vld [vmem:[%s945 + $0x92] sm:$0xff]
      %v1167 = vld [vmem:[%s945 + $0x9a] sm:$0xff]
      %v1168 = vld [vmem:[%s945 + $0xaa] sm:$0xff]
      %v1169 = vld [vmem:[%s945 + $0xb2] sm:$0xff]
      %v1170 = vld [vmem:[%s945 + $0xc2] sm:$0xff]
      %v1171 = vld [vmem:[%s945 + $0xca] sm:$0xff]
      %v1172 = vld [vmem:[%s945 + $0xda] sm:$0xff]
      %v1173 = vld [vmem:[%s945 + $0xe2] sm:$0xff]
      %v1174 = vld [vmem:[%s945 + $0xf2] sm:$0xff]
      %v1175 = vld [vmem:[%s945 + $0xfa] sm:$0xff]
      %v1176 = vld [vmem:[%s945 + $0x10a] sm:$0xff]
      %v1177 = vld [vmem:[%s945 + $0x112] sm:$0xff]
      %v1178 = vld [vmem:[%s945 + $0x122] sm:$0xff]
      %v1179 = vld [vmem:[%s945 + $0x12a] sm:$0xff]
      %v1180 = vld [vmem:[%s945 + $0x13a] sm:$0xff]
      %v1181 = vld [vmem:[%s945 + $0x142] sm:$0xff]
      %v1182 = vld [vmem:[%s945 + $0x152] sm:$0xff]
      %v1183 = vld [vmem:[%s945 + $0x15a] sm:$0xff]
      %v1184 = vld [vmem:[%s945 + $0x16a] sm:$0xff]
      %v1185 = vld [vmem:[%s945 + $0x172] sm:$0xff]
      %s1186 = scalar_lea.vmem %s1, 8
      %v1187 = vld [vmem:[%s1186] sm:$0x1]
      %v1189 = vlaneseq
      %v1190 = vshrl.u32 %v1189, 7
      %v1191 = vsub.s32 0, %v1190
      %v1192 = vrot.slane %v1187, %v1191
      %v1194 = vmul.f32 %v1154, %v1192
      %v1195 = vmul.f32 %v1155, %v1192
      %v1196 = vmul.f32 %v1156, %v1192
      %v1197 = vmul.f32 %v1157, %v1192
      %v1198 = vmul.f32 %v1158, %v1192
      %v1199 = vmul.f32 %v1159, %v1192
      %v1200 = vmul.f32 %v1160, %v1192
      %v1201 = vmul.f32 %v1161, %v1192
      %v1202 = vmul.f32 %v1162, %v1192
      %v1203 = vmul.f32 %v1163, %v1192
      %v1204 = vmul.f32 %v1164, %v1192
      %v1205 = vmul.f32 %v1165, %v1192
      %v1206 = vmul.f32 %v1166, %v1192
      %v1207 = vmul.f32 %v1167, %v1192
      %v1208 = vmul.f32 %v1168, %v1192
      %v1209 = vmul.f32 %v1169, %v1192
      %v1210 = vmul.f32 %v1170, %v1192
      %v1211 = vmul.f32 %v1171, %v1192
      %v1212 = vmul.f32 %v1172, %v1192
      %v1213 = vmul.f32 %v1173, %v1192
      %v1214 = vmul.f32 %v1174, %v1192
      %v1215 = vmul.f32 %v1175, %v1192
      %v1216 = vmul.f32 %v1176, %v1192
      %v1217 = vmul.f32 %v1177, %v1192
      %v1218 = vmul.f32 %v1178, %v1192
      %v1219 = vmul.f32 %v1179, %v1192
      %v1220 = vmul.f32 %v1180, %v1192
      %v1221 = vmul.f32 %v1181, %v1192
      %v1222 = vmul.f32 %v1182, %v1192
      %v1223 = vmul.f32 %v1183, %v1192
      %v1224 = vmul.f32 %v1184, %v1192
      %v1225 = vmul.f32 %v1185, %v1192
      %v1226 = vadd.f32 %v1122, %v1194
      %v1227 = vadd.f32 %v1123, %v1195
      %v1228 = vadd.f32 %v1124, %v1196
      %v1229 = vadd.f32 %v1125, %v1197
      %v1230 = vadd.f32 %v1126, %v1198
      %v1231 = vadd.f32 %v1127, %v1199
      %v1232 = vadd.f32 %v1128, %v1200
      %v1233 = vadd.f32 %v1129, %v1201
      %v1234 = vadd.f32 %v1130, %v1202
      %v1235 = vadd.f32 %v1131, %v1203
      %v1236 = vadd.f32 %v1132, %v1204
      %v1237 = vadd.f32 %v1133, %v1205
      %v1238 = vadd.f32 %v1134, %v1206
      %v1239 = vadd.f32 %v1135, %v1207
      %v1240 = vadd.f32 %v1136, %v1208
      %v1241 = vadd.f32 %v1137, %v1209
      %v1242 = vadd.f32 %v1138, %v1210
      %v1243 = vadd.f32 %v1139, %v1211
      %v1244 = vadd.f32 %v1140, %v1212
      %v1245 = vadd.f32 %v1141, %v1213
      %v1246 = vadd.f32 %v1142, %v1214
      %v1247 = vadd.f32 %v1143, %v1215
      %v1248 = vadd.f32 %v1144, %v1216
      %v1249 = vadd.f32 %v1145, %v1217
      %v1250 = vadd.f32 %v1146, %v1218
      %v1251 = vadd.f32 %v1147, %v1219
      %v1252 = vadd.f32 %v1148, %v1220
      %v1253 = vadd.f32 %v1149, %v1221
      %v1254 = vadd.f32 %v1150, %v1222
      %v1255 = vadd.f32 %v1151, %v1223
      %v1256 = vadd.f32 %v1152, %v1224
      %v1257 = vadd.f32 %v1153, %v1225
      %v1258 = vpack.c.bf16 %v1227, %v1226
      %v1259 = vpack.c.bf16 %v1229, %v1228
      %v1260 = vpack.c.bf16 %v1231, %v1230
      %v1261 = vpack.c.bf16 %v1233, %v1232
      %v1262 = vpack.c.bf16 %v1235, %v1234
      %v1263 = vpack.c.bf16 %v1237, %v1236
      %v1264 = vpack.c.bf16 %v1239, %v1238
      %v1265 = vpack.c.bf16 %v1241, %v1240
      %v1266 = vpack.c.bf16 %v1243, %v1242
      %v1267 = vpack.c.bf16 %v1245, %v1244
      %v1268 = vpack.c.bf16 %v1247, %v1246
      %v1269 = vpack.c.bf16 %v1249, %v1248
      %v1270 = vpack.c.bf16 %v1251, %v1250
      %v1271 = vpack.c.bf16 %v1253, %v1252
      %v1272 = vpack.c.bf16 %v1255, %v1254
      %v1273 = vpack.c.bf16 %v1257, %v1256
      %v1290 = vunpack.c.l.b16 %v1258
      %v1291 = vunpack.c.h.b16 %v1258
      %v1292 = vunpack.c.l.b16 %v1259
      %v1293 = vunpack.c.h.b16 %v1259
      %v1294 = vunpack.c.l.b16 %v1260
      %v1295 = vunpack.c.h.b16 %v1260
      %v1296 = vunpack.c.l.b16 %v1261
      %v1297 = vunpack.c.h.b16 %v1261
      %v1298 = vunpack.c.l.b16 %v1262
      %v1299 = vunpack.c.h.b16 %v1262
      %v1300 = vunpack.c.l.b16 %v1263
      %v1301 = vunpack.c.h.b16 %v1263
      %v1302 = vunpack.c.l.b16 %v1264
      %v1303 = vunpack.c.h.b16 %v1264
      %v1304 = vunpack.c.l.b16 %v1265
      %v1305 = vunpack.c.h.b16 %v1265
      %v1306 = vunpack.c.l.b16 %v1266
      %v1307 = vunpack.c.h.b16 %v1266
      %v1308 = vunpack.c.l.b16 %v1267
      %v1309 = vunpack.c.h.b16 %v1267
      %v1310 = vunpack.c.l.b16 %v1268
      %v1311 = vunpack.c.h.b16 %v1268
      %v1312 = vunpack.c.l.b16 %v1269
      %v1313 = vunpack.c.h.b16 %v1269
      %v1314 = vunpack.c.l.b16 %v1270
      %v1315 = vunpack.c.h.b16 %v1270
      %v1316 = vunpack.c.l.b16 %v1271
      %v1317 = vunpack.c.h.b16 %v1271
      %v1318 = vunpack.c.l.b16 %v1272
      %v1319 = vunpack.c.h.b16 %v1272
      %v1320 = vunpack.c.l.b16 %v1273
      %v1321 = vunpack.c.h.b16 %v1273
      %v1322 = vpack.c.b16 %v1290, %v1290
      %v1323 = vpack.c.b16 %v1291, %v1291
      %v1324 = vpack.c.b16 %v1292, %v1292
      %v1325 = vpack.c.b16 %v1293, %v1293
      %v1326 = vpack.c.b16 %v1294, %v1294
      %v1327 = vpack.c.b16 %v1295, %v1295
      %v1328 = vpack.c.b16 %v1296, %v1296
      %v1329 = vpack.c.b16 %v1297, %v1297
      %v1330 = vpack.c.b16 %v1298, %v1298
      %v1331 = vpack.c.b16 %v1299, %v1299
      %v1332 = vpack.c.b16 %v1300, %v1300
      %v1333 = vpack.c.b16 %v1301, %v1301
      %v1334 = vpack.c.b16 %v1302, %v1302
      %v1335 = vpack.c.b16 %v1303, %v1303
      %v1336 = vpack.c.b16 %v1304, %v1304
      %v1337 = vpack.c.b16 %v1305, %v1305
      %v1338 = vpack.c.b16 %v1306, %v1306
      %v1339 = vpack.c.b16 %v1307, %v1307
      %v1340 = vpack.c.b16 %v1308, %v1308
      %v1341 = vpack.c.b16 %v1309, %v1309
      %v1342 = vpack.c.b16 %v1310, %v1310
      %v1343 = vpack.c.b16 %v1311, %v1311
      %v1344 = vpack.c.b16 %v1312, %v1312
      %v1345 = vpack.c.b16 %v1313, %v1313
      %v1346 = vpack.c.b16 %v1314, %v1314
      %v1347 = vpack.c.b16 %v1315, %v1315
      %v1348 = vpack.c.b16 %v1316, %v1316
      %v1349 = vpack.c.b16 %v1317, %v1317
      %v1350 = vpack.c.b16 %v1318, %v1318
      %v1351 = vpack.c.b16 %v1319, %v1319
      %v1352 = vpack.c.b16 %v1320, %v1320
      %v1353 = vpack.c.b16 %v1321, %v1321
      %vm1386 = vcmask 519168
      %1387 = vst.msk [vmem:[%s170] sm:$0xf] %vm1386, %v1322
      %1388 = vst.msk [vmem:[%s170 + $0x4] sm:$0xf] %vm1386, %v1323
      %1389 = vst.msk [vmem:[%s170 + $0x8] sm:$0xf] %vm1386, %v1324
      %1390 = vst.msk [vmem:[%s170 + $0xc] sm:$0xf] %vm1386, %v1325
      %1391 = vst.msk [vmem:[%s170 + $0x10] sm:$0xf] %vm1386, %v1326
      %1392 = vst.msk [vmem:[%s170 + $0x14] sm:$0xf] %vm1386, %v1327
      %1393 = vst.msk [vmem:[%s170 + $0x18] sm:$0xf] %vm1386, %v1328
      %1394 = vst.msk [vmem:[%s170 + $0x1c] sm:$0xf] %vm1386, %v1329
      %1395 = vst.msk [vmem:[%s170 + $0x20] sm:$0xf] %vm1386, %v1330
      %1396 = vst.msk [vmem:[%s170 + $0x24] sm:$0xf] %vm1386, %v1331
      %1397 = vst.msk [vmem:[%s170 + $0x28] sm:$0xf] %vm1386, %v1332
      %1398 = vst.msk [vmem:[%s170 + $0x2c] sm:$0xf] %vm1386, %v1333
      %1399 = vst.msk [vmem:[%s170 + $0x30] sm:$0xf] %vm1386, %v1334
      %1400 = vst.msk [vmem:[%s170 + $0x34] sm:$0xf] %vm1386, %v1335
      %1401 = vst.msk [vmem:[%s170 + $0x38] sm:$0xf] %vm1386, %v1336
      %1402 = vst.msk [vmem:[%s170 + $0x3c] sm:$0xf] %vm1386, %v1337
      %1403 = vst.msk [vmem:[%s170 + $0x40] sm:$0xf] %vm1386, %v1338
      %1404 = vst.msk [vmem:[%s170 + $0x44] sm:$0xf] %vm1386, %v1339
      %1405 = vst.msk [vmem:[%s170 + $0x48] sm:$0xf] %vm1386, %v1340
      %1406 = vst.msk [vmem:[%s170 + $0x4c] sm:$0xf] %vm1386, %v1341
      %1407 = vst.msk [vmem:[%s170 + $0x50] sm:$0xf] %vm1386, %v1342
      %1408 = vst.msk [vmem:[%s170 + $0x54] sm:$0xf] %vm1386, %v1343
      %1409 = vst.msk [vmem:[%s170 + $0x58] sm:$0xf] %vm1386, %v1344
      %1410 = vst.msk [vmem:[%s170 + $0x5c] sm:$0xf] %vm1386, %v1345
      %1411 = vst.msk [vmem:[%s170 + $0x60] sm:$0xf] %vm1386, %v1346
      %1412 = vst.msk [vmem:[%s170 + $0x64] sm:$0xf] %vm1386, %v1347
      %1413 = vst.msk [vmem:[%s170 + $0x68] sm:$0xf] %vm1386, %v1348
      %1414 = vst.msk [vmem:[%s170 + $0x6c] sm:$0xf] %vm1386, %v1349
      %1415 = vst.msk [vmem:[%s170 + $0x70] sm:$0xf] %vm1386, %v1350
      %1416 = vst.msk [vmem:[%s170 + $0x74] sm:$0xf] %vm1386, %v1351
      %1417 = vst.msk [vmem:[%s170 + $0x78] sm:$0xf] %vm1386, %v1352
      %1418 = vst.msk [vmem:[%s170 + $0x7c] sm:$0xf] %vm1386, %v1353
      %p1419 = scmp.lt.s32.totalorder %s14, 1
      %s1420 = scalar_select %p1419, %s14, 1
      %s1421 = smul.addr %s1420, 32
      %s1422 = smul.addr %s1421, 4
      %s1423 = scalar_lea.vmem %s3, %s1422
      // Predicated region
      $region33: #{transformer_block_forward.10} parent=31 // pred_check
        %p1424 = pneg %p100
      $region34: #{transformer_block_forward.10} parent=31 // pred_check_branch
        %1426 = sbr.rel (%p1424) target = $region36
      $region35: #{transformer_block_forward.10} parent=31 // pred_region
        _
      $region36: #{transformer_block_forward.10} parent=31 // pred_fallthru
        _
    $region32: #{transformer_block_forward.10} parent=5 // pred_fallthru
      _
    %p1427 = scmp.le.s32.totalorder 2, %s9
    // Predicated region
    $region37: #{transformer_block_forward.10} parent=5 // pred_check
      %p1428 = pneg %p1427
    $region38: #{transformer_block_forward.10} parent=5 // pred_check_branch
      %1430 = sbr.rel (%p1428) target = $region40
    $region39: #{transformer_block_forward.10} parent=5 // pred_region
      %s1431 = ssub.s32 %s9, 2
      // Predicated region
      $region41: #{transformer_block_forward.10} parent=39 // pred_check
        %p1432 = pneg %p106
      $region42: #{transformer_block_forward.10} parent=39 // pred_check_branch
        %1434 = sbr.rel (%p1432) target = $region44
      $region43: #{transformer_block_forward.10} parent=39 // pred_region
        %p1435 = scmp.lt.s32.totalorder %s15, 1
        %s1436 = scalar_select %p1435, %s15, 1
        %s1437 = smul.addr %s1436, 32
        %s1438 = smul.addr %s1437, 4
        %s1439 = scalar_lea.vmem %s3, %s1438
      $region44: #{transformer_block_forward.10} parent=39 // pred_fallthru
        _
    $region40: #{transformer_block_forward.10} parent=5 // pred_fallthru
      _
  $region6: #{transformer_block_forward.10} parent=0 // loop_footer
    %s13 = sadd.s32 1, %s9
  $region7: #{transformer_block_forward.10} parent=0 // loop_footer_branch
    %8 = sbr.rel target = $region3
  $region8: #{transformer_block_forward.10} parent=0 // loop_exit
    _

</llo_original>
